<compile_context>
chip_gen: v5e
topology: v5e:2x2
jax: 0.10.0
libtpu: 0.0.40
codegen_flags: <defaults>
</compile_context>

<pallas_src>
import functools

import numpy as np
import jax
import jax.numpy as jnp
from jax.experimental import pallas as pl
from jax.experimental.pallas import tpu as pltpu


# ------------------------------------------------------------- packed layouts


def _w_entries(E, F, HLP):
    # Every weight whose input dim is E, packed along the output (lane) axis.
    return (("ca_w_oa", 2 * HLP), ("sa_wqk", 2 * E), ("ffn_w1", F),
            ("sa_wv", E), ("sa_wo", E), ("ca_w_val", E), ("ca_w_out", E))


def _b_entries(E, F, HLP):
    # Every bias + LayerNorm gamma/beta, packed into one lane-dense row.
    return (("ca_b_oa", 2 * HLP), ("sa_bqk", 2 * E), ("ffn_b1", F),
            ("sa_bv", E), ("sa_bo", E), ("ca_b_val", E), ("ca_b_out", E),
            ("ffn_b2", E), ("n1_g", E), ("n1_b", E), ("n2_g", E), ("n2_b", E),
            ("n3_g", E), ("n3_b", E))


def _layout(entries):
    layout, off = {}, 0
    for name, n in entries:
        layout[name] = (off, n)
        off += n
    return layout, off


# ------------------------------------------------------------------------ kernel


def _make_decoder_kernel(lengths, num_layers, NQ, E, H, L, P, F,
                         w_layout, b_layout):
    """Fused kernel: runs every decoder layer for one batch element."""
    Dh = E // H
    LP = L * P
    HLP = H * L * P
    T = int(sum(lengths))

    def layernorm(y, g, b):
        mu = jnp.mean(y, axis=-1, keepdims=True)
        var = jnp.mean(jnp.square(y - mu), axis=-1, keepdims=True)
        return (y - mu) * jax.lax.rsqrt(var + 1e-5) * g + b

    def kernel(q_ref, qpos_ref, val_ref, ref_ref,
               wslab_ref, w2_ref, bslab_ref, hs_ref):

        def W(li, name):                      # (E, n) weight slice, static offsets
            o, n = w_layout[name]
            return wslab_ref[li, :, o:o + n]

        def Bv(li, name):                     # (1, n) bias / LN param slice
            o, n = b_layout[name]
            return bslab_ref[li, :, o:o + n]

        x = q_ref[0].astype(jnp.float32)          # (NQ, E)
        qpos = qpos_ref[0].astype(jnp.float32)    # (NQ, E)
        mem = val_ref[0].astype(jnp.float32)      # (T, E)  multi-level memory
        refp = ref_ref[0].astype(jnp.float32)     # (NQ, L) ref points * valid_ratios

        # Hoisted once: local temporal coordinate row; per-level prefix slices
        # t_row[:, :Tl] give coordinates 0..Tl-1.
        t_row = jax.lax.broadcasted_iota(jnp.int32, (1, T), 1).astype(jnp.float32)

        for li in range(num_layers):
            # ---------------- self-attention: q = k = x + query_pos, v = x -------
            # (1/sqrt(Dh) is pre-folded into the packed Q weights/bias.)
            q_in = x + qpos
            qk = jnp.dot(q_in, W(li, "sa_wqk"),
                         preferred_element_type=jnp.float32) + Bv(li, "sa_bqk")  # (NQ, 2E)
            v = jnp.dot(x, W(li, "sa_wv"),
                        preferred_element_type=jnp.float32) + Bv(li, "sa_bv")    # (NQ, E)

            # per-head scores, stacked along sublanes -> ONE softmax pass
            s_blocks = []
            for h in range(H):
                lo, hi = h * Dh, (h + 1) * Dh
                qh = qk[:, lo:hi]
                kh = qk[:, E + lo:E + hi]
                s_blocks.append(jax.lax.dot_general(
                    qh, kh, (((1,), (1,)), ((), ())),
                    preferred_element_type=jnp.float32))                          # (NQ, NQ)
            s_all = jnp.concatenate(s_blocks, axis=0)                             # (H*NQ, NQ)
            s_all = s_all - jnp.max(s_all, axis=-1, keepdims=True)
            p_all = jnp.exp(s_all)
            p_all = p_all * pl.reciprocal(
                jnp.sum(p_all, axis=-1, keepdims=True), approx=True)

            # per-head P@V, lane-concat, then ONE merged out-projection matmul
            o_blocks = []
            for h in range(H):
                lo, hi = h * Dh, (h + 1) * Dh
                ph = p_all[h * NQ:(h + 1) * NQ, :]                                # (NQ, NQ)
                o_blocks.append(jnp.dot(ph, v[:, lo:hi],
                                        preferred_element_type=jnp.float32))      # (NQ, Dh)
            o_cat = jnp.concatenate(o_blocks, axis=-1)                            # (NQ, E)
            attn_out = jnp.dot(o_cat, W(li, "sa_wo"),
                               preferred_element_type=jnp.float32) + Bv(li, "sa_bo")
            # TODO(synk): attention/proj dropout omitted (eval-mode semantics).
            x = layernorm(x + attn_out, Bv(li, "n1_g"), Bv(li, "n1_b"))

            # ---------------- multi-scale deformable cross-attn (1-D temporal) ---
            qc = x + qpos
            vproj = jnp.dot(mem, W(li, "ca_w_val"),
                            preferred_element_type=jnp.float32) + Bv(li, "ca_b_val")  # (T, E)
            # TODO(synk): key_padding_mask masking of value omitted (mask is None here).
            # TODO(synk): at real DETR scale (large T, E), cast matmul operands to
            # bf16 and tile the value/vproj path over T (v7x has only 64 MiB VMEM).
            oa = jnp.dot(qc, W(li, "ca_w_oa"),
                         preferred_element_type=jnp.float32) + Bv(li, "ca_b_oa")      # (NQ, 2*HLP)

            samp_blocks = []
            for h in range(H):
                off_h = oa[:, h * LP:(h + 1) * LP]                    # (NQ, L*P) offsets
                aw_h = oa[:, HLP + h * LP:HLP + (h + 1) * LP]         # (NQ, L*P) logits
                aw_h = aw_h - jnp.max(aw_h, axis=-1, keepdims=True)
                aw_h = jnp.exp(aw_h)
                aw_h = aw_h * pl.reciprocal(
                    jnp.sum(aw_h, axis=-1, keepdims=True), approx=True)   # softmax over L*P

                # Tent-weight tap construction, no P axis: per level accumulate
                # a (NQ, Tl) chunk over the LOCAL iota, then lane-concat.
                lvl_chunks = []
                for l in range(L):
                    Tl = int(lengths[l])
                    t_loc = t_row[:, :Tl]                             # (1, Tl): 0..Tl-1
                    # 1-D grid_sample, align_corners=False, padding_mode='zeros':
                    # pixel coord = (ref + off/Tl) * Tl - 0.5 = ref*Tl + off - 0.5
                    xg = refp[:, l:l + 1] * float(Tl) \
                        + off_h[:, l * P:(l + 1) * P] - 0.5           # (NQ, P)
                    lvl = jnp.zeros((NQ, Tl), jnp.float32)
                    for pi in range(P):
                        xp = xg[:, pi:pi + 1]                         # (NQ, 1)
                        ap = aw_h[:, l * P + pi:l * P + pi + 1]       # (NQ, 1)
                        tent = jnp.maximum(1.0 - jnp.abs(t_loc - xp), 0.0)
                        lvl = lvl + tent * ap
                    lvl_chunks.append(lvl)
                wq = jnp.concatenate(lvl_chunks, axis=-1)             # (NQ, T), level order
                samp_blocks.append(jnp.dot(wq, vproj[:, h * Dh:(h + 1) * Dh],
                                           preferred_element_type=jnp.float32))  # (NQ, Dh)
            samp_cat = jnp.concatenate(samp_blocks, axis=-1)          # (NQ, E)
            ca_out = jnp.dot(samp_cat, W(li, "ca_w_out"),
                             preferred_element_type=jnp.float32) + Bv(li, "ca_b_out")
            x = layernorm(x + ca_out, Bv(li, "n2_g"), Bv(li, "n2_b"))

            # ---------------- FFN (+ residual) + norm3 ----------------------------
            hmid = jnp.dot(x, W(li, "ffn_w1"),
                           preferred_element_type=jnp.float32) + Bv(li, "ffn_b1")
            hmid = jnp.maximum(hmid, 0.0)                             # ReLU
            y = jnp.dot(hmid, w2_ref[li],
                        preferred_element_type=jnp.float32) + Bv(li, "ffn_b2")
            x = layernorm(x + y, Bv(li, "n3_g"), Bv(li, "n3_b"))

            hs_ref[li, 0, :, :] = x.astype(hs_ref.dtype)

    return kernel


# ------------------------------------------------------------------------ model


def decoder_forward(packed, query, key, value, query_pos, reference_points,
                    valid_ratios, lengths, H, L, P):
    """DeformableDETRDecoder.forward (bbox_embed=None, return_intermediate=True)."""
    del key  # self_attn attends within query; cross_attn only consumes `value`
    B, NQ, E = query.shape
    T = value.shape[1]
    num_layers = packed["wslab"].shape[0]
    F = packed["ffn_w2"].shape[1]
    HLP = H * L * P
    w_layout, _ = _layout(_w_entries(E, F, HLP))
    b_layout, _ = _layout(_b_entries(E, F, HLP))

    # reference_points[:, :, None, :] * valid_ratios[:, None, :, None] -> (B,NQ,L,1);
    # bbox_embed is None, so this is identical for every layer. Squeeze trailing 1.
    ref_input = (reference_points[:, :, None, :] * valid_ratios[:, None, :, None])[..., 0]

    kernel = _make_decoder_kernel(tuple(int(t) for t in lengths), num_layers,
                                  NQ, E, H, L, P, F, w_layout, b_layout)

    def _resident_spec(arr):
        zeros = (0,) * arr.ndim
        return pl.BlockSpec(arr.shape, lambda b, _z=zeros: _z)   # fetched once, VMEM-resident

    hs = pl.pallas_call(
        kernel,
        out_shape=jax.ShapeDtypeStruct((num_layers, B, NQ, E), query.dtype),
        grid=(B,),
        in_specs=[pl.BlockSpec((1, NQ, E), lambda b: (b, 0, 0)),
                  pl.BlockSpec((1, NQ, E), lambda b: (b, 0, 0)),
                  pl.BlockSpec((1, T, E), lambda b: (b, 0, 0)),
                  pl.BlockSpec((1, NQ, L), lambda b: (b, 0, 0)),
                  _resident_spec(packed["wslab"]),
                  _resident_spec(packed["ffn_w2"]),
                  _resident_spec(packed["bslab"])],
        out_specs=pl.BlockSpec((num_layers, 1, NQ, E), lambda b: (0, b, 0, 0)),
        compiler_params=pltpu.CompilerParams(dimension_semantics=("parallel",)),
    )(query, query_pos, value, ref_input,
      packed["wslab"], packed["ffn_w2"], packed["bslab"])

    # bbox_embed is None -> reference points never update
    refs = jnp.broadcast_to(reference_points[None],
                            (num_layers,) + reference_points.shape)
    return hs, refs


# ------------------------------------------------------------------------ params


def init_params(key, num_layers, E, H, L, P, F):
    def dense(k, fan_in, fan_out, scale=0.05):
        kw, kb = jax.random.split(k)
        w = scale * jax.random.normal(kw, (fan_in, fan_out), jnp.float32)
        b = scale * jax.random.normal(kb, (fan_out,), jnp.float32)
        return w, b

    layers = []
    for lk in jax.random.split(key, num_layers):
        ks = jax.random.split(lk, 10)
        p = {}
        p['sa_wq'], p['sa_bq'] = dense(ks[0], E, E)
        p['sa_wk'], p['sa_bk'] = dense(ks[1], E, E)
        p['sa_wv'], p['sa_bv'] = dense(ks[2], E, E)
        p['sa_wo'], p['sa_bo'] = dense(ks[3], E, E)
        p['ca_w_val'], p['ca_b_val'] = dense(ks[4], E, E)
        p['ca_w_off'], p['ca_b_off'] = dense(ks[5], E, H * L * P)   # 1-D offsets
        p['ca_w_aw'], p['ca_b_aw'] = dense(ks[6], E, H * L * P)
        p['ca_w_out'], p['ca_b_out'] = dense(ks[7], E, E)
        p['ffn_w1'], p['ffn_b1'] = dense(ks[8], E, F)
        p['ffn_w2'], p['ffn_b2'] = dense(ks[9], F, E)
        for n in ('n1', 'n2', 'n3'):
            p[n + '_g'] = jnp.ones((E,), jnp.float32)
            p[n + '_b'] = jnp.zeros((E,), jnp.float32)
        layers.append(p)
    return layers


def pack_params(layer_params, H, L, P):
    """Pack per-layer params into 3 lane-dense slabs:
       wslab  (NL, E, sum_cols)  -- all E-input weights, merged Q|K and off|aw,
                                    1/sqrt(Dh) folded into the Q half
       ffn_w2 (NL, F, E)
       bslab  (NL, 1, sum_cols)  -- all biases + LayerNorm gammas/betas."""
    E = layer_params[0]["sa_wq"].shape[0]
    F = layer_params[0]["ffn_w1"].shape[1]
    HLP = H * L * P
    scale = 1.0 / float(np.sqrt(E // H))
    w_entries = _w_entries(E, F, HLP)
    b_entries = _b_entries(E, F, HLP)

    wslabs, bslabs, w2s = [], [], []
    for p in layer_params:
        wparts = {
            "ca_w_oa": jnp.concatenate([p["ca_w_off"], p["ca_w_aw"]], axis=1),
            "sa_wqk": jnp.concatenate([p["sa_wq"] * scale, p["sa_wk"]], axis=1),
            "ffn_w1": p["ffn_w1"],
            "sa_wv": p["sa_wv"], "sa_wo": p["sa_wo"],
            "ca_w_val": p["ca_w_val"], "ca_w_out": p["ca_w_out"],
        }
        bparts = {
            "ca_b_oa": jnp.concatenate([p["ca_b_off"], p["ca_b_aw"]], axis=0),
            "sa_bqk": jnp.concatenate([p["sa_bq"] * scale, p["sa_bk"]], axis=0),
            "ffn_b1": p["ffn_b1"],
            "sa_bv": p["sa_bv"], "sa_bo": p["sa_bo"],
            "ca_b_val": p["ca_b_val"], "ca_b_out": p["ca_b_out"],
            "ffn_b2": p["ffn_b2"],
            "n1_g": p["n1_g"], "n1_b": p["n1_b"],
            "n2_g": p["n2_g"], "n2_b": p["n2_b"],
            "n3_g": p["n3_g"], "n3_b": p["n3_b"],
        }
        wslabs.append(jnp.concatenate([wparts[name] for name, _ in w_entries], axis=1))
        bslabs.append(jnp.concatenate([bparts[name] for name, _ in b_entries], axis=0)[None, :])
        w2s.append(p["ffn_w2"])

    return {"wslab": jnp.stack(wslabs, axis=0),      # (NL, E, 512)
            "ffn_w2": jnp.stack(w2s, axis=0),        # (NL, F, E)
            "bslab": jnp.stack(bslabs, axis=0)}      # (NL, 1, 736)


# ------------------------------------------------------------------------ main


if __name__ == "__main__":
    B, NQ, E, H, P, L, F, NLAYERS = 2, 8, 32, 4, 4, 4, 64, 2
    lengths = (32, 16, 8, 8)            # temporal length per feature level (static)
    T = sum(lengths)

    key0 = jax.random.PRNGKey(0)
    ks = jax.random.split(key0, 8)
    query = 0.1 * jax.random.normal(ks[0], (B, NQ, E), jnp.float32)
    query_pos = 0.1 * jax.random.normal(ks[1], (B, NQ, E), jnp.float32)
    value = 0.1 * jax.random.normal(ks[2], (B, T, E), jnp.float32)
    memory_key = value                   # `key` is unused by the decoder layers
    reference_points = jax.random.uniform(ks[3], (B, NQ, 1), jnp.float32, 0.05, 0.95)
    valid_ratios = jax.random.uniform(ks[4], (B, L), jnp.float32, 0.5, 1.0)

    raw_params = init_params(ks[5], NLAYERS, E, H, L, P, F)
    packed = pack_params(raw_params, H, L, P)

    fwd = jax.jit(functools.partial(decoder_forward, lengths=lengths, H=H, L=L, P=P))
    hs, refs = fwd(packed, query, memory_key, value, query_pos,
                   reference_points, valid_ratios)
    jax.block_until_ready((hs, refs))

    assert hs.shape == (NLAYERS, B, NQ, E)
    assert refs.shape == (NLAYERS, B, NQ, 1)
    assert bool(jnp.all(jnp.isfinite(hs)))
    print("KERNEL_OK")
</pallas_src>

<mosaic_0001>
module attributes {stable_mosaic.version = 11 : i64} {
  func.func @kernel(%arg0: i32, %arg1: memref<1x8x32xf32, #tpu.memory_space<vmem>>, %arg2: memref<1x8x32xf32, #tpu.memory_space<vmem>>, %arg3: memref<1x64x32xf32, #tpu.memory_space<vmem>>, %arg4: memref<1x8x4xf32, #tpu.memory_space<vmem>>, %arg5: memref<2x32x384xf32, #tpu.memory_space<vmem>>, %arg6: memref<2x64x32xf32, #tpu.memory_space<vmem>>, %arg7: memref<2x1x608xf32, #tpu.memory_space<vmem>>, %arg8: memref<2x1x8x32xf32, #tpu.memory_space<vmem>>) attributes {dimension_semantics = [#tpu.dimension_semantics<parallel>], iteration_bounds = array<i64: 2>, scalar_prefetch = 0 : i64, scratch_operands = 0 : i64, tpu.core_type = #tpu.core_type<tc>, window_params = [{transform_indices = @transform_0, window_bounds = array<i64: 1, 8, 32>}, {transform_indices = @transform_1, window_bounds = array<i64: 1, 8, 32>}, {transform_indices = @transform_2, window_bounds = array<i64: 1, 64, 32>}, {transform_indices = @transform_3, window_bounds = array<i64: 1, 8, 4>}, {pipeline_mode = #tpu.pipeline_mode<synchronous>, transform_indices = @transform_4, window_bounds = array<i64: 2, 32, 384>}, {pipeline_mode = #tpu.pipeline_mode<synchronous>, transform_indices = @transform_5, window_bounds = array<i64: 2, 64, 32>}, {pipeline_mode = #tpu.pipeline_mode<synchronous>, transform_indices = @transform_6, window_bounds = array<i64: 2, 1, 608>}, {transform_indices = @transform_7, window_bounds = array<i64: 2, 1, 8, 32>}]} {
    %c0 = arith.constant 0 : index
    %c0_0 = arith.constant 0 : index
    %c0_1 = arith.constant 0 : index
    %0 = vector.load %arg1[%c0, %c0_0, %c0_1] : memref<1x8x32xf32, #tpu.memory_space<vmem>>, vector<1x8x32xf32>
    %1 = vector.shape_cast %0 : vector<1x8x32xf32> to vector<8x32xf32>
    %c0_2 = arith.constant 0 : index
    %c0_3 = arith.constant 0 : index
    %c0_4 = arith.constant 0 : index
    %2 = vector.load %arg2[%c0_2, %c0_3, %c0_4] : memref<1x8x32xf32, #tpu.memory_space<vmem>>, vector<1x8x32xf32>
    %3 = vector.shape_cast %2 : vector<1x8x32xf32> to vector<8x32xf32>
    %c0_5 = arith.constant 0 : index
    %c0_6 = arith.constant 0 : index
    %c0_7 = arith.constant 0 : index
    %4 = vector.load %arg3[%c0_5, %c0_6, %c0_7] : memref<1x64x32xf32, #tpu.memory_space<vmem>>, vector<1x64x32xf32>
    %5 = vector.shape_cast %4 : vector<1x64x32xf32> to vector<64x32xf32>
    %c0_8 = arith.constant 0 : index
    %c0_9 = arith.constant 0 : index
    %c0_10 = arith.constant 0 : index
    %6 = vector.load %arg4[%c0_8, %c0_9, %c0_10] : memref<1x8x4xf32, #tpu.memory_space<vmem>>, vector<1x8x4xf32>
    %7 = vector.shape_cast %6 : vector<1x8x4xf32> to vector<8x4xf32>
    %8 = tpu.iota {dimensions = array<i32: 1>} : vector<1x64xi32>
    %9 = arith.sitofp %8 : vector<1x64xi32> to vector<1x64xf32>
    %10 = arith.addf %1, %3 : vector<8x32xf32>
    %c0_11 = arith.constant 0 : index
    %c0_12 = arith.constant 0 : index
    %c128 = arith.constant 128 : index
    %11 = vector.load %arg5[%c0_11, %c0_12, %c128] : memref<2x32x384xf32, #tpu.memory_space<vmem>>, vector<1x32x64xf32>
    %12 = vector.shape_cast %11 : vector<1x32x64xf32> to vector<32x64xf32>
    %cst = arith.constant dense<0.000000e+00> : vector<8x64xf32>
    %13 = tpu.matmul %10, %12, %cst {dimension_numbers = #tpu.dot_dimension_numbers<[1], [0], [0], [1], [0, 0, 1, 1], [], []>} : vector<8x32xf32>, vector<32x64xf32>, vector<8x64xf32> -> vector<8x64xf32>
    %c0_13 = arith.constant 0 : index
    %c0_14 = arith.constant 0 : index
    %c128_15 = arith.constant 128 : index
    %14 = vector.load %arg7[%c0_13, %c0_14, %c128_15] : memref<2x1x608xf32, #tpu.memory_space<vmem>>, vector<1x1x64xf32>
    %15 = vector.shape_cast %14 : vector<1x1x64xf32> to vector<1x64xf32>
    %16 = vector.broadcast %15 : vector<1x64xf32> to vector<8x64xf32>
    %17 = arith.addf %13, %16 : vector<8x64xf32>
    %c0_16 = arith.constant 0 : index
    %c0_17 = arith.constant 0 : index
    %c256 = arith.constant 256 : index
    %18 = vector.load %arg5[%c0_16, %c0_17, %c256] : memref<2x32x384xf32, #tpu.memory_space<vmem>>, vector<1x32x32xf32>
    %19 = vector.shape_cast %18 : vector<1x32x32xf32> to vector<32x32xf32>
    %cst_18 = arith.constant dense<0.000000e+00> : vector<8x32xf32>
    %20 = tpu.matmul %1, %19, %cst_18 {dimension_numbers = #tpu.dot_dimension_numbers<[1], [0], [0], [1], [0, 0, 1, 1], [], []>} : vector<8x32xf32>, vector<32x32xf32>, vector<8x32xf32> -> vector<8x32xf32>
    %c0_19 = arith.constant 0 : index
    %c0_20 = arith.constant 0 : index
    %c256_21 = arith.constant 256 : index
    %21 = vector.load %arg7[%c0_19, %c0_20, %c256_21] : memref<2x1x608xf32, #tpu.memory_space<vmem>>, vector<1x1x32xf32>
    %22 = vector.shape_cast %21 : vector<1x1x32xf32> to vector<1x32xf32>
    %23 = vector.broadcast %22 : vector<1x32xf32> to vector<8x32xf32>
    %24 = arith.addf %20, %23 : vector<8x32xf32>
    %25 = vector.extract_strided_slice %17 {offsets = [0, 0], sizes = [8, 8], strides = [1, 1]} : vector<8x64xf32> to vector<8x8xf32>
    %26 = vector.extract_strided_slice %17 {offsets = [0, 32], sizes = [8, 8], strides = [1, 1]} : vector<8x64xf32> to vector<8x8xf32>
    %cst_22 = arith.constant dense<0.000000e+00> : vector<8x8xf32>
    %27 = tpu.matmul %25, %26, %cst_22 {dimension_numbers = #tpu.dot_dimension_numbers<[1], [1], [0], [0], [0, 0, 1, 0], [], []>} : vector<8x8xf32>, vector<8x8xf32>, vector<8x8xf32> -> vector<8x8xf32>
    %28 = vector.extract_strided_slice %17 {offsets = [0, 8], sizes = [8, 8], strides = [1, 1]} : vector<8x64xf32> to vector<8x8xf32>
    %29 = vector.extract_strided_slice %17 {offsets = [0, 40], sizes = [8, 8], strides = [1, 1]} : vector<8x64xf32> to vector<8x8xf32>
    %cst_23 = arith.constant dense<0.000000e+00> : vector<8x8xf32>
    %30 = tpu.matmul %28, %29, %cst_23 {dimension_numbers = #tpu.dot_dimension_numbers<[1], [1], [0], [0], [0, 0, 1, 0], [], []>} : vector<8x8xf32>, vector<8x8xf32>, vector<8x8xf32> -> vector<8x8xf32>
    %31 = vector.extract_strided_slice %17 {offsets = [0, 16], sizes = [8, 8], strides = [1, 1]} : vector<8x64xf32> to vector<8x8xf32>
    %32 = vector.extract_strided_slice %17 {offsets = [0, 48], sizes = [8, 8], strides = [1, 1]} : vector<8x64xf32> to vector<8x8xf32>
    %cst_24 = arith.constant dense<0.000000e+00> : vector<8x8xf32>
    %33 = tpu.matmul %31, %32, %cst_24 {dimension_numbers = #tpu.dot_dimension_numbers<[1], [1], [0], [0], [0, 0, 1, 0], [], []>} : vector<8x8xf32>, vector<8x8xf32>, vector<8x8xf32> -> vector<8x8xf32>
    %34 = vector.extract_strided_slice %17 {offsets = [0, 24], sizes = [8, 8], strides = [1, 1]} : vector<8x64xf32> to vector<8x8xf32>
    %35 = vector.extract_strided_slice %17 {offsets = [0, 56], sizes = [8, 8], strides = [1, 1]} : vector<8x64xf32> to vector<8x8xf32>
    %cst_25 = arith.constant dense<0.000000e+00> : vector<8x8xf32>
    %36 = tpu.matmul %34, %35, %cst_25 {dimension_numbers = #tpu.dot_dimension_numbers<[1], [1], [0], [0], [0, 0, 1, 0], [], []>} : vector<8x8xf32>, vector<8x8xf32>, vector<8x8xf32> -> vector<8x8xf32>
    %37 = tpu.concatenate %27, %30, %33, %36 in 0 : vector<8x8xf32>, vector<8x8xf32>, vector<8x8xf32>, vector<8x8xf32> -> vector<32x8xf32>
    %cst_26 = arith.constant dense<0xFF800000> : vector<32xf32>
    %38 = vector.multi_reduction <maximumf>, %37, %cst_26 [1] : vector<32x8xf32> to vector<32xf32>
    %39 = vector.shape_cast %38 : vector<32xf32> to vector<32x1xf32>
    %40 = vector.broadcast %39 : vector<32x1xf32> to vector<32x8xf32>
    %41 = arith.subf %37, %40 : vector<32x8xf32>
    %42 = math.exp %41 : vector<32x8xf32>
    %cst_27 = arith.constant dense<0.000000e+00> : vector<32xf32>
    %43 = vector.multi_reduction <add>, %42, %cst_27 [1] : vector<32x8xf32> to vector<32xf32>
    %44 = vector.shape_cast %43 : vector<32xf32> to vector<32x1xf32>
    %45 = tpu.reciprocal %44 {approx = true} : vector<32x1xf32> -> vector<32x1xf32>
    %46 = vector.broadcast %45 : vector<32x1xf32> to vector<32x8xf32>
    %47 = arith.mulf %42, %46 : vector<32x8xf32>
    %48 = vector.extract_strided_slice %47 {offsets = [0, 0], sizes = [8, 8], strides = [1, 1]} : vector<32x8xf32> to vector<8x8xf32>
    %49 = vector.extract_strided_slice %24 {offsets = [0, 0], sizes = [8, 8], strides = [1, 1]} : vector<8x32xf32> to vector<8x8xf32>
    %cst_28 = arith.constant dense<0.000000e+00> : vector<8x8xf32>
    %50 = tpu.matmul %48, %49, %cst_28 {dimension_numbers = #tpu.dot_dimension_numbers<[1], [0], [0], [1], [0, 0, 1, 1], [], []>} : vector<8x8xf32>, vector<8x8xf32>, vector<8x8xf32> -> vector<8x8xf32>
    %51 = vector.extract_strided_slice %47 {offsets = [8, 0], sizes = [8, 8], strides = [1, 1]} : vector<32x8xf32> to vector<8x8xf32>
    %52 = vector.extract_strided_slice %24 {offsets = [0, 8], sizes = [8, 8], strides = [1, 1]} : vector<8x32xf32> to vector<8x8xf32>
    %cst_29 = arith.constant dense<0.000000e+00> : vector<8x8xf32>
    %53 = tpu.matmul %51, %52, %cst_29 {dimension_numbers = #tpu.dot_dimension_numbers<[1], [0], [0], [1], [0, 0, 1, 1], [], []>} : vector<8x8xf32>, vector<8x8xf32>, vector<8x8xf32> -> vector<8x8xf32>
    %54 = vector.extract_strided_slice %47 {offsets = [16, 0], sizes = [8, 8], strides = [1, 1]} : vector<32x8xf32> to vector<8x8xf32>
    %55 = vector.extract_strided_slice %24 {offsets = [0, 16], sizes = [8, 8], strides = [1, 1]} : vector<8x32xf32> to vector<8x8xf32>
    %cst_30 = arith.constant dense<0.000000e+00> : vector<8x8xf32>
    %56 = tpu.matmul %54, %55, %cst_30 {dimension_numbers = #tpu.dot_dimension_numbers<[1], [0], [0], [1], [0, 0, 1, 1], [], []>} : vector<8x8xf32>, vector<8x8xf32>, vector<8x8xf32> -> vector<8x8xf32>
    %57 = vector.extract_strided_slice %47 {offsets = [24, 0], sizes = [8, 8], strides = [1, 1]} : vector<32x8xf32> to vector<8x8xf32>
    %58 = vector.extract_strided_slice %24 {offsets = [0, 24], sizes = [8, 8], strides = [1, 1]} : vector<8x32xf32> to vector<8x8xf32>
    %cst_31 = arith.constant dense<0.000000e+00> : vector<8x8xf32>
    %59 = tpu.matmul %57, %58, %cst_31 {dimension_numbers = #tpu.dot_dimension_numbers<[1], [0], [0], [1], [0, 0, 1, 1], [], []>} : vector<8x8xf32>, vector<8x8xf32>, vector<8x8xf32> -> vector<8x8xf32>
    %60 = tpu.concatenate %50, %53, %56, %59 in 1 : vector<8x8xf32>, vector<8x8xf32>, vector<8x8xf32>, vector<8x8xf32> -> vector<8x32xf32>
    %c0_32 = arith.constant 0 : index
    %c0_33 = arith.constant 0 : index
    %c288 = arith.constant 288 : index
    %61 = vector.load %arg5[%c0_32, %c0_33, %c288] : memref<2x32x384xf32, #tpu.memory_space<vmem>>, vector<1x32x32xf32>
    %62 = vector.shape_cast %61 : vector<1x32x32xf32> to vector<32x32xf32>
    %cst_34 = arith.constant dense<0.000000e+00> : vector<8x32xf32>
    %63 = tpu.matmul %60, %62, %cst_34 {dimension_numbers = #tpu.dot_dimension_numbers<[1], [0], [0], [1], [0, 0, 1, 1], [], []>} : vector<8x32xf32>, vector<32x32xf32>, vector<8x32xf32> -> vector<8x32xf32>
    %c0_35 = arith.constant 0 : index
    %c0_36 = arith.constant 0 : index
    %c288_37 = arith.constant 288 : index
    %64 = vector.load %arg7[%c0_35, %c0_36, %c288_37] : memref<2x1x608xf32, #tpu.memory_space<vmem>>, vector<1x1x32xf32>
    %65 = vector.shape_cast %64 : vector<1x1x32xf32> to vector<1x32xf32>
    %66 = vector.broadcast %65 : vector<1x32xf32> to vector<8x32xf32>
    %67 = arith.addf %63, %66 : vector<8x32xf32>
    %68 = arith.addf %1, %67 : vector<8x32xf32>
    %c0_38 = arith.constant 0 : index
    %c0_39 = arith.constant 0 : index
    %c416 = arith.constant 416 : index
    %69 = vector.load %arg7[%c0_38, %c0_39, %c416] : memref<2x1x608xf32, #tpu.memory_space<vmem>>, vector<1x1x32xf32>
    %70 = vector.shape_cast %69 : vector<1x1x32xf32> to vector<1x32xf32>
    %c0_40 = arith.constant 0 : index
    %c0_41 = arith.constant 0 : index
    %c448 = arith.constant 448 : index
    %71 = vector.load %arg7[%c0_40, %c0_41, %c448] : memref<2x1x608xf32, #tpu.memory_space<vmem>>, vector<1x1x32xf32>
    %72 = vector.shape_cast %71 : vector<1x1x32xf32> to vector<1x32xf32>
    %cst_42 = arith.constant dense<0.000000e+00> : vector<8xf32>
    %73 = vector.multi_reduction <add>, %68, %cst_42 [1] : vector<8x32xf32> to vector<8xf32>
    %74 = vector.shape_cast %73 : vector<8xf32> to vector<8x1xf32>
    %cst_43 = arith.constant 3.200000e+01 : f32
    %75 = vector.broadcast %cst_43 : f32 to vector<8x1xf32>
    %76 = arith.divf %74, %75 : vector<8x1xf32>
    %77 = vector.broadcast %76 : vector<8x1xf32> to vector<8x32xf32>
    %78 = arith.subf %68, %77 : vector<8x32xf32>
    %79 = arith.mulf %78, %78 : vector<8x32xf32>
    %cst_44 = arith.constant dense<0.000000e+00> : vector<8xf32>
    %80 = vector.multi_reduction <add>, %79, %cst_44 [1] : vector<8x32xf32> to vector<8xf32>
    %81 = vector.shape_cast %80 : vector<8xf32> to vector<8x1xf32>
    %cst_45 = arith.constant 3.200000e+01 : f32
    %82 = vector.broadcast %cst_45 : f32 to vector<8x1xf32>
    %83 = arith.divf %81, %82 : vector<8x1xf32>
    %84 = vector.broadcast %76 : vector<8x1xf32> to vector<8x32xf32>
    %85 = arith.subf %68, %84 : vector<8x32xf32>
    %cst_46 = arith.constant 9.99999974E-6 : f32
    %86 = vector.broadcast %cst_46 : f32 to vector<8x1xf32>
    %87 = arith.addf %83, %86 : vector<8x1xf32>
    %88 = math.rsqrt %87 : vector<8x1xf32>
    %89 = vector.broadcast %88 : vector<8x1xf32> to vector<8x32xf32>
    %90 = arith.mulf %85, %89 : vector<8x32xf32>
    %91 = vector.broadcast %70 : vector<1x32xf32> to vector<8x32xf32>
    %92 = arith.mulf %90, %91 : vector<8x32xf32>
    %93 = vector.broadcast %72 : vector<1x32xf32> to vector<8x32xf32>
    %94 = arith.addf %92, %93 : vector<8x32xf32>
    %95 = arith.addf %94, %3 : vector<8x32xf32>
    %c0_47 = arith.constant 0 : index
    %c0_48 = arith.constant 0 : index
    %c320 = arith.constant 320 : index
    %96 = vector.load %arg5[%c0_47, %c0_48, %c320] : memref<2x32x384xf32, #tpu.memory_space<vmem>>, vector<1x32x32xf32>
    %97 = vector.shape_cast %96 : vector<1x32x32xf32> to vector<32x32xf32>
    %cst_49 = arith.constant dense<0.000000e+00> : vector<64x32xf32>
    %98 = tpu.matmul %5, %97, %cst_49 {dimension_numbers = #tpu.dot_dimension_numbers<[1], [0], [0], [1], [0, 0, 1, 1], [], []>} : vector<64x32xf32>, vector<32x32xf32>, vector<64x32xf32> -> vector<64x32xf32>
    %c0_50 = arith.constant 0 : index
    %c0_51 = arith.constant 0 : index
    %c320_52 = arith.constant 320 : index
    %99 = vector.load %arg7[%c0_50, %c0_51, %c320_52] : memref<2x1x608xf32, #tpu.memory_space<vmem>>, vector<1x1x32xf32>
    %100 = vector.shape_cast %99 : vector<1x1x32xf32> to vector<1x32xf32>
    %101 = vector.broadcast %100 : vector<1x32xf32> to vector<64x32xf32>
    %102 = arith.addf %98, %101 : vector<64x32xf32>
    %c0_53 = arith.constant 0 : index
    %c0_54 = arith.constant 0 : index
    %c0_55 = arith.constant 0 : index
    %103 = vector.load %arg5[%c0_53, %c0_54, %c0_55] : memref<2x32x384xf32, #tpu.memory_space<vmem>>, vector<1x32x128xf32>
    %104 = vector.shape_cast %103 : vector<1x32x128xf32> to vector<32x128xf32>
    %cst_56 = arith.constant dense<0.000000e+00> : vector<8x128xf32>
    %105 = tpu.matmul %95, %104, %cst_56 {dimension_numbers = #tpu.dot_dimension_numbers<[1], [0], [0], [1], [0, 0, 1, 1], [], []>} : vector<8x32xf32>, vector<32x128xf32>, vector<8x128xf32> -> vector<8x128xf32>
    %c0_57 = arith.constant 0 : index
    %c0_58 = arith.constant 0 : index
    %c0_59 = arith.constant 0 : index
    %106 = vector.load %arg7[%c0_57, %c0_58, %c0_59] : memref<2x1x608xf32, #tpu.memory_space<vmem>>, vector<1x1x128xf32>
    %107 = vector.shape_cast %106 : vector<1x1x128xf32> to vector<1x128xf32>
    %108 = vector.broadcast %107 : vector<1x128xf32> to vector<8x128xf32>
    %109 = arith.addf %105, %108 : vector<8x128xf32>
    %110 = vector.extract_strided_slice %109 {offsets = [0, 0], sizes = [8, 16], strides = [1, 1]} : vector<8x128xf32> to vector<8x16xf32>
    %111 = vector.extract_strided_slice %109 {offsets = [0, 64], sizes = [8, 16], strides = [1, 1]} : vector<8x128xf32> to vector<8x16xf32>
    %cst_60 = arith.constant dense<0xFF800000> : vector<8xf32>
    %112 = vector.multi_reduction <maximumf>, %111, %cst_60 [1] : vector<8x16xf32> to vector<8xf32>
    %113 = vector.shape_cast %112 : vector<8xf32> to vector<8x1xf32>
    %114 = vector.broadcast %113 : vector<8x1xf32> to vector<8x16xf32>
    %115 = arith.subf %111, %114 : vector<8x16xf32>
    %116 = math.exp %115 : vector<8x16xf32>
    %cst_61 = arith.constant dense<0.000000e+00> : vector<8xf32>
    %117 = vector.multi_reduction <add>, %116, %cst_61 [1] : vector<8x16xf32> to vector<8xf32>
    %118 = vector.shape_cast %117 : vector<8xf32> to vector<8x1xf32>
    %119 = tpu.reciprocal %118 {approx = true} : vector<8x1xf32> -> vector<8x1xf32>
    %120 = vector.broadcast %119 : vector<8x1xf32> to vector<8x16xf32>
    %121 = arith.mulf %116, %120 : vector<8x16xf32>
    %122 = vector.extract_strided_slice %9 {offsets = [0, 0], sizes = [1, 32], strides = [1, 1]} : vector<1x64xf32> to vector<1x32xf32>
    %123 = vector.extract_strided_slice %7 {offsets = [0, 0], sizes = [8, 1], strides = [1, 1]} : vector<8x4xf32> to vector<8x1xf32>
    %cst_62 = arith.constant 3.200000e+01 : f32
    %124 = vector.broadcast %cst_62 : f32 to vector<8x1xf32>
    %125 = arith.mulf %123, %124 : vector<8x1xf32>
    %126 = vector.extract_strided_slice %110 {offsets = [0, 0], sizes = [8, 4], strides = [1, 1]} : vector<8x16xf32> to vector<8x4xf32>
    %127 = vector.broadcast %125 : vector<8x1xf32> to vector<8x4xf32>
    %128 = arith.addf %127, %126 : vector<8x4xf32>
    %cst_63 = arith.constant 5.000000e-01 : f32
    %129 = vector.broadcast %cst_63 : f32 to vector<8x4xf32>
    %130 = arith.subf %128, %129 : vector<8x4xf32>
    %cst_64 = arith.constant 0.000000e+00 : f32
    %131 = vector.broadcast %cst_64 : f32 to vector<8x32xf32>
    %132 = vector.extract_strided_slice %130 {offsets = [0, 0], sizes = [8, 1], strides = [1, 1]} : vector<8x4xf32> to vector<8x1xf32>
    %133 = vector.extract_strided_slice %121 {offsets = [0, 0], sizes = [8, 1], strides = [1, 1]} : vector<8x16xf32> to vector<8x1xf32>
    %134 = vector.broadcast %122 : vector<1x32xf32> to vector<8x32xf32>
    %135 = vector.broadcast %132 : vector<8x1xf32> to vector<8x32xf32>
    %136 = arith.subf %134, %135 : vector<8x32xf32>
    %137 = math.absf %136 : vector<8x32xf32>
    %cst_65 = arith.constant 1.000000e+00 : f32
    %138 = vector.broadcast %cst_65 : f32 to vector<8x32xf32>
    %139 = arith.subf %138, %137 : vector<8x32xf32>
    %cst_66 = arith.constant 0.000000e+00 : f32
    %140 = vector.broadcast %cst_66 : f32 to vector<8x32xf32>
    %141 = arith.maximumf %139, %140 : vector<8x32xf32>
    %142 = vector.broadcast %133 : vector<8x1xf32> to vector<8x32xf32>
    %143 = arith.mulf %141, %142 : vector<8x32xf32>
    %144 = arith.addf %131, %143 : vector<8x32xf32>
    %145 = vector.extract_strided_slice %130 {offsets = [0, 1], sizes = [8, 1], strides = [1, 1]} : vector<8x4xf32> to vector<8x1xf32>
    %146 = vector.extract_strided_slice %121 {offsets = [0, 1], sizes = [8, 1], strides = [1, 1]} : vector<8x16xf32> to vector<8x1xf32>
    %147 = vector.broadcast %122 : vector<1x32xf32> to vector<8x32xf32>
    %148 = vector.broadcast %145 : vector<8x1xf32> to vector<8x32xf32>
    %149 = arith.subf %147, %148 : vector<8x32xf32>
    %150 = math.absf %149 : vector<8x32xf32>
    %cst_67 = arith.constant 1.000000e+00 : f32
    %151 = vector.broadcast %cst_67 : f32 to vector<8x32xf32>
    %152 = arith.subf %151, %150 : vector<8x32xf32>
    %cst_68 = arith.constant 0.000000e+00 : f32
    %153 = vector.broadcast %cst_68 : f32 to vector<8x32xf32>
    %154 = arith.maximumf %152, %153 : vector<8x32xf32>
    %155 = vector.broadcast %146 : vector<8x1xf32> to vector<8x32xf32>
    %156 = arith.mulf %154, %155 : vector<8x32xf32>
    %157 = arith.addf %144, %156 : vector<8x32xf32>
    %158 = vector.extract_strided_slice %130 {offsets = [0, 2], sizes = [8, 1], strides = [1, 1]} : vector<8x4xf32> to vector<8x1xf32>
    %159 = vector.extract_strided_slice %121 {offsets = [0, 2], sizes = [8, 1], strides = [1, 1]} : vector<8x16xf32> to vector<8x1xf32>
    %160 = vector.broadcast %122 : vector<1x32xf32> to vector<8x32xf32>
    %161 = vector.broadcast %158 : vector<8x1xf32> to vector<8x32xf32>
    %162 = arith.subf %160, %161 : vector<8x32xf32>
    %163 = math.absf %162 : vector<8x32xf32>
    %cst_69 = arith.constant 1.000000e+00 : f32
    %164 = vector.broadcast %cst_69 : f32 to vector<8x32xf32>
    %165 = arith.subf %164, %163 : vector<8x32xf32>
    %cst_70 = arith.constant 0.000000e+00 : f32
    %166 = vector.broadcast %cst_70 : f32 to vector<8x32xf32>
    %167 = arith.maximumf %165, %166 : vector<8x32xf32>
    %168 = vector.broadcast %159 : vector<8x1xf32> to vector<8x32xf32>
    %169 = arith.mulf %167, %168 : vector<8x32xf32>
    %170 = arith.addf %157, %169 : vector<8x32xf32>
    %171 = vector.extract_strided_slice %130 {offsets = [0, 3], sizes = [8, 1], strides = [1, 1]} : vector<8x4xf32> to vector<8x1xf32>
    %172 = vector.extract_strided_slice %121 {offsets = [0, 3], sizes = [8, 1], strides = [1, 1]} : vector<8x16xf32> to vector<8x1xf32>
    %173 = vector.broadcast %122 : vector<1x32xf32> to vector<8x32xf32>
    %174 = vector.broadcast %171 : vector<8x1xf32> to vector<8x32xf32>
    %175 = arith.subf %173, %174 : vector<8x32xf32>
    %176 = math.absf %175 : vector<8x32xf32>
    %cst_71 = arith.constant 1.000000e+00 : f32
    %177 = vector.broadcast %cst_71 : f32 to vector<8x32xf32>
    %178 = arith.subf %177, %176 : vector<8x32xf32>
    %cst_72 = arith.constant 0.000000e+00 : f32
    %179 = vector.broadcast %cst_72 : f32 to vector<8x32xf32>
    %180 = arith.maximumf %178, %179 : vector<8x32xf32>
    %181 = vector.broadcast %172 : vector<8x1xf32> to vector<8x32xf32>
    %182 = arith.mulf %180, %181 : vector<8x32xf32>
    %183 = arith.addf %170, %182 : vector<8x32xf32>
    %184 = vector.extract_strided_slice %9 {offsets = [0, 0], sizes = [1, 16], strides = [1, 1]} : vector<1x64xf32> to vector<1x16xf32>
    %185 = vector.extract_strided_slice %7 {offsets = [0, 1], sizes = [8, 1], strides = [1, 1]} : vector<8x4xf32> to vector<8x1xf32>
    %cst_73 = arith.constant 1.600000e+01 : f32
    %186 = vector.broadcast %cst_73 : f32 to vector<8x1xf32>
    %187 = arith.mulf %185, %186 : vector<8x1xf32>
    %188 = vector.extract_strided_slice %110 {offsets = [0, 4], sizes = [8, 4], strides = [1, 1]} : vector<8x16xf32> to vector<8x4xf32>
    %189 = vector.broadcast %187 : vector<8x1xf32> to vector<8x4xf32>
    %190 = arith.addf %189, %188 : vector<8x4xf32>
    %cst_74 = arith.constant 5.000000e-01 : f32
    %191 = vector.broadcast %cst_74 : f32 to vector<8x4xf32>
    %192 = arith.subf %190, %191 : vector<8x4xf32>
    %cst_75 = arith.constant 0.000000e+00 : f32
    %193 = vector.broadcast %cst_75 : f32 to vector<8x16xf32>
    %194 = vector.extract_strided_slice %192 {offsets = [0, 0], sizes = [8, 1], strides = [1, 1]} : vector<8x4xf32> to vector<8x1xf32>
    %195 = vector.extract_strided_slice %121 {offsets = [0, 4], sizes = [8, 1], strides = [1, 1]} : vector<8x16xf32> to vector<8x1xf32>
    %196 = vector.broadcast %184 : vector<1x16xf32> to vector<8x16xf32>
    %197 = vector.broadcast %194 : vector<8x1xf32> to vector<8x16xf32>
    %198 = arith.subf %196, %197 : vector<8x16xf32>
    %199 = math.absf %198 : vector<8x16xf32>
    %cst_76 = arith.constant 1.000000e+00 : f32
    %200 = vector.broadcast %cst_76 : f32 to vector<8x16xf32>
    %201 = arith.subf %200, %199 : vector<8x16xf32>
    %cst_77 = arith.constant 0.000000e+00 : f32
    %202 = vector.broadcast %cst_77 : f32 to vector<8x16xf32>
    %203 = arith.maximumf %201, %202 : vector<8x16xf32>
    %204 = vector.broadcast %195 : vector<8x1xf32> to vector<8x16xf32>
    %205 = arith.mulf %203, %204 : vector<8x16xf32>
    %206 = arith.addf %193, %205 : vector<8x16xf32>
    %207 = vector.extract_strided_slice %192 {offsets = [0, 1], sizes = [8, 1], strides = [1, 1]} : vector<8x4xf32> to vector<8x1xf32>
    %208 = vector.extract_strided_slice %121 {offsets = [0, 5], sizes = [8, 1], strides = [1, 1]} : vector<8x16xf32> to vector<8x1xf32>
    %209 = vector.broadcast %184 : vector<1x16xf32> to vector<8x16xf32>
    %210 = vector.broadcast %207 : vector<8x1xf32> to vector<8x16xf32>
    %211 = arith.subf %209, %210 : vector<8x16xf32>
    %212 = math.absf %211 : vector<8x16xf32>
    %cst_78 = arith.constant 1.000000e+00 : f32
    %213 = vector.broadcast %cst_78 : f32 to vector<8x16xf32>
    %214 = arith.subf %213, %212 : vector<8x16xf32>
    %cst_79 = arith.constant 0.000000e+00 : f32
    %215 = vector.broadcast %cst_79 : f32 to vector<8x16xf32>
    %216 = arith.maximumf %214, %215 : vector<8x16xf32>
    %217 = vector.broadcast %208 : vector<8x1xf32> to vector<8x16xf32>
    %218 = arith.mulf %216, %217 : vector<8x16xf32>
    %219 = arith.addf %206, %218 : vector<8x16xf32>
    %220 = vector.extract_strided_slice %192 {offsets = [0, 2], sizes = [8, 1], strides = [1, 1]} : vector<8x4xf32> to vector<8x1xf32>
    %221 = vector.extract_strided_slice %121 {offsets = [0, 6], sizes = [8, 1], strides = [1, 1]} : vector<8x16xf32> to vector<8x1xf32>
    %222 = vector.broadcast %184 : vector<1x16xf32> to vector<8x16xf32>
    %223 = vector.broadcast %220 : vector<8x1xf32> to vector<8x16xf32>
    %224 = arith.subf %222, %223 : vector<8x16xf32>
    %225 = math.absf %224 : vector<8x16xf32>
    %cst_80 = arith.constant 1.000000e+00 : f32
    %226 = vector.broadcast %cst_80 : f32 to vector<8x16xf32>
    %227 = arith.subf %226, %225 : vector<8x16xf32>
    %cst_81 = arith.constant 0.000000e+00 : f32
    %228 = vector.broadcast %cst_81 : f32 to vector<8x16xf32>
    %229 = arith.maximumf %227, %228 : vector<8x16xf32>
    %230 = vector.broadcast %221 : vector<8x1xf32> to vector<8x16xf32>
    %231 = arith.mulf %229, %230 : vector<8x16xf32>
    %232 = arith.addf %219, %231 : vector<8x16xf32>
    %233 = vector.extract_strided_slice %192 {offsets = [0, 3], sizes = [8, 1], strides = [1, 1]} : vector<8x4xf32> to vector<8x1xf32>
    %234 = vector.extract_strided_slice %121 {offsets = [0, 7], sizes = [8, 1], strides = [1, 1]} : vector<8x16xf32> to vector<8x1xf32>
    %235 = vector.broadcast %184 : vector<1x16xf32> to vector<8x16xf32>
    %236 = vector.broadcast %233 : vector<8x1xf32> to vector<8x16xf32>
    %237 = arith.subf %235, %236 : vector<8x16xf32>
    %238 = math.absf %237 : vector<8x16xf32>
    %cst_82 = arith.constant 1.000000e+00 : f32
    %239 = vector.broadcast %cst_82 : f32 to vector<8x16xf32>
    %240 = arith.subf %239, %238 : vector<8x16xf32>
    %cst_83 = arith.constant 0.000000e+00 : f32
    %241 = vector.broadcast %cst_83 : f32 to vector<8x16xf32>
    %242 = arith.maximumf %240, %241 : vector<8x16xf32>
    %243 = vector.broadcast %234 : vector<8x1xf32> to vector<8x16xf32>
    %244 = arith.mulf %242, %243 : vector<8x16xf32>
    %245 = arith.addf %232, %244 : vector<8x16xf32>
    %246 = vector.extract_strided_slice %9 {offsets = [0, 0], sizes = [1, 8], strides = [1, 1]} : vector<1x64xf32> to vector<1x8xf32>
    %247 = vector.extract_strided_slice %7 {offsets = [0, 2], sizes = [8, 1], strides = [1, 1]} : vector<8x4xf32> to vector<8x1xf32>
    %cst_84 = arith.constant 8.000000e+00 : f32
    %248 = vector.broadcast %cst_84 : f32 to vector<8x1xf32>
    %249 = arith.mulf %247, %248 : vector<8x1xf32>
    %250 = vector.extract_strided_slice %110 {offsets = [0, 8], sizes = [8, 4], strides = [1, 1]} : vector<8x16xf32> to vector<8x4xf32>
    %251 = vector.broadcast %249 : vector<8x1xf32> to vector<8x4xf32>
    %252 = arith.addf %251, %250 : vector<8x4xf32>
    %cst_85 = arith.constant 5.000000e-01 : f32
    %253 = vector.broadcast %cst_85 : f32 to vector<8x4xf32>
    %254 = arith.subf %252, %253 : vector<8x4xf32>
    %cst_86 = arith.constant 0.000000e+00 : f32
    %255 = vector.broadcast %cst_86 : f32 to vector<8x8xf32>
    %256 = vector.extract_strided_slice %254 {offsets = [0, 0], sizes = [8, 1], strides = [1, 1]} : vector<8x4xf32> to vector<8x1xf32>
    %257 = vector.extract_strided_slice %121 {offsets = [0, 8], sizes = [8, 1], strides = [1, 1]} : vector<8x16xf32> to vector<8x1xf32>
    %258 = vector.broadcast %246 : vector<1x8xf32> to vector<8x8xf32>
    %259 = vector.broadcast %256 : vector<8x1xf32> to vector<8x8xf32>
    %260 = arith.subf %258, %259 : vector<8x8xf32>
    %261 = math.absf %260 : vector<8x8xf32>
    %cst_87 = arith.constant 1.000000e+00 : f32
    %262 = vector.broadcast %cst_87 : f32 to vector<8x8xf32>
    %263 = arith.subf %262, %261 : vector<8x8xf32>
    %cst_88 = arith.constant 0.000000e+00 : f32
    %264 = vector.broadcast %cst_88 : f32 to vector<8x8xf32>
    %265 = arith.maximumf %263, %264 : vector<8x8xf32>
    %266 = vector.broadcast %257 : vector<8x1xf32> to vector<8x8xf32>
    %267 = arith.mulf %265, %266 : vector<8x8xf32>
    %268 = arith.addf %255, %267 : vector<8x8xf32>
    %269 = vector.extract_strided_slice %254 {offsets = [0, 1], sizes = [8, 1], strides = [1, 1]} : vector<8x4xf32> to vector<8x1xf32>
    %270 = vector.extract_strided_slice %121 {offsets = [0, 9], sizes = [8, 1], strides = [1, 1]} : vector<8x16xf32> to vector<8x1xf32>
    %271 = vector.broadcast %246 : vector<1x8xf32> to vector<8x8xf32>
    %272 = vector.broadcast %269 : vector<8x1xf32> to vector<8x8xf32>
    %273 = arith.subf %271, %272 : vector<8x8xf32>
    %274 = math.absf %273 : vector<8x8xf32>
    %cst_89 = arith.constant 1.000000e+00 : f32
    %275 = vector.broadcast %cst_89 : f32 to vector<8x8xf32>
    %276 = arith.subf %275, %274 : vector<8x8xf32>
    %cst_90 = arith.constant 0.000000e+00 : f32
    %277 = vector.broadcast %cst_90 : f32 to vector<8x8xf32>
    %278 = arith.maximumf %276, %277 : vector<8x8xf32>
    %279 = vector.broadcast %270 : vector<8x1xf32> to vector<8x8xf32>
    %280 = arith.mulf %278, %279 : vector<8x8xf32>
    %281 = arith.addf %268, %280 : vector<8x8xf32>
    %282 = vector.extract_strided_slice %254 {offsets = [0, 2], sizes = [8, 1], strides = [1, 1]} : vector<8x4xf32> to vector<8x1xf32>
    %283 = vector.extract_strided_slice %121 {offsets = [0, 10], sizes = [8, 1], strides = [1, 1]} : vector<8x16xf32> to vector<8x1xf32>
    %284 = vector.broadcast %246 : vector<1x8xf32> to vector<8x8xf32>
    %285 = vector.broadcast %282 : vector<8x1xf32> to vector<8x8xf32>
    %286 = arith.subf %284, %285 : vector<8x8xf32>
    %287 = math.absf %286 : vector<8x8xf32>
    %cst_91 = arith.constant 1.000000e+00 : f32
    %288 = vector.broadcast %cst_91 : f32 to vector<8x8xf32>
    %289 = arith.subf %288, %287 : vector<8x8xf32>
    %cst_92 = arith.constant 0.000000e+00 : f32
    %290 = vector.broadcast %cst_92 : f32 to vector<8x8xf32>
    %291 = arith.maximumf %289, %290 : vector<8x8xf32>
    %292 = vector.broadcast %283 : vector<8x1xf32> to vector<8x8xf32>
    %293 = arith.mulf %291, %292 : vector<8x8xf32>
    %294 = arith.addf %281, %293 : vector<8x8xf32>
    %295 = vector.extract_strided_slice %254 {offsets = [0, 3], sizes = [8, 1], strides = [1, 1]} : vector<8x4xf32> to vector<8x1xf32>
    %296 = vector.extract_strided_slice %121 {offsets = [0, 11], sizes = [8, 1], strides = [1, 1]} : vector<8x16xf32> to vector<8x1xf32>
    %297 = vector.broadcast %246 : vector<1x8xf32> to vector<8x8xf32>
    %298 = vector.broadcast %295 : vector<8x1xf32> to vector<8x8xf32>
    %299 = arith.subf %297, %298 : vector<8x8xf32>
    %300 = math.absf %299 : vector<8x8xf32>
    %cst_93 = arith.constant 1.000000e+00 : f32
    %301 = vector.broadcast %cst_93 : f32 to vector<8x8xf32>
    %302 = arith.subf %301, %300 : vector<8x8xf32>
    %cst_94 = arith.constant 0.000000e+00 : f32
    %303 = vector.broadcast %cst_94 : f32 to vector<8x8xf32>
    %304 = arith.maximumf %302, %303 : vector<8x8xf32>
    %305 = vector.broadcast %296 : vector<8x1xf32> to vector<8x8xf32>
    %306 = arith.mulf %304, %305 : vector<8x8xf32>
    %307 = arith.addf %294, %306 : vector<8x8xf32>
    %308 = vector.extract_strided_slice %9 {offsets = [0, 0], sizes = [1, 8], strides = [1, 1]} : vector<1x64xf32> to vector<1x8xf32>
    %309 = vector.extract_strided_slice %7 {offsets = [0, 3], sizes = [8, 1], strides = [1, 1]} : vector<8x4xf32> to vector<8x1xf32>
    %cst_95 = arith.constant 8.000000e+00 : f32
    %310 = vector.broadcast %cst_95 : f32 to vector<8x1xf32>
    %311 = arith.mulf %309, %310 : vector<8x1xf32>
    %312 = vector.extract_strided_slice %110 {offsets = [0, 12], sizes = [8, 4], strides = [1, 1]} : vector<8x16xf32> to vector<8x4xf32>
    %313 = vector.broadcast %311 : vector<8x1xf32> to vector<8x4xf32>
    %314 = arith.addf %313, %312 : vector<8x4xf32>
    %cst_96 = arith.constant 5.000000e-01 : f32
    %315 = vector.broadcast %cst_96 : f32 to vector<8x4xf32>
    %316 = arith.subf %314, %315 : vector<8x4xf32>
    %cst_97 = arith.constant 0.000000e+00 : f32
    %317 = vector.broadcast %cst_97 : f32 to vector<8x8xf32>
    %318 = vector.extract_strided_slice %316 {offsets = [0, 0], sizes = [8, 1], strides = [1, 1]} : vector<8x4xf32> to vector<8x1xf32>
    %319 = vector.extract_strided_slice %121 {offsets = [0, 12], sizes = [8, 1], strides = [1, 1]} : vector<8x16xf32> to vector<8x1xf32>
    %320 = vector.broadcast %308 : vector<1x8xf32> to vector<8x8xf32>
    %321 = vector.broadcast %318 : vector<8x1xf32> to vector<8x8xf32>
    %322 = arith.subf %320, %321 : vector<8x8xf32>
    %323 = math.absf %322 : vector<8x8xf32>
    %cst_98 = arith.constant 1.000000e+00 : f32
    %324 = vector.broadcast %cst_98 : f32 to vector<8x8xf32>
    %325 = arith.subf %324, %323 : vector<8x8xf32>
    %cst_99 = arith.constant 0.000000e+00 : f32
    %326 = vector.broadcast %cst_99 : f32 to vector<8x8xf32>
    %327 = arith.maximumf %325, %326 : vector<8x8xf32>
    %328 = vector.broadcast %319 : vector<8x1xf32> to vector<8x8xf32>
    %329 = arith.mulf %327, %328 : vector<8x8xf32>
    %330 = arith.addf %317, %329 : vector<8x8xf32>
    %331 = vector.extract_strided_slice %316 {offsets = [0, 1], sizes = [8, 1], strides = [1, 1]} : vector<8x4xf32> to vector<8x1xf32>
    %332 = vector.extract_strided_slice %121 {offsets = [0, 13], sizes = [8, 1], strides = [1, 1]} : vector<8x16xf32> to vector<8x1xf32>
    %333 = vector.broadcast %308 : vector<1x8xf32> to vector<8x8xf32>
    %334 = vector.broadcast %331 : vector<8x1xf32> to vector<8x8xf32>
    %335 = arith.subf %333, %334 : vector<8x8xf32>
    %336 = math.absf %335 : vector<8x8xf32>
    %cst_100 = arith.constant 1.000000e+00 : f32
    %337 = vector.broadcast %cst_100 : f32 to vector<8x8xf32>
    %338 = arith.subf %337, %336 : vector<8x8xf32>
    %cst_101 = arith.constant 0.000000e+00 : f32
    %339 = vector.broadcast %cst_101 : f32 to vector<8x8xf32>
    %340 = arith.maximumf %338, %339 : vector<8x8xf32>
    %341 = vector.broadcast %332 : vector<8x1xf32> to vector<8x8xf32>
    %342 = arith.mulf %340, %341 : vector<8x8xf32>
    %343 = arith.addf %330, %342 : vector<8x8xf32>
    %344 = vector.extract_strided_slice %316 {offsets = [0, 2], sizes = [8, 1], strides = [1, 1]} : vector<8x4xf32> to vector<8x1xf32>
    %345 = vector.extract_strided_slice %121 {offsets = [0, 14], sizes = [8, 1], strides = [1, 1]} : vector<8x16xf32> to vector<8x1xf32>
    %346 = vector.broadcast %308 : vector<1x8xf32> to vector<8x8xf32>
    %347 = vector.broadcast %344 : vector<8x1xf32> to vector<8x8xf32>
    %348 = arith.subf %346, %347 : vector<8x8xf32>
    %349 = math.absf %348 : vector<8x8xf32>
    %cst_102 = arith.constant 1.000000e+00 : f32
    %350 = vector.broadcast %cst_102 : f32 to vector<8x8xf32>
    %351 = arith.subf %350, %349 : vector<8x8xf32>
    %cst_103 = arith.constant 0.000000e+00 : f32
    %352 = vector.broadcast %cst_103 : f32 to vector<8x8xf32>
    %353 = arith.maximumf %351, %352 : vector<8x8xf32>
    %354 = vector.broadcast %345 : vector<8x1xf32> to vector<8x8xf32>
    %355 = arith.mulf %353, %354 : vector<8x8xf32>
    %356 = arith.addf %343, %355 : vector<8x8xf32>
    %357 = vector.extract_strided_slice %316 {offsets = [0, 3], sizes = [8, 1], strides = [1, 1]} : vector<8x4xf32> to vector<8x1xf32>
    %358 = vector.extract_strided_slice %121 {offsets = [0, 15], sizes = [8, 1], strides = [1, 1]} : vector<8x16xf32> to vector<8x1xf32>
    %359 = vector.broadcast %308 : vector<1x8xf32> to vector<8x8xf32>
    %360 = vector.broadcast %357 : vector<8x1xf32> to vector<8x8xf32>
    %361 = arith.subf %359, %360 : vector<8x8xf32>
    %362 = math.absf %361 : vector<8x8xf32>
    %cst_104 = arith.constant 1.000000e+00 : f32
    %363 = vector.broadcast %cst_104 : f32 to vector<8x8xf32>
    %364 = arith.subf %363, %362 : vector<8x8xf32>
    %cst_105 = arith.constant 0.000000e+00 : f32
    %365 = vector.broadcast %cst_105 : f32 to vector<8x8xf32>
    %366 = arith.maximumf %364, %365 : vector<8x8xf32>
    %367 = vector.broadcast %358 : vector<8x1xf32> to vector<8x8xf32>
    %368 = arith.mulf %366, %367 : vector<8x8xf32>
    %369 = arith.addf %356, %368 : vector<8x8xf32>
    %370 = tpu.concatenate %183, %245, %307, %369 in 1 : vector<8x32xf32>, vector<8x16xf32>, vector<8x8xf32>, vector<8x8xf32> -> vector<8x64xf32>
    %371 = vector.extract_strided_slice %102 {offsets = [0, 0], sizes = [64, 8], strides = [1, 1]} : vector<64x32xf32> to vector<64x8xf32>
    %cst_106 = arith.constant dense<0.000000e+00> : vector<8x8xf32>
    %372 = tpu.matmul %370, %371, %cst_106 {dimension_numbers = #tpu.dot_dimension_numbers<[1], [0], [0], [1], [0, 0, 1, 1], [], []>} : vector<8x64xf32>, vector<64x8xf32>, vector<8x8xf32> -> vector<8x8xf32>
    %373 = vector.extract_strided_slice %109 {offsets = [0, 16], sizes = [8, 16], strides = [1, 1]} : vector<8x128xf32> to vector<8x16xf32>
    %374 = vector.extract_strided_slice %109 {offsets = [0, 80], sizes = [8, 16], strides = [1, 1]} : vector<8x128xf32> to vector<8x16xf32>
    %cst_107 = arith.constant dense<0xFF800000> : vector<8xf32>
    %375 = vector.multi_reduction <maximumf>, %374, %cst_107 [1] : vector<8x16xf32> to vector<8xf32>
    %376 = vector.shape_cast %375 : vector<8xf32> to vector<8x1xf32>
    %377 = vector.broadcast %376 : vector<8x1xf32> to vector<8x16xf32>
    %378 = arith.subf %374, %377 : vector<8x16xf32>
    %379 = math.exp %378 : vector<8x16xf32>
    %cst_108 = arith.constant dense<0.000000e+00> : vector<8xf32>
    %380 = vector.multi_reduction <add>, %379, %cst_108 [1] : vector<8x16xf32> to vector<8xf32>
    %381 = vector.shape_cast %380 : vector<8xf32> to vector<8x1xf32>
    %382 = tpu.reciprocal %381 {approx = true} : vector<8x1xf32> -> vector<8x1xf32>
    %383 = vector.broadcast %382 : vector<8x1xf32> to vector<8x16xf32>
    %384 = arith.mulf %379, %383 : vector<8x16xf32>
    %385 = vector.extract_strided_slice %9 {offsets = [0, 0], sizes = [1, 32], strides = [1, 1]} : vector<1x64xf32> to vector<1x32xf32>
    %386 = vector.extract_strided_slice %7 {offsets = [0, 0], sizes = [8, 1], strides = [1, 1]} : vector<8x4xf32> to vector<8x1xf32>
    %cst_109 = arith.constant 3.200000e+01 : f32
    %387 = vector.broadcast %cst_109 : f32 to vector<8x1xf32>
    %388 = arith.mulf %386, %387 : vector<8x1xf32>
    %389 = vector.extract_strided_slice %373 {offsets = [0, 0], sizes = [8, 4], strides = [1, 1]} : vector<8x16xf32> to vector<8x4xf32>
    %390 = vector.broadcast %388 : vector<8x1xf32> to vector<8x4xf32>
    %391 = arith.addf %390, %389 : vector<8x4xf32>
    %cst_110 = arith.constant 5.000000e-01 : f32
    %392 = vector.broadcast %cst_110 : f32 to vector<8x4xf32>
    %393 = arith.subf %391, %392 : vector<8x4xf32>
    %cst_111 = arith.constant 0.000000e+00 : f32
    %394 = vector.broadcast %cst_111 : f32 to vector<8x32xf32>
    %395 = vector.extract_strided_slice %393 {offsets = [0, 0], sizes = [8, 1], strides = [1, 1]} : vector<8x4xf32> to vector<8x1xf32>
    %396 = vector.extract_strided_slice %384 {offsets = [0, 0], sizes = [8, 1], strides = [1, 1]} : vector<8x16xf32> to vector<8x1xf32>
    %397 = vector.broadcast %385 : vector<1x32xf32> to vector<8x32xf32>
    %398 = vector.broadcast %395 : vector<8x1xf32> to vector<8x32xf32>
    %399 = arith.subf %397, %398 : vector<8x32xf32>
    %400 = math.absf %399 : vector<8x32xf32>
    %cst_112 = arith.constant 1.000000e+00 : f32
    %401 = vector.broadcast %cst_112 : f32 to vector<8x32xf32>
    %402 = arith.subf %401, %400 : vector<8x32xf32>
    %cst_113 = arith.constant 0.000000e+00 : f32
    %403 = vector.broadcast %cst_113 : f32 to vector<8x32xf32>
    %404 = arith.maximumf %402, %403 : vector<8x32xf32>
    %405 = vector.broadcast %396 : vector<8x1xf32> to vector<8x32xf32>
    %406 = arith.mulf %404, %405 : vector<8x32xf32>
    %407 = arith.addf %394, %406 : vector<8x32xf32>
    %408 = vector.extract_strided_slice %393 {offsets = [0, 1], sizes = [8, 1], strides = [1, 1]} : vector<8x4xf32> to vector<8x1xf32>
    %409 = vector.extract_strided_slice %384 {offsets = [0, 1], sizes = [8, 1], strides = [1, 1]} : vector<8x16xf32> to vector<8x1xf32>
    %410 = vector.broadcast %385 : vector<1x32xf32> to vector<8x32xf32>
    %411 = vector.broadcast %408 : vector<8x1xf32> to vector<8x32xf32>
    %412 = arith.subf %410, %411 : vector<8x32xf32>
    %413 = math.absf %412 : vector<8x32xf32>
    %cst_114 = arith.constant 1.000000e+00 : f32
    %414 = vector.broadcast %cst_114 : f32 to vector<8x32xf32>
    %415 = arith.subf %414, %413 : vector<8x32xf32>
    %cst_115 = arith.constant 0.000000e+00 : f32
    %416 = vector.broadcast %cst_115 : f32 to vector<8x32xf32>
    %417 = arith.maximumf %415, %416 : vector<8x32xf32>
    %418 = vector.broadcast %409 : vector<8x1xf32> to vector<8x32xf32>
    %419 = arith.mulf %417, %418 : vector<8x32xf32>
    %420 = arith.addf %407, %419 : vector<8x32xf32>
    %421 = vector.extract_strided_slice %393 {offsets = [0, 2], sizes = [8, 1], strides = [1, 1]} : vector<8x4xf32> to vector<8x1xf32>
    %422 = vector.extract_strided_slice %384 {offsets = [0, 2], sizes = [8, 1], strides = [1, 1]} : vector<8x16xf32> to vector<8x1xf32>
    %423 = vector.broadcast %385 : vector<1x32xf32> to vector<8x32xf32>
    %424 = vector.broadcast %421 : vector<8x1xf32> to vector<8x32xf32>
    %425 = arith.subf %423, %424 : vector<8x32xf32>
    %426 = math.absf %425 : vector<8x32xf32>
    %cst_116 = arith.constant 1.000000e+00 : f32
    %427 = vector.broadcast %cst_116 : f32 to vector<8x32xf32>
    %428 = arith.subf %427, %426 : vector<8x32xf32>
    %cst_117 = arith.constant 0.000000e+00 : f32
    %429 = vector.broadcast %cst_117 : f32 to vector<8x32xf32>
    %430 = arith.maximumf %428, %429 : vector<8x32xf32>
    %431 = vector.broadcast %422 : vector<8x1xf32> to vector<8x32xf32>
    %432 = arith.mulf %430, %431 : vector<8x32xf32>
    %433 = arith.addf %420, %432 : vector<8x32xf32>
    %434 = vector.extract_strided_slice %393 {offsets = [0, 3], sizes = [8, 1], strides = [1, 1]} : vector<8x4xf32> to vector<8x1xf32>
    %435 = vector.extract_strided_slice %384 {offsets = [0, 3], sizes = [8, 1], strides = [1, 1]} : vector<8x16xf32> to vector<8x1xf32>
    %436 = vector.broadcast %385 : vector<1x32xf32> to vector<8x32xf32>
    %437 = vector.broadcast %434 : vector<8x1xf32> to vector<8x32xf32>
    %438 = arith.subf %436, %437 : vector<8x32xf32>
    %439 = math.absf %438 : vector<8x32xf32>
    %cst_118 = arith.constant 1.000000e+00 : f32
    %440 = vector.broadcast %cst_118 : f32 to vector<8x32xf32>
    %441 = arith.subf %440, %439 : vector<8x32xf32>
    %cst_119 = arith.constant 0.000000e+00 : f32
    %442 = vector.broadcast %cst_119 : f32 to vector<8x32xf32>
    %443 = arith.maximumf %441, %442 : vector<8x32xf32>
    %444 = vector.broadcast %435 : vector<8x1xf32> to vector<8x32xf32>
    %445 = arith.mulf %443, %444 : vector<8x32xf32>
    %446 = arith.addf %433, %445 : vector<8x32xf32>
    %447 = vector.extract_strided_slice %9 {offsets = [0, 0], sizes = [1, 16], strides = [1, 1]} : vector<1x64xf32> to vector<1x16xf32>
    %448 = vector.extract_strided_slice %7 {offsets = [0, 1], sizes = [8, 1], strides = [1, 1]} : vector<8x4xf32> to vector<8x1xf32>
    %cst_120 = arith.constant 1.600000e+01 : f32
    %449 = vector.broadcast %cst_120 : f32 to vector<8x1xf32>
    %450 = arith.mulf %448, %449 : vector<8x1xf32>
    %451 = vector.extract_strided_slice %373 {offsets = [0, 4], sizes = [8, 4], strides = [1, 1]} : vector<8x16xf32> to vector<8x4xf32>
    %452 = vector.broadcast %450 : vector<8x1xf32> to vector<8x4xf32>
    %453 = arith.addf %452, %451 : vector<8x4xf32>
    %cst_121 = arith.constant 5.000000e-01 : f32
    %454 = vector.broadcast %cst_121 : f32 to vector<8x4xf32>
    %455 = arith.subf %453, %454 : vector<8x4xf32>
    %cst_122 = arith.constant 0.000000e+00 : f32
    %456 = vector.broadcast %cst_122 : f32 to vector<8x16xf32>
    %457 = vector.extract_strided_slice %455 {offsets = [0, 0], sizes = [8, 1], strides = [1, 1]} : vector<8x4xf32> to vector<8x1xf32>
    %458 = vector.extract_strided_slice %384 {offsets = [0, 4], sizes = [8, 1], strides = [1, 1]} : vector<8x16xf32> to vector<8x1xf32>
    %459 = vector.broadcast %447 : vector<1x16xf32> to vector<8x16xf32>
    %460 = vector.broadcast %457 : vector<8x1xf32> to vector<8x16xf32>
    %461 = arith.subf %459, %460 : vector<8x16xf32>
    %462 = math.absf %461 : vector<8x16xf32>
    %cst_123 = arith.constant 1.000000e+00 : f32
    %463 = vector.broadcast %cst_123 : f32 to vector<8x16xf32>
    %464 = arith.subf %463, %462 : vector<8x16xf32>
    %cst_124 = arith.constant 0.000000e+00 : f32
    %465 = vector.broadcast %cst_124 : f32 to vector<8x16xf32>
    %466 = arith.maximumf %464, %465 : vector<8x16xf32>
    %467 = vector.broadcast %458 : vector<8x1xf32> to vector<8x16xf32>
    %468 = arith.mulf %466, %467 : vector<8x16xf32>
    %469 = arith.addf %456, %468 : vector<8x16xf32>
    %470 = vector.extract_strided_slice %455 {offsets = [0, 1], sizes = [8, 1], strides = [1, 1]} : vector<8x4xf32> to vector<8x1xf32>
    %471 = vector.extract_strided_slice %384 {offsets = [0, 5], sizes = [8, 1], strides = [1, 1]} : vector<8x16xf32> to vector<8x1xf32>
    %472 = vector.broadcast %447 : vector<1x16xf32> to vector<8x16xf32>
    %473 = vector.broadcast %470 : vector<8x1xf32> to vector<8x16xf32>
    %474 = arith.subf %472, %473 : vector<8x16xf32>
    %475 = math.absf %474 : vector<8x16xf32>
    %cst_125 = arith.constant 1.000000e+00 : f32
    %476 = vector.broadcast %cst_125 : f32 to vector<8x16xf32>
    %477 = arith.subf %476, %475 : vector<8x16xf32>
    %cst_126 = arith.constant 0.000000e+00 : f32
    %478 = vector.broadcast %cst_126 : f32 to vector<8x16xf32>
    %479 = arith.maximumf %477, %478 : vector<8x16xf32>
    %480 = vector.broadcast %471 : vector<8x1xf32> to vector<8x16xf32>
    %481 = arith.mulf %479, %480 : vector<8x16xf32>
    %482 = arith.addf %469, %481 : vector<8x16xf32>
    %483 = vector.extract_strided_slice %455 {offsets = [0, 2], sizes = [8, 1], strides = [1, 1]} : vector<8x4xf32> to vector<8x1xf32>
    %484 = vector.extract_strided_slice %384 {offsets = [0, 6], sizes = [8, 1], strides = [1, 1]} : vector<8x16xf32> to vector<8x1xf32>
    %485 = vector.broadcast %447 : vector<1x16xf32> to vector<8x16xf32>
    %486 = vector.broadcast %483 : vector<8x1xf32> to vector<8x16xf32>
    %487 = arith.subf %485, %486 : vector<8x16xf32>
    %488 = math.absf %487 : vector<8x16xf32>
    %cst_127 = arith.constant 1.000000e+00 : f32
    %489 = vector.broadcast %cst_127 : f32 to vector<8x16xf32>
    %490 = arith.subf %489, %488 : vector<8x16xf32>
    %cst_128 = arith.constant 0.000000e+00 : f32
    %491 = vector.broadcast %cst_128 : f32 to vector<8x16xf32>
    %492 = arith.maximumf %490, %491 : vector<8x16xf32>
    %493 = vector.broadcast %484 : vector<8x1xf32> to vector<8x16xf32>
    %494 = arith.mulf %492, %493 : vector<8x16xf32>
    %495 = arith.addf %482, %494 : vector<8x16xf32>
    %496 = vector.extract_strided_slice %455 {offsets = [0, 3], sizes = [8, 1], strides = [1, 1]} : vector<8x4xf32> to vector<8x1xf32>
    %497 = vector.extract_strided_slice %384 {offsets = [0, 7], sizes = [8, 1], strides = [1, 1]} : vector<8x16xf32> to vector<8x1xf32>
    %498 = vector.broadcast %447 : vector<1x16xf32> to vector<8x16xf32>
    %499 = vector.broadcast %496 : vector<8x1xf32> to vector<8x16xf32>
    %500 = arith.subf %498, %499 : vector<8x16xf32>
    %501 = math.absf %500 : vector<8x16xf32>
    %cst_129 = arith.constant 1.000000e+00 : f32
    %502 = vector.broadcast %cst_129 : f32 to vector<8x16xf32>
    %503 = arith.subf %502, %501 : vector<8x16xf32>
    %cst_130 = arith.constant 0.000000e+00 : f32
    %504 = vector.broadcast %cst_130 : f32 to vector<8x16xf32>
    %505 = arith.maximumf %503, %504 : vector<8x16xf32>
    %506 = vector.broadcast %497 : vector<8x1xf32> to vector<8x16xf32>
    %507 = arith.mulf %505, %506 : vector<8x16xf32>
    %508 = arith.addf %495, %507 : vector<8x16xf32>
    %509 = vector.extract_strided_slice %9 {offsets = [0, 0], sizes = [1, 8], strides = [1, 1]} : vector<1x64xf32> to vector<1x8xf32>
    %510 = vector.extract_strided_slice %7 {offsets = [0, 2], sizes = [8, 1], strides = [1, 1]} : vector<8x4xf32> to vector<8x1xf32>
    %cst_131 = arith.constant 8.000000e+00 : f32
    %511 = vector.broadcast %cst_131 : f32 to vector<8x1xf32>
    %512 = arith.mulf %510, %511 : vector<8x1xf32>
    %513 = vector.extract_strided_slice %373 {offsets = [0, 8], sizes = [8, 4], strides = [1, 1]} : vector<8x16xf32> to vector<8x4xf32>
    %514 = vector.broadcast %512 : vector<8x1xf32> to vector<8x4xf32>
    %515 = arith.addf %514, %513 : vector<8x4xf32>
    %cst_132 = arith.constant 5.000000e-01 : f32
    %516 = vector.broadcast %cst_132 : f32 to vector<8x4xf32>
    %517 = arith.subf %515, %516 : vector<8x4xf32>
    %cst_133 = arith.constant 0.000000e+00 : f32
    %518 = vector.broadcast %cst_133 : f32 to vector<8x8xf32>
    %519 = vector.extract_strided_slice %517 {offsets = [0, 0], sizes = [8, 1], strides = [1, 1]} : vector<8x4xf32> to vector<8x1xf32>
    %520 = vector.extract_strided_slice %384 {offsets = [0, 8], sizes = [8, 1], strides = [1, 1]} : vector<8x16xf32> to vector<8x1xf32>
    %521 = vector.broadcast %509 : vector<1x8xf32> to vector<8x8xf32>
    %522 = vector.broadcast %519 : vector<8x1xf32> to vector<8x8xf32>
    %523 = arith.subf %521, %522 : vector<8x8xf32>
    %524 = math.absf %523 : vector<8x8xf32>
    %cst_134 = arith.constant 1.000000e+00 : f32
    %525 = vector.broadcast %cst_134 : f32 to vector<8x8xf32>
    %526 = arith.subf %525, %524 : vector<8x8xf32>
    %cst_135 = arith.constant 0.000000e+00 : f32
    %527 = vector.broadcast %cst_135 : f32 to vector<8x8xf32>
    %528 = arith.maximumf %526, %527 : vector<8x8xf32>
    %529 = vector.broadcast %520 : vector<8x1xf32> to vector<8x8xf32>
    %530 = arith.mulf %528, %529 : vector<8x8xf32>
    %531 = arith.addf %518, %530 : vector<8x8xf32>
    %532 = vector.extract_strided_slice %517 {offsets = [0, 1], sizes = [8, 1], strides = [1, 1]} : vector<8x4xf32> to vector<8x1xf32>
    %533 = vector.extract_strided_slice %384 {offsets = [0, 9], sizes = [8, 1], strides = [1, 1]} : vector<8x16xf32> to vector<8x1xf32>
    %534 = vector.broadcast %509 : vector<1x8xf32> to vector<8x8xf32>
    %535 = vector.broadcast %532 : vector<8x1xf32> to vector<8x8xf32>
    %536 = arith.subf %534, %535 : vector<8x8xf32>
    %537 = math.absf %536 : vector<8x8xf32>
    %cst_136 = arith.constant 1.000000e+00 : f32
    %538 = vector.broadcast %cst_136 : f32 to vector<8x8xf32>
    %539 = arith.subf %538, %537 : vector<8x8xf32>
    %cst_137 = arith.constant 0.000000e+00 : f32
    %540 = vector.broadcast %cst_137 : f32 to vector<8x8xf32>
    %541 = arith.maximumf %539, %540 : vector<8x8xf32>
    %542 = vector.broadcast %533 : vector<8x1xf32> to vector<8x8xf32>
    %543 = arith.mulf %541, %542 : vector<8x8xf32>
    %544 = arith.addf %531, %543 : vector<8x8xf32>
    %545 = vector.extract_strided_slice %517 {offsets = [0, 2], sizes = [8, 1], strides = [1, 1]} : vector<8x4xf32> to vector<8x1xf32>
    %546 = vector.extract_strided_slice %384 {offsets = [0, 10], sizes = [8, 1], strides = [1, 1]} : vector<8x16xf32> to vector<8x1xf32>
    %547 = vector.broadcast %509 : vector<1x8xf32> to vector<8x8xf32>
    %548 = vector.broadcast %545 : vector<8x1xf32> to vector<8x8xf32>
    %549 = arith.subf %547, %548 : vector<8x8xf32>
    %550 = math.absf %549 : vector<8x8xf32>
    %cst_138 = arith.constant 1.000000e+00 : f32
    %551 = vector.broadcast %cst_138 : f32 to vector<8x8xf32>
    %552 = arith.subf %551, %550 : vector<8x8xf32>
    %cst_139 = arith.constant 0.000000e+00 : f32
    %553 = vector.broadcast %cst_139 : f32 to vector<8x8xf32>
    %554 = arith.maximumf %552, %553 : vector<8x8xf32>
    %555 = vector.broadcast %546 : vector<8x1xf32> to vector<8x8xf32>
    %556 = arith.mulf %554, %555 : vector<8x8xf32>
    %557 = arith.addf %544, %556 : vector<8x8xf32>
    %558 = vector.extract_strided_slice %517 {offsets = [0, 3], sizes = [8, 1], strides = [1, 1]} : vector<8x4xf32> to vector<8x1xf32>
    %559 = vector.extract_strided_slice %384 {offsets = [0, 11], sizes = [8, 1], strides = [1, 1]} : vector<8x16xf32> to vector<8x1xf32>
    %560 = vector.broadcast %509 : vector<1x8xf32> to vector<8x8xf32>
    %561 = vector.broadcast %558 : vector<8x1xf32> to vector<8x8xf32>
    %562 = arith.subf %560, %561 : vector<8x8xf32>
    %563 = math.absf %562 : vector<8x8xf32>
    %cst_140 = arith.constant 1.000000e+00 : f32
    %564 = vector.broadcast %cst_140 : f32 to vector<8x8xf32>
    %565 = arith.subf %564, %563 : vector<8x8xf32>
    %cst_141 = arith.constant 0.000000e+00 : f32
    %566 = vector.broadcast %cst_141 : f32 to vector<8x8xf32>
    %567 = arith.maximumf %565, %566 : vector<8x8xf32>
    %568 = vector.broadcast %559 : vector<8x1xf32> to vector<8x8xf32>
    %569 = arith.mulf %567, %568 : vector<8x8xf32>
    %570 = arith.addf %557, %569 : vector<8x8xf32>
    %571 = vector.extract_strided_slice %9 {offsets = [0, 0], sizes = [1, 8], strides = [1, 1]} : vector<1x64xf32> to vector<1x8xf32>
    %572 = vector.extract_strided_slice %7 {offsets = [0, 3], sizes = [8, 1], strides = [1, 1]} : vector<8x4xf32> to vector<8x1xf32>
    %cst_142 = arith.constant 8.000000e+00 : f32
    %573 = vector.broadcast %cst_142 : f32 to vector<8x1xf32>
    %574 = arith.mulf %572, %573 : vector<8x1xf32>
    %575 = vector.extract_strided_slice %373 {offsets = [0, 12], sizes = [8, 4], strides = [1, 1]} : vector<8x16xf32> to vector<8x4xf32>
    %576 = vector.broadcast %574 : vector<8x1xf32> to vector<8x4xf32>
    %577 = arith.addf %576, %575 : vector<8x4xf32>
    %cst_143 = arith.constant 5.000000e-01 : f32
    %578 = vector.broadcast %cst_143 : f32 to vector<8x4xf32>
    %579 = arith.subf %577, %578 : vector<8x4xf32>
    %cst_144 = arith.constant 0.000000e+00 : f32
    %580 = vector.broadcast %cst_144 : f32 to vector<8x8xf32>
    %581 = vector.extract_strided_slice %579 {offsets = [0, 0], sizes = [8, 1], strides = [1, 1]} : vector<8x4xf32> to vector<8x1xf32>
    %582 = vector.extract_strided_slice %384 {offsets = [0, 12], sizes = [8, 1], strides = [1, 1]} : vector<8x16xf32> to vector<8x1xf32>
    %583 = vector.broadcast %571 : vector<1x8xf32> to vector<8x8xf32>
    %584 = vector.broadcast %581 : vector<8x1xf32> to vector<8x8xf32>
    %585 = arith.subf %583, %584 : vector<8x8xf32>
    %586 = math.absf %585 : vector<8x8xf32>
    %cst_145 = arith.constant 1.000000e+00 : f32
    %587 = vector.broadcast %cst_145 : f32 to vector<8x8xf32>
    %588 = arith.subf %587, %586 : vector<8x8xf32>
    %cst_146 = arith.constant 0.000000e+00 : f32
    %589 = vector.broadcast %cst_146 : f32 to vector<8x8xf32>
    %590 = arith.maximumf %588, %589 : vector<8x8xf32>
    %591 = vector.broadcast %582 : vector<8x1xf32> to vector<8x8xf32>
    %592 = arith.mulf %590, %591 : vector<8x8xf32>
    %593 = arith.addf %580, %592 : vector<8x8xf32>
    %594 = vector.extract_strided_slice %579 {offsets = [0, 1], sizes = [8, 1], strides = [1, 1]} : vector<8x4xf32> to vector<8x1xf32>
    %595 = vector.extract_strided_slice %384 {offsets = [0, 13], sizes = [8, 1], strides = [1, 1]} : vector<8x16xf32> to vector<8x1xf32>
    %596 = vector.broadcast %571 : vector<1x8xf32> to vector<8x8xf32>
    %597 = vector.broadcast %594 : vector<8x1xf32> to vector<8x8xf32>
    %598 = arith.subf %596, %597 : vector<8x8xf32>
    %599 = math.absf %598 : vector<8x8xf32>
    %cst_147 = arith.constant 1.000000e+00 : f32
    %600 = vector.broadcast %cst_147 : f32 to vector<8x8xf32>
    %601 = arith.subf %600, %599 : vector<8x8xf32>
    %cst_148 = arith.constant 0.000000e+00 : f32
    %602 = vector.broadcast %cst_148 : f32 to vector<8x8xf32>
    %603 = arith.maximumf %601, %602 : vector<8x8xf32>
    %604 = vector.broadcast %595 : vector<8x1xf32> to vector<8x8xf32>
    %605 = arith.mulf %603, %604 : vector<8x8xf32>
    %606 = arith.addf %593, %605 : vector<8x8xf32>
    %607 = vector.extract_strided_slice %579 {offsets = [0, 2], sizes = [8, 1], strides = [1, 1]} : vector<8x4xf32> to vector<8x1xf32>
    %608 = vector.extract_strided_slice %384 {offsets = [0, 14], sizes = [8, 1], strides = [1, 1]} : vector<8x16xf32> to vector<8x1xf32>
    %609 = vector.broadcast %571 : vector<1x8xf32> to vector<8x8xf32>
    %610 = vector.broadcast %607 : vector<8x1xf32> to vector<8x8xf32>
    %611 = arith.subf %609, %610 : vector<8x8xf32>
    %612 = math.absf %611 : vector<8x8xf32>
    %cst_149 = arith.constant 1.000000e+00 : f32
    %613 = vector.broadcast %cst_149 : f32 to vector<8x8xf32>
    %614 = arith.subf %613, %612 : vector<8x8xf32>
    %cst_150 = arith.constant 0.000000e+00 : f32
    %615 = vector.broadcast %cst_150 : f32 to vector<8x8xf32>
    %616 = arith.maximumf %614, %615 : vector<8x8xf32>
    %617 = vector.broadcast %608 : vector<8x1xf32> to vector<8x8xf32>
    %618 = arith.mulf %616, %617 : vector<8x8xf32>
    %619 = arith.addf %606, %618 : vector<8x8xf32>
    %620 = vector.extract_strided_slice %579 {offsets = [0, 3], sizes = [8, 1], strides = [1, 1]} : vector<8x4xf32> to vector<8x1xf32>
    %621 = vector.extract_strided_slice %384 {offsets = [0, 15], sizes = [8, 1], strides = [1, 1]} : vector<8x16xf32> to vector<8x1xf32>
    %622 = vector.broadcast %571 : vector<1x8xf32> to vector<8x8xf32>
    %623 = vector.broadcast %620 : vector<8x1xf32> to vector<8x8xf32>
    %624 = arith.subf %622, %623 : vector<8x8xf32>
    %625 = math.absf %624 : vector<8x8xf32>
    %cst_151 = arith.constant 1.000000e+00 : f32
    %626 = vector.broadcast %cst_151 : f32 to vector<8x8xf32>
    %627 = arith.subf %626, %625 : vector<8x8xf32>
    %cst_152 = arith.constant 0.000000e+00 : f32
    %628 = vector.broadcast %cst_152 : f32 to vector<8x8xf32>
    %629 = arith.maximumf %627, %628 : vector<8x8xf32>
    %630 = vector.broadcast %621 : vector<8x1xf32> to vector<8x8xf32>
    %631 = arith.mulf %629, %630 : vector<8x8xf32>
    %632 = arith.addf %619, %631 : vector<8x8xf32>
    %633 = tpu.concatenate %446, %508, %570, %632 in 1 : vector<8x32xf32>, vector<8x16xf32>, vector<8x8xf32>, vector<8x8xf32> -> vector<8x64xf32>
    %634 = vector.extract_strided_slice %102 {offsets = [0, 8], sizes = [64, 8], strides = [1, 1]} : vector<64x32xf32> to vector<64x8xf32>
    %cst_153 = arith.constant dense<0.000000e+00> : vector<8x8xf32>
    %635 = tpu.matmul %633, %634, %cst_153 {dimension_numbers = #tpu.dot_dimension_numbers<[1], [0], [0], [1], [0, 0, 1, 1], [], []>} : vector<8x64xf32>, vector<64x8xf32>, vector<8x8xf32> -> vector<8x8xf32>
    %636 = vector.extract_strided_slice %109 {offsets = [0, 32], sizes = [8, 16], strides = [1, 1]} : vector<8x128xf32> to vector<8x16xf32>
    %637 = vector.extract_strided_slice %109 {offsets = [0, 96], sizes = [8, 16], strides = [1, 1]} : vector<8x128xf32> to vector<8x16xf32>
    %cst_154 = arith.constant dense<0xFF800000> : vector<8xf32>
    %638 = vector.multi_reduction <maximumf>, %637, %cst_154 [1] : vector<8x16xf32> to vector<8xf32>
    %639 = vector.shape_cast %638 : vector<8xf32> to vector<8x1xf32>
    %640 = vector.broadcast %639 : vector<8x1xf32> to vector<8x16xf32>
    %641 = arith.subf %637, %640 : vector<8x16xf32>
    %642 = math.exp %641 : vector<8x16xf32>
    %cst_155 = arith.constant dense<0.000000e+00> : vector<8xf32>
    %643 = vector.multi_reduction <add>, %642, %cst_155 [1] : vector<8x16xf32> to vector<8xf32>
    %644 = vector.shape_cast %643 : vector<8xf32> to vector<8x1xf32>
    %645 = tpu.reciprocal %644 {approx = true} : vector<8x1xf32> -> vector<8x1xf32>
    %646 = vector.broadcast %645 : vector<8x1xf32> to vector<8x16xf32>
    %647 = arith.mulf %642, %646 : vector<8x16xf32>
    %648 = vector.extract_strided_slice %9 {offsets = [0, 0], sizes = [1, 32], strides = [1, 1]} : vector<1x64xf32> to vector<1x32xf32>
    %649 = vector.extract_strided_slice %7 {offsets = [0, 0], sizes = [8, 1], strides = [1, 1]} : vector<8x4xf32> to vector<8x1xf32>
    %cst_156 = arith.constant 3.200000e+01 : f32
    %650 = vector.broadcast %cst_156 : f32 to vector<8x1xf32>
    %651 = arith.mulf %649, %650 : vector<8x1xf32>
    %652 = vector.extract_strided_slice %636 {offsets = [0, 0], sizes = [8, 4], strides = [1, 1]} : vector<8x16xf32> to vector<8x4xf32>
    %653 = vector.broadcast %651 : vector<8x1xf32> to vector<8x4xf32>
    %654 = arith.addf %653, %652 : vector<8x4xf32>
    %cst_157 = arith.constant 5.000000e-01 : f32
    %655 = vector.broadcast %cst_157 : f32 to vector<8x4xf32>
    %656 = arith.subf %654, %655 : vector<8x4xf32>
    %cst_158 = arith.constant 0.000000e+00 : f32
    %657 = vector.broadcast %cst_158 : f32 to vector<8x32xf32>
    %658 = vector.extract_strided_slice %656 {offsets = [0, 0], sizes = [8, 1], strides = [1, 1]} : vector<8x4xf32> to vector<8x1xf32>
    %659 = vector.extract_strided_slice %647 {offsets = [0, 0], sizes = [8, 1], strides = [1, 1]} : vector<8x16xf32> to vector<8x1xf32>
    %660 = vector.broadcast %648 : vector<1x32xf32> to vector<8x32xf32>
    %661 = vector.broadcast %658 : vector<8x1xf32> to vector<8x32xf32>
    %662 = arith.subf %660, %661 : vector<8x32xf32>
    %663 = math.absf %662 : vector<8x32xf32>
    %cst_159 = arith.constant 1.000000e+00 : f32
    %664 = vector.broadcast %cst_159 : f32 to vector<8x32xf32>
    %665 = arith.subf %664, %663 : vector<8x32xf32>
    %cst_160 = arith.constant 0.000000e+00 : f32
    %666 = vector.broadcast %cst_160 : f32 to vector<8x32xf32>
    %667 = arith.maximumf %665, %666 : vector<8x32xf32>
    %668 = vector.broadcast %659 : vector<8x1xf32> to vector<8x32xf32>
    %669 = arith.mulf %667, %668 : vector<8x32xf32>
    %670 = arith.addf %657, %669 : vector<8x32xf32>
    %671 = vector.extract_strided_slice %656 {offsets = [0, 1], sizes = [8, 1], strides = [1, 1]} : vector<8x4xf32> to vector<8x1xf32>
    %672 = vector.extract_strided_slice %647 {offsets = [0, 1], sizes = [8, 1], strides = [1, 1]} : vector<8x16xf32> to vector<8x1xf32>
    %673 = vector.broadcast %648 : vector<1x32xf32> to vector<8x32xf32>
    %674 = vector.broadcast %671 : vector<8x1xf32> to vector<8x32xf32>
    %675 = arith.subf %673, %674 : vector<8x32xf32>
    %676 = math.absf %675 : vector<8x32xf32>
    %cst_161 = arith.constant 1.000000e+00 : f32
    %677 = vector.broadcast %cst_161 : f32 to vector<8x32xf32>
    %678 = arith.subf %677, %676 : vector<8x32xf32>
    %cst_162 = arith.constant 0.000000e+00 : f32
    %679 = vector.broadcast %cst_162 : f32 to vector<8x32xf32>
    %680 = arith.maximumf %678, %679 : vector<8x32xf32>
    %681 = vector.broadcast %672 : vector<8x1xf32> to vector<8x32xf32>
    %682 = arith.mulf %680, %681 : vector<8x32xf32>
    %683 = arith.addf %670, %682 : vector<8x32xf32>
    %684 = vector.extract_strided_slice %656 {offsets = [0, 2], sizes = [8, 1], strides = [1, 1]} : vector<8x4xf32> to vector<8x1xf32>
    %685 = vector.extract_strided_slice %647 {offsets = [0, 2], sizes = [8, 1], strides = [1, 1]} : vector<8x16xf32> to vector<8x1xf32>
    %686 = vector.broadcast %648 : vector<1x32xf32> to vector<8x32xf32>
    %687 = vector.broadcast %684 : vector<8x1xf32> to vector<8x32xf32>
    %688 = arith.subf %686, %687 : vector<8x32xf32>
    %689 = math.absf %688 : vector<8x32xf32>
    %cst_163 = arith.constant 1.000000e+00 : f32
    %690 = vector.broadcast %cst_163 : f32 to vector<8x32xf32>
    %691 = arith.subf %690, %689 : vector<8x32xf32>
    %cst_164 = arith.constant 0.000000e+00 : f32
    %692 = vector.broadcast %cst_164 : f32 to vector<8x32xf32>
    %693 = arith.maximumf %691, %692 : vector<8x32xf32>
    %694 = vector.broadcast %685 : vector<8x1xf32> to vector<8x32xf32>
    %695 = arith.mulf %693, %694 : vector<8x32xf32>
    %696 = arith.addf %683, %695 : vector<8x32xf32>
    %697 = vector.extract_strided_slice %656 {offsets = [0, 3], sizes = [8, 1], strides = [1, 1]} : vector<8x4xf32> to vector<8x1xf32>
    %698 = vector.extract_strided_slice %647 {offsets = [0, 3], sizes = [8, 1], strides = [1, 1]} : vector<8x16xf32> to vector<8x1xf32>
    %699 = vector.broadcast %648 : vector<1x32xf32> to vector<8x32xf32>
    %700 = vector.broadcast %697 : vector<8x1xf32> to vector<8x32xf32>
    %701 = arith.subf %699, %700 : vector<8x32xf32>
    %702 = math.absf %701 : vector<8x32xf32>
    %cst_165 = arith.constant 1.000000e+00 : f32
    %703 = vector.broadcast %cst_165 : f32 to vector<8x32xf32>
    %704 = arith.subf %703, %702 : vector<8x32xf32>
    %cst_166 = arith.constant 0.000000e+00 : f32
    %705 = vector.broadcast %cst_166 : f32 to vector<8x32xf32>
    %706 = arith.maximumf %704, %705 : vector<8x32xf32>
    %707 = vector.broadcast %698 : vector<8x1xf32> to vector<8x32xf32>
    %708 = arith.mulf %706, %707 : vector<8x32xf32>
    %709 = arith.addf %696, %708 : vector<8x32xf32>
    %710 = vector.extract_strided_slice %9 {offsets = [0, 0], sizes = [1, 16], strides = [1, 1]} : vector<1x64xf32> to vector<1x16xf32>
    %711 = vector.extract_strided_slice %7 {offsets = [0, 1], sizes = [8, 1], strides = [1, 1]} : vector<8x4xf32> to vector<8x1xf32>
    %cst_167 = arith.constant 1.600000e+01 : f32
    %712 = vector.broadcast %cst_167 : f32 to vector<8x1xf32>
    %713 = arith.mulf %711, %712 : vector<8x1xf32>
    %714 = vector.extract_strided_slice %636 {offsets = [0, 4], sizes = [8, 4], strides = [1, 1]} : vector<8x16xf32> to vector<8x4xf32>
    %715 = vector.broadcast %713 : vector<8x1xf32> to vector<8x4xf32>
    %716 = arith.addf %715, %714 : vector<8x4xf32>
    %cst_168 = arith.constant 5.000000e-01 : f32
    %717 = vector.broadcast %cst_168 : f32 to vector<8x4xf32>
    %718 = arith.subf %716, %717 : vector<8x4xf32>
    %cst_169 = arith.constant 0.000000e+00 : f32
    %719 = vector.broadcast %cst_169 : f32 to vector<8x16xf32>
    %720 = vector.extract_strided_slice %718 {offsets = [0, 0], sizes = [8, 1], strides = [1, 1]} : vector<8x4xf32> to vector<8x1xf32>
    %721 = vector.extract_strided_slice %647 {offsets = [0, 4], sizes = [8, 1], strides = [1, 1]} : vector<8x16xf32> to vector<8x1xf32>
    %722 = vector.broadcast %710 : vector<1x16xf32> to vector<8x16xf32>
    %723 = vector.broadcast %720 : vector<8x1xf32> to vector<8x16xf32>
    %724 = arith.subf %722, %723 : vector<8x16xf32>
    %725 = math.absf %724 : vector<8x16xf32>
    %cst_170 = arith.constant 1.000000e+00 : f32
    %726 = vector.broadcast %cst_170 : f32 to vector<8x16xf32>
    %727 = arith.subf %726, %725 : vector<8x16xf32>
    %cst_171 = arith.constant 0.000000e+00 : f32
    %728 = vector.broadcast %cst_171 : f32 to vector<8x16xf32>
    %729 = arith.maximumf %727, %728 : vector<8x16xf32>
    %730 = vector.broadcast %721 : vector<8x1xf32> to vector<8x16xf32>
    %731 = arith.mulf %729, %730 : vector<8x16xf32>
    %732 = arith.addf %719, %731 : vector<8x16xf32>
    %733 = vector.extract_strided_slice %718 {offsets = [0, 1], sizes = [8, 1], strides = [1, 1]} : vector<8x4xf32> to vector<8x1xf32>
    %734 = vector.extract_strided_slice %647 {offsets = [0, 5], sizes = [8, 1], strides = [1, 1]} : vector<8x16xf32> to vector<8x1xf32>
    %735 = vector.broadcast %710 : vector<1x16xf32> to vector<8x16xf32>
    %736 = vector.broadcast %733 : vector<8x1xf32> to vector<8x16xf32>
    %737 = arith.subf %735, %736 : vector<8x16xf32>
    %738 = math.absf %737 : vector<8x16xf32>
    %cst_172 = arith.constant 1.000000e+00 : f32
    %739 = vector.broadcast %cst_172 : f32 to vector<8x16xf32>
    %740 = arith.subf %739, %738 : vector<8x16xf32>
    %cst_173 = arith.constant 0.000000e+00 : f32
    %741 = vector.broadcast %cst_173 : f32 to vector<8x16xf32>
    %742 = arith.maximumf %740, %741 : vector<8x16xf32>
    %743 = vector.broadcast %734 : vector<8x1xf32> to vector<8x16xf32>
    %744 = arith.mulf %742, %743 : vector<8x16xf32>
    %745 = arith.addf %732, %744 : vector<8x16xf32>
    %746 = vector.extract_strided_slice %718 {offsets = [0, 2], sizes = [8, 1], strides = [1, 1]} : vector<8x4xf32> to vector<8x1xf32>
    %747 = vector.extract_strided_slice %647 {offsets = [0, 6], sizes = [8, 1], strides = [1, 1]} : vector<8x16xf32> to vector<8x1xf32>
    %748 = vector.broadcast %710 : vector<1x16xf32> to vector<8x16xf32>
    %749 = vector.broadcast %746 : vector<8x1xf32> to vector<8x16xf32>
    %750 = arith.subf %748, %749 : vector<8x16xf32>
    %751 = math.absf %750 : vector<8x16xf32>
    %cst_174 = arith.constant 1.000000e+00 : f32
    %752 = vector.broadcast %cst_174 : f32 to vector<8x16xf32>
    %753 = arith.subf %752, %751 : vector<8x16xf32>
    %cst_175 = arith.constant 0.000000e+00 : f32
    %754 = vector.broadcast %cst_175 : f32 to vector<8x16xf32>
    %755 = arith.maximumf %753, %754 : vector<8x16xf32>
    %756 = vector.broadcast %747 : vector<8x1xf32> to vector<8x16xf32>
    %757 = arith.mulf %755, %756 : vector<8x16xf32>
    %758 = arith.addf %745, %757 : vector<8x16xf32>
    %759 = vector.extract_strided_slice %718 {offsets = [0, 3], sizes = [8, 1], strides = [1, 1]} : vector<8x4xf32> to vector<8x1xf32>
    %760 = vector.extract_strided_slice %647 {offsets = [0, 7], sizes = [8, 1], strides = [1, 1]} : vector<8x16xf32> to vector<8x1xf32>
    %761 = vector.broadcast %710 : vector<1x16xf32> to vector<8x16xf32>
    %762 = vector.broadcast %759 : vector<8x1xf32> to vector<8x16xf32>
    %763 = arith.subf %761, %762 : vector<8x16xf32>
    %764 = math.absf %763 : vector<8x16xf32>
    %cst_176 = arith.constant 1.000000e+00 : f32
    %765 = vector.broadcast %cst_176 : f32 to vector<8x16xf32>
    %766 = arith.subf %765, %764 : vector<8x16xf32>
    %cst_177 = arith.constant 0.000000e+00 : f32
    %767 = vector.broadcast %cst_177 : f32 to vector<8x16xf32>
    %768 = arith.maximumf %766, %767 : vector<8x16xf32>
    %769 = vector.broadcast %760 : vector<8x1xf32> to vector<8x16xf32>
    %770 = arith.mulf %768, %769 : vector<8x16xf32>
    %771 = arith.addf %758, %770 : vector<8x16xf32>
    %772 = vector.extract_strided_slice %9 {offsets = [0, 0], sizes = [1, 8], strides = [1, 1]} : vector<1x64xf32> to vector<1x8xf32>
    %773 = vector.extract_strided_slice %7 {offsets = [0, 2], sizes = [8, 1], strides = [1, 1]} : vector<8x4xf32> to vector<8x1xf32>
    %cst_178 = arith.constant 8.000000e+00 : f32
    %774 = vector.broadcast %cst_178 : f32 to vector<8x1xf32>
    %775 = arith.mulf %773, %774 : vector<8x1xf32>
    %776 = vector.extract_strided_slice %636 {offsets = [0, 8], sizes = [8, 4], strides = [1, 1]} : vector<8x16xf32> to vector<8x4xf32>
    %777 = vector.broadcast %775 : vector<8x1xf32> to vector<8x4xf32>
    %778 = arith.addf %777, %776 : vector<8x4xf32>
    %cst_179 = arith.constant 5.000000e-01 : f32
    %779 = vector.broadcast %cst_179 : f32 to vector<8x4xf32>
    %780 = arith.subf %778, %779 : vector<8x4xf32>
    %cst_180 = arith.constant 0.000000e+00 : f32
    %781 = vector.broadcast %cst_180 : f32 to vector<8x8xf32>
    %782 = vector.extract_strided_slice %780 {offsets = [0, 0], sizes = [8, 1], strides = [1, 1]} : vector<8x4xf32> to vector<8x1xf32>
    %783 = vector.extract_strided_slice %647 {offsets = [0, 8], sizes = [8, 1], strides = [1, 1]} : vector<8x16xf32> to vector<8x1xf32>
    %784 = vector.broadcast %772 : vector<1x8xf32> to vector<8x8xf32>
    %785 = vector.broadcast %782 : vector<8x1xf32> to vector<8x8xf32>
    %786 = arith.subf %784, %785 : vector<8x8xf32>
    %787 = math.absf %786 : vector<8x8xf32>
    %cst_181 = arith.constant 1.000000e+00 : f32
    %788 = vector.broadcast %cst_181 : f32 to vector<8x8xf32>
    %789 = arith.subf %788, %787 : vector<8x8xf32>
    %cst_182 = arith.constant 0.000000e+00 : f32
    %790 = vector.broadcast %cst_182 : f32 to vector<8x8xf32>
    %791 = arith.maximumf %789, %790 : vector<8x8xf32>
    %792 = vector.broadcast %783 : vector<8x1xf32> to vector<8x8xf32>
    %793 = arith.mulf %791, %792 : vector<8x8xf32>
    %794 = arith.addf %781, %793 : vector<8x8xf32>
    %795 = vector.extract_strided_slice %780 {offsets = [0, 1], sizes = [8, 1], strides = [1, 1]} : vector<8x4xf32> to vector<8x1xf32>
    %796 = vector.extract_strided_slice %647 {offsets = [0, 9], sizes = [8, 1], strides = [1, 1]} : vector<8x16xf32> to vector<8x1xf32>
    %797 = vector.broadcast %772 : vector<1x8xf32> to vector<8x8xf32>
    %798 = vector.broadcast %795 : vector<8x1xf32> to vector<8x8xf32>
    %799 = arith.subf %797, %798 : vector<8x8xf32>
    %800 = math.absf %799 : vector<8x8xf32>
    %cst_183 = arith.constant 1.000000e+00 : f32
    %801 = vector.broadcast %cst_183 : f32 to vector<8x8xf32>
    %802 = arith.subf %801, %800 : vector<8x8xf32>
    %cst_184 = arith.constant 0.000000e+00 : f32
    %803 = vector.broadcast %cst_184 : f32 to vector<8x8xf32>
    %804 = arith.maximumf %802, %803 : vector<8x8xf32>
    %805 = vector.broadcast %796 : vector<8x1xf32> to vector<8x8xf32>
    %806 = arith.mulf %804, %805 : vector<8x8xf32>
    %807 = arith.addf %794, %806 : vector<8x8xf32>
    %808 = vector.extract_strided_slice %780 {offsets = [0, 2], sizes = [8, 1], strides = [1, 1]} : vector<8x4xf32> to vector<8x1xf32>
    %809 = vector.extract_strided_slice %647 {offsets = [0, 10], sizes = [8, 1], strides = [1, 1]} : vector<8x16xf32> to vector<8x1xf32>
    %810 = vector.broadcast %772 : vector<1x8xf32> to vector<8x8xf32>
    %811 = vector.broadcast %808 : vector<8x1xf32> to vector<8x8xf32>
    %812 = arith.subf %810, %811 : vector<8x8xf32>
    %813 = math.absf %812 : vector<8x8xf32>
    %cst_185 = arith.constant 1.000000e+00 : f32
    %814 = vector.broadcast %cst_185 : f32 to vector<8x8xf32>
    %815 = arith.subf %814, %813 : vector<8x8xf32>
    %cst_186 = arith.constant 0.000000e+00 : f32
    %816 = vector.broadcast %cst_186 : f32 to vector<8x8xf32>
    %817 = arith.maximumf %815, %816 : vector<8x8xf32>
    %818 = vector.broadcast %809 : vector<8x1xf32> to vector<8x8xf32>
    %819 = arith.mulf %817, %818 : vector<8x8xf32>
    %820 = arith.addf %807, %819 : vector<8x8xf32>
    %821 = vector.extract_strided_slice %780 {offsets = [0, 3], sizes = [8, 1], strides = [1, 1]} : vector<8x4xf32> to vector<8x1xf32>
    %822 = vector.extract_strided_slice %647 {offsets = [0, 11], sizes = [8, 1], strides = [1, 1]} : vector<8x16xf32> to vector<8x1xf32>
    %823 = vector.broadcast %772 : vector<1x8xf32> to vector<8x8xf32>
    %824 = vector.broadcast %821 : vector<8x1xf32> to vector<8x8xf32>
    %825 = arith.subf %823, %824 : vector<8x8xf32>
    %826 = math.absf %825 : vector<8x8xf32>
    %cst_187 = arith.constant 1.000000e+00 : f32
    %827 = vector.broadcast %cst_187 : f32 to vector<8x8xf32>
    %828 = arith.subf %827, %826 : vector<8x8xf32>
    %cst_188 = arith.constant 0.000000e+00 : f32
    %829 = vector.broadcast %cst_188 : f32 to vector<8x8xf32>
    %830 = arith.maximumf %828, %829 : vector<8x8xf32>
    %831 = vector.broadcast %822 : vector<8x1xf32> to vector<8x8xf32>
    %832 = arith.mulf %830, %831 : vector<8x8xf32>
    %833 = arith.addf %820, %832 : vector<8x8xf32>
    %834 = vector.extract_strided_slice %9 {offsets = [0, 0], sizes = [1, 8], strides = [1, 1]} : vector<1x64xf32> to vector<1x8xf32>
    %835 = vector.extract_strided_slice %7 {offsets = [0, 3], sizes = [8, 1], strides = [1, 1]} : vector<8x4xf32> to vector<8x1xf32>
    %cst_189 = arith.constant 8.000000e+00 : f32
    %836 = vector.broadcast %cst_189 : f32 to vector<8x1xf32>
    %837 = arith.mulf %835, %836 : vector<8x1xf32>
    %838 = vector.extract_strided_slice %636 {offsets = [0, 12], sizes = [8, 4], strides = [1, 1]} : vector<8x16xf32> to vector<8x4xf32>
    %839 = vector.broadcast %837 : vector<8x1xf32> to vector<8x4xf32>
    %840 = arith.addf %839, %838 : vector<8x4xf32>
    %cst_190 = arith.constant 5.000000e-01 : f32
    %841 = vector.broadcast %cst_190 : f32 to vector<8x4xf32>
    %842 = arith.subf %840, %841 : vector<8x4xf32>
    %cst_191 = arith.constant 0.000000e+00 : f32
    %843 = vector.broadcast %cst_191 : f32 to vector<8x8xf32>
    %844 = vector.extract_strided_slice %842 {offsets = [0, 0], sizes = [8, 1], strides = [1, 1]} : vector<8x4xf32> to vector<8x1xf32>
    %845 = vector.extract_strided_slice %647 {offsets = [0, 12], sizes = [8, 1], strides = [1, 1]} : vector<8x16xf32> to vector<8x1xf32>
    %846 = vector.broadcast %834 : vector<1x8xf32> to vector<8x8xf32>
    %847 = vector.broadcast %844 : vector<8x1xf32> to vector<8x8xf32>
    %848 = arith.subf %846, %847 : vector<8x8xf32>
    %849 = math.absf %848 : vector<8x8xf32>
    %cst_192 = arith.constant 1.000000e+00 : f32
    %850 = vector.broadcast %cst_192 : f32 to vector<8x8xf32>
    %851 = arith.subf %850, %849 : vector<8x8xf32>
    %cst_193 = arith.constant 0.000000e+00 : f32
    %852 = vector.broadcast %cst_193 : f32 to vector<8x8xf32>
    %853 = arith.maximumf %851, %852 : vector<8x8xf32>
    %854 = vector.broadcast %845 : vector<8x1xf32> to vector<8x8xf32>
    %855 = arith.mulf %853, %854 : vector<8x8xf32>
    %856 = arith.addf %843, %855 : vector<8x8xf32>
    %857 = vector.extract_strided_slice %842 {offsets = [0, 1], sizes = [8, 1], strides = [1, 1]} : vector<8x4xf32> to vector<8x1xf32>
    %858 = vector.extract_strided_slice %647 {offsets = [0, 13], sizes = [8, 1], strides = [1, 1]} : vector<8x16xf32> to vector<8x1xf32>
    %859 = vector.broadcast %834 : vector<1x8xf32> to vector<8x8xf32>
    %860 = vector.broadcast %857 : vector<8x1xf32> to vector<8x8xf32>
    %861 = arith.subf %859, %860 : vector<8x8xf32>
    %862 = math.absf %861 : vector<8x8xf32>
    %cst_194 = arith.constant 1.000000e+00 : f32
    %863 = vector.broadcast %cst_194 : f32 to vector<8x8xf32>
    %864 = arith.subf %863, %862 : vector<8x8xf32>
    %cst_195 = arith.constant 0.000000e+00 : f32
    %865 = vector.broadcast %cst_195 : f32 to vector<8x8xf32>
    %866 = arith.maximumf %864, %865 : vector<8x8xf32>
    %867 = vector.broadcast %858 : vector<8x1xf32> to vector<8x8xf32>
    %868 = arith.mulf %866, %867 : vector<8x8xf32>
    %869 = arith.addf %856, %868 : vector<8x8xf32>
    %870 = vector.extract_strided_slice %842 {offsets = [0, 2], sizes = [8, 1], strides = [1, 1]} : vector<8x4xf32> to vector<8x1xf32>
    %871 = vector.extract_strided_slice %647 {offsets = [0, 14], sizes = [8, 1], strides = [1, 1]} : vector<8x16xf32> to vector<8x1xf32>
    %872 = vector.broadcast %834 : vector<1x8xf32> to vector<8x8xf32>
    %873 = vector.broadcast %870 : vector<8x1xf32> to vector<8x8xf32>
    %874 = arith.subf %872, %873 : vector<8x8xf32>
    %875 = math.absf %874 : vector<8x8xf32>
    %cst_196 = arith.constant 1.000000e+00 : f32
    %876 = vector.broadcast %cst_196 : f32 to vector<8x8xf32>
    %877 = arith.subf %876, %875 : vector<8x8xf32>
    %cst_197 = arith.constant 0.000000e+00 : f32
    %878 = vector.broadcast %cst_197 : f32 to vector<8x8xf32>
    %879 = arith.maximumf %877, %878 : vector<8x8xf32>
    %880 = vector.broadcast %871 : vector<8x1xf32> to vector<8x8xf32>
    %881 = arith.mulf %879, %880 : vector<8x8xf32>
    %882 = arith.addf %869, %881 : vector<8x8xf32>
    %883 = vector.extract_strided_slice %842 {offsets = [0, 3], sizes = [8, 1], strides = [1, 1]} : vector<8x4xf32> to vector<8x1xf32>
    %884 = vector.extract_strided_slice %647 {offsets = [0, 15], sizes = [8, 1], strides = [1, 1]} : vector<8x16xf32> to vector<8x1xf32>
    %885 = vector.broadcast %834 : vector<1x8xf32> to vector<8x8xf32>
    %886 = vector.broadcast %883 : vector<8x1xf32> to vector<8x8xf32>
    %887 = arith.subf %885, %886 : vector<8x8xf32>
    %888 = math.absf %887 : vector<8x8xf32>
    %cst_198 = arith.constant 1.000000e+00 : f32
    %889 = vector.broadcast %cst_198 : f32 to vector<8x8xf32>
    %890 = arith.subf %889, %888 : vector<8x8xf32>
    %cst_199 = arith.constant 0.000000e+00 : f32
    %891 = vector.broadcast %cst_199 : f32 to vector<8x8xf32>
    %892 = arith.maximumf %890, %891 : vector<8x8xf32>
    %893 = vector.broadcast %884 : vector<8x1xf32> to vector<8x8xf32>
    %894 = arith.mulf %892, %893 : vector<8x8xf32>
    %895 = arith.addf %882, %894 : vector<8x8xf32>
    %896 = tpu.concatenate %709, %771, %833, %895 in 1 : vector<8x32xf32>, vector<8x16xf32>, vector<8x8xf32>, vector<8x8xf32> -> vector<8x64xf32>
    %897 = vector.extract_strided_slice %102 {offsets = [0, 16], sizes = [64, 8], strides = [1, 1]} : vector<64x32xf32> to vector<64x8xf32>
    %cst_200 = arith.constant dense<0.000000e+00> : vector<8x8xf32>
    %898 = tpu.matmul %896, %897, %cst_200 {dimension_numbers = #tpu.dot_dimension_numbers<[1], [0], [0], [1], [0, 0, 1, 1], [], []>} : vector<8x64xf32>, vector<64x8xf32>, vector<8x8xf32> -> vector<8x8xf32>
    %899 = vector.extract_strided_slice %109 {offsets = [0, 48], sizes = [8, 16], strides = [1, 1]} : vector<8x128xf32> to vector<8x16xf32>
    %900 = vector.extract_strided_slice %109 {offsets = [0, 112], sizes = [8, 16], strides = [1, 1]} : vector<8x128xf32> to vector<8x16xf32>
    %cst_201 = arith.constant dense<0xFF800000> : vector<8xf32>
    %901 = vector.multi_reduction <maximumf>, %900, %cst_201 [1] : vector<8x16xf32> to vector<8xf32>
    %902 = vector.shape_cast %901 : vector<8xf32> to vector<8x1xf32>
    %903 = vector.broadcast %902 : vector<8x1xf32> to vector<8x16xf32>
    %904 = arith.subf %900, %903 : vector<8x16xf32>
    %905 = math.exp %904 : vector<8x16xf32>
    %cst_202 = arith.constant dense<0.000000e+00> : vector<8xf32>
    %906 = vector.multi_reduction <add>, %905, %cst_202 [1] : vector<8x16xf32> to vector<8xf32>
    %907 = vector.shape_cast %906 : vector<8xf32> to vector<8x1xf32>
    %908 = tpu.reciprocal %907 {approx = true} : vector<8x1xf32> -> vector<8x1xf32>
    %909 = vector.broadcast %908 : vector<8x1xf32> to vector<8x16xf32>
    %910 = arith.mulf %905, %909 : vector<8x16xf32>
    %911 = vector.extract_strided_slice %9 {offsets = [0, 0], sizes = [1, 32], strides = [1, 1]} : vector<1x64xf32> to vector<1x32xf32>
    %912 = vector.extract_strided_slice %7 {offsets = [0, 0], sizes = [8, 1], strides = [1, 1]} : vector<8x4xf32> to vector<8x1xf32>
    %cst_203 = arith.constant 3.200000e+01 : f32
    %913 = vector.broadcast %cst_203 : f32 to vector<8x1xf32>
    %914 = arith.mulf %912, %913 : vector<8x1xf32>
    %915 = vector.extract_strided_slice %899 {offsets = [0, 0], sizes = [8, 4], strides = [1, 1]} : vector<8x16xf32> to vector<8x4xf32>
    %916 = vector.broadcast %914 : vector<8x1xf32> to vector<8x4xf32>
    %917 = arith.addf %916, %915 : vector<8x4xf32>
    %cst_204 = arith.constant 5.000000e-01 : f32
    %918 = vector.broadcast %cst_204 : f32 to vector<8x4xf32>
    %919 = arith.subf %917, %918 : vector<8x4xf32>
    %cst_205 = arith.constant 0.000000e+00 : f32
    %920 = vector.broadcast %cst_205 : f32 to vector<8x32xf32>
    %921 = vector.extract_strided_slice %919 {offsets = [0, 0], sizes = [8, 1], strides = [1, 1]} : vector<8x4xf32> to vector<8x1xf32>
    %922 = vector.extract_strided_slice %910 {offsets = [0, 0], sizes = [8, 1], strides = [1, 1]} : vector<8x16xf32> to vector<8x1xf32>
    %923 = vector.broadcast %911 : vector<1x32xf32> to vector<8x32xf32>
    %924 = vector.broadcast %921 : vector<8x1xf32> to vector<8x32xf32>
    %925 = arith.subf %923, %924 : vector<8x32xf32>
    %926 = math.absf %925 : vector<8x32xf32>
    %cst_206 = arith.constant 1.000000e+00 : f32
    %927 = vector.broadcast %cst_206 : f32 to vector<8x32xf32>
    %928 = arith.subf %927, %926 : vector<8x32xf32>
    %cst_207 = arith.constant 0.000000e+00 : f32
    %929 = vector.broadcast %cst_207 : f32 to vector<8x32xf32>
    %930 = arith.maximumf %928, %929 : vector<8x32xf32>
    %931 = vector.broadcast %922 : vector<8x1xf32> to vector<8x32xf32>
    %932 = arith.mulf %930, %931 : vector<8x32xf32>
    %933 = arith.addf %920, %932 : vector<8x32xf32>
    %934 = vector.extract_strided_slice %919 {offsets = [0, 1], sizes = [8, 1], strides = [1, 1]} : vector<8x4xf32> to vector<8x1xf32>
    %935 = vector.extract_strided_slice %910 {offsets = [0, 1], sizes = [8, 1], strides = [1, 1]} : vector<8x16xf32> to vector<8x1xf32>
    %936 = vector.broadcast %911 : vector<1x32xf32> to vector<8x32xf32>
    %937 = vector.broadcast %934 : vector<8x1xf32> to vector<8x32xf32>
    %938 = arith.subf %936, %937 : vector<8x32xf32>
    %939 = math.absf %938 : vector<8x32xf32>
    %cst_208 = arith.constant 1.000000e+00 : f32
    %940 = vector.broadcast %cst_208 : f32 to vector<8x32xf32>
    %941 = arith.subf %940, %939 : vector<8x32xf32>
    %cst_209 = arith.constant 0.000000e+00 : f32
    %942 = vector.broadcast %cst_209 : f32 to vector<8x32xf32>
    %943 = arith.maximumf %941, %942 : vector<8x32xf32>
    %944 = vector.broadcast %935 : vector<8x1xf32> to vector<8x32xf32>
    %945 = arith.mulf %943, %944 : vector<8x32xf32>
    %946 = arith.addf %933, %945 : vector<8x32xf32>
    %947 = vector.extract_strided_slice %919 {offsets = [0, 2], sizes = [8, 1], strides = [1, 1]} : vector<8x4xf32> to vector<8x1xf32>
    %948 = vector.extract_strided_slice %910 {offsets = [0, 2], sizes = [8, 1], strides = [1, 1]} : vector<8x16xf32> to vector<8x1xf32>
    %949 = vector.broadcast %911 : vector<1x32xf32> to vector<8x32xf32>
    %950 = vector.broadcast %947 : vector<8x1xf32> to vector<8x32xf32>
    %951 = arith.subf %949, %950 : vector<8x32xf32>
    %952 = math.absf %951 : vector<8x32xf32>
    %cst_210 = arith.constant 1.000000e+00 : f32
    %953 = vector.broadcast %cst_210 : f32 to vector<8x32xf32>
    %954 = arith.subf %953, %952 : vector<8x32xf32>
    %cst_211 = arith.constant 0.000000e+00 : f32
    %955 = vector.broadcast %cst_211 : f32 to vector<8x32xf32>
    %956 = arith.maximumf %954, %955 : vector<8x32xf32>
    %957 = vector.broadcast %948 : vector<8x1xf32> to vector<8x32xf32>
    %958 = arith.mulf %956, %957 : vector<8x32xf32>
    %959 = arith.addf %946, %958 : vector<8x32xf32>
    %960 = vector.extract_strided_slice %919 {offsets = [0, 3], sizes = [8, 1], strides = [1, 1]} : vector<8x4xf32> to vector<8x1xf32>
    %961 = vector.extract_strided_slice %910 {offsets = [0, 3], sizes = [8, 1], strides = [1, 1]} : vector<8x16xf32> to vector<8x1xf32>
    %962 = vector.broadcast %911 : vector<1x32xf32> to vector<8x32xf32>
    %963 = vector.broadcast %960 : vector<8x1xf32> to vector<8x32xf32>
    %964 = arith.subf %962, %963 : vector<8x32xf32>
    %965 = math.absf %964 : vector<8x32xf32>
    %cst_212 = arith.constant 1.000000e+00 : f32
    %966 = vector.broadcast %cst_212 : f32 to vector<8x32xf32>
    %967 = arith.subf %966, %965 : vector<8x32xf32>
    %cst_213 = arith.constant 0.000000e+00 : f32
    %968 = vector.broadcast %cst_213 : f32 to vector<8x32xf32>
    %969 = arith.maximumf %967, %968 : vector<8x32xf32>
    %970 = vector.broadcast %961 : vector<8x1xf32> to vector<8x32xf32>
    %971 = arith.mulf %969, %970 : vector<8x32xf32>
    %972 = arith.addf %959, %971 : vector<8x32xf32>
    %973 = vector.extract_strided_slice %9 {offsets = [0, 0], sizes = [1, 16], strides = [1, 1]} : vector<1x64xf32> to vector<1x16xf32>
    %974 = vector.extract_strided_slice %7 {offsets = [0, 1], sizes = [8, 1], strides = [1, 1]} : vector<8x4xf32> to vector<8x1xf32>
    %cst_214 = arith.constant 1.600000e+01 : f32
    %975 = vector.broadcast %cst_214 : f32 to vector<8x1xf32>
    %976 = arith.mulf %974, %975 : vector<8x1xf32>
    %977 = vector.extract_strided_slice %899 {offsets = [0, 4], sizes = [8, 4], strides = [1, 1]} : vector<8x16xf32> to vector<8x4xf32>
    %978 = vector.broadcast %976 : vector<8x1xf32> to vector<8x4xf32>
    %979 = arith.addf %978, %977 : vector<8x4xf32>
    %cst_215 = arith.constant 5.000000e-01 : f32
    %980 = vector.broadcast %cst_215 : f32 to vector<8x4xf32>
    %981 = arith.subf %979, %980 : vector<8x4xf32>
    %cst_216 = arith.constant 0.000000e+00 : f32
    %982 = vector.broadcast %cst_216 : f32 to vector<8x16xf32>
    %983 = vector.extract_strided_slice %981 {offsets = [0, 0], sizes = [8, 1], strides = [1, 1]} : vector<8x4xf32> to vector<8x1xf32>
    %984 = vector.extract_strided_slice %910 {offsets = [0, 4], sizes = [8, 1], strides = [1, 1]} : vector<8x16xf32> to vector<8x1xf32>
    %985 = vector.broadcast %973 : vector<1x16xf32> to vector<8x16xf32>
    %986 = vector.broadcast %983 : vector<8x1xf32> to vector<8x16xf32>
    %987 = arith.subf %985, %986 : vector<8x16xf32>
    %988 = math.absf %987 : vector<8x16xf32>
    %cst_217 = arith.constant 1.000000e+00 : f32
    %989 = vector.broadcast %cst_217 : f32 to vector<8x16xf32>
    %990 = arith.subf %989, %988 : vector<8x16xf32>
    %cst_218 = arith.constant 0.000000e+00 : f32
    %991 = vector.broadcast %cst_218 : f32 to vector<8x16xf32>
    %992 = arith.maximumf %990, %991 : vector<8x16xf32>
    %993 = vector.broadcast %984 : vector<8x1xf32> to vector<8x16xf32>
    %994 = arith.mulf %992, %993 : vector<8x16xf32>
    %995 = arith.addf %982, %994 : vector<8x16xf32>
    %996 = vector.extract_strided_slice %981 {offsets = [0, 1], sizes = [8, 1], strides = [1, 1]} : vector<8x4xf32> to vector<8x1xf32>
    %997 = vector.extract_strided_slice %910 {offsets = [0, 5], sizes = [8, 1], strides = [1, 1]} : vector<8x16xf32> to vector<8x1xf32>
    %998 = vector.broadcast %973 : vector<1x16xf32> to vector<8x16xf32>
    %999 = vector.broadcast %996 : vector<8x1xf32> to vector<8x16xf32>
    %1000 = arith.subf %998, %999 : vector<8x16xf32>
    %1001 = math.absf %1000 : vector<8x16xf32>
    %cst_219 = arith.constant 1.000000e+00 : f32
    %1002 = vector.broadcast %cst_219 : f32 to vector<8x16xf32>
    %1003 = arith.subf %1002, %1001 : vector<8x16xf32>
    %cst_220 = arith.constant 0.000000e+00 : f32
    %1004 = vector.broadcast %cst_220 : f32 to vector<8x16xf32>
    %1005 = arith.maximumf %1003, %1004 : vector<8x16xf32>
    %1006 = vector.broadcast %997 : vector<8x1xf32> to vector<8x16xf32>
    %1007 = arith.mulf %1005, %1006 : vector<8x16xf32>
    %1008 = arith.addf %995, %1007 : vector<8x16xf32>
    %1009 = vector.extract_strided_slice %981 {offsets = [0, 2], sizes = [8, 1], strides = [1, 1]} : vector<8x4xf32> to vector<8x1xf32>
    %1010 = vector.extract_strided_slice %910 {offsets = [0, 6], sizes = [8, 1], strides = [1, 1]} : vector<8x16xf32> to vector<8x1xf32>
    %1011 = vector.broadcast %973 : vector<1x16xf32> to vector<8x16xf32>
    %1012 = vector.broadcast %1009 : vector<8x1xf32> to vector<8x16xf32>
    %1013 = arith.subf %1011, %1012 : vector<8x16xf32>
    %1014 = math.absf %1013 : vector<8x16xf32>
    %cst_221 = arith.constant 1.000000e+00 : f32
    %1015 = vector.broadcast %cst_221 : f32 to vector<8x16xf32>
    %1016 = arith.subf %1015, %1014 : vector<8x16xf32>
    %cst_222 = arith.constant 0.000000e+00 : f32
    %1017 = vector.broadcast %cst_222 : f32 to vector<8x16xf32>
    %1018 = arith.maximumf %1016, %1017 : vector<8x16xf32>
    %1019 = vector.broadcast %1010 : vector<8x1xf32> to vector<8x16xf32>
    %1020 = arith.mulf %1018, %1019 : vector<8x16xf32>
    %1021 = arith.addf %1008, %1020 : vector<8x16xf32>
    %1022 = vector.extract_strided_slice %981 {offsets = [0, 3], sizes = [8, 1], strides = [1, 1]} : vector<8x4xf32> to vector<8x1xf32>
    %1023 = vector.extract_strided_slice %910 {offsets = [0, 7], sizes = [8, 1], strides = [1, 1]} : vector<8x16xf32> to vector<8x1xf32>
    %1024 = vector.broadcast %973 : vector<1x16xf32> to vector<8x16xf32>
    %1025 = vector.broadcast %1022 : vector<8x1xf32> to vector<8x16xf32>
    %1026 = arith.subf %1024, %1025 : vector<8x16xf32>
    %1027 = math.absf %1026 : vector<8x16xf32>
    %cst_223 = arith.constant 1.000000e+00 : f32
    %1028 = vector.broadcast %cst_223 : f32 to vector<8x16xf32>
    %1029 = arith.subf %1028, %1027 : vector<8x16xf32>
    %cst_224 = arith.constant 0.000000e+00 : f32
    %1030 = vector.broadcast %cst_224 : f32 to vector<8x16xf32>
    %1031 = arith.maximumf %1029, %1030 : vector<8x16xf32>
    %1032 = vector.broadcast %1023 : vector<8x1xf32> to vector<8x16xf32>
    %1033 = arith.mulf %1031, %1032 : vector<8x16xf32>
    %1034 = arith.addf %1021, %1033 : vector<8x16xf32>
    %1035 = vector.extract_strided_slice %9 {offsets = [0, 0], sizes = [1, 8], strides = [1, 1]} : vector<1x64xf32> to vector<1x8xf32>
    %1036 = vector.extract_strided_slice %7 {offsets = [0, 2], sizes = [8, 1], strides = [1, 1]} : vector<8x4xf32> to vector<8x1xf32>
    %cst_225 = arith.constant 8.000000e+00 : f32
    %1037 = vector.broadcast %cst_225 : f32 to vector<8x1xf32>
    %1038 = arith.mulf %1036, %1037 : vector<8x1xf32>
    %1039 = vector.extract_strided_slice %899 {offsets = [0, 8], sizes = [8, 4], strides = [1, 1]} : vector<8x16xf32> to vector<8x4xf32>
    %1040 = vector.broadcast %1038 : vector<8x1xf32> to vector<8x4xf32>
    %1041 = arith.addf %1040, %1039 : vector<8x4xf32>
    %cst_226 = arith.constant 5.000000e-01 : f32
    %1042 = vector.broadcast %cst_226 : f32 to vector<8x4xf32>
    %1043 = arith.subf %1041, %1042 : vector<8x4xf32>
    %cst_227 = arith.constant 0.000000e+00 : f32
    %1044 = vector.broadcast %cst_227 : f32 to vector<8x8xf32>
    %1045 = vector.extract_strided_slice %1043 {offsets = [0, 0], sizes = [8, 1], strides = [1, 1]} : vector<8x4xf32> to vector<8x1xf32>
    %1046 = vector.extract_strided_slice %910 {offsets = [0, 8], sizes = [8, 1], strides = [1, 1]} : vector<8x16xf32> to vector<8x1xf32>
    %1047 = vector.broadcast %1035 : vector<1x8xf32> to vector<8x8xf32>
    %1048 = vector.broadcast %1045 : vector<8x1xf32> to vector<8x8xf32>
    %1049 = arith.subf %1047, %1048 : vector<8x8xf32>
    %1050 = math.absf %1049 : vector<8x8xf32>
    %cst_228 = arith.constant 1.000000e+00 : f32
    %1051 = vector.broadcast %cst_228 : f32 to vector<8x8xf32>
    %1052 = arith.subf %1051, %1050 : vector<8x8xf32>
    %cst_229 = arith.constant 0.000000e+00 : f32
    %1053 = vector.broadcast %cst_229 : f32 to vector<8x8xf32>
    %1054 = arith.maximumf %1052, %1053 : vector<8x8xf32>
    %1055 = vector.broadcast %1046 : vector<8x1xf32> to vector<8x8xf32>
    %1056 = arith.mulf %1054, %1055 : vector<8x8xf32>
    %1057 = arith.addf %1044, %1056 : vector<8x8xf32>
    %1058 = vector.extract_strided_slice %1043 {offsets = [0, 1], sizes = [8, 1], strides = [1, 1]} : vector<8x4xf32> to vector<8x1xf32>
    %1059 = vector.extract_strided_slice %910 {offsets = [0, 9], sizes = [8, 1], strides = [1, 1]} : vector<8x16xf32> to vector<8x1xf32>
    %1060 = vector.broadcast %1035 : vector<1x8xf32> to vector<8x8xf32>
    %1061 = vector.broadcast %1058 : vector<8x1xf32> to vector<8x8xf32>
    %1062 = arith.subf %1060, %1061 : vector<8x8xf32>
    %1063 = math.absf %1062 : vector<8x8xf32>
    %cst_230 = arith.constant 1.000000e+00 : f32
    %1064 = vector.broadcast %cst_230 : f32 to vector<8x8xf32>
    %1065 = arith.subf %1064, %1063 : vector<8x8xf32>
    %cst_231 = arith.constant 0.000000e+00 : f32
    %1066 = vector.broadcast %cst_231 : f32 to vector<8x8xf32>
    %1067 = arith.maximumf %1065, %1066 : vector<8x8xf32>
    %1068 = vector.broadcast %1059 : vector<8x1xf32> to vector<8x8xf32>
    %1069 = arith.mulf %1067, %1068 : vector<8x8xf32>
    %1070 = arith.addf %1057, %1069 : vector<8x8xf32>
    %1071 = vector.extract_strided_slice %1043 {offsets = [0, 2], sizes = [8, 1], strides = [1, 1]} : vector<8x4xf32> to vector<8x1xf32>
    %1072 = vector.extract_strided_slice %910 {offsets = [0, 10], sizes = [8, 1], strides = [1, 1]} : vector<8x16xf32> to vector<8x1xf32>
    %1073 = vector.broadcast %1035 : vector<1x8xf32> to vector<8x8xf32>
    %1074 = vector.broadcast %1071 : vector<8x1xf32> to vector<8x8xf32>
    %1075 = arith.subf %1073, %1074 : vector<8x8xf32>
    %1076 = math.absf %1075 : vector<8x8xf32>
    %cst_232 = arith.constant 1.000000e+00 : f32
    %1077 = vector.broadcast %cst_232 : f32 to vector<8x8xf32>
    %1078 = arith.subf %1077, %1076 : vector<8x8xf32>
    %cst_233 = arith.constant 0.000000e+00 : f32
    %1079 = vector.broadcast %cst_233 : f32 to vector<8x8xf32>
    %1080 = arith.maximumf %1078, %1079 : vector<8x8xf32>
    %1081 = vector.broadcast %1072 : vector<8x1xf32> to vector<8x8xf32>
    %1082 = arith.mulf %1080, %1081 : vector<8x8xf32>
    %1083 = arith.addf %1070, %1082 : vector<8x8xf32>
    %1084 = vector.extract_strided_slice %1043 {offsets = [0, 3], sizes = [8, 1], strides = [1, 1]} : vector<8x4xf32> to vector<8x1xf32>
    %1085 = vector.extract_strided_slice %910 {offsets = [0, 11], sizes = [8, 1], strides = [1, 1]} : vector<8x16xf32> to vector<8x1xf32>
    %1086 = vector.broadcast %1035 : vector<1x8xf32> to vector<8x8xf32>
    %1087 = vector.broadcast %1084 : vector<8x1xf32> to vector<8x8xf32>
    %1088 = arith.subf %1086, %1087 : vector<8x8xf32>
    %1089 = math.absf %1088 : vector<8x8xf32>
    %cst_234 = arith.constant 1.000000e+00 : f32
    %1090 = vector.broadcast %cst_234 : f32 to vector<8x8xf32>
    %1091 = arith.subf %1090, %1089 : vector<8x8xf32>
    %cst_235 = arith.constant 0.000000e+00 : f32
    %1092 = vector.broadcast %cst_235 : f32 to vector<8x8xf32>
    %1093 = arith.maximumf %1091, %1092 : vector<8x8xf32>
    %1094 = vector.broadcast %1085 : vector<8x1xf32> to vector<8x8xf32>
    %1095 = arith.mulf %1093, %1094 : vector<8x8xf32>
    %1096 = arith.addf %1083, %1095 : vector<8x8xf32>
    %1097 = vector.extract_strided_slice %9 {offsets = [0, 0], sizes = [1, 8], strides = [1, 1]} : vector<1x64xf32> to vector<1x8xf32>
    %1098 = vector.extract_strided_slice %7 {offsets = [0, 3], sizes = [8, 1], strides = [1, 1]} : vector<8x4xf32> to vector<8x1xf32>
    %cst_236 = arith.constant 8.000000e+00 : f32
    %1099 = vector.broadcast %cst_236 : f32 to vector<8x1xf32>
    %1100 = arith.mulf %1098, %1099 : vector<8x1xf32>
    %1101 = vector.extract_strided_slice %899 {offsets = [0, 12], sizes = [8, 4], strides = [1, 1]} : vector<8x16xf32> to vector<8x4xf32>
    %1102 = vector.broadcast %1100 : vector<8x1xf32> to vector<8x4xf32>
    %1103 = arith.addf %1102, %1101 : vector<8x4xf32>
    %cst_237 = arith.constant 5.000000e-01 : f32
    %1104 = vector.broadcast %cst_237 : f32 to vector<8x4xf32>
    %1105 = arith.subf %1103, %1104 : vector<8x4xf32>
    %cst_238 = arith.constant 0.000000e+00 : f32
    %1106 = vector.broadcast %cst_238 : f32 to vector<8x8xf32>
    %1107 = vector.extract_strided_slice %1105 {offsets = [0, 0], sizes = [8, 1], strides = [1, 1]} : vector<8x4xf32> to vector<8x1xf32>
    %1108 = vector.extract_strided_slice %910 {offsets = [0, 12], sizes = [8, 1], strides = [1, 1]} : vector<8x16xf32> to vector<8x1xf32>
    %1109 = vector.broadcast %1097 : vector<1x8xf32> to vector<8x8xf32>
    %1110 = vector.broadcast %1107 : vector<8x1xf32> to vector<8x8xf32>
    %1111 = arith.subf %1109, %1110 : vector<8x8xf32>
    %1112 = math.absf %1111 : vector<8x8xf32>
    %cst_239 = arith.constant 1.000000e+00 : f32
    %1113 = vector.broadcast %cst_239 : f32 to vector<8x8xf32>
    %1114 = arith.subf %1113, %1112 : vector<8x8xf32>
    %cst_240 = arith.constant 0.000000e+00 : f32
    %1115 = vector.broadcast %cst_240 : f32 to vector<8x8xf32>
    %1116 = arith.maximumf %1114, %1115 : vector<8x8xf32>
    %1117 = vector.broadcast %1108 : vector<8x1xf32> to vector<8x8xf32>
    %1118 = arith.mulf %1116, %1117 : vector<8x8xf32>
    %1119 = arith.addf %1106, %1118 : vector<8x8xf32>
    %1120 = vector.extract_strided_slice %1105 {offsets = [0, 1], sizes = [8, 1], strides = [1, 1]} : vector<8x4xf32> to vector<8x1xf32>
    %1121 = vector.extract_strided_slice %910 {offsets = [0, 13], sizes = [8, 1], strides = [1, 1]} : vector<8x16xf32> to vector<8x1xf32>
    %1122 = vector.broadcast %1097 : vector<1x8xf32> to vector<8x8xf32>
    %1123 = vector.broadcast %1120 : vector<8x1xf32> to vector<8x8xf32>
    %1124 = arith.subf %1122, %1123 : vector<8x8xf32>
    %1125 = math.absf %1124 : vector<8x8xf32>
    %cst_241 = arith.constant 1.000000e+00 : f32
    %1126 = vector.broadcast %cst_241 : f32 to vector<8x8xf32>
    %1127 = arith.subf %1126, %1125 : vector<8x8xf32>
    %cst_242 = arith.constant 0.000000e+00 : f32
    %1128 = vector.broadcast %cst_242 : f32 to vector<8x8xf32>
    %1129 = arith.maximumf %1127, %1128 : vector<8x8xf32>
    %1130 = vector.broadcast %1121 : vector<8x1xf32> to vector<8x8xf32>
    %1131 = arith.mulf %1129, %1130 : vector<8x8xf32>
    %1132 = arith.addf %1119, %1131 : vector<8x8xf32>
    %1133 = vector.extract_strided_slice %1105 {offsets = [0, 2], sizes = [8, 1], strides = [1, 1]} : vector<8x4xf32> to vector<8x1xf32>
    %1134 = vector.extract_strided_slice %910 {offsets = [0, 14], sizes = [8, 1], strides = [1, 1]} : vector<8x16xf32> to vector<8x1xf32>
    %1135 = vector.broadcast %1097 : vector<1x8xf32> to vector<8x8xf32>
    %1136 = vector.broadcast %1133 : vector<8x1xf32> to vector<8x8xf32>
    %1137 = arith.subf %1135, %1136 : vector<8x8xf32>
    %1138 = math.absf %1137 : vector<8x8xf32>
    %cst_243 = arith.constant 1.000000e+00 : f32
    %1139 = vector.broadcast %cst_243 : f32 to vector<8x8xf32>
    %1140 = arith.subf %1139, %1138 : vector<8x8xf32>
    %cst_244 = arith.constant 0.000000e+00 : f32
    %1141 = vector.broadcast %cst_244 : f32 to vector<8x8xf32>
    %1142 = arith.maximumf %1140, %1141 : vector<8x8xf32>
    %1143 = vector.broadcast %1134 : vector<8x1xf32> to vector<8x8xf32>
    %1144 = arith.mulf %1142, %1143 : vector<8x8xf32>
    %1145 = arith.addf %1132, %1144 : vector<8x8xf32>
    %1146 = vector.extract_strided_slice %1105 {offsets = [0, 3], sizes = [8, 1], strides = [1, 1]} : vector<8x4xf32> to vector<8x1xf32>
    %1147 = vector.extract_strided_slice %910 {offsets = [0, 15], sizes = [8, 1], strides = [1, 1]} : vector<8x16xf32> to vector<8x1xf32>
    %1148 = vector.broadcast %1097 : vector<1x8xf32> to vector<8x8xf32>
    %1149 = vector.broadcast %1146 : vector<8x1xf32> to vector<8x8xf32>
    %1150 = arith.subf %1148, %1149 : vector<8x8xf32>
    %1151 = math.absf %1150 : vector<8x8xf32>
    %cst_245 = arith.constant 1.000000e+00 : f32
    %1152 = vector.broadcast %cst_245 : f32 to vector<8x8xf32>
    %1153 = arith.subf %1152, %1151 : vector<8x8xf32>
    %cst_246 = arith.constant 0.000000e+00 : f32
    %1154 = vector.broadcast %cst_246 : f32 to vector<8x8xf32>
    %1155 = arith.maximumf %1153, %1154 : vector<8x8xf32>
    %1156 = vector.broadcast %1147 : vector<8x1xf32> to vector<8x8xf32>
    %1157 = arith.mulf %1155, %1156 : vector<8x8xf32>
    %1158 = arith.addf %1145, %1157 : vector<8x8xf32>
    %1159 = tpu.concatenate %972, %1034, %1096, %1158 in 1 : vector<8x32xf32>, vector<8x16xf32>, vector<8x8xf32>, vector<8x8xf32> -> vector<8x64xf32>
    %1160 = vector.extract_strided_slice %102 {offsets = [0, 24], sizes = [64, 8], strides = [1, 1]} : vector<64x32xf32> to vector<64x8xf32>
    %cst_247 = arith.constant dense<0.000000e+00> : vector<8x8xf32>
    %1161 = tpu.matmul %1159, %1160, %cst_247 {dimension_numbers = #tpu.dot_dimension_numbers<[1], [0], [0], [1], [0, 0, 1, 1], [], []>} : vector<8x64xf32>, vector<64x8xf32>, vector<8x8xf32> -> vector<8x8xf32>
    %1162 = tpu.concatenate %372, %635, %898, %1161 in 1 : vector<8x8xf32>, vector<8x8xf32>, vector<8x8xf32>, vector<8x8xf32> -> vector<8x32xf32>
    %c0_248 = arith.constant 0 : index
    %c0_249 = arith.constant 0 : index
    %c352 = arith.constant 352 : index
    %1163 = vector.load %arg5[%c0_248, %c0_249, %c352] : memref<2x32x384xf32, #tpu.memory_space<vmem>>, vector<1x32x32xf32>
    %1164 = vector.shape_cast %1163 : vector<1x32x32xf32> to vector<32x32xf32>
    %cst_250 = arith.constant dense<0.000000e+00> : vector<8x32xf32>
    %1165 = tpu.matmul %1162, %1164, %cst_250 {dimension_numbers = #tpu.dot_dimension_numbers<[1], [0], [0], [1], [0, 0, 1, 1], [], []>} : vector<8x32xf32>, vector<32x32xf32>, vector<8x32xf32> -> vector<8x32xf32>
    %c0_251 = arith.constant 0 : index
    %c0_252 = arith.constant 0 : index
    %c352_253 = arith.constant 352 : index
    %1166 = vector.load %arg7[%c0_251, %c0_252, %c352_253] : memref<2x1x608xf32, #tpu.memory_space<vmem>>, vector<1x1x32xf32>
    %1167 = vector.shape_cast %1166 : vector<1x1x32xf32> to vector<1x32xf32>
    %1168 = vector.broadcast %1167 : vector<1x32xf32> to vector<8x32xf32>
    %1169 = arith.addf %1165, %1168 : vector<8x32xf32>
    %1170 = arith.addf %94, %1169 : vector<8x32xf32>
    %c0_254 = arith.constant 0 : index
    %c0_255 = arith.constant 0 : index
    %c480 = arith.constant 480 : index
    %1171 = vector.load %arg7[%c0_254, %c0_255, %c480] : memref<2x1x608xf32, #tpu.memory_space<vmem>>, vector<1x1x32xf32>
    %1172 = vector.shape_cast %1171 : vector<1x1x32xf32> to vector<1x32xf32>
    %c0_256 = arith.constant 0 : index
    %c0_257 = arith.constant 0 : index
    %c512 = arith.constant 512 : index
    %1173 = vector.load %arg7[%c0_256, %c0_257, %c512] : memref<2x1x608xf32, #tpu.memory_space<vmem>>, vector<1x1x32xf32>
    %1174 = vector.shape_cast %1173 : vector<1x1x32xf32> to vector<1x32xf32>
    %cst_258 = arith.constant dense<0.000000e+00> : vector<8xf32>
    %1175 = vector.multi_reduction <add>, %1170, %cst_258 [1] : vector<8x32xf32> to vector<8xf32>
    %1176 = vector.shape_cast %1175 : vector<8xf32> to vector<8x1xf32>
    %cst_259 = arith.constant 3.200000e+01 : f32
    %1177 = vector.broadcast %cst_259 : f32 to vector<8x1xf32>
    %1178 = arith.divf %1176, %1177 : vector<8x1xf32>
    %1179 = vector.broadcast %1178 : vector<8x1xf32> to vector<8x32xf32>
    %1180 = arith.subf %1170, %1179 : vector<8x32xf32>
    %1181 = arith.mulf %1180, %1180 : vector<8x32xf32>
    %cst_260 = arith.constant dense<0.000000e+00> : vector<8xf32>
    %1182 = vector.multi_reduction <add>, %1181, %cst_260 [1] : vector<8x32xf32> to vector<8xf32>
    %1183 = vector.shape_cast %1182 : vector<8xf32> to vector<8x1xf32>
    %cst_261 = arith.constant 3.200000e+01 : f32
    %1184 = vector.broadcast %cst_261 : f32 to vector<8x1xf32>
    %1185 = arith.divf %1183, %1184 : vector<8x1xf32>
    %1186 = vector.broadcast %1178 : vector<8x1xf32> to vector<8x32xf32>
    %1187 = arith.subf %1170, %1186 : vector<8x32xf32>
    %cst_262 = arith.constant 9.99999974E-6 : f32
    %1188 = vector.broadcast %cst_262 : f32 to vector<8x1xf32>
    %1189 = arith.addf %1185, %1188 : vector<8x1xf32>
    %1190 = math.rsqrt %1189 : vector<8x1xf32>
    %1191 = vector.broadcast %1190 : vector<8x1xf32> to vector<8x32xf32>
    %1192 = arith.mulf %1187, %1191 : vector<8x32xf32>
    %1193 = vector.broadcast %1172 : vector<1x32xf32> to vector<8x32xf32>
    %1194 = arith.mulf %1192, %1193 : vector<8x32xf32>
    %1195 = vector.broadcast %1174 : vector<1x32xf32> to vector<8x32xf32>
    %1196 = arith.addf %1194, %1195 : vector<8x32xf32>
    %c0_263 = arith.constant 0 : index
    %c0_264 = arith.constant 0 : index
    %c192 = arith.constant 192 : index
    %1197 = vector.load %arg5[%c0_263, %c0_264, %c192] : memref<2x32x384xf32, #tpu.memory_space<vmem>>, vector<1x32x64xf32>
    %1198 = vector.shape_cast %1197 : vector<1x32x64xf32> to vector<32x64xf32>
    %cst_265 = arith.constant dense<0.000000e+00> : vector<8x64xf32>
    %1199 = tpu.matmul %1196, %1198, %cst_265 {dimension_numbers = #tpu.dot_dimension_numbers<[1], [0], [0], [1], [0, 0, 1, 1], [], []>} : vector<8x32xf32>, vector<32x64xf32>, vector<8x64xf32> -> vector<8x64xf32>
    %c0_266 = arith.constant 0 : index
    %c0_267 = arith.constant 0 : index
    %c192_268 = arith.constant 192 : index
    %1200 = vector.load %arg7[%c0_266, %c0_267, %c192_268] : memref<2x1x608xf32, #tpu.memory_space<vmem>>, vector<1x1x64xf32>
    %1201 = vector.shape_cast %1200 : vector<1x1x64xf32> to vector<1x64xf32>
    %1202 = vector.broadcast %1201 : vector<1x64xf32> to vector<8x64xf32>
    %1203 = arith.addf %1199, %1202 : vector<8x64xf32>
    %cst_269 = arith.constant 0.000000e+00 : f32
    %1204 = vector.broadcast %cst_269 : f32 to vector<8x64xf32>
    %1205 = arith.maximumf %1203, %1204 : vector<8x64xf32>
    %c0_270 = arith.constant 0 : index
    %c0_271 = arith.constant 0 : index
    %c0_272 = arith.constant 0 : index
    %1206 = vector.load %arg6[%c0_270, %c0_271, %c0_272] : memref<2x64x32xf32, #tpu.memory_space<vmem>>, vector<1x64x32xf32>
    %1207 = vector.shape_cast %1206 : vector<1x64x32xf32> to vector<64x32xf32>
    %cst_273 = arith.constant dense<0.000000e+00> : vector<8x32xf32>
    %1208 = tpu.matmul %1205, %1207, %cst_273 {dimension_numbers = #tpu.dot_dimension_numbers<[1], [0], [0], [1], [0, 0, 1, 1], [], []>} : vector<8x64xf32>, vector<64x32xf32>, vector<8x32xf32> -> vector<8x32xf32>
    %c0_274 = arith.constant 0 : index
    %c0_275 = arith.constant 0 : index
    %c384 = arith.constant 384 : index
    %1209 = vector.load %arg7[%c0_274, %c0_275, %c384] : memref<2x1x608xf32, #tpu.memory_space<vmem>>, vector<1x1x32xf32>
    %1210 = vector.shape_cast %1209 : vector<1x1x32xf32> to vector<1x32xf32>
    %1211 = vector.broadcast %1210 : vector<1x32xf32> to vector<8x32xf32>
    %1212 = arith.addf %1208, %1211 : vector<8x32xf32>
    %1213 = arith.addf %1196, %1212 : vector<8x32xf32>
    %c0_276 = arith.constant 0 : index
    %c0_277 = arith.constant 0 : index
    %c544 = arith.constant 544 : index
    %1214 = vector.load %arg7[%c0_276, %c0_277, %c544] : memref<2x1x608xf32, #tpu.memory_space<vmem>>, vector<1x1x32xf32>
    %1215 = vector.shape_cast %1214 : vector<1x1x32xf32> to vector<1x32xf32>
    %c0_278 = arith.constant 0 : index
    %c0_279 = arith.constant 0 : index
    %c576 = arith.constant 576 : index
    %1216 = vector.load %arg7[%c0_278, %c0_279, %c576] : memref<2x1x608xf32, #tpu.memory_space<vmem>>, vector<1x1x32xf32>
    %1217 = vector.shape_cast %1216 : vector<1x1x32xf32> to vector<1x32xf32>
    %cst_280 = arith.constant dense<0.000000e+00> : vector<8xf32>
    %1218 = vector.multi_reduction <add>, %1213, %cst_280 [1] : vector<8x32xf32> to vector<8xf32>
    %1219 = vector.shape_cast %1218 : vector<8xf32> to vector<8x1xf32>
    %cst_281 = arith.constant 3.200000e+01 : f32
    %1220 = vector.broadcast %cst_281 : f32 to vector<8x1xf32>
    %1221 = arith.divf %1219, %1220 : vector<8x1xf32>
    %1222 = vector.broadcast %1221 : vector<8x1xf32> to vector<8x32xf32>
    %1223 = arith.subf %1213, %1222 : vector<8x32xf32>
    %1224 = arith.mulf %1223, %1223 : vector<8x32xf32>
    %cst_282 = arith.constant dense<0.000000e+00> : vector<8xf32>
    %1225 = vector.multi_reduction <add>, %1224, %cst_282 [1] : vector<8x32xf32> to vector<8xf32>
    %1226 = vector.shape_cast %1225 : vector<8xf32> to vector<8x1xf32>
    %cst_283 = arith.constant 3.200000e+01 : f32
    %1227 = vector.broadcast %cst_283 : f32 to vector<8x1xf32>
    %1228 = arith.divf %1226, %1227 : vector<8x1xf32>
    %1229 = vector.broadcast %1221 : vector<8x1xf32> to vector<8x32xf32>
    %1230 = arith.subf %1213, %1229 : vector<8x32xf32>
    %cst_284 = arith.constant 9.99999974E-6 : f32
    %1231 = vector.broadcast %cst_284 : f32 to vector<8x1xf32>
    %1232 = arith.addf %1228, %1231 : vector<8x1xf32>
    %1233 = math.rsqrt %1232 : vector<8x1xf32>
    %1234 = vector.broadcast %1233 : vector<8x1xf32> to vector<8x32xf32>
    %1235 = arith.mulf %1230, %1234 : vector<8x32xf32>
    %1236 = vector.broadcast %1215 : vector<1x32xf32> to vector<8x32xf32>
    %1237 = arith.mulf %1235, %1236 : vector<8x32xf32>
    %1238 = vector.broadcast %1217 : vector<1x32xf32> to vector<8x32xf32>
    %1239 = arith.addf %1237, %1238 : vector<8x32xf32>
    %c0_285 = arith.constant 0 : index
    %c0_286 = arith.constant 0 : index
    %c0_287 = arith.constant 0 : index
    %c0_288 = arith.constant 0 : index
    %1240 = vector.load %arg8[%c0_285, %c0_286, %c0_287, %c0_288] : memref<2x1x8x32xf32, #tpu.memory_space<vmem>>, vector<1x1x8x32xf32>
    %1241 = vector.shape_cast %1240 : vector<1x1x8x32xf32> to vector<8x32xf32>
    %1242 = vector.shape_cast %1239 : vector<8x32xf32> to vector<1x1x8x32xf32>
    tpu.vector_store %arg8[%c0_285, %c0_286, %c0_287, %c0_288], %1242 {strides = array<i32>} : memref<2x1x8x32xf32, #tpu.memory_space<vmem>>, vector<1x1x8x32xf32>,
    %1243 = arith.addf %1239, %3 : vector<8x32xf32>
    %c1 = arith.constant 1 : index
    %c0_289 = arith.constant 0 : index
    %c128_290 = arith.constant 128 : index
    %1244 = vector.load %arg5[%c1, %c0_289, %c128_290] : memref<2x32x384xf32, #tpu.memory_space<vmem>>, vector<1x32x64xf32>
    %1245 = vector.shape_cast %1244 : vector<1x32x64xf32> to vector<32x64xf32>
    %cst_291 = arith.constant dense<0.000000e+00> : vector<8x64xf32>
    %1246 = tpu.matmul %1243, %1245, %cst_291 {dimension_numbers = #tpu.dot_dimension_numbers<[1], [0], [0], [1], [0, 0, 1, 1], [], []>} : vector<8x32xf32>, vector<32x64xf32>, vector<8x64xf32> -> vector<8x64xf32>
    %c1_292 = arith.constant 1 : index
    %c0_293 = arith.constant 0 : index
    %c128_294 = arith.constant 128 : index
    %1247 = vector.load %arg7[%c1_292, %c0_293, %c128_294] : memref<2x1x608xf32, #tpu.memory_space<vmem>>, vector<1x1x64xf32>
    %1248 = vector.shape_cast %1247 : vector<1x1x64xf32> to vector<1x64xf32>
    %1249 = vector.broadcast %1248 : vector<1x64xf32> to vector<8x64xf32>
    %1250 = arith.addf %1246, %1249 : vector<8x64xf32>
    %c1_295 = arith.constant 1 : index
    %c0_296 = arith.constant 0 : index
    %c256_297 = arith.constant 256 : index
    %1251 = vector.load %arg5[%c1_295, %c0_296, %c256_297] : memref<2x32x384xf32, #tpu.memory_space<vmem>>, vector<1x32x32xf32>
    %1252 = vector.shape_cast %1251 : vector<1x32x32xf32> to vector<32x32xf32>
    %cst_298 = arith.constant dense<0.000000e+00> : vector<8x32xf32>
    %1253 = tpu.matmul %1239, %1252, %cst_298 {dimension_numbers = #tpu.dot_dimension_numbers<[1], [0], [0], [1], [0, 0, 1, 1], [], []>} : vector<8x32xf32>, vector<32x32xf32>, vector<8x32xf32> -> vector<8x32xf32>
    %c1_299 = arith.constant 1 : index
    %c0_300 = arith.constant 0 : index
    %c256_301 = arith.constant 256 : index
    %1254 = vector.load %arg7[%c1_299, %c0_300, %c256_301] : memref<2x1x608xf32, #tpu.memory_space<vmem>>, vector<1x1x32xf32>
    %1255 = vector.shape_cast %1254 : vector<1x1x32xf32> to vector<1x32xf32>
    %1256 = vector.broadcast %1255 : vector<1x32xf32> to vector<8x32xf32>
    %1257 = arith.addf %1253, %1256 : vector<8x32xf32>
    %1258 = vector.extract_strided_slice %1250 {offsets = [0, 0], sizes = [8, 8], strides = [1, 1]} : vector<8x64xf32> to vector<8x8xf32>
    %1259 = vector.extract_strided_slice %1250 {offsets = [0, 32], sizes = [8, 8], strides = [1, 1]} : vector<8x64xf32> to vector<8x8xf32>
    %cst_302 = arith.constant dense<0.000000e+00> : vector<8x8xf32>
    %1260 = tpu.matmul %1258, %1259, %cst_302 {dimension_numbers = #tpu.dot_dimension_numbers<[1], [1], [0], [0], [0, 0, 1, 0], [], []>} : vector<8x8xf32>, vector<8x8xf32>, vector<8x8xf32> -> vector<8x8xf32>
    %1261 = vector.extract_strided_slice %1250 {offsets = [0, 8], sizes = [8, 8], strides = [1, 1]} : vector<8x64xf32> to vector<8x8xf32>
    %1262 = vector.extract_strided_slice %1250 {offsets = [0, 40], sizes = [8, 8], strides = [1, 1]} : vector<8x64xf32> to vector<8x8xf32>
    %cst_303 = arith.constant dense<0.000000e+00> : vector<8x8xf32>
    %1263 = tpu.matmul %1261, %1262, %cst_303 {dimension_numbers = #tpu.dot_dimension_numbers<[1], [1], [0], [0], [0, 0, 1, 0], [], []>} : vector<8x8xf32>, vector<8x8xf32>, vector<8x8xf32> -> vector<8x8xf32>
    %1264 = vector.extract_strided_slice %1250 {offsets = [0, 16], sizes = [8, 8], strides = [1, 1]} : vector<8x64xf32> to vector<8x8xf32>
    %1265 = vector.extract_strided_slice %1250 {offsets = [0, 48], sizes = [8, 8], strides = [1, 1]} : vector<8x64xf32> to vector<8x8xf32>
    %cst_304 = arith.constant dense<0.000000e+00> : vector<8x8xf32>
    %1266 = tpu.matmul %1264, %1265, %cst_304 {dimension_numbers = #tpu.dot_dimension_numbers<[1], [1], [0], [0], [0, 0, 1, 0], [], []>} : vector<8x8xf32>, vector<8x8xf32>, vector<8x8xf32> -> vector<8x8xf32>
    %1267 = vector.extract_strided_slice %1250 {offsets = [0, 24], sizes = [8, 8], strides = [1, 1]} : vector<8x64xf32> to vector<8x8xf32>
    %1268 = vector.extract_strided_slice %1250 {offsets = [0, 56], sizes = [8, 8], strides = [1, 1]} : vector<8x64xf32> to vector<8x8xf32>
    %cst_305 = arith.constant dense<0.000000e+00> : vector<8x8xf32>
    %1269 = tpu.matmul %1267, %1268, %cst_305 {dimension_numbers = #tpu.dot_dimension_numbers<[1], [1], [0], [0], [0, 0, 1, 0], [], []>} : vector<8x8xf32>, vector<8x8xf32>, vector<8x8xf32> -> vector<8x8xf32>
    %1270 = tpu.concatenate %1260, %1263, %1266, %1269 in 0 : vector<8x8xf32>, vector<8x8xf32>, vector<8x8xf32>, vector<8x8xf32> -> vector<32x8xf32>
    %cst_306 = arith.constant dense<0xFF800000> : vector<32xf32>
    %1271 = vector.multi_reduction <maximumf>, %1270, %cst_306 [1] : vector<32x8xf32> to vector<32xf32>
    %1272 = vector.shape_cast %1271 : vector<32xf32> to vector<32x1xf32>
    %1273 = vector.broadcast %1272 : vector<32x1xf32> to vector<32x8xf32>
    %1274 = arith.subf %1270, %1273 : vector<32x8xf32>
    %1275 = math.exp %1274 : vector<32x8xf32>
    %cst_307 = arith.constant dense<0.000000e+00> : vector<32xf32>
    %1276 = vector.multi_reduction <add>, %1275, %cst_307 [1] : vector<32x8xf32> to vector<32xf32>
    %1277 = vector.shape_cast %1276 : vector<32xf32> to vector<32x1xf32>
    %1278 = tpu.reciprocal %1277 {approx = true} : vector<32x1xf32> -> vector<32x1xf32>
    %1279 = vector.broadcast %1278 : vector<32x1xf32> to vector<32x8xf32>
    %1280 = arith.mulf %1275, %1279 : vector<32x8xf32>
    %1281 = vector.extract_strided_slice %1280 {offsets = [0, 0], sizes = [8, 8], strides = [1, 1]} : vector<32x8xf32> to vector<8x8xf32>
    %1282 = vector.extract_strided_slice %1257 {offsets = [0, 0], sizes = [8, 8], strides = [1, 1]} : vector<8x32xf32> to vector<8x8xf32>
    %cst_308 = arith.constant dense<0.000000e+00> : vector<8x8xf32>
    %1283 = tpu.matmul %1281, %1282, %cst_308 {dimension_numbers = #tpu.dot_dimension_numbers<[1], [0], [0], [1], [0, 0, 1, 1], [], []>} : vector<8x8xf32>, vector<8x8xf32>, vector<8x8xf32> -> vector<8x8xf32>
    %1284 = vector.extract_strided_slice %1280 {offsets = [8, 0], sizes = [8, 8], strides = [1, 1]} : vector<32x8xf32> to vector<8x8xf32>
    %1285 = vector.extract_strided_slice %1257 {offsets = [0, 8], sizes = [8, 8], strides = [1, 1]} : vector<8x32xf32> to vector<8x8xf32>
    %cst_309 = arith.constant dense<0.000000e+00> : vector<8x8xf32>
    %1286 = tpu.matmul %1284, %1285, %cst_309 {dimension_numbers = #tpu.dot_dimension_numbers<[1], [0], [0], [1], [0, 0, 1, 1], [], []>} : vector<8x8xf32>, vector<8x8xf32>, vector<8x8xf32> -> vector<8x8xf32>
    %1287 = vector.extract_strided_slice %1280 {offsets = [16, 0], sizes = [8, 8], strides = [1, 1]} : vector<32x8xf32> to vector<8x8xf32>
    %1288 = vector.extract_strided_slice %1257 {offsets = [0, 16], sizes = [8, 8], strides = [1, 1]} : vector<8x32xf32> to vector<8x8xf32>
    %cst_310 = arith.constant dense<0.000000e+00> : vector<8x8xf32>
    %1289 = tpu.matmul %1287, %1288, %cst_310 {dimension_numbers = #tpu.dot_dimension_numbers<[1], [0], [0], [1], [0, 0, 1, 1], [], []>} : vector<8x8xf32>, vector<8x8xf32>, vector<8x8xf32> -> vector<8x8xf32>
    %1290 = vector.extract_strided_slice %1280 {offsets = [24, 0], sizes = [8, 8], strides = [1, 1]} : vector<32x8xf32> to vector<8x8xf32>
    %1291 = vector.extract_strided_slice %1257 {offsets = [0, 24], sizes = [8, 8], strides = [1, 1]} : vector<8x32xf32> to vector<8x8xf32>
    %cst_311 = arith.constant dense<0.000000e+00> : vector<8x8xf32>
    %1292 = tpu.matmul %1290, %1291, %cst_311 {dimension_numbers = #tpu.dot_dimension_numbers<[1], [0], [0], [1], [0, 0, 1, 1], [], []>} : vector<8x8xf32>, vector<8x8xf32>, vector<8x8xf32> -> vector<8x8xf32>
    %1293 = tpu.concatenate %1283, %1286, %1289, %1292 in 1 : vector<8x8xf32>, vector<8x8xf32>, vector<8x8xf32>, vector<8x8xf32> -> vector<8x32xf32>
    %c1_312 = arith.constant 1 : index
    %c0_313 = arith.constant 0 : index
    %c288_314 = arith.constant 288 : index
    %1294 = vector.load %arg5[%c1_312, %c0_313, %c288_314] : memref<2x32x384xf32, #tpu.memory_space<vmem>>, vector<1x32x32xf32>
    %1295 = vector.shape_cast %1294 : vector<1x32x32xf32> to vector<32x32xf32>
    %cst_315 = arith.constant dense<0.000000e+00> : vector<8x32xf32>
    %1296 = tpu.matmul %1293, %1295, %cst_315 {dimension_numbers = #tpu.dot_dimension_numbers<[1], [0], [0], [1], [0, 0, 1, 1], [], []>} : vector<8x32xf32>, vector<32x32xf32>, vector<8x32xf32> -> vector<8x32xf32>
    %c1_316 = arith.constant 1 : index
    %c0_317 = arith.constant 0 : index
    %c288_318 = arith.constant 288 : index
    %1297 = vector.load %arg7[%c1_316, %c0_317, %c288_318] : memref<2x1x608xf32, #tpu.memory_space<vmem>>, vector<1x1x32xf32>
    %1298 = vector.shape_cast %1297 : vector<1x1x32xf32> to vector<1x32xf32>
    %1299 = vector.broadcast %1298 : vector<1x32xf32> to vector<8x32xf32>
    %1300 = arith.addf %1296, %1299 : vector<8x32xf32>
    %1301 = arith.addf %1239, %1300 : vector<8x32xf32>
    %c1_319 = arith.constant 1 : index
    %c0_320 = arith.constant 0 : index
    %c416_321 = arith.constant 416 : index
    %1302 = vector.load %arg7[%c1_319, %c0_320, %c416_321] : memref<2x1x608xf32, #tpu.memory_space<vmem>>, vector<1x1x32xf32>
    %1303 = vector.shape_cast %1302 : vector<1x1x32xf32> to vector<1x32xf32>
    %c1_322 = arith.constant 1 : index
    %c0_323 = arith.constant 0 : index
    %c448_324 = arith.constant 448 : index
    %1304 = vector.load %arg7[%c1_322, %c0_323, %c448_324] : memref<2x1x608xf32, #tpu.memory_space<vmem>>, vector<1x1x32xf32>
    %1305 = vector.shape_cast %1304 : vector<1x1x32xf32> to vector<1x32xf32>
    %cst_325 = arith.constant dense<0.000000e+00> : vector<8xf32>
    %1306 = vector.multi_reduction <add>, %1301, %cst_325 [1] : vector<8x32xf32> to vector<8xf32>
    %1307 = vector.shape_cast %1306 : vector<8xf32> to vector<8x1xf32>
    %cst_326 = arith.constant 3.200000e+01 : f32
    %1308 = vector.broadcast %cst_326 : f32 to vector<8x1xf32>
    %1309 = arith.divf %1307, %1308 : vector<8x1xf32>
    %1310 = vector.broadcast %1309 : vector<8x1xf32> to vector<8x32xf32>
    %1311 = arith.subf %1301, %1310 : vector<8x32xf32>
    %1312 = arith.mulf %1311, %1311 : vector<8x32xf32>
    %cst_327 = arith.constant dense<0.000000e+00> : vector<8xf32>
    %1313 = vector.multi_reduction <add>, %1312, %cst_327 [1] : vector<8x32xf32> to vector<8xf32>
    %1314 = vector.shape_cast %1313 : vector<8xf32> to vector<8x1xf32>
    %cst_328 = arith.constant 3.200000e+01 : f32
    %1315 = vector.broadcast %cst_328 : f32 to vector<8x1xf32>
    %1316 = arith.divf %1314, %1315 : vector<8x1xf32>
    %1317 = vector.broadcast %1309 : vector<8x1xf32> to vector<8x32xf32>
    %1318 = arith.subf %1301, %1317 : vector<8x32xf32>
    %cst_329 = arith.constant 9.99999974E-6 : f32
    %1319 = vector.broadcast %cst_329 : f32 to vector<8x1xf32>
    %1320 = arith.addf %1316, %1319 : vector<8x1xf32>
    %1321 = math.rsqrt %1320 : vector<8x1xf32>
    %1322 = vector.broadcast %1321 : vector<8x1xf32> to vector<8x32xf32>
    %1323 = arith.mulf %1318, %1322 : vector<8x32xf32>
    %1324 = vector.broadcast %1303 : vector<1x32xf32> to vector<8x32xf32>
    %1325 = arith.mulf %1323, %1324 : vector<8x32xf32>
    %1326 = vector.broadcast %1305 : vector<1x32xf32> to vector<8x32xf32>
    %1327 = arith.addf %1325, %1326 : vector<8x32xf32>
    %1328 = arith.addf %1327, %3 : vector<8x32xf32>
    %c1_330 = arith.constant 1 : index
    %c0_331 = arith.constant 0 : index
    %c320_332 = arith.constant 320 : index
    %1329 = vector.load %arg5[%c1_330, %c0_331, %c320_332] : memref<2x32x384xf32, #tpu.memory_space<vmem>>, vector<1x32x32xf32>
    %1330 = vector.shape_cast %1329 : vector<1x32x32xf32> to vector<32x32xf32>
    %cst_333 = arith.constant dense<0.000000e+00> : vector<64x32xf32>
    %1331 = tpu.matmul %5, %1330, %cst_333 {dimension_numbers = #tpu.dot_dimension_numbers<[1], [0], [0], [1], [0, 0, 1, 1], [], []>} : vector<64x32xf32>, vector<32x32xf32>, vector<64x32xf32> -> vector<64x32xf32>
    %c1_334 = arith.constant 1 : index
    %c0_335 = arith.constant 0 : index
    %c320_336 = arith.constant 320 : index
    %1332 = vector.load %arg7[%c1_334, %c0_335, %c320_336] : memref<2x1x608xf32, #tpu.memory_space<vmem>>, vector<1x1x32xf32>
    %1333 = vector.shape_cast %1332 : vector<1x1x32xf32> to vector<1x32xf32>
    %1334 = vector.broadcast %1333 : vector<1x32xf32> to vector<64x32xf32>
    %1335 = arith.addf %1331, %1334 : vector<64x32xf32>
    %c1_337 = arith.constant 1 : index
    %c0_338 = arith.constant 0 : index
    %c0_339 = arith.constant 0 : index
    %1336 = vector.load %arg5[%c1_337, %c0_338, %c0_339] : memref<2x32x384xf32, #tpu.memory_space<vmem>>, vector<1x32x128xf32>
    %1337 = vector.shape_cast %1336 : vector<1x32x128xf32> to vector<32x128xf32>
    %cst_340 = arith.constant dense<0.000000e+00> : vector<8x128xf32>
    %1338 = tpu.matmul %1328, %1337, %cst_340 {dimension_numbers = #tpu.dot_dimension_numbers<[1], [0], [0], [1], [0, 0, 1, 1], [], []>} : vector<8x32xf32>, vector<32x128xf32>, vector<8x128xf32> -> vector<8x128xf32>
    %c1_341 = arith.constant 1 : index
    %c0_342 = arith.constant 0 : index
    %c0_343 = arith.constant 0 : index
    %1339 = vector.load %arg7[%c1_341, %c0_342, %c0_343] : memref<2x1x608xf32, #tpu.memory_space<vmem>>, vector<1x1x128xf32>
    %1340 = vector.shape_cast %1339 : vector<1x1x128xf32> to vector<1x128xf32>
    %1341 = vector.broadcast %1340 : vector<1x128xf32> to vector<8x128xf32>
    %1342 = arith.addf %1338, %1341 : vector<8x128xf32>
    %1343 = vector.extract_strided_slice %1342 {offsets = [0, 0], sizes = [8, 16], strides = [1, 1]} : vector<8x128xf32> to vector<8x16xf32>
    %1344 = vector.extract_strided_slice %1342 {offsets = [0, 64], sizes = [8, 16], strides = [1, 1]} : vector<8x128xf32> to vector<8x16xf32>
    %cst_344 = arith.constant dense<0xFF800000> : vector<8xf32>
    %1345 = vector.multi_reduction <maximumf>, %1344, %cst_344 [1] : vector<8x16xf32> to vector<8xf32>
    %1346 = vector.shape_cast %1345 : vector<8xf32> to vector<8x1xf32>
    %1347 = vector.broadcast %1346 : vector<8x1xf32> to vector<8x16xf32>
    %1348 = arith.subf %1344, %1347 : vector<8x16xf32>
    %1349 = math.exp %1348 : vector<8x16xf32>
    %cst_345 = arith.constant dense<0.000000e+00> : vector<8xf32>
    %1350 = vector.multi_reduction <add>, %1349, %cst_345 [1] : vector<8x16xf32> to vector<8xf32>
    %1351 = vector.shape_cast %1350 : vector<8xf32> to vector<8x1xf32>
    %1352 = tpu.reciprocal %1351 {approx = true} : vector<8x1xf32> -> vector<8x1xf32>
    %1353 = vector.broadcast %1352 : vector<8x1xf32> to vector<8x16xf32>
    %1354 = arith.mulf %1349, %1353 : vector<8x16xf32>
    %1355 = vector.extract_strided_slice %9 {offsets = [0, 0], sizes = [1, 32], strides = [1, 1]} : vector<1x64xf32> to vector<1x32xf32>
    %1356 = vector.extract_strided_slice %7 {offsets = [0, 0], sizes = [8, 1], strides = [1, 1]} : vector<8x4xf32> to vector<8x1xf32>
    %cst_346 = arith.constant 3.200000e+01 : f32
    %1357 = vector.broadcast %cst_346 : f32 to vector<8x1xf32>
    %1358 = arith.mulf %1356, %1357 : vector<8x1xf32>
    %1359 = vector.extract_strided_slice %1343 {offsets = [0, 0], sizes = [8, 4], strides = [1, 1]} : vector<8x16xf32> to vector<8x4xf32>
    %1360 = vector.broadcast %1358 : vector<8x1xf32> to vector<8x4xf32>
    %1361 = arith.addf %1360, %1359 : vector<8x4xf32>
    %cst_347 = arith.constant 5.000000e-01 : f32
    %1362 = vector.broadcast %cst_347 : f32 to vector<8x4xf32>
    %1363 = arith.subf %1361, %1362 : vector<8x4xf32>
    %cst_348 = arith.constant 0.000000e+00 : f32
    %1364 = vector.broadcast %cst_348 : f32 to vector<8x32xf32>
    %1365 = vector.extract_strided_slice %1363 {offsets = [0, 0], sizes = [8, 1], strides = [1, 1]} : vector<8x4xf32> to vector<8x1xf32>
    %1366 = vector.extract_strided_slice %1354 {offsets = [0, 0], sizes = [8, 1], strides = [1, 1]} : vector<8x16xf32> to vector<8x1xf32>
    %1367 = vector.broadcast %1355 : vector<1x32xf32> to vector<8x32xf32>
    %1368 = vector.broadcast %1365 : vector<8x1xf32> to vector<8x32xf32>
    %1369 = arith.subf %1367, %1368 : vector<8x32xf32>
    %1370 = math.absf %1369 : vector<8x32xf32>
    %cst_349 = arith.constant 1.000000e+00 : f32
    %1371 = vector.broadcast %cst_349 : f32 to vector<8x32xf32>
    %1372 = arith.subf %1371, %1370 : vector<8x32xf32>
    %cst_350 = arith.constant 0.000000e+00 : f32
    %1373 = vector.broadcast %cst_350 : f32 to vector<8x32xf32>
    %1374 = arith.maximumf %1372, %1373 : vector<8x32xf32>
    %1375 = vector.broadcast %1366 : vector<8x1xf32> to vector<8x32xf32>
    %1376 = arith.mulf %1374, %1375 : vector<8x32xf32>
    %1377 = arith.addf %1364, %1376 : vector<8x32xf32>
    %1378 = vector.extract_strided_slice %1363 {offsets = [0, 1], sizes = [8, 1], strides = [1, 1]} : vector<8x4xf32> to vector<8x1xf32>
    %1379 = vector.extract_strided_slice %1354 {offsets = [0, 1], sizes = [8, 1], strides = [1, 1]} : vector<8x16xf32> to vector<8x1xf32>
    %1380 = vector.broadcast %1355 : vector<1x32xf32> to vector<8x32xf32>
    %1381 = vector.broadcast %1378 : vector<8x1xf32> to vector<8x32xf32>
    %1382 = arith.subf %1380, %1381 : vector<8x32xf32>
    %1383 = math.absf %1382 : vector<8x32xf32>
    %cst_351 = arith.constant 1.000000e+00 : f32
    %1384 = vector.broadcast %cst_351 : f32 to vector<8x32xf32>
    %1385 = arith.subf %1384, %1383 : vector<8x32xf32>
    %cst_352 = arith.constant 0.000000e+00 : f32
    %1386 = vector.broadcast %cst_352 : f32 to vector<8x32xf32>
    %1387 = arith.maximumf %1385, %1386 : vector<8x32xf32>
    %1388 = vector.broadcast %1379 : vector<8x1xf32> to vector<8x32xf32>
    %1389 = arith.mulf %1387, %1388 : vector<8x32xf32>
    %1390 = arith.addf %1377, %1389 : vector<8x32xf32>
    %1391 = vector.extract_strided_slice %1363 {offsets = [0, 2], sizes = [8, 1], strides = [1, 1]} : vector<8x4xf32> to vector<8x1xf32>
    %1392 = vector.extract_strided_slice %1354 {offsets = [0, 2], sizes = [8, 1], strides = [1, 1]} : vector<8x16xf32> to vector<8x1xf32>
    %1393 = vector.broadcast %1355 : vector<1x32xf32> to vector<8x32xf32>
    %1394 = vector.broadcast %1391 : vector<8x1xf32> to vector<8x32xf32>
    %1395 = arith.subf %1393, %1394 : vector<8x32xf32>
    %1396 = math.absf %1395 : vector<8x32xf32>
    %cst_353 = arith.constant 1.000000e+00 : f32
    %1397 = vector.broadcast %cst_353 : f32 to vector<8x32xf32>
    %1398 = arith.subf %1397, %1396 : vector<8x32xf32>
    %cst_354 = arith.constant 0.000000e+00 : f32
    %1399 = vector.broadcast %cst_354 : f32 to vector<8x32xf32>
    %1400 = arith.maximumf %1398, %1399 : vector<8x32xf32>
    %1401 = vector.broadcast %1392 : vector<8x1xf32> to vector<8x32xf32>
    %1402 = arith.mulf %1400, %1401 : vector<8x32xf32>
    %1403 = arith.addf %1390, %1402 : vector<8x32xf32>
    %1404 = vector.extract_strided_slice %1363 {offsets = [0, 3], sizes = [8, 1], strides = [1, 1]} : vector<8x4xf32> to vector<8x1xf32>
    %1405 = vector.extract_strided_slice %1354 {offsets = [0, 3], sizes = [8, 1], strides = [1, 1]} : vector<8x16xf32> to vector<8x1xf32>
    %1406 = vector.broadcast %1355 : vector<1x32xf32> to vector<8x32xf32>
    %1407 = vector.broadcast %1404 : vector<8x1xf32> to vector<8x32xf32>
    %1408 = arith.subf %1406, %1407 : vector<8x32xf32>
    %1409 = math.absf %1408 : vector<8x32xf32>
    %cst_355 = arith.constant 1.000000e+00 : f32
    %1410 = vector.broadcast %cst_355 : f32 to vector<8x32xf32>
    %1411 = arith.subf %1410, %1409 : vector<8x32xf32>
    %cst_356 = arith.constant 0.000000e+00 : f32
    %1412 = vector.broadcast %cst_356 : f32 to vector<8x32xf32>
    %1413 = arith.maximumf %1411, %1412 : vector<8x32xf32>
    %1414 = vector.broadcast %1405 : vector<8x1xf32> to vector<8x32xf32>
    %1415 = arith.mulf %1413, %1414 : vector<8x32xf32>
    %1416 = arith.addf %1403, %1415 : vector<8x32xf32>
    %1417 = vector.extract_strided_slice %9 {offsets = [0, 0], sizes = [1, 16], strides = [1, 1]} : vector<1x64xf32> to vector<1x16xf32>
    %1418 = vector.extract_strided_slice %7 {offsets = [0, 1], sizes = [8, 1], strides = [1, 1]} : vector<8x4xf32> to vector<8x1xf32>
    %cst_357 = arith.constant 1.600000e+01 : f32
    %1419 = vector.broadcast %cst_357 : f32 to vector<8x1xf32>
    %1420 = arith.mulf %1418, %1419 : vector<8x1xf32>
    %1421 = vector.extract_strided_slice %1343 {offsets = [0, 4], sizes = [8, 4], strides = [1, 1]} : vector<8x16xf32> to vector<8x4xf32>
    %1422 = vector.broadcast %1420 : vector<8x1xf32> to vector<8x4xf32>
    %1423 = arith.addf %1422, %1421 : vector<8x4xf32>
    %cst_358 = arith.constant 5.000000e-01 : f32
    %1424 = vector.broadcast %cst_358 : f32 to vector<8x4xf32>
    %1425 = arith.subf %1423, %1424 : vector<8x4xf32>
    %cst_359 = arith.constant 0.000000e+00 : f32
    %1426 = vector.broadcast %cst_359 : f32 to vector<8x16xf32>
    %1427 = vector.extract_strided_slice %1425 {offsets = [0, 0], sizes = [8, 1], strides = [1, 1]} : vector<8x4xf32> to vector<8x1xf32>
    %1428 = vector.extract_strided_slice %1354 {offsets = [0, 4], sizes = [8, 1], strides = [1, 1]} : vector<8x16xf32> to vector<8x1xf32>
    %1429 = vector.broadcast %1417 : vector<1x16xf32> to vector<8x16xf32>
    %1430 = vector.broadcast %1427 : vector<8x1xf32> to vector<8x16xf32>
    %1431 = arith.subf %1429, %1430 : vector<8x16xf32>
    %1432 = math.absf %1431 : vector<8x16xf32>
    %cst_360 = arith.constant 1.000000e+00 : f32
    %1433 = vector.broadcast %cst_360 : f32 to vector<8x16xf32>
    %1434 = arith.subf %1433, %1432 : vector<8x16xf32>
    %cst_361 = arith.constant 0.000000e+00 : f32
    %1435 = vector.broadcast %cst_361 : f32 to vector<8x16xf32>
    %1436 = arith.maximumf %1434, %1435 : vector<8x16xf32>
    %1437 = vector.broadcast %1428 : vector<8x1xf32> to vector<8x16xf32>
    %1438 = arith.mulf %1436, %1437 : vector<8x16xf32>
    %1439 = arith.addf %1426, %1438 : vector<8x16xf32>
    %1440 = vector.extract_strided_slice %1425 {offsets = [0, 1], sizes = [8, 1], strides = [1, 1]} : vector<8x4xf32> to vector<8x1xf32>
    %1441 = vector.extract_strided_slice %1354 {offsets = [0, 5], sizes = [8, 1], strides = [1, 1]} : vector<8x16xf32> to vector<8x1xf32>
    %1442 = vector.broadcast %1417 : vector<1x16xf32> to vector<8x16xf32>
    %1443 = vector.broadcast %1440 : vector<8x1xf32> to vector<8x16xf32>
    %1444 = arith.subf %1442, %1443 : vector<8x16xf32>
    %1445 = math.absf %1444 : vector<8x16xf32>
    %cst_362 = arith.constant 1.000000e+00 : f32
    %1446 = vector.broadcast %cst_362 : f32 to vector<8x16xf32>
    %1447 = arith.subf %1446, %1445 : vector<8x16xf32>
    %cst_363 = arith.constant 0.000000e+00 : f32
    %1448 = vector.broadcast %cst_363 : f32 to vector<8x16xf32>
    %1449 = arith.maximumf %1447, %1448 : vector<8x16xf32>
    %1450 = vector.broadcast %1441 : vector<8x1xf32> to vector<8x16xf32>
    %1451 = arith.mulf %1449, %1450 : vector<8x16xf32>
    %1452 = arith.addf %1439, %1451 : vector<8x16xf32>
    %1453 = vector.extract_strided_slice %1425 {offsets = [0, 2], sizes = [8, 1], strides = [1, 1]} : vector<8x4xf32> to vector<8x1xf32>
    %1454 = vector.extract_strided_slice %1354 {offsets = [0, 6], sizes = [8, 1], strides = [1, 1]} : vector<8x16xf32> to vector<8x1xf32>
    %1455 = vector.broadcast %1417 : vector<1x16xf32> to vector<8x16xf32>
    %1456 = vector.broadcast %1453 : vector<8x1xf32> to vector<8x16xf32>
    %1457 = arith.subf %1455, %1456 : vector<8x16xf32>
    %1458 = math.absf %1457 : vector<8x16xf32>
    %cst_364 = arith.constant 1.000000e+00 : f32
    %1459 = vector.broadcast %cst_364 : f32 to vector<8x16xf32>
    %1460 = arith.subf %1459, %1458 : vector<8x16xf32>
    %cst_365 = arith.constant 0.000000e+00 : f32
    %1461 = vector.broadcast %cst_365 : f32 to vector<8x16xf32>
    %1462 = arith.maximumf %1460, %1461 : vector<8x16xf32>
    %1463 = vector.broadcast %1454 : vector<8x1xf32> to vector<8x16xf32>
    %1464 = arith.mulf %1462, %1463 : vector<8x16xf32>
    %1465 = arith.addf %1452, %1464 : vector<8x16xf32>
    %1466 = vector.extract_strided_slice %1425 {offsets = [0, 3], sizes = [8, 1], strides = [1, 1]} : vector<8x4xf32> to vector<8x1xf32>
    %1467 = vector.extract_strided_slice %1354 {offsets = [0, 7], sizes = [8, 1], strides = [1, 1]} : vector<8x16xf32> to vector<8x1xf32>
    %1468 = vector.broadcast %1417 : vector<1x16xf32> to vector<8x16xf32>
    %1469 = vector.broadcast %1466 : vector<8x1xf32> to vector<8x16xf32>
    %1470 = arith.subf %1468, %1469 : vector<8x16xf32>
    %1471 = math.absf %1470 : vector<8x16xf32>
    %cst_366 = arith.constant 1.000000e+00 : f32
    %1472 = vector.broadcast %cst_366 : f32 to vector<8x16xf32>
    %1473 = arith.subf %1472, %1471 : vector<8x16xf32>
    %cst_367 = arith.constant 0.000000e+00 : f32
    %1474 = vector.broadcast %cst_367 : f32 to vector<8x16xf32>
    %1475 = arith.maximumf %1473, %1474 : vector<8x16xf32>
    %1476 = vector.broadcast %1467 : vector<8x1xf32> to vector<8x16xf32>
    %1477 = arith.mulf %1475, %1476 : vector<8x16xf32>
    %1478 = arith.addf %1465, %1477 : vector<8x16xf32>
    %1479 = vector.extract_strided_slice %9 {offsets = [0, 0], sizes = [1, 8], strides = [1, 1]} : vector<1x64xf32> to vector<1x8xf32>
    %1480 = vector.extract_strided_slice %7 {offsets = [0, 2], sizes = [8, 1], strides = [1, 1]} : vector<8x4xf32> to vector<8x1xf32>
    %cst_368 = arith.constant 8.000000e+00 : f32
    %1481 = vector.broadcast %cst_368 : f32 to vector<8x1xf32>
    %1482 = arith.mulf %1480, %1481 : vector<8x1xf32>
    %1483 = vector.extract_strided_slice %1343 {offsets = [0, 8], sizes = [8, 4], strides = [1, 1]} : vector<8x16xf32> to vector<8x4xf32>
    %1484 = vector.broadcast %1482 : vector<8x1xf32> to vector<8x4xf32>
    %1485 = arith.addf %1484, %1483 : vector<8x4xf32>
    %cst_369 = arith.constant 5.000000e-01 : f32
    %1486 = vector.broadcast %cst_369 : f32 to vector<8x4xf32>
    %1487 = arith.subf %1485, %1486 : vector<8x4xf32>
    %cst_370 = arith.constant 0.000000e+00 : f32
    %1488 = vector.broadcast %cst_370 : f32 to vector<8x8xf32>
    %1489 = vector.extract_strided_slice %1487 {offsets = [0, 0], sizes = [8, 1], strides = [1, 1]} : vector<8x4xf32> to vector<8x1xf32>
    %1490 = vector.extract_strided_slice %1354 {offsets = [0, 8], sizes = [8, 1], strides = [1, 1]} : vector<8x16xf32> to vector<8x1xf32>
    %1491 = vector.broadcast %1479 : vector<1x8xf32> to vector<8x8xf32>
    %1492 = vector.broadcast %1489 : vector<8x1xf32> to vector<8x8xf32>
    %1493 = arith.subf %1491, %1492 : vector<8x8xf32>
    %1494 = math.absf %1493 : vector<8x8xf32>
    %cst_371 = arith.constant 1.000000e+00 : f32
    %1495 = vector.broadcast %cst_371 : f32 to vector<8x8xf32>
    %1496 = arith.subf %1495, %1494 : vector<8x8xf32>
    %cst_372 = arith.constant 0.000000e+00 : f32
    %1497 = vector.broadcast %cst_372 : f32 to vector<8x8xf32>
    %1498 = arith.maximumf %1496, %1497 : vector<8x8xf32>
    %1499 = vector.broadcast %1490 : vector<8x1xf32> to vector<8x8xf32>
    %1500 = arith.mulf %1498, %1499 : vector<8x8xf32>
    %1501 = arith.addf %1488, %1500 : vector<8x8xf32>
    %1502 = vector.extract_strided_slice %1487 {offsets = [0, 1], sizes = [8, 1], strides = [1, 1]} : vector<8x4xf32> to vector<8x1xf32>
    %1503 = vector.extract_strided_slice %1354 {offsets = [0, 9], sizes = [8, 1], strides = [1, 1]} : vector<8x16xf32> to vector<8x1xf32>
    %1504 = vector.broadcast %1479 : vector<1x8xf32> to vector<8x8xf32>
    %1505 = vector.broadcast %1502 : vector<8x1xf32> to vector<8x8xf32>
    %1506 = arith.subf %1504, %1505 : vector<8x8xf32>
    %1507 = math.absf %1506 : vector<8x8xf32>
    %cst_373 = arith.constant 1.000000e+00 : f32
    %1508 = vector.broadcast %cst_373 : f32 to vector<8x8xf32>
    %1509 = arith.subf %1508, %1507 : vector<8x8xf32>
    %cst_374 = arith.constant 0.000000e+00 : f32
    %1510 = vector.broadcast %cst_374 : f32 to vector<8x8xf32>
    %1511 = arith.maximumf %1509, %1510 : vector<8x8xf32>
    %1512 = vector.broadcast %1503 : vector<8x1xf32> to vector<8x8xf32>
    %1513 = arith.mulf %1511, %1512 : vector<8x8xf32>
    %1514 = arith.addf %1501, %1513 : vector<8x8xf32>
    %1515 = vector.extract_strided_slice %1487 {offsets = [0, 2], sizes = [8, 1], strides = [1, 1]} : vector<8x4xf32> to vector<8x1xf32>
    %1516 = vector.extract_strided_slice %1354 {offsets = [0, 10], sizes = [8, 1], strides = [1, 1]} : vector<8x16xf32> to vector<8x1xf32>
    %1517 = vector.broadcast %1479 : vector<1x8xf32> to vector<8x8xf32>
    %1518 = vector.broadcast %1515 : vector<8x1xf32> to vector<8x8xf32>
    %1519 = arith.subf %1517, %1518 : vector<8x8xf32>
    %1520 = math.absf %1519 : vector<8x8xf32>
    %cst_375 = arith.constant 1.000000e+00 : f32
    %1521 = vector.broadcast %cst_375 : f32 to vector<8x8xf32>
    %1522 = arith.subf %1521, %1520 : vector<8x8xf32>
    %cst_376 = arith.constant 0.000000e+00 : f32
    %1523 = vector.broadcast %cst_376 : f32 to vector<8x8xf32>
    %1524 = arith.maximumf %1522, %1523 : vector<8x8xf32>
    %1525 = vector.broadcast %1516 : vector<8x1xf32> to vector<8x8xf32>
    %1526 = arith.mulf %1524, %1525 : vector<8x8xf32>
    %1527 = arith.addf %1514, %1526 : vector<8x8xf32>
    %1528 = vector.extract_strided_slice %1487 {offsets = [0, 3], sizes = [8, 1], strides = [1, 1]} : vector<8x4xf32> to vector<8x1xf32>
    %1529 = vector.extract_strided_slice %1354 {offsets = [0, 11], sizes = [8, 1], strides = [1, 1]} : vector<8x16xf32> to vector<8x1xf32>
    %1530 = vector.broadcast %1479 : vector<1x8xf32> to vector<8x8xf32>
    %1531 = vector.broadcast %1528 : vector<8x1xf32> to vector<8x8xf32>
    %1532 = arith.subf %1530, %1531 : vector<8x8xf32>
    %1533 = math.absf %1532 : vector<8x8xf32>
    %cst_377 = arith.constant 1.000000e+00 : f32
    %1534 = vector.broadcast %cst_377 : f32 to vector<8x8xf32>
    %1535 = arith.subf %1534, %1533 : vector<8x8xf32>
    %cst_378 = arith.constant 0.000000e+00 : f32
    %1536 = vector.broadcast %cst_378 : f32 to vector<8x8xf32>
    %1537 = arith.maximumf %1535, %1536 : vector<8x8xf32>
    %1538 = vector.broadcast %1529 : vector<8x1xf32> to vector<8x8xf32>
    %1539 = arith.mulf %1537, %1538 : vector<8x8xf32>
    %1540 = arith.addf %1527, %1539 : vector<8x8xf32>
    %1541 = vector.extract_strided_slice %9 {offsets = [0, 0], sizes = [1, 8], strides = [1, 1]} : vector<1x64xf32> to vector<1x8xf32>
    %1542 = vector.extract_strided_slice %7 {offsets = [0, 3], sizes = [8, 1], strides = [1, 1]} : vector<8x4xf32> to vector<8x1xf32>
    %cst_379 = arith.constant 8.000000e+00 : f32
    %1543 = vector.broadcast %cst_379 : f32 to vector<8x1xf32>
    %1544 = arith.mulf %1542, %1543 : vector<8x1xf32>
    %1545 = vector.extract_strided_slice %1343 {offsets = [0, 12], sizes = [8, 4], strides = [1, 1]} : vector<8x16xf32> to vector<8x4xf32>
    %1546 = vector.broadcast %1544 : vector<8x1xf32> to vector<8x4xf32>
    %1547 = arith.addf %1546, %1545 : vector<8x4xf32>
    %cst_380 = arith.constant 5.000000e-01 : f32
    %1548 = vector.broadcast %cst_380 : f32 to vector<8x4xf32>
    %1549 = arith.subf %1547, %1548 : vector<8x4xf32>
    %cst_381 = arith.constant 0.000000e+00 : f32
    %1550 = vector.broadcast %cst_381 : f32 to vector<8x8xf32>
    %1551 = vector.extract_strided_slice %1549 {offsets = [0, 0], sizes = [8, 1], strides = [1, 1]} : vector<8x4xf32> to vector<8x1xf32>
    %1552 = vector.extract_strided_slice %1354 {offsets = [0, 12], sizes = [8, 1], strides = [1, 1]} : vector<8x16xf32> to vector<8x1xf32>
    %1553 = vector.broadcast %1541 : vector<1x8xf32> to vector<8x8xf32>
    %1554 = vector.broadcast %1551 : vector<8x1xf32> to vector<8x8xf32>
    %1555 = arith.subf %1553, %1554 : vector<8x8xf32>
    %1556 = math.absf %1555 : vector<8x8xf32>
    %cst_382 = arith.constant 1.000000e+00 : f32
    %1557 = vector.broadcast %cst_382 : f32 to vector<8x8xf32>
    %1558 = arith.subf %1557, %1556 : vector<8x8xf32>
    %cst_383 = arith.constant 0.000000e+00 : f32
    %1559 = vector.broadcast %cst_383 : f32 to vector<8x8xf32>
    %1560 = arith.maximumf %1558, %1559 : vector<8x8xf32>
    %1561 = vector.broadcast %1552 : vector<8x1xf32> to vector<8x8xf32>
    %1562 = arith.mulf %1560, %1561 : vector<8x8xf32>
    %1563 = arith.addf %1550, %1562 : vector<8x8xf32>
    %1564 = vector.extract_strided_slice %1549 {offsets = [0, 1], sizes = [8, 1], strides = [1, 1]} : vector<8x4xf32> to vector<8x1xf32>
    %1565 = vector.extract_strided_slice %1354 {offsets = [0, 13], sizes = [8, 1], strides = [1, 1]} : vector<8x16xf32> to vector<8x1xf32>
    %1566 = vector.broadcast %1541 : vector<1x8xf32> to vector<8x8xf32>
    %1567 = vector.broadcast %1564 : vector<8x1xf32> to vector<8x8xf32>
    %1568 = arith.subf %1566, %1567 : vector<8x8xf32>
    %1569 = math.absf %1568 : vector<8x8xf32>
    %cst_384 = arith.constant 1.000000e+00 : f32
    %1570 = vector.broadcast %cst_384 : f32 to vector<8x8xf32>
    %1571 = arith.subf %1570, %1569 : vector<8x8xf32>
    %cst_385 = arith.constant 0.000000e+00 : f32
    %1572 = vector.broadcast %cst_385 : f32 to vector<8x8xf32>
    %1573 = arith.maximumf %1571, %1572 : vector<8x8xf32>
    %1574 = vector.broadcast %1565 : vector<8x1xf32> to vector<8x8xf32>
    %1575 = arith.mulf %1573, %1574 : vector<8x8xf32>
    %1576 = arith.addf %1563, %1575 : vector<8x8xf32>
    %1577 = vector.extract_strided_slice %1549 {offsets = [0, 2], sizes = [8, 1], strides = [1, 1]} : vector<8x4xf32> to vector<8x1xf32>
    %1578 = vector.extract_strided_slice %1354 {offsets = [0, 14], sizes = [8, 1], strides = [1, 1]} : vector<8x16xf32> to vector<8x1xf32>
    %1579 = vector.broadcast %1541 : vector<1x8xf32> to vector<8x8xf32>
    %1580 = vector.broadcast %1577 : vector<8x1xf32> to vector<8x8xf32>
    %1581 = arith.subf %1579, %1580 : vector<8x8xf32>
    %1582 = math.absf %1581 : vector<8x8xf32>
    %cst_386 = arith.constant 1.000000e+00 : f32
    %1583 = vector.broadcast %cst_386 : f32 to vector<8x8xf32>
    %1584 = arith.subf %1583, %1582 : vector<8x8xf32>
    %cst_387 = arith.constant 0.000000e+00 : f32
    %1585 = vector.broadcast %cst_387 : f32 to vector<8x8xf32>
    %1586 = arith.maximumf %1584, %1585 : vector<8x8xf32>
    %1587 = vector.broadcast %1578 : vector<8x1xf32> to vector<8x8xf32>
    %1588 = arith.mulf %1586, %1587 : vector<8x8xf32>
    %1589 = arith.addf %1576, %1588 : vector<8x8xf32>
    %1590 = vector.extract_strided_slice %1549 {offsets = [0, 3], sizes = [8, 1], strides = [1, 1]} : vector<8x4xf32> to vector<8x1xf32>
    %1591 = vector.extract_strided_slice %1354 {offsets = [0, 15], sizes = [8, 1], strides = [1, 1]} : vector<8x16xf32> to vector<8x1xf32>
    %1592 = vector.broadcast %1541 : vector<1x8xf32> to vector<8x8xf32>
    %1593 = vector.broadcast %1590 : vector<8x1xf32> to vector<8x8xf32>
    %1594 = arith.subf %1592, %1593 : vector<8x8xf32>
    %1595 = math.absf %1594 : vector<8x8xf32>
    %cst_388 = arith.constant 1.000000e+00 : f32
    %1596 = vector.broadcast %cst_388 : f32 to vector<8x8xf32>
    %1597 = arith.subf %1596, %1595 : vector<8x8xf32>
    %cst_389 = arith.constant 0.000000e+00 : f32
    %1598 = vector.broadcast %cst_389 : f32 to vector<8x8xf32>
    %1599 = arith.maximumf %1597, %1598 : vector<8x8xf32>
    %1600 = vector.broadcast %1591 : vector<8x1xf32> to vector<8x8xf32>
    %1601 = arith.mulf %1599, %1600 : vector<8x8xf32>
    %1602 = arith.addf %1589, %1601 : vector<8x8xf32>
    %1603 = tpu.concatenate %1416, %1478, %1540, %1602 in 1 : vector<8x32xf32>, vector<8x16xf32>, vector<8x8xf32>, vector<8x8xf32> -> vector<8x64xf32>
    %1604 = vector.extract_strided_slice %1335 {offsets = [0, 0], sizes = [64, 8], strides = [1, 1]} : vector<64x32xf32> to vector<64x8xf32>
    %cst_390 = arith.constant dense<0.000000e+00> : vector<8x8xf32>
    %1605 = tpu.matmul %1603, %1604, %cst_390 {dimension_numbers = #tpu.dot_dimension_numbers<[1], [0], [0], [1], [0, 0, 1, 1], [], []>} : vector<8x64xf32>, vector<64x8xf32>, vector<8x8xf32> -> vector<8x8xf32>
    %1606 = vector.extract_strided_slice %1342 {offsets = [0, 16], sizes = [8, 16], strides = [1, 1]} : vector<8x128xf32> to vector<8x16xf32>
    %1607 = vector.extract_strided_slice %1342 {offsets = [0, 80], sizes = [8, 16], strides = [1, 1]} : vector<8x128xf32> to vector<8x16xf32>
    %cst_391 = arith.constant dense<0xFF800000> : vector<8xf32>
    %1608 = vector.multi_reduction <maximumf>, %1607, %cst_391 [1] : vector<8x16xf32> to vector<8xf32>
    %1609 = vector.shape_cast %1608 : vector<8xf32> to vector<8x1xf32>
    %1610 = vector.broadcast %1609 : vector<8x1xf32> to vector<8x16xf32>
    %1611 = arith.subf %1607, %1610 : vector<8x16xf32>
    %1612 = math.exp %1611 : vector<8x16xf32>
    %cst_392 = arith.constant dense<0.000000e+00> : vector<8xf32>
    %1613 = vector.multi_reduction <add>, %1612, %cst_392 [1] : vector<8x16xf32> to vector<8xf32>
    %1614 = vector.shape_cast %1613 : vector<8xf32> to vector<8x1xf32>
    %1615 = tpu.reciprocal %1614 {approx = true} : vector<8x1xf32> -> vector<8x1xf32>
    %1616 = vector.broadcast %1615 : vector<8x1xf32> to vector<8x16xf32>
    %1617 = arith.mulf %1612, %1616 : vector<8x16xf32>
    %1618 = vector.extract_strided_slice %9 {offsets = [0, 0], sizes = [1, 32], strides = [1, 1]} : vector<1x64xf32> to vector<1x32xf32>
    %1619 = vector.extract_strided_slice %7 {offsets = [0, 0], sizes = [8, 1], strides = [1, 1]} : vector<8x4xf32> to vector<8x1xf32>
    %cst_393 = arith.constant 3.200000e+01 : f32
    %1620 = vector.broadcast %cst_393 : f32 to vector<8x1xf32>
    %1621 = arith.mulf %1619, %1620 : vector<8x1xf32>
    %1622 = vector.extract_strided_slice %1606 {offsets = [0, 0], sizes = [8, 4], strides = [1, 1]} : vector<8x16xf32> to vector<8x4xf32>
    %1623 = vector.broadcast %1621 : vector<8x1xf32> to vector<8x4xf32>
    %1624 = arith.addf %1623, %1622 : vector<8x4xf32>
    %cst_394 = arith.constant 5.000000e-01 : f32
    %1625 = vector.broadcast %cst_394 : f32 to vector<8x4xf32>
    %1626 = arith.subf %1624, %1625 : vector<8x4xf32>
    %cst_395 = arith.constant 0.000000e+00 : f32
    %1627 = vector.broadcast %cst_395 : f32 to vector<8x32xf32>
    %1628 = vector.extract_strided_slice %1626 {offsets = [0, 0], sizes = [8, 1], strides = [1, 1]} : vector<8x4xf32> to vector<8x1xf32>
    %1629 = vector.extract_strided_slice %1617 {offsets = [0, 0], sizes = [8, 1], strides = [1, 1]} : vector<8x16xf32> to vector<8x1xf32>
    %1630 = vector.broadcast %1618 : vector<1x32xf32> to vector<8x32xf32>
    %1631 = vector.broadcast %1628 : vector<8x1xf32> to vector<8x32xf32>
    %1632 = arith.subf %1630, %1631 : vector<8x32xf32>
    %1633 = math.absf %1632 : vector<8x32xf32>
    %cst_396 = arith.constant 1.000000e+00 : f32
    %1634 = vector.broadcast %cst_396 : f32 to vector<8x32xf32>
    %1635 = arith.subf %1634, %1633 : vector<8x32xf32>
    %cst_397 = arith.constant 0.000000e+00 : f32
    %1636 = vector.broadcast %cst_397 : f32 to vector<8x32xf32>
    %1637 = arith.maximumf %1635, %1636 : vector<8x32xf32>
    %1638 = vector.broadcast %1629 : vector<8x1xf32> to vector<8x32xf32>
    %1639 = arith.mulf %1637, %1638 : vector<8x32xf32>
    %1640 = arith.addf %1627, %1639 : vector<8x32xf32>
    %1641 = vector.extract_strided_slice %1626 {offsets = [0, 1], sizes = [8, 1], strides = [1, 1]} : vector<8x4xf32> to vector<8x1xf32>
    %1642 = vector.extract_strided_slice %1617 {offsets = [0, 1], sizes = [8, 1], strides = [1, 1]} : vector<8x16xf32> to vector<8x1xf32>
    %1643 = vector.broadcast %1618 : vector<1x32xf32> to vector<8x32xf32>
    %1644 = vector.broadcast %1641 : vector<8x1xf32> to vector<8x32xf32>
    %1645 = arith.subf %1643, %1644 : vector<8x32xf32>
    %1646 = math.absf %1645 : vector<8x32xf32>
    %cst_398 = arith.constant 1.000000e+00 : f32
    %1647 = vector.broadcast %cst_398 : f32 to vector<8x32xf32>
    %1648 = arith.subf %1647, %1646 : vector<8x32xf32>
    %cst_399 = arith.constant 0.000000e+00 : f32
    %1649 = vector.broadcast %cst_399 : f32 to vector<8x32xf32>
    %1650 = arith.maximumf %1648, %1649 : vector<8x32xf32>
    %1651 = vector.broadcast %1642 : vector<8x1xf32> to vector<8x32xf32>
    %1652 = arith.mulf %1650, %1651 : vector<8x32xf32>
    %1653 = arith.addf %1640, %1652 : vector<8x32xf32>
    %1654 = vector.extract_strided_slice %1626 {offsets = [0, 2], sizes = [8, 1], strides = [1, 1]} : vector<8x4xf32> to vector<8x1xf32>
    %1655 = vector.extract_strided_slice %1617 {offsets = [0, 2], sizes = [8, 1], strides = [1, 1]} : vector<8x16xf32> to vector<8x1xf32>
    %1656 = vector.broadcast %1618 : vector<1x32xf32> to vector<8x32xf32>
    %1657 = vector.broadcast %1654 : vector<8x1xf32> to vector<8x32xf32>
    %1658 = arith.subf %1656, %1657 : vector<8x32xf32>
    %1659 = math.absf %1658 : vector<8x32xf32>
    %cst_400 = arith.constant 1.000000e+00 : f32
    %1660 = vector.broadcast %cst_400 : f32 to vector<8x32xf32>
    %1661 = arith.subf %1660, %1659 : vector<8x32xf32>
    %cst_401 = arith.constant 0.000000e+00 : f32
    %1662 = vector.broadcast %cst_401 : f32 to vector<8x32xf32>
    %1663 = arith.maximumf %1661, %1662 : vector<8x32xf32>
    %1664 = vector.broadcast %1655 : vector<8x1xf32> to vector<8x32xf32>
    %1665 = arith.mulf %1663, %1664 : vector<8x32xf32>
    %1666 = arith.addf %1653, %1665 : vector<8x32xf32>
    %1667 = vector.extract_strided_slice %1626 {offsets = [0, 3], sizes = [8, 1], strides = [1, 1]} : vector<8x4xf32> to vector<8x1xf32>
    %1668 = vector.extract_strided_slice %1617 {offsets = [0, 3], sizes = [8, 1], strides = [1, 1]} : vector<8x16xf32> to vector<8x1xf32>
    %1669 = vector.broadcast %1618 : vector<1x32xf32> to vector<8x32xf32>
    %1670 = vector.broadcast %1667 : vector<8x1xf32> to vector<8x32xf32>
    %1671 = arith.subf %1669, %1670 : vector<8x32xf32>
    %1672 = math.absf %1671 : vector<8x32xf32>
    %cst_402 = arith.constant 1.000000e+00 : f32
    %1673 = vector.broadcast %cst_402 : f32 to vector<8x32xf32>
    %1674 = arith.subf %1673, %1672 : vector<8x32xf32>
    %cst_403 = arith.constant 0.000000e+00 : f32
    %1675 = vector.broadcast %cst_403 : f32 to vector<8x32xf32>
    %1676 = arith.maximumf %1674, %1675 : vector<8x32xf32>
    %1677 = vector.broadcast %1668 : vector<8x1xf32> to vector<8x32xf32>
    %1678 = arith.mulf %1676, %1677 : vector<8x32xf32>
    %1679 = arith.addf %1666, %1678 : vector<8x32xf32>
    %1680 = vector.extract_strided_slice %9 {offsets = [0, 0], sizes = [1, 16], strides = [1, 1]} : vector<1x64xf32> to vector<1x16xf32>
    %1681 = vector.extract_strided_slice %7 {offsets = [0, 1], sizes = [8, 1], strides = [1, 1]} : vector<8x4xf32> to vector<8x1xf32>
    %cst_404 = arith.constant 1.600000e+01 : f32
    %1682 = vector.broadcast %cst_404 : f32 to vector<8x1xf32>
    %1683 = arith.mulf %1681, %1682 : vector<8x1xf32>
    %1684 = vector.extract_strided_slice %1606 {offsets = [0, 4], sizes = [8, 4], strides = [1, 1]} : vector<8x16xf32> to vector<8x4xf32>
    %1685 = vector.broadcast %1683 : vector<8x1xf32> to vector<8x4xf32>
    %1686 = arith.addf %1685, %1684 : vector<8x4xf32>
    %cst_405 = arith.constant 5.000000e-01 : f32
    %1687 = vector.broadcast %cst_405 : f32 to vector<8x4xf32>
    %1688 = arith.subf %1686, %1687 : vector<8x4xf32>
    %cst_406 = arith.constant 0.000000e+00 : f32
    %1689 = vector.broadcast %cst_406 : f32 to vector<8x16xf32>
    %1690 = vector.extract_strided_slice %1688 {offsets = [0, 0], sizes = [8, 1], strides = [1, 1]} : vector<8x4xf32> to vector<8x1xf32>
    %1691 = vector.extract_strided_slice %1617 {offsets = [0, 4], sizes = [8, 1], strides = [1, 1]} : vector<8x16xf32> to vector<8x1xf32>
    %1692 = vector.broadcast %1680 : vector<1x16xf32> to vector<8x16xf32>
    %1693 = vector.broadcast %1690 : vector<8x1xf32> to vector<8x16xf32>
    %1694 = arith.subf %1692, %1693 : vector<8x16xf32>
    %1695 = math.absf %1694 : vector<8x16xf32>
    %cst_407 = arith.constant 1.000000e+00 : f32
    %1696 = vector.broadcast %cst_407 : f32 to vector<8x16xf32>
    %1697 = arith.subf %1696, %1695 : vector<8x16xf32>
    %cst_408 = arith.constant 0.000000e+00 : f32
    %1698 = vector.broadcast %cst_408 : f32 to vector<8x16xf32>
    %1699 = arith.maximumf %1697, %1698 : vector<8x16xf32>
    %1700 = vector.broadcast %1691 : vector<8x1xf32> to vector<8x16xf32>
    %1701 = arith.mulf %1699, %1700 : vector<8x16xf32>
    %1702 = arith.addf %1689, %1701 : vector<8x16xf32>
    %1703 = vector.extract_strided_slice %1688 {offsets = [0, 1], sizes = [8, 1], strides = [1, 1]} : vector<8x4xf32> to vector<8x1xf32>
    %1704 = vector.extract_strided_slice %1617 {offsets = [0, 5], sizes = [8, 1], strides = [1, 1]} : vector<8x16xf32> to vector<8x1xf32>
    %1705 = vector.broadcast %1680 : vector<1x16xf32> to vector<8x16xf32>
    %1706 = vector.broadcast %1703 : vector<8x1xf32> to vector<8x16xf32>
    %1707 = arith.subf %1705, %1706 : vector<8x16xf32>
    %1708 = math.absf %1707 : vector<8x16xf32>
    %cst_409 = arith.constant 1.000000e+00 : f32
    %1709 = vector.broadcast %cst_409 : f32 to vector<8x16xf32>
    %1710 = arith.subf %1709, %1708 : vector<8x16xf32>
    %cst_410 = arith.constant 0.000000e+00 : f32
    %1711 = vector.broadcast %cst_410 : f32 to vector<8x16xf32>
    %1712 = arith.maximumf %1710, %1711 : vector<8x16xf32>
    %1713 = vector.broadcast %1704 : vector<8x1xf32> to vector<8x16xf32>
    %1714 = arith.mulf %1712, %1713 : vector<8x16xf32>
    %1715 = arith.addf %1702, %1714 : vector<8x16xf32>
    %1716 = vector.extract_strided_slice %1688 {offsets = [0, 2], sizes = [8, 1], strides = [1, 1]} : vector<8x4xf32> to vector<8x1xf32>
    %1717 = vector.extract_strided_slice %1617 {offsets = [0, 6], sizes = [8, 1], strides = [1, 1]} : vector<8x16xf32> to vector<8x1xf32>
    %1718 = vector.broadcast %1680 : vector<1x16xf32> to vector<8x16xf32>
    %1719 = vector.broadcast %1716 : vector<8x1xf32> to vector<8x16xf32>
    %1720 = arith.subf %1718, %1719 : vector<8x16xf32>
    %1721 = math.absf %1720 : vector<8x16xf32>
    %cst_411 = arith.constant 1.000000e+00 : f32
    %1722 = vector.broadcast %cst_411 : f32 to vector<8x16xf32>
    %1723 = arith.subf %1722, %1721 : vector<8x16xf32>
    %cst_412 = arith.constant 0.000000e+00 : f32
    %1724 = vector.broadcast %cst_412 : f32 to vector<8x16xf32>
    %1725 = arith.maximumf %1723, %1724 : vector<8x16xf32>
    %1726 = vector.broadcast %1717 : vector<8x1xf32> to vector<8x16xf32>
    %1727 = arith.mulf %1725, %1726 : vector<8x16xf32>
    %1728 = arith.addf %1715, %1727 : vector<8x16xf32>
    %1729 = vector.extract_strided_slice %1688 {offsets = [0, 3], sizes = [8, 1], strides = [1, 1]} : vector<8x4xf32> to vector<8x1xf32>
    %1730 = vector.extract_strided_slice %1617 {offsets = [0, 7], sizes = [8, 1], strides = [1, 1]} : vector<8x16xf32> to vector<8x1xf32>
    %1731 = vector.broadcast %1680 : vector<1x16xf32> to vector<8x16xf32>
    %1732 = vector.broadcast %1729 : vector<8x1xf32> to vector<8x16xf32>
    %1733 = arith.subf %1731, %1732 : vector<8x16xf32>
    %1734 = math.absf %1733 : vector<8x16xf32>
    %cst_413 = arith.constant 1.000000e+00 : f32
    %1735 = vector.broadcast %cst_413 : f32 to vector<8x16xf32>
    %1736 = arith.subf %1735, %1734 : vector<8x16xf32>
    %cst_414 = arith.constant 0.000000e+00 : f32
    %1737 = vector.broadcast %cst_414 : f32 to vector<8x16xf32>
    %1738 = arith.maximumf %1736, %1737 : vector<8x16xf32>
    %1739 = vector.broadcast %1730 : vector<8x1xf32> to vector<8x16xf32>
    %1740 = arith.mulf %1738, %1739 : vector<8x16xf32>
    %1741 = arith.addf %1728, %1740 : vector<8x16xf32>
    %1742 = vector.extract_strided_slice %9 {offsets = [0, 0], sizes = [1, 8], strides = [1, 1]} : vector<1x64xf32> to vector<1x8xf32>
    %1743 = vector.extract_strided_slice %7 {offsets = [0, 2], sizes = [8, 1], strides = [1, 1]} : vector<8x4xf32> to vector<8x1xf32>
    %cst_415 = arith.constant 8.000000e+00 : f32
    %1744 = vector.broadcast %cst_415 : f32 to vector<8x1xf32>
    %1745 = arith.mulf %1743, %1744 : vector<8x1xf32>
    %1746 = vector.extract_strided_slice %1606 {offsets = [0, 8], sizes = [8, 4], strides = [1, 1]} : vector<8x16xf32> to vector<8x4xf32>
    %1747 = vector.broadcast %1745 : vector<8x1xf32> to vector<8x4xf32>
    %1748 = arith.addf %1747, %1746 : vector<8x4xf32>
    %cst_416 = arith.constant 5.000000e-01 : f32
    %1749 = vector.broadcast %cst_416 : f32 to vector<8x4xf32>
    %1750 = arith.subf %1748, %1749 : vector<8x4xf32>
    %cst_417 = arith.constant 0.000000e+00 : f32
    %1751 = vector.broadcast %cst_417 : f32 to vector<8x8xf32>
    %1752 = vector.extract_strided_slice %1750 {offsets = [0, 0], sizes = [8, 1], strides = [1, 1]} : vector<8x4xf32> to vector<8x1xf32>
    %1753 = vector.extract_strided_slice %1617 {offsets = [0, 8], sizes = [8, 1], strides = [1, 1]} : vector<8x16xf32> to vector<8x1xf32>
    %1754 = vector.broadcast %1742 : vector<1x8xf32> to vector<8x8xf32>
    %1755 = vector.broadcast %1752 : vector<8x1xf32> to vector<8x8xf32>
    %1756 = arith.subf %1754, %1755 : vector<8x8xf32>
    %1757 = math.absf %1756 : vector<8x8xf32>
    %cst_418 = arith.constant 1.000000e+00 : f32
    %1758 = vector.broadcast %cst_418 : f32 to vector<8x8xf32>
    %1759 = arith.subf %1758, %1757 : vector<8x8xf32>
    %cst_419 = arith.constant 0.000000e+00 : f32
    %1760 = vector.broadcast %cst_419 : f32 to vector<8x8xf32>
    %1761 = arith.maximumf %1759, %1760 : vector<8x8xf32>
    %1762 = vector.broadcast %1753 : vector<8x1xf32> to vector<8x8xf32>
    %1763 = arith.mulf %1761, %1762 : vector<8x8xf32>
    %1764 = arith.addf %1751, %1763 : vector<8x8xf32>
    %1765 = vector.extract_strided_slice %1750 {offsets = [0, 1], sizes = [8, 1], strides = [1, 1]} : vector<8x4xf32> to vector<8x1xf32>
    %1766 = vector.extract_strided_slice %1617 {offsets = [0, 9], sizes = [8, 1], strides = [1, 1]} : vector<8x16xf32> to vector<8x1xf32>
    %1767 = vector.broadcast %1742 : vector<1x8xf32> to vector<8x8xf32>
    %1768 = vector.broadcast %1765 : vector<8x1xf32> to vector<8x8xf32>
    %1769 = arith.subf %1767, %1768 : vector<8x8xf32>
    %1770 = math.absf %1769 : vector<8x8xf32>
    %cst_420 = arith.constant 1.000000e+00 : f32
    %1771 = vector.broadcast %cst_420 : f32 to vector<8x8xf32>
    %1772 = arith.subf %1771, %1770 : vector<8x8xf32>
    %cst_421 = arith.constant 0.000000e+00 : f32
    %1773 = vector.broadcast %cst_421 : f32 to vector<8x8xf32>
    %1774 = arith.maximumf %1772, %1773 : vector<8x8xf32>
    %1775 = vector.broadcast %1766 : vector<8x1xf32> to vector<8x8xf32>
    %1776 = arith.mulf %1774, %1775 : vector<8x8xf32>
    %1777 = arith.addf %1764, %1776 : vector<8x8xf32>
    %1778 = vector.extract_strided_slice %1750 {offsets = [0, 2], sizes = [8, 1], strides = [1, 1]} : vector<8x4xf32> to vector<8x1xf32>
    %1779 = vector.extract_strided_slice %1617 {offsets = [0, 10], sizes = [8, 1], strides = [1, 1]} : vector<8x16xf32> to vector<8x1xf32>
    %1780 = vector.broadcast %1742 : vector<1x8xf32> to vector<8x8xf32>
    %1781 = vector.broadcast %1778 : vector<8x1xf32> to vector<8x8xf32>
    %1782 = arith.subf %1780, %1781 : vector<8x8xf32>
    %1783 = math.absf %1782 : vector<8x8xf32>
    %cst_422 = arith.constant 1.000000e+00 : f32
    %1784 = vector.broadcast %cst_422 : f32 to vector<8x8xf32>
    %1785 = arith.subf %1784, %1783 : vector<8x8xf32>
    %cst_423 = arith.constant 0.000000e+00 : f32
    %1786 = vector.broadcast %cst_423 : f32 to vector<8x8xf32>
    %1787 = arith.maximumf %1785, %1786 : vector<8x8xf32>
    %1788 = vector.broadcast %1779 : vector<8x1xf32> to vector<8x8xf32>
    %1789 = arith.mulf %1787, %1788 : vector<8x8xf32>
    %1790 = arith.addf %1777, %1789 : vector<8x8xf32>
    %1791 = vector.extract_strided_slice %1750 {offsets = [0, 3], sizes = [8, 1], strides = [1, 1]} : vector<8x4xf32> to vector<8x1xf32>
    %1792 = vector.extract_strided_slice %1617 {offsets = [0, 11], sizes = [8, 1], strides = [1, 1]} : vector<8x16xf32> to vector<8x1xf32>
    %1793 = vector.broadcast %1742 : vector<1x8xf32> to vector<8x8xf32>
    %1794 = vector.broadcast %1791 : vector<8x1xf32> to vector<8x8xf32>
    %1795 = arith.subf %1793, %1794 : vector<8x8xf32>
    %1796 = math.absf %1795 : vector<8x8xf32>
    %cst_424 = arith.constant 1.000000e+00 : f32
    %1797 = vector.broadcast %cst_424 : f32 to vector<8x8xf32>
    %1798 = arith.subf %1797, %1796 : vector<8x8xf32>
    %cst_425 = arith.constant 0.000000e+00 : f32
    %1799 = vector.broadcast %cst_425 : f32 to vector<8x8xf32>
    %1800 = arith.maximumf %1798, %1799 : vector<8x8xf32>
    %1801 = vector.broadcast %1792 : vector<8x1xf32> to vector<8x8xf32>
    %1802 = arith.mulf %1800, %1801 : vector<8x8xf32>
    %1803 = arith.addf %1790, %1802 : vector<8x8xf32>
    %1804 = vector.extract_strided_slice %9 {offsets = [0, 0], sizes = [1, 8], strides = [1, 1]} : vector<1x64xf32> to vector<1x8xf32>
    %1805 = vector.extract_strided_slice %7 {offsets = [0, 3], sizes = [8, 1], strides = [1, 1]} : vector<8x4xf32> to vector<8x1xf32>
    %cst_426 = arith.constant 8.000000e+00 : f32
    %1806 = vector.broadcast %cst_426 : f32 to vector<8x1xf32>
    %1807 = arith.mulf %1805, %1806 : vector<8x1xf32>
    %1808 = vector.extract_strided_slice %1606 {offsets = [0, 12], sizes = [8, 4], strides = [1, 1]} : vector<8x16xf32> to vector<8x4xf32>
    %1809 = vector.broadcast %1807 : vector<8x1xf32> to vector<8x4xf32>
    %1810 = arith.addf %1809, %1808 : vector<8x4xf32>
    %cst_427 = arith.constant 5.000000e-01 : f32
    %1811 = vector.broadcast %cst_427 : f32 to vector<8x4xf32>
    %1812 = arith.subf %1810, %1811 : vector<8x4xf32>
    %cst_428 = arith.constant 0.000000e+00 : f32
    %1813 = vector.broadcast %cst_428 : f32 to vector<8x8xf32>
    %1814 = vector.extract_strided_slice %1812 {offsets = [0, 0], sizes = [8, 1], strides = [1, 1]} : vector<8x4xf32> to vector<8x1xf32>
    %1815 = vector.extract_strided_slice %1617 {offsets = [0, 12], sizes = [8, 1], strides = [1, 1]} : vector<8x16xf32> to vector<8x1xf32>
    %1816 = vector.broadcast %1804 : vector<1x8xf32> to vector<8x8xf32>
    %1817 = vector.broadcast %1814 : vector<8x1xf32> to vector<8x8xf32>
    %1818 = arith.subf %1816, %1817 : vector<8x8xf32>
    %1819 = math.absf %1818 : vector<8x8xf32>
    %cst_429 = arith.constant 1.000000e+00 : f32
    %1820 = vector.broadcast %cst_429 : f32 to vector<8x8xf32>
    %1821 = arith.subf %1820, %1819 : vector<8x8xf32>
    %cst_430 = arith.constant 0.000000e+00 : f32
    %1822 = vector.broadcast %cst_430 : f32 to vector<8x8xf32>
    %1823 = arith.maximumf %1821, %1822 : vector<8x8xf32>
    %1824 = vector.broadcast %1815 : vector<8x1xf32> to vector<8x8xf32>
    %1825 = arith.mulf %1823, %1824 : vector<8x8xf32>
    %1826 = arith.addf %1813, %1825 : vector<8x8xf32>
    %1827 = vector.extract_strided_slice %1812 {offsets = [0, 1], sizes = [8, 1], strides = [1, 1]} : vector<8x4xf32> to vector<8x1xf32>
    %1828 = vector.extract_strided_slice %1617 {offsets = [0, 13], sizes = [8, 1], strides = [1, 1]} : vector<8x16xf32> to vector<8x1xf32>
    %1829 = vector.broadcast %1804 : vector<1x8xf32> to vector<8x8xf32>
    %1830 = vector.broadcast %1827 : vector<8x1xf32> to vector<8x8xf32>
    %1831 = arith.subf %1829, %1830 : vector<8x8xf32>
    %1832 = math.absf %1831 : vector<8x8xf32>
    %cst_431 = arith.constant 1.000000e+00 : f32
    %1833 = vector.broadcast %cst_431 : f32 to vector<8x8xf32>
    %1834 = arith.subf %1833, %1832 : vector<8x8xf32>
    %cst_432 = arith.constant 0.000000e+00 : f32
    %1835 = vector.broadcast %cst_432 : f32 to vector<8x8xf32>
    %1836 = arith.maximumf %1834, %1835 : vector<8x8xf32>
    %1837 = vector.broadcast %1828 : vector<8x1xf32> to vector<8x8xf32>
    %1838 = arith.mulf %1836, %1837 : vector<8x8xf32>
    %1839 = arith.addf %1826, %1838 : vector<8x8xf32>
    %1840 = vector.extract_strided_slice %1812 {offsets = [0, 2], sizes = [8, 1], strides = [1, 1]} : vector<8x4xf32> to vector<8x1xf32>
    %1841 = vector.extract_strided_slice %1617 {offsets = [0, 14], sizes = [8, 1], strides = [1, 1]} : vector<8x16xf32> to vector<8x1xf32>
    %1842 = vector.broadcast %1804 : vector<1x8xf32> to vector<8x8xf32>
    %1843 = vector.broadcast %1840 : vector<8x1xf32> to vector<8x8xf32>
    %1844 = arith.subf %1842, %1843 : vector<8x8xf32>
    %1845 = math.absf %1844 : vector<8x8xf32>
    %cst_433 = arith.constant 1.000000e+00 : f32
    %1846 = vector.broadcast %cst_433 : f32 to vector<8x8xf32>
    %1847 = arith.subf %1846, %1845 : vector<8x8xf32>
    %cst_434 = arith.constant 0.000000e+00 : f32
    %1848 = vector.broadcast %cst_434 : f32 to vector<8x8xf32>
    %1849 = arith.maximumf %1847, %1848 : vector<8x8xf32>
    %1850 = vector.broadcast %1841 : vector<8x1xf32> to vector<8x8xf32>
    %1851 = arith.mulf %1849, %1850 : vector<8x8xf32>
    %1852 = arith.addf %1839, %1851 : vector<8x8xf32>
    %1853 = vector.extract_strided_slice %1812 {offsets = [0, 3], sizes = [8, 1], strides = [1, 1]} : vector<8x4xf32> to vector<8x1xf32>
    %1854 = vector.extract_strided_slice %1617 {offsets = [0, 15], sizes = [8, 1], strides = [1, 1]} : vector<8x16xf32> to vector<8x1xf32>
    %1855 = vector.broadcast %1804 : vector<1x8xf32> to vector<8x8xf32>
    %1856 = vector.broadcast %1853 : vector<8x1xf32> to vector<8x8xf32>
    %1857 = arith.subf %1855, %1856 : vector<8x8xf32>
    %1858 = math.absf %1857 : vector<8x8xf32>
    %cst_435 = arith.constant 1.000000e+00 : f32
    %1859 = vector.broadcast %cst_435 : f32 to vector<8x8xf32>
    %1860 = arith.subf %1859, %1858 : vector<8x8xf32>
    %cst_436 = arith.constant 0.000000e+00 : f32
    %1861 = vector.broadcast %cst_436 : f32 to vector<8x8xf32>
    %1862 = arith.maximumf %1860, %1861 : vector<8x8xf32>
    %1863 = vector.broadcast %1854 : vector<8x1xf32> to vector<8x8xf32>
    %1864 = arith.mulf %1862, %1863 : vector<8x8xf32>
    %1865 = arith.addf %1852, %1864 : vector<8x8xf32>
    %1866 = tpu.concatenate %1679, %1741, %1803, %1865 in 1 : vector<8x32xf32>, vector<8x16xf32>, vector<8x8xf32>, vector<8x8xf32> -> vector<8x64xf32>
    %1867 = vector.extract_strided_slice %1335 {offsets = [0, 8], sizes = [64, 8], strides = [1, 1]} : vector<64x32xf32> to vector<64x8xf32>
    %cst_437 = arith.constant dense<0.000000e+00> : vector<8x8xf32>
    %1868 = tpu.matmul %1866, %1867, %cst_437 {dimension_numbers = #tpu.dot_dimension_numbers<[1], [0], [0], [1], [0, 0, 1, 1], [], []>} : vector<8x64xf32>, vector<64x8xf32>, vector<8x8xf32> -> vector<8x8xf32>
    %1869 = vector.extract_strided_slice %1342 {offsets = [0, 32], sizes = [8, 16], strides = [1, 1]} : vector<8x128xf32> to vector<8x16xf32>
    %1870 = vector.extract_strided_slice %1342 {offsets = [0, 96], sizes = [8, 16], strides = [1, 1]} : vector<8x128xf32> to vector<8x16xf32>
    %cst_438 = arith.constant dense<0xFF800000> : vector<8xf32>
    %1871 = vector.multi_reduction <maximumf>, %1870, %cst_438 [1] : vector<8x16xf32> to vector<8xf32>
    %1872 = vector.shape_cast %1871 : vector<8xf32> to vector<8x1xf32>
    %1873 = vector.broadcast %1872 : vector<8x1xf32> to vector<8x16xf32>
    %1874 = arith.subf %1870, %1873 : vector<8x16xf32>
    %1875 = math.exp %1874 : vector<8x16xf32>
    %cst_439 = arith.constant dense<0.000000e+00> : vector<8xf32>
    %1876 = vector.multi_reduction <add>, %1875, %cst_439 [1] : vector<8x16xf32> to vector<8xf32>
    %1877 = vector.shape_cast %1876 : vector<8xf32> to vector<8x1xf32>
    %1878 = tpu.reciprocal %1877 {approx = true} : vector<8x1xf32> -> vector<8x1xf32>
    %1879 = vector.broadcast %1878 : vector<8x1xf32> to vector<8x16xf32>
    %1880 = arith.mulf %1875, %1879 : vector<8x16xf32>
    %1881 = vector.extract_strided_slice %9 {offsets = [0, 0], sizes = [1, 32], strides = [1, 1]} : vector<1x64xf32> to vector<1x32xf32>
    %1882 = vector.extract_strided_slice %7 {offsets = [0, 0], sizes = [8, 1], strides = [1, 1]} : vector<8x4xf32> to vector<8x1xf32>
    %cst_440 = arith.constant 3.200000e+01 : f32
    %1883 = vector.broadcast %cst_440 : f32 to vector<8x1xf32>
    %1884 = arith.mulf %1882, %1883 : vector<8x1xf32>
    %1885 = vector.extract_strided_slice %1869 {offsets = [0, 0], sizes = [8, 4], strides = [1, 1]} : vector<8x16xf32> to vector<8x4xf32>
    %1886 = vector.broadcast %1884 : vector<8x1xf32> to vector<8x4xf32>
    %1887 = arith.addf %1886, %1885 : vector<8x4xf32>
    %cst_441 = arith.constant 5.000000e-01 : f32
    %1888 = vector.broadcast %cst_441 : f32 to vector<8x4xf32>
    %1889 = arith.subf %1887, %1888 : vector<8x4xf32>
    %cst_442 = arith.constant 0.000000e+00 : f32
    %1890 = vector.broadcast %cst_442 : f32 to vector<8x32xf32>
    %1891 = vector.extract_strided_slice %1889 {offsets = [0, 0], sizes = [8, 1], strides = [1, 1]} : vector<8x4xf32> to vector<8x1xf32>
    %1892 = vector.extract_strided_slice %1880 {offsets = [0, 0], sizes = [8, 1], strides = [1, 1]} : vector<8x16xf32> to vector<8x1xf32>
    %1893 = vector.broadcast %1881 : vector<1x32xf32> to vector<8x32xf32>
    %1894 = vector.broadcast %1891 : vector<8x1xf32> to vector<8x32xf32>
    %1895 = arith.subf %1893, %1894 : vector<8x32xf32>
    %1896 = math.absf %1895 : vector<8x32xf32>
    %cst_443 = arith.constant 1.000000e+00 : f32
    %1897 = vector.broadcast %cst_443 : f32 to vector<8x32xf32>
    %1898 = arith.subf %1897, %1896 : vector<8x32xf32>
    %cst_444 = arith.constant 0.000000e+00 : f32
    %1899 = vector.broadcast %cst_444 : f32 to vector<8x32xf32>
    %1900 = arith.maximumf %1898, %1899 : vector<8x32xf32>
    %1901 = vector.broadcast %1892 : vector<8x1xf32> to vector<8x32xf32>
    %1902 = arith.mulf %1900, %1901 : vector<8x32xf32>
    %1903 = arith.addf %1890, %1902 : vector<8x32xf32>
    %1904 = vector.extract_strided_slice %1889 {offsets = [0, 1], sizes = [8, 1], strides = [1, 1]} : vector<8x4xf32> to vector<8x1xf32>
    %1905 = vector.extract_strided_slice %1880 {offsets = [0, 1], sizes = [8, 1], strides = [1, 1]} : vector<8x16xf32> to vector<8x1xf32>
    %1906 = vector.broadcast %1881 : vector<1x32xf32> to vector<8x32xf32>
    %1907 = vector.broadcast %1904 : vector<8x1xf32> to vector<8x32xf32>
    %1908 = arith.subf %1906, %1907 : vector<8x32xf32>
    %1909 = math.absf %1908 : vector<8x32xf32>
    %cst_445 = arith.constant 1.000000e+00 : f32
    %1910 = vector.broadcast %cst_445 : f32 to vector<8x32xf32>
    %1911 = arith.subf %1910, %1909 : vector<8x32xf32>
    %cst_446 = arith.constant 0.000000e+00 : f32
    %1912 = vector.broadcast %cst_446 : f32 to vector<8x32xf32>
    %1913 = arith.maximumf %1911, %1912 : vector<8x32xf32>
    %1914 = vector.broadcast %1905 : vector<8x1xf32> to vector<8x32xf32>
    %1915 = arith.mulf %1913, %1914 : vector<8x32xf32>
    %1916 = arith.addf %1903, %1915 : vector<8x32xf32>
    %1917 = vector.extract_strided_slice %1889 {offsets = [0, 2], sizes = [8, 1], strides = [1, 1]} : vector<8x4xf32> to vector<8x1xf32>
    %1918 = vector.extract_strided_slice %1880 {offsets = [0, 2], sizes = [8, 1], strides = [1, 1]} : vector<8x16xf32> to vector<8x1xf32>
    %1919 = vector.broadcast %1881 : vector<1x32xf32> to vector<8x32xf32>
    %1920 = vector.broadcast %1917 : vector<8x1xf32> to vector<8x32xf32>
    %1921 = arith.subf %1919, %1920 : vector<8x32xf32>
    %1922 = math.absf %1921 : vector<8x32xf32>
    %cst_447 = arith.constant 1.000000e+00 : f32
    %1923 = vector.broadcast %cst_447 : f32 to vector<8x32xf32>
    %1924 = arith.subf %1923, %1922 : vector<8x32xf32>
    %cst_448 = arith.constant 0.000000e+00 : f32
    %1925 = vector.broadcast %cst_448 : f32 to vector<8x32xf32>
    %1926 = arith.maximumf %1924, %1925 : vector<8x32xf32>
    %1927 = vector.broadcast %1918 : vector<8x1xf32> to vector<8x32xf32>
    %1928 = arith.mulf %1926, %1927 : vector<8x32xf32>
    %1929 = arith.addf %1916, %1928 : vector<8x32xf32>
    %1930 = vector.extract_strided_slice %1889 {offsets = [0, 3], sizes = [8, 1], strides = [1, 1]} : vector<8x4xf32> to vector<8x1xf32>
    %1931 = vector.extract_strided_slice %1880 {offsets = [0, 3], sizes = [8, 1], strides = [1, 1]} : vector<8x16xf32> to vector<8x1xf32>
    %1932 = vector.broadcast %1881 : vector<1x32xf32> to vector<8x32xf32>
    %1933 = vector.broadcast %1930 : vector<8x1xf32> to vector<8x32xf32>
    %1934 = arith.subf %1932, %1933 : vector<8x32xf32>
    %1935 = math.absf %1934 : vector<8x32xf32>
    %cst_449 = arith.constant 1.000000e+00 : f32
    %1936 = vector.broadcast %cst_449 : f32 to vector<8x32xf32>
    %1937 = arith.subf %1936, %1935 : vector<8x32xf32>
    %cst_450 = arith.constant 0.000000e+00 : f32
    %1938 = vector.broadcast %cst_450 : f32 to vector<8x32xf32>
    %1939 = arith.maximumf %1937, %1938 : vector<8x32xf32>
    %1940 = vector.broadcast %1931 : vector<8x1xf32> to vector<8x32xf32>
    %1941 = arith.mulf %1939, %1940 : vector<8x32xf32>
    %1942 = arith.addf %1929, %1941 : vector<8x32xf32>
    %1943 = vector.extract_strided_slice %9 {offsets = [0, 0], sizes = [1, 16], strides = [1, 1]} : vector<1x64xf32> to vector<1x16xf32>
    %1944 = vector.extract_strided_slice %7 {offsets = [0, 1], sizes = [8, 1], strides = [1, 1]} : vector<8x4xf32> to vector<8x1xf32>
    %cst_451 = arith.constant 1.600000e+01 : f32
    %1945 = vector.broadcast %cst_451 : f32 to vector<8x1xf32>
    %1946 = arith.mulf %1944, %1945 : vector<8x1xf32>
    %1947 = vector.extract_strided_slice %1869 {offsets = [0, 4], sizes = [8, 4], strides = [1, 1]} : vector<8x16xf32> to vector<8x4xf32>
    %1948 = vector.broadcast %1946 : vector<8x1xf32> to vector<8x4xf32>
    %1949 = arith.addf %1948, %1947 : vector<8x4xf32>
    %cst_452 = arith.constant 5.000000e-01 : f32
    %1950 = vector.broadcast %cst_452 : f32 to vector<8x4xf32>
    %1951 = arith.subf %1949, %1950 : vector<8x4xf32>
    %cst_453 = arith.constant 0.000000e+00 : f32
    %1952 = vector.broadcast %cst_453 : f32 to vector<8x16xf32>
    %1953 = vector.extract_strided_slice %1951 {offsets = [0, 0], sizes = [8, 1], strides = [1, 1]} : vector<8x4xf32> to vector<8x1xf32>
    %1954 = vector.extract_strided_slice %1880 {offsets = [0, 4], sizes = [8, 1], strides = [1, 1]} : vector<8x16xf32> to vector<8x1xf32>
    %1955 = vector.broadcast %1943 : vector<1x16xf32> to vector<8x16xf32>
    %1956 = vector.broadcast %1953 : vector<8x1xf32> to vector<8x16xf32>
    %1957 = arith.subf %1955, %1956 : vector<8x16xf32>
    %1958 = math.absf %1957 : vector<8x16xf32>
    %cst_454 = arith.constant 1.000000e+00 : f32
    %1959 = vector.broadcast %cst_454 : f32 to vector<8x16xf32>
    %1960 = arith.subf %1959, %1958 : vector<8x16xf32>
    %cst_455 = arith.constant 0.000000e+00 : f32
    %1961 = vector.broadcast %cst_455 : f32 to vector<8x16xf32>
    %1962 = arith.maximumf %1960, %1961 : vector<8x16xf32>
    %1963 = vector.broadcast %1954 : vector<8x1xf32> to vector<8x16xf32>
    %1964 = arith.mulf %1962, %1963 : vector<8x16xf32>
    %1965 = arith.addf %1952, %1964 : vector<8x16xf32>
    %1966 = vector.extract_strided_slice %1951 {offsets = [0, 1], sizes = [8, 1], strides = [1, 1]} : vector<8x4xf32> to vector<8x1xf32>
    %1967 = vector.extract_strided_slice %1880 {offsets = [0, 5], sizes = [8, 1], strides = [1, 1]} : vector<8x16xf32> to vector<8x1xf32>
    %1968 = vector.broadcast %1943 : vector<1x16xf32> to vector<8x16xf32>
    %1969 = vector.broadcast %1966 : vector<8x1xf32> to vector<8x16xf32>
    %1970 = arith.subf %1968, %1969 : vector<8x16xf32>
    %1971 = math.absf %1970 : vector<8x16xf32>
    %cst_456 = arith.constant 1.000000e+00 : f32
    %1972 = vector.broadcast %cst_456 : f32 to vector<8x16xf32>
    %1973 = arith.subf %1972, %1971 : vector<8x16xf32>
    %cst_457 = arith.constant 0.000000e+00 : f32
    %1974 = vector.broadcast %cst_457 : f32 to vector<8x16xf32>
    %1975 = arith.maximumf %1973, %1974 : vector<8x16xf32>
    %1976 = vector.broadcast %1967 : vector<8x1xf32> to vector<8x16xf32>
    %1977 = arith.mulf %1975, %1976 : vector<8x16xf32>
    %1978 = arith.addf %1965, %1977 : vector<8x16xf32>
    %1979 = vector.extract_strided_slice %1951 {offsets = [0, 2], sizes = [8, 1], strides = [1, 1]} : vector<8x4xf32> to vector<8x1xf32>
    %1980 = vector.extract_strided_slice %1880 {offsets = [0, 6], sizes = [8, 1], strides = [1, 1]} : vector<8x16xf32> to vector<8x1xf32>
    %1981 = vector.broadcast %1943 : vector<1x16xf32> to vector<8x16xf32>
    %1982 = vector.broadcast %1979 : vector<8x1xf32> to vector<8x16xf32>
    %1983 = arith.subf %1981, %1982 : vector<8x16xf32>
    %1984 = math.absf %1983 : vector<8x16xf32>
    %cst_458 = arith.constant 1.000000e+00 : f32
    %1985 = vector.broadcast %cst_458 : f32 to vector<8x16xf32>
    %1986 = arith.subf %1985, %1984 : vector<8x16xf32>
    %cst_459 = arith.constant 0.000000e+00 : f32
    %1987 = vector.broadcast %cst_459 : f32 to vector<8x16xf32>
    %1988 = arith.maximumf %1986, %1987 : vector<8x16xf32>
    %1989 = vector.broadcast %1980 : vector<8x1xf32> to vector<8x16xf32>
    %1990 = arith.mulf %1988, %1989 : vector<8x16xf32>
    %1991 = arith.addf %1978, %1990 : vector<8x16xf32>
    %1992 = vector.extract_strided_slice %1951 {offsets = [0, 3], sizes = [8, 1], strides = [1, 1]} : vector<8x4xf32> to vector<8x1xf32>
    %1993 = vector.extract_strided_slice %1880 {offsets = [0, 7], sizes = [8, 1], strides = [1, 1]} : vector<8x16xf32> to vector<8x1xf32>
    %1994 = vector.broadcast %1943 : vector<1x16xf32> to vector<8x16xf32>
    %1995 = vector.broadcast %1992 : vector<8x1xf32> to vector<8x16xf32>
    %1996 = arith.subf %1994, %1995 : vector<8x16xf32>
    %1997 = math.absf %1996 : vector<8x16xf32>
    %cst_460 = arith.constant 1.000000e+00 : f32
    %1998 = vector.broadcast %cst_460 : f32 to vector<8x16xf32>
    %1999 = arith.subf %1998, %1997 : vector<8x16xf32>
    %cst_461 = arith.constant 0.000000e+00 : f32
    %2000 = vector.broadcast %cst_461 : f32 to vector<8x16xf32>
    %2001 = arith.maximumf %1999, %2000 : vector<8x16xf32>
    %2002 = vector.broadcast %1993 : vector<8x1xf32> to vector<8x16xf32>
    %2003 = arith.mulf %2001, %2002 : vector<8x16xf32>
    %2004 = arith.addf %1991, %2003 : vector<8x16xf32>
    %2005 = vector.extract_strided_slice %9 {offsets = [0, 0], sizes = [1, 8], strides = [1, 1]} : vector<1x64xf32> to vector<1x8xf32>
    %2006 = vector.extract_strided_slice %7 {offsets = [0, 2], sizes = [8, 1], strides = [1, 1]} : vector<8x4xf32> to vector<8x1xf32>
    %cst_462 = arith.constant 8.000000e+00 : f32
    %2007 = vector.broadcast %cst_462 : f32 to vector<8x1xf32>
    %2008 = arith.mulf %2006, %2007 : vector<8x1xf32>
    %2009 = vector.extract_strided_slice %1869 {offsets = [0, 8], sizes = [8, 4], strides = [1, 1]} : vector<8x16xf32> to vector<8x4xf32>
    %2010 = vector.broadcast %2008 : vector<8x1xf32> to vector<8x4xf32>
    %2011 = arith.addf %2010, %2009 : vector<8x4xf32>
    %cst_463 = arith.constant 5.000000e-01 : f32
    %2012 = vector.broadcast %cst_463 : f32 to vector<8x4xf32>
    %2013 = arith.subf %2011, %2012 : vector<8x4xf32>
    %cst_464 = arith.constant 0.000000e+00 : f32
    %2014 = vector.broadcast %cst_464 : f32 to vector<8x8xf32>
    %2015 = vector.extract_strided_slice %2013 {offsets = [0, 0], sizes = [8, 1], strides = [1, 1]} : vector<8x4xf32> to vector<8x1xf32>
    %2016 = vector.extract_strided_slice %1880 {offsets = [0, 8], sizes = [8, 1], strides = [1, 1]} : vector<8x16xf32> to vector<8x1xf32>
    %2017 = vector.broadcast %2005 : vector<1x8xf32> to vector<8x8xf32>
    %2018 = vector.broadcast %2015 : vector<8x1xf32> to vector<8x8xf32>
    %2019 = arith.subf %2017, %2018 : vector<8x8xf32>
    %2020 = math.absf %2019 : vector<8x8xf32>
    %cst_465 = arith.constant 1.000000e+00 : f32
    %2021 = vector.broadcast %cst_465 : f32 to vector<8x8xf32>
    %2022 = arith.subf %2021, %2020 : vector<8x8xf32>
    %cst_466 = arith.constant 0.000000e+00 : f32
    %2023 = vector.broadcast %cst_466 : f32 to vector<8x8xf32>
    %2024 = arith.maximumf %2022, %2023 : vector<8x8xf32>
    %2025 = vector.broadcast %2016 : vector<8x1xf32> to vector<8x8xf32>
    %2026 = arith.mulf %2024, %2025 : vector<8x8xf32>
    %2027 = arith.addf %2014, %2026 : vector<8x8xf32>
    %2028 = vector.extract_strided_slice %2013 {offsets = [0, 1], sizes = [8, 1], strides = [1, 1]} : vector<8x4xf32> to vector<8x1xf32>
    %2029 = vector.extract_strided_slice %1880 {offsets = [0, 9], sizes = [8, 1], strides = [1, 1]} : vector<8x16xf32> to vector<8x1xf32>
    %2030 = vector.broadcast %2005 : vector<1x8xf32> to vector<8x8xf32>
    %2031 = vector.broadcast %2028 : vector<8x1xf32> to vector<8x8xf32>
    %2032 = arith.subf %2030, %2031 : vector<8x8xf32>
    %2033 = math.absf %2032 : vector<8x8xf32>
    %cst_467 = arith.constant 1.000000e+00 : f32
    %2034 = vector.broadcast %cst_467 : f32 to vector<8x8xf32>
    %2035 = arith.subf %2034, %2033 : vector<8x8xf32>
    %cst_468 = arith.constant 0.000000e+00 : f32
    %2036 = vector.broadcast %cst_468 : f32 to vector<8x8xf32>
    %2037 = arith.maximumf %2035, %2036 : vector<8x8xf32>
    %2038 = vector.broadcast %2029 : vector<8x1xf32> to vector<8x8xf32>
    %2039 = arith.mulf %2037, %2038 : vector<8x8xf32>
    %2040 = arith.addf %2027, %2039 : vector<8x8xf32>
    %2041 = vector.extract_strided_slice %2013 {offsets = [0, 2], sizes = [8, 1], strides = [1, 1]} : vector<8x4xf32> to vector<8x1xf32>
    %2042 = vector.extract_strided_slice %1880 {offsets = [0, 10], sizes = [8, 1], strides = [1, 1]} : vector<8x16xf32> to vector<8x1xf32>
    %2043 = vector.broadcast %2005 : vector<1x8xf32> to vector<8x8xf32>
    %2044 = vector.broadcast %2041 : vector<8x1xf32> to vector<8x8xf32>
    %2045 = arith.subf %2043, %2044 : vector<8x8xf32>
    %2046 = math.absf %2045 : vector<8x8xf32>
    %cst_469 = arith.constant 1.000000e+00 : f32
    %2047 = vector.broadcast %cst_469 : f32 to vector<8x8xf32>
    %2048 = arith.subf %2047, %2046 : vector<8x8xf32>
    %cst_470 = arith.constant 0.000000e+00 : f32
    %2049 = vector.broadcast %cst_470 : f32 to vector<8x8xf32>
    %2050 = arith.maximumf %2048, %2049 : vector<8x8xf32>
    %2051 = vector.broadcast %2042 : vector<8x1xf32> to vector<8x8xf32>
    %2052 = arith.mulf %2050, %2051 : vector<8x8xf32>
    %2053 = arith.addf %2040, %2052 : vector<8x8xf32>
    %2054 = vector.extract_strided_slice %2013 {offsets = [0, 3], sizes = [8, 1], strides = [1, 1]} : vector<8x4xf32> to vector<8x1xf32>
    %2055 = vector.extract_strided_slice %1880 {offsets = [0, 11], sizes = [8, 1], strides = [1, 1]} : vector<8x16xf32> to vector<8x1xf32>
    %2056 = vector.broadcast %2005 : vector<1x8xf32> to vector<8x8xf32>
    %2057 = vector.broadcast %2054 : vector<8x1xf32> to vector<8x8xf32>
    %2058 = arith.subf %2056, %2057 : vector<8x8xf32>
    %2059 = math.absf %2058 : vector<8x8xf32>
    %cst_471 = arith.constant 1.000000e+00 : f32
    %2060 = vector.broadcast %cst_471 : f32 to vector<8x8xf32>
    %2061 = arith.subf %2060, %2059 : vector<8x8xf32>
    %cst_472 = arith.constant 0.000000e+00 : f32
    %2062 = vector.broadcast %cst_472 : f32 to vector<8x8xf32>
    %2063 = arith.maximumf %2061, %2062 : vector<8x8xf32>
    %2064 = vector.broadcast %2055 : vector<8x1xf32> to vector<8x8xf32>
    %2065 = arith.mulf %2063, %2064 : vector<8x8xf32>
    %2066 = arith.addf %2053, %2065 : vector<8x8xf32>
    %2067 = vector.extract_strided_slice %9 {offsets = [0, 0], sizes = [1, 8], strides = [1, 1]} : vector<1x64xf32> to vector<1x8xf32>
    %2068 = vector.extract_strided_slice %7 {offsets = [0, 3], sizes = [8, 1], strides = [1, 1]} : vector<8x4xf32> to vector<8x1xf32>
    %cst_473 = arith.constant 8.000000e+00 : f32
    %2069 = vector.broadcast %cst_473 : f32 to vector<8x1xf32>
    %2070 = arith.mulf %2068, %2069 : vector<8x1xf32>
    %2071 = vector.extract_strided_slice %1869 {offsets = [0, 12], sizes = [8, 4], strides = [1, 1]} : vector<8x16xf32> to vector<8x4xf32>
    %2072 = vector.broadcast %2070 : vector<8x1xf32> to vector<8x4xf32>
    %2073 = arith.addf %2072, %2071 : vector<8x4xf32>
    %cst_474 = arith.constant 5.000000e-01 : f32
    %2074 = vector.broadcast %cst_474 : f32 to vector<8x4xf32>
    %2075 = arith.subf %2073, %2074 : vector<8x4xf32>
    %cst_475 = arith.constant 0.000000e+00 : f32
    %2076 = vector.broadcast %cst_475 : f32 to vector<8x8xf32>
    %2077 = vector.extract_strided_slice %2075 {offsets = [0, 0], sizes = [8, 1], strides = [1, 1]} : vector<8x4xf32> to vector<8x1xf32>
    %2078 = vector.extract_strided_slice %1880 {offsets = [0, 12], sizes = [8, 1], strides = [1, 1]} : vector<8x16xf32> to vector<8x1xf32>
    %2079 = vector.broadcast %2067 : vector<1x8xf32> to vector<8x8xf32>
    %2080 = vector.broadcast %2077 : vector<8x1xf32> to vector<8x8xf32>
    %2081 = arith.subf %2079, %2080 : vector<8x8xf32>
    %2082 = math.absf %2081 : vector<8x8xf32>
    %cst_476 = arith.constant 1.000000e+00 : f32
    %2083 = vector.broadcast %cst_476 : f32 to vector<8x8xf32>
    %2084 = arith.subf %2083, %2082 : vector<8x8xf32>
    %cst_477 = arith.constant 0.000000e+00 : f32
    %2085 = vector.broadcast %cst_477 : f32 to vector<8x8xf32>
    %2086 = arith.maximumf %2084, %2085 : vector<8x8xf32>
    %2087 = vector.broadcast %2078 : vector<8x1xf32> to vector<8x8xf32>
    %2088 = arith.mulf %2086, %2087 : vector<8x8xf32>
    %2089 = arith.addf %2076, %2088 : vector<8x8xf32>
    %2090 = vector.extract_strided_slice %2075 {offsets = [0, 1], sizes = [8, 1], strides = [1, 1]} : vector<8x4xf32> to vector<8x1xf32>
    %2091 = vector.extract_strided_slice %1880 {offsets = [0, 13], sizes = [8, 1], strides = [1, 1]} : vector<8x16xf32> to vector<8x1xf32>
    %2092 = vector.broadcast %2067 : vector<1x8xf32> to vector<8x8xf32>
    %2093 = vector.broadcast %2090 : vector<8x1xf32> to vector<8x8xf32>
    %2094 = arith.subf %2092, %2093 : vector<8x8xf32>
    %2095 = math.absf %2094 : vector<8x8xf32>
    %cst_478 = arith.constant 1.000000e+00 : f32
    %2096 = vector.broadcast %cst_478 : f32 to vector<8x8xf32>
    %2097 = arith.subf %2096, %2095 : vector<8x8xf32>
    %cst_479 = arith.constant 0.000000e+00 : f32
    %2098 = vector.broadcast %cst_479 : f32 to vector<8x8xf32>
    %2099 = arith.maximumf %2097, %2098 : vector<8x8xf32>
    %2100 = vector.broadcast %2091 : vector<8x1xf32> to vector<8x8xf32>
    %2101 = arith.mulf %2099, %2100 : vector<8x8xf32>
    %2102 = arith.addf %2089, %2101 : vector<8x8xf32>
    %2103 = vector.extract_strided_slice %2075 {offsets = [0, 2], sizes = [8, 1], strides = [1, 1]} : vector<8x4xf32> to vector<8x1xf32>
    %2104 = vector.extract_strided_slice %1880 {offsets = [0, 14], sizes = [8, 1], strides = [1, 1]} : vector<8x16xf32> to vector<8x1xf32>
    %2105 = vector.broadcast %2067 : vector<1x8xf32> to vector<8x8xf32>
    %2106 = vector.broadcast %2103 : vector<8x1xf32> to vector<8x8xf32>
    %2107 = arith.subf %2105, %2106 : vector<8x8xf32>
    %2108 = math.absf %2107 : vector<8x8xf32>
    %cst_480 = arith.constant 1.000000e+00 : f32
    %2109 = vector.broadcast %cst_480 : f32 to vector<8x8xf32>
    %2110 = arith.subf %2109, %2108 : vector<8x8xf32>
    %cst_481 = arith.constant 0.000000e+00 : f32
    %2111 = vector.broadcast %cst_481 : f32 to vector<8x8xf32>
    %2112 = arith.maximumf %2110, %2111 : vector<8x8xf32>
    %2113 = vector.broadcast %2104 : vector<8x1xf32> to vector<8x8xf32>
    %2114 = arith.mulf %2112, %2113 : vector<8x8xf32>
    %2115 = arith.addf %2102, %2114 : vector<8x8xf32>
    %2116 = vector.extract_strided_slice %2075 {offsets = [0, 3], sizes = [8, 1], strides = [1, 1]} : vector<8x4xf32> to vector<8x1xf32>
    %2117 = vector.extract_strided_slice %1880 {offsets = [0, 15], sizes = [8, 1], strides = [1, 1]} : vector<8x16xf32> to vector<8x1xf32>
    %2118 = vector.broadcast %2067 : vector<1x8xf32> to vector<8x8xf32>
    %2119 = vector.broadcast %2116 : vector<8x1xf32> to vector<8x8xf32>
    %2120 = arith.subf %2118, %2119 : vector<8x8xf32>
    %2121 = math.absf %2120 : vector<8x8xf32>
    %cst_482 = arith.constant 1.000000e+00 : f32
    %2122 = vector.broadcast %cst_482 : f32 to vector<8x8xf32>
    %2123 = arith.subf %2122, %2121 : vector<8x8xf32>
    %cst_483 = arith.constant 0.000000e+00 : f32
    %2124 = vector.broadcast %cst_483 : f32 to vector<8x8xf32>
    %2125 = arith.maximumf %2123, %2124 : vector<8x8xf32>
    %2126 = vector.broadcast %2117 : vector<8x1xf32> to vector<8x8xf32>
    %2127 = arith.mulf %2125, %2126 : vector<8x8xf32>
    %2128 = arith.addf %2115, %2127 : vector<8x8xf32>
    %2129 = tpu.concatenate %1942, %2004, %2066, %2128 in 1 : vector<8x32xf32>, vector<8x16xf32>, vector<8x8xf32>, vector<8x8xf32> -> vector<8x64xf32>
    %2130 = vector.extract_strided_slice %1335 {offsets = [0, 16], sizes = [64, 8], strides = [1, 1]} : vector<64x32xf32> to vector<64x8xf32>
    %cst_484 = arith.constant dense<0.000000e+00> : vector<8x8xf32>
    %2131 = tpu.matmul %2129, %2130, %cst_484 {dimension_numbers = #tpu.dot_dimension_numbers<[1], [0], [0], [1], [0, 0, 1, 1], [], []>} : vector<8x64xf32>, vector<64x8xf32>, vector<8x8xf32> -> vector<8x8xf32>
    %2132 = vector.extract_strided_slice %1342 {offsets = [0, 48], sizes = [8, 16], strides = [1, 1]} : vector<8x128xf32> to vector<8x16xf32>
    %2133 = vector.extract_strided_slice %1342 {offsets = [0, 112], sizes = [8, 16], strides = [1, 1]} : vector<8x128xf32> to vector<8x16xf32>
    %cst_485 = arith.constant dense<0xFF800000> : vector<8xf32>
    %2134 = vector.multi_reduction <maximumf>, %2133, %cst_485 [1] : vector<8x16xf32> to vector<8xf32>
    %2135 = vector.shape_cast %2134 : vector<8xf32> to vector<8x1xf32>
    %2136 = vector.broadcast %2135 : vector<8x1xf32> to vector<8x16xf32>
    %2137 = arith.subf %2133, %2136 : vector<8x16xf32>
    %2138 = math.exp %2137 : vector<8x16xf32>
    %cst_486 = arith.constant dense<0.000000e+00> : vector<8xf32>
    %2139 = vector.multi_reduction <add>, %2138, %cst_486 [1] : vector<8x16xf32> to vector<8xf32>
    %2140 = vector.shape_cast %2139 : vector<8xf32> to vector<8x1xf32>
    %2141 = tpu.reciprocal %2140 {approx = true} : vector<8x1xf32> -> vector<8x1xf32>
    %2142 = vector.broadcast %2141 : vector<8x1xf32> to vector<8x16xf32>
    %2143 = arith.mulf %2138, %2142 : vector<8x16xf32>
    %2144 = vector.extract_strided_slice %9 {offsets = [0, 0], sizes = [1, 32], strides = [1, 1]} : vector<1x64xf32> to vector<1x32xf32>
    %2145 = vector.extract_strided_slice %7 {offsets = [0, 0], sizes = [8, 1], strides = [1, 1]} : vector<8x4xf32> to vector<8x1xf32>
    %cst_487 = arith.constant 3.200000e+01 : f32
    %2146 = vector.broadcast %cst_487 : f32 to vector<8x1xf32>
    %2147 = arith.mulf %2145, %2146 : vector<8x1xf32>
    %2148 = vector.extract_strided_slice %2132 {offsets = [0, 0], sizes = [8, 4], strides = [1, 1]} : vector<8x16xf32> to vector<8x4xf32>
    %2149 = vector.broadcast %2147 : vector<8x1xf32> to vector<8x4xf32>
    %2150 = arith.addf %2149, %2148 : vector<8x4xf32>
    %cst_488 = arith.constant 5.000000e-01 : f32
    %2151 = vector.broadcast %cst_488 : f32 to vector<8x4xf32>
    %2152 = arith.subf %2150, %2151 : vector<8x4xf32>
    %cst_489 = arith.constant 0.000000e+00 : f32
    %2153 = vector.broadcast %cst_489 : f32 to vector<8x32xf32>
    %2154 = vector.extract_strided_slice %2152 {offsets = [0, 0], sizes = [8, 1], strides = [1, 1]} : vector<8x4xf32> to vector<8x1xf32>
    %2155 = vector.extract_strided_slice %2143 {offsets = [0, 0], sizes = [8, 1], strides = [1, 1]} : vector<8x16xf32> to vector<8x1xf32>
    %2156 = vector.broadcast %2144 : vector<1x32xf32> to vector<8x32xf32>
    %2157 = vector.broadcast %2154 : vector<8x1xf32> to vector<8x32xf32>
    %2158 = arith.subf %2156, %2157 : vector<8x32xf32>
    %2159 = math.absf %2158 : vector<8x32xf32>
    %cst_490 = arith.constant 1.000000e+00 : f32
    %2160 = vector.broadcast %cst_490 : f32 to vector<8x32xf32>
    %2161 = arith.subf %2160, %2159 : vector<8x32xf32>
    %cst_491 = arith.constant 0.000000e+00 : f32
    %2162 = vector.broadcast %cst_491 : f32 to vector<8x32xf32>
    %2163 = arith.maximumf %2161, %2162 : vector<8x32xf32>
    %2164 = vector.broadcast %2155 : vector<8x1xf32> to vector<8x32xf32>
    %2165 = arith.mulf %2163, %2164 : vector<8x32xf32>
    %2166 = arith.addf %2153, %2165 : vector<8x32xf32>
    %2167 = vector.extract_strided_slice %2152 {offsets = [0, 1], sizes = [8, 1], strides = [1, 1]} : vector<8x4xf32> to vector<8x1xf32>
    %2168 = vector.extract_strided_slice %2143 {offsets = [0, 1], sizes = [8, 1], strides = [1, 1]} : vector<8x16xf32> to vector<8x1xf32>
    %2169 = vector.broadcast %2144 : vector<1x32xf32> to vector<8x32xf32>
    %2170 = vector.broadcast %2167 : vector<8x1xf32> to vector<8x32xf32>
    %2171 = arith.subf %2169, %2170 : vector<8x32xf32>
    %2172 = math.absf %2171 : vector<8x32xf32>
    %cst_492 = arith.constant 1.000000e+00 : f32
    %2173 = vector.broadcast %cst_492 : f32 to vector<8x32xf32>
    %2174 = arith.subf %2173, %2172 : vector<8x32xf32>
    %cst_493 = arith.constant 0.000000e+00 : f32
    %2175 = vector.broadcast %cst_493 : f32 to vector<8x32xf32>
    %2176 = arith.maximumf %2174, %2175 : vector<8x32xf32>
    %2177 = vector.broadcast %2168 : vector<8x1xf32> to vector<8x32xf32>
    %2178 = arith.mulf %2176, %2177 : vector<8x32xf32>
    %2179 = arith.addf %2166, %2178 : vector<8x32xf32>
    %2180 = vector.extract_strided_slice %2152 {offsets = [0, 2], sizes = [8, 1], strides = [1, 1]} : vector<8x4xf32> to vector<8x1xf32>
    %2181 = vector.extract_strided_slice %2143 {offsets = [0, 2], sizes = [8, 1], strides = [1, 1]} : vector<8x16xf32> to vector<8x1xf32>
    %2182 = vector.broadcast %2144 : vector<1x32xf32> to vector<8x32xf32>
    %2183 = vector.broadcast %2180 : vector<8x1xf32> to vector<8x32xf32>
    %2184 = arith.subf %2182, %2183 : vector<8x32xf32>
    %2185 = math.absf %2184 : vector<8x32xf32>
    %cst_494 = arith.constant 1.000000e+00 : f32
    %2186 = vector.broadcast %cst_494 : f32 to vector<8x32xf32>
    %2187 = arith.subf %2186, %2185 : vector<8x32xf32>
    %cst_495 = arith.constant 0.000000e+00 : f32
    %2188 = vector.broadcast %cst_495 : f32 to vector<8x32xf32>
    %2189 = arith.maximumf %2187, %2188 : vector<8x32xf32>
    %2190 = vector.broadcast %2181 : vector<8x1xf32> to vector<8x32xf32>
    %2191 = arith.mulf %2189, %2190 : vector<8x32xf32>
    %2192 = arith.addf %2179, %2191 : vector<8x32xf32>
    %2193 = vector.extract_strided_slice %2152 {offsets = [0, 3], sizes = [8, 1], strides = [1, 1]} : vector<8x4xf32> to vector<8x1xf32>
    %2194 = vector.extract_strided_slice %2143 {offsets = [0, 3], sizes = [8, 1], strides = [1, 1]} : vector<8x16xf32> to vector<8x1xf32>
    %2195 = vector.broadcast %2144 : vector<1x32xf32> to vector<8x32xf32>
    %2196 = vector.broadcast %2193 : vector<8x1xf32> to vector<8x32xf32>
    %2197 = arith.subf %2195, %2196 : vector<8x32xf32>
    %2198 = math.absf %2197 : vector<8x32xf32>
    %cst_496 = arith.constant 1.000000e+00 : f32
    %2199 = vector.broadcast %cst_496 : f32 to vector<8x32xf32>
    %2200 = arith.subf %2199, %2198 : vector<8x32xf32>
    %cst_497 = arith.constant 0.000000e+00 : f32
    %2201 = vector.broadcast %cst_497 : f32 to vector<8x32xf32>
    %2202 = arith.maximumf %2200, %2201 : vector<8x32xf32>
    %2203 = vector.broadcast %2194 : vector<8x1xf32> to vector<8x32xf32>
    %2204 = arith.mulf %2202, %2203 : vector<8x32xf32>
    %2205 = arith.addf %2192, %2204 : vector<8x32xf32>
    %2206 = vector.extract_strided_slice %9 {offsets = [0, 0], sizes = [1, 16], strides = [1, 1]} : vector<1x64xf32> to vector<1x16xf32>
    %2207 = vector.extract_strided_slice %7 {offsets = [0, 1], sizes = [8, 1], strides = [1, 1]} : vector<8x4xf32> to vector<8x1xf32>
    %cst_498 = arith.constant 1.600000e+01 : f32
    %2208 = vector.broadcast %cst_498 : f32 to vector<8x1xf32>
    %2209 = arith.mulf %2207, %2208 : vector<8x1xf32>
    %2210 = vector.extract_strided_slice %2132 {offsets = [0, 4], sizes = [8, 4], strides = [1, 1]} : vector<8x16xf32> to vector<8x4xf32>
    %2211 = vector.broadcast %2209 : vector<8x1xf32> to vector<8x4xf32>
    %2212 = arith.addf %2211, %2210 : vector<8x4xf32>
    %cst_499 = arith.constant 5.000000e-01 : f32
    %2213 = vector.broadcast %cst_499 : f32 to vector<8x4xf32>
    %2214 = arith.subf %2212, %2213 : vector<8x4xf32>
    %cst_500 = arith.constant 0.000000e+00 : f32
    %2215 = vector.broadcast %cst_500 : f32 to vector<8x16xf32>
    %2216 = vector.extract_strided_slice %2214 {offsets = [0, 0], sizes = [8, 1], strides = [1, 1]} : vector<8x4xf32> to vector<8x1xf32>
    %2217 = vector.extract_strided_slice %2143 {offsets = [0, 4], sizes = [8, 1], strides = [1, 1]} : vector<8x16xf32> to vector<8x1xf32>
    %2218 = vector.broadcast %2206 : vector<1x16xf32> to vector<8x16xf32>
    %2219 = vector.broadcast %2216 : vector<8x1xf32> to vector<8x16xf32>
    %2220 = arith.subf %2218, %2219 : vector<8x16xf32>
    %2221 = math.absf %2220 : vector<8x16xf32>
    %cst_501 = arith.constant 1.000000e+00 : f32
    %2222 = vector.broadcast %cst_501 : f32 to vector<8x16xf32>
    %2223 = arith.subf %2222, %2221 : vector<8x16xf32>
    %cst_502 = arith.constant 0.000000e+00 : f32
    %2224 = vector.broadcast %cst_502 : f32 to vector<8x16xf32>
    %2225 = arith.maximumf %2223, %2224 : vector<8x16xf32>
    %2226 = vector.broadcast %2217 : vector<8x1xf32> to vector<8x16xf32>
    %2227 = arith.mulf %2225, %2226 : vector<8x16xf32>
    %2228 = arith.addf %2215, %2227 : vector<8x16xf32>
    %2229 = vector.extract_strided_slice %2214 {offsets = [0, 1], sizes = [8, 1], strides = [1, 1]} : vector<8x4xf32> to vector<8x1xf32>
    %2230 = vector.extract_strided_slice %2143 {offsets = [0, 5], sizes = [8, 1], strides = [1, 1]} : vector<8x16xf32> to vector<8x1xf32>
    %2231 = vector.broadcast %2206 : vector<1x16xf32> to vector<8x16xf32>
    %2232 = vector.broadcast %2229 : vector<8x1xf32> to vector<8x16xf32>
    %2233 = arith.subf %2231, %2232 : vector<8x16xf32>
    %2234 = math.absf %2233 : vector<8x16xf32>
    %cst_503 = arith.constant 1.000000e+00 : f32
    %2235 = vector.broadcast %cst_503 : f32 to vector<8x16xf32>
    %2236 = arith.subf %2235, %2234 : vector<8x16xf32>
    %cst_504 = arith.constant 0.000000e+00 : f32
    %2237 = vector.broadcast %cst_504 : f32 to vector<8x16xf32>
    %2238 = arith.maximumf %2236, %2237 : vector<8x16xf32>
    %2239 = vector.broadcast %2230 : vector<8x1xf32> to vector<8x16xf32>
    %2240 = arith.mulf %2238, %2239 : vector<8x16xf32>
    %2241 = arith.addf %2228, %2240 : vector<8x16xf32>
    %2242 = vector.extract_strided_slice %2214 {offsets = [0, 2], sizes = [8, 1], strides = [1, 1]} : vector<8x4xf32> to vector<8x1xf32>
    %2243 = vector.extract_strided_slice %2143 {offsets = [0, 6], sizes = [8, 1], strides = [1, 1]} : vector<8x16xf32> to vector<8x1xf32>
    %2244 = vector.broadcast %2206 : vector<1x16xf32> to vector<8x16xf32>
    %2245 = vector.broadcast %2242 : vector<8x1xf32> to vector<8x16xf32>
    %2246 = arith.subf %2244, %2245 : vector<8x16xf32>
    %2247 = math.absf %2246 : vector<8x16xf32>
    %cst_505 = arith.constant 1.000000e+00 : f32
    %2248 = vector.broadcast %cst_505 : f32 to vector<8x16xf32>
    %2249 = arith.subf %2248, %2247 : vector<8x16xf32>
    %cst_506 = arith.constant 0.000000e+00 : f32
    %2250 = vector.broadcast %cst_506 : f32 to vector<8x16xf32>
    %2251 = arith.maximumf %2249, %2250 : vector<8x16xf32>
    %2252 = vector.broadcast %2243 : vector<8x1xf32> to vector<8x16xf32>
    %2253 = arith.mulf %2251, %2252 : vector<8x16xf32>
    %2254 = arith.addf %2241, %2253 : vector<8x16xf32>
    %2255 = vector.extract_strided_slice %2214 {offsets = [0, 3], sizes = [8, 1], strides = [1, 1]} : vector<8x4xf32> to vector<8x1xf32>
    %2256 = vector.extract_strided_slice %2143 {offsets = [0, 7], sizes = [8, 1], strides = [1, 1]} : vector<8x16xf32> to vector<8x1xf32>
    %2257 = vector.broadcast %2206 : vector<1x16xf32> to vector<8x16xf32>
    %2258 = vector.broadcast %2255 : vector<8x1xf32> to vector<8x16xf32>
    %2259 = arith.subf %2257, %2258 : vector<8x16xf32>
    %2260 = math.absf %2259 : vector<8x16xf32>
    %cst_507 = arith.constant 1.000000e+00 : f32
    %2261 = vector.broadcast %cst_507 : f32 to vector<8x16xf32>
    %2262 = arith.subf %2261, %2260 : vector<8x16xf32>
    %cst_508 = arith.constant 0.000000e+00 : f32
    %2263 = vector.broadcast %cst_508 : f32 to vector<8x16xf32>
    %2264 = arith.maximumf %2262, %2263 : vector<8x16xf32>
    %2265 = vector.broadcast %2256 : vector<8x1xf32> to vector<8x16xf32>
    %2266 = arith.mulf %2264, %2265 : vector<8x16xf32>
    %2267 = arith.addf %2254, %2266 : vector<8x16xf32>
    %2268 = vector.extract_strided_slice %9 {offsets = [0, 0], sizes = [1, 8], strides = [1, 1]} : vector<1x64xf32> to vector<1x8xf32>
    %2269 = vector.extract_strided_slice %7 {offsets = [0, 2], sizes = [8, 1], strides = [1, 1]} : vector<8x4xf32> to vector<8x1xf32>
    %cst_509 = arith.constant 8.000000e+00 : f32
    %2270 = vector.broadcast %cst_509 : f32 to vector<8x1xf32>
    %2271 = arith.mulf %2269, %2270 : vector<8x1xf32>
    %2272 = vector.extract_strided_slice %2132 {offsets = [0, 8], sizes = [8, 4], strides = [1, 1]} : vector<8x16xf32> to vector<8x4xf32>
    %2273 = vector.broadcast %2271 : vector<8x1xf32> to vector<8x4xf32>
    %2274 = arith.addf %2273, %2272 : vector<8x4xf32>
    %cst_510 = arith.constant 5.000000e-01 : f32
    %2275 = vector.broadcast %cst_510 : f32 to vector<8x4xf32>
    %2276 = arith.subf %2274, %2275 : vector<8x4xf32>
    %cst_511 = arith.constant 0.000000e+00 : f32
    %2277 = vector.broadcast %cst_511 : f32 to vector<8x8xf32>
    %2278 = vector.extract_strided_slice %2276 {offsets = [0, 0], sizes = [8, 1], strides = [1, 1]} : vector<8x4xf32> to vector<8x1xf32>
    %2279 = vector.extract_strided_slice %2143 {offsets = [0, 8], sizes = [8, 1], strides = [1, 1]} : vector<8x16xf32> to vector<8x1xf32>
    %2280 = vector.broadcast %2268 : vector<1x8xf32> to vector<8x8xf32>
    %2281 = vector.broadcast %2278 : vector<8x1xf32> to vector<8x8xf32>
    %2282 = arith.subf %2280, %2281 : vector<8x8xf32>
    %2283 = math.absf %2282 : vector<8x8xf32>
    %cst_512 = arith.constant 1.000000e+00 : f32
    %2284 = vector.broadcast %cst_512 : f32 to vector<8x8xf32>
    %2285 = arith.subf %2284, %2283 : vector<8x8xf32>
    %cst_513 = arith.constant 0.000000e+00 : f32
    %2286 = vector.broadcast %cst_513 : f32 to vector<8x8xf32>
    %2287 = arith.maximumf %2285, %2286 : vector<8x8xf32>
    %2288 = vector.broadcast %2279 : vector<8x1xf32> to vector<8x8xf32>
    %2289 = arith.mulf %2287, %2288 : vector<8x8xf32>
    %2290 = arith.addf %2277, %2289 : vector<8x8xf32>
    %2291 = vector.extract_strided_slice %2276 {offsets = [0, 1], sizes = [8, 1], strides = [1, 1]} : vector<8x4xf32> to vector<8x1xf32>
    %2292 = vector.extract_strided_slice %2143 {offsets = [0, 9], sizes = [8, 1], strides = [1, 1]} : vector<8x16xf32> to vector<8x1xf32>
    %2293 = vector.broadcast %2268 : vector<1x8xf32> to vector<8x8xf32>
    %2294 = vector.broadcast %2291 : vector<8x1xf32> to vector<8x8xf32>
    %2295 = arith.subf %2293, %2294 : vector<8x8xf32>
    %2296 = math.absf %2295 : vector<8x8xf32>
    %cst_514 = arith.constant 1.000000e+00 : f32
    %2297 = vector.broadcast %cst_514 : f32 to vector<8x8xf32>
    %2298 = arith.subf %2297, %2296 : vector<8x8xf32>
    %cst_515 = arith.constant 0.000000e+00 : f32
    %2299 = vector.broadcast %cst_515 : f32 to vector<8x8xf32>
    %2300 = arith.maximumf %2298, %2299 : vector<8x8xf32>
    %2301 = vector.broadcast %2292 : vector<8x1xf32> to vector<8x8xf32>
    %2302 = arith.mulf %2300, %2301 : vector<8x8xf32>
    %2303 = arith.addf %2290, %2302 : vector<8x8xf32>
    %2304 = vector.extract_strided_slice %2276 {offsets = [0, 2], sizes = [8, 1], strides = [1, 1]} : vector<8x4xf32> to vector<8x1xf32>
    %2305 = vector.extract_strided_slice %2143 {offsets = [0, 10], sizes = [8, 1], strides = [1, 1]} : vector<8x16xf32> to vector<8x1xf32>
    %2306 = vector.broadcast %2268 : vector<1x8xf32> to vector<8x8xf32>
    %2307 = vector.broadcast %2304 : vector<8x1xf32> to vector<8x8xf32>
    %2308 = arith.subf %2306, %2307 : vector<8x8xf32>
    %2309 = math.absf %2308 : vector<8x8xf32>
    %cst_516 = arith.constant 1.000000e+00 : f32
    %2310 = vector.broadcast %cst_516 : f32 to vector<8x8xf32>
    %2311 = arith.subf %2310, %2309 : vector<8x8xf32>
    %cst_517 = arith.constant 0.000000e+00 : f32
    %2312 = vector.broadcast %cst_517 : f32 to vector<8x8xf32>
    %2313 = arith.maximumf %2311, %2312 : vector<8x8xf32>
    %2314 = vector.broadcast %2305 : vector<8x1xf32> to vector<8x8xf32>
    %2315 = arith.mulf %2313, %2314 : vector<8x8xf32>
    %2316 = arith.addf %2303, %2315 : vector<8x8xf32>
    %2317 = vector.extract_strided_slice %2276 {offsets = [0, 3], sizes = [8, 1], strides = [1, 1]} : vector<8x4xf32> to vector<8x1xf32>
    %2318 = vector.extract_strided_slice %2143 {offsets = [0, 11], sizes = [8, 1], strides = [1, 1]} : vector<8x16xf32> to vector<8x1xf32>
    %2319 = vector.broadcast %2268 : vector<1x8xf32> to vector<8x8xf32>
    %2320 = vector.broadcast %2317 : vector<8x1xf32> to vector<8x8xf32>
    %2321 = arith.subf %2319, %2320 : vector<8x8xf32>
    %2322 = math.absf %2321 : vector<8x8xf32>
    %cst_518 = arith.constant 1.000000e+00 : f32
    %2323 = vector.broadcast %cst_518 : f32 to vector<8x8xf32>
    %2324 = arith.subf %2323, %2322 : vector<8x8xf32>
    %cst_519 = arith.constant 0.000000e+00 : f32
    %2325 = vector.broadcast %cst_519 : f32 to vector<8x8xf32>
    %2326 = arith.maximumf %2324, %2325 : vector<8x8xf32>
    %2327 = vector.broadcast %2318 : vector<8x1xf32> to vector<8x8xf32>
    %2328 = arith.mulf %2326, %2327 : vector<8x8xf32>
    %2329 = arith.addf %2316, %2328 : vector<8x8xf32>
    %2330 = vector.extract_strided_slice %9 {offsets = [0, 0], sizes = [1, 8], strides = [1, 1]} : vector<1x64xf32> to vector<1x8xf32>
    %2331 = vector.extract_strided_slice %7 {offsets = [0, 3], sizes = [8, 1], strides = [1, 1]} : vector<8x4xf32> to vector<8x1xf32>
    %cst_520 = arith.constant 8.000000e+00 : f32
    %2332 = vector.broadcast %cst_520 : f32 to vector<8x1xf32>
    %2333 = arith.mulf %2331, %2332 : vector<8x1xf32>
    %2334 = vector.extract_strided_slice %2132 {offsets = [0, 12], sizes = [8, 4], strides = [1, 1]} : vector<8x16xf32> to vector<8x4xf32>
    %2335 = vector.broadcast %2333 : vector<8x1xf32> to vector<8x4xf32>
    %2336 = arith.addf %2335, %2334 : vector<8x4xf32>
    %cst_521 = arith.constant 5.000000e-01 : f32
    %2337 = vector.broadcast %cst_521 : f32 to vector<8x4xf32>
    %2338 = arith.subf %2336, %2337 : vector<8x4xf32>
    %cst_522 = arith.constant 0.000000e+00 : f32
    %2339 = vector.broadcast %cst_522 : f32 to vector<8x8xf32>
    %2340 = vector.extract_strided_slice %2338 {offsets = [0, 0], sizes = [8, 1], strides = [1, 1]} : vector<8x4xf32> to vector<8x1xf32>
    %2341 = vector.extract_strided_slice %2143 {offsets = [0, 12], sizes = [8, 1], strides = [1, 1]} : vector<8x16xf32> to vector<8x1xf32>
    %2342 = vector.broadcast %2330 : vector<1x8xf32> to vector<8x8xf32>
    %2343 = vector.broadcast %2340 : vector<8x1xf32> to vector<8x8xf32>
    %2344 = arith.subf %2342, %2343 : vector<8x8xf32>
    %2345 = math.absf %2344 : vector<8x8xf32>
    %cst_523 = arith.constant 1.000000e+00 : f32
    %2346 = vector.broadcast %cst_523 : f32 to vector<8x8xf32>
    %2347 = arith.subf %2346, %2345 : vector<8x8xf32>
    %cst_524 = arith.constant 0.000000e+00 : f32
    %2348 = vector.broadcast %cst_524 : f32 to vector<8x8xf32>
    %2349 = arith.maximumf %2347, %2348 : vector<8x8xf32>
    %2350 = vector.broadcast %2341 : vector<8x1xf32> to vector<8x8xf32>
    %2351 = arith.mulf %2349, %2350 : vector<8x8xf32>
    %2352 = arith.addf %2339, %2351 : vector<8x8xf32>
    %2353 = vector.extract_strided_slice %2338 {offsets = [0, 1], sizes = [8, 1], strides = [1, 1]} : vector<8x4xf32> to vector<8x1xf32>
    %2354 = vector.extract_strided_slice %2143 {offsets = [0, 13], sizes = [8, 1], strides = [1, 1]} : vector<8x16xf32> to vector<8x1xf32>
    %2355 = vector.broadcast %2330 : vector<1x8xf32> to vector<8x8xf32>
    %2356 = vector.broadcast %2353 : vector<8x1xf32> to vector<8x8xf32>
    %2357 = arith.subf %2355, %2356 : vector<8x8xf32>
    %2358 = math.absf %2357 : vector<8x8xf32>
    %cst_525 = arith.constant 1.000000e+00 : f32
    %2359 = vector.broadcast %cst_525 : f32 to vector<8x8xf32>
    %2360 = arith.subf %2359, %2358 : vector<8x8xf32>
    %cst_526 = arith.constant 0.000000e+00 : f32
    %2361 = vector.broadcast %cst_526 : f32 to vector<8x8xf32>
    %2362 = arith.maximumf %2360, %2361 : vector<8x8xf32>
    %2363 = vector.broadcast %2354 : vector<8x1xf32> to vector<8x8xf32>
    %2364 = arith.mulf %2362, %2363 : vector<8x8xf32>
    %2365 = arith.addf %2352, %2364 : vector<8x8xf32>
    %2366 = vector.extract_strided_slice %2338 {offsets = [0, 2], sizes = [8, 1], strides = [1, 1]} : vector<8x4xf32> to vector<8x1xf32>
    %2367 = vector.extract_strided_slice %2143 {offsets = [0, 14], sizes = [8, 1], strides = [1, 1]} : vector<8x16xf32> to vector<8x1xf32>
    %2368 = vector.broadcast %2330 : vector<1x8xf32> to vector<8x8xf32>
    %2369 = vector.broadcast %2366 : vector<8x1xf32> to vector<8x8xf32>
    %2370 = arith.subf %2368, %2369 : vector<8x8xf32>
    %2371 = math.absf %2370 : vector<8x8xf32>
    %cst_527 = arith.constant 1.000000e+00 : f32
    %2372 = vector.broadcast %cst_527 : f32 to vector<8x8xf32>
    %2373 = arith.subf %2372, %2371 : vector<8x8xf32>
    %cst_528 = arith.constant 0.000000e+00 : f32
    %2374 = vector.broadcast %cst_528 : f32 to vector<8x8xf32>
    %2375 = arith.maximumf %2373, %2374 : vector<8x8xf32>
    %2376 = vector.broadcast %2367 : vector<8x1xf32> to vector<8x8xf32>
    %2377 = arith.mulf %2375, %2376 : vector<8x8xf32>
    %2378 = arith.addf %2365, %2377 : vector<8x8xf32>
    %2379 = vector.extract_strided_slice %2338 {offsets = [0, 3], sizes = [8, 1], strides = [1, 1]} : vector<8x4xf32> to vector<8x1xf32>
    %2380 = vector.extract_strided_slice %2143 {offsets = [0, 15], sizes = [8, 1], strides = [1, 1]} : vector<8x16xf32> to vector<8x1xf32>
    %2381 = vector.broadcast %2330 : vector<1x8xf32> to vector<8x8xf32>
    %2382 = vector.broadcast %2379 : vector<8x1xf32> to vector<8x8xf32>
    %2383 = arith.subf %2381, %2382 : vector<8x8xf32>
    %2384 = math.absf %2383 : vector<8x8xf32>
    %cst_529 = arith.constant 1.000000e+00 : f32
    %2385 = vector.broadcast %cst_529 : f32 to vector<8x8xf32>
    %2386 = arith.subf %2385, %2384 : vector<8x8xf32>
    %cst_530 = arith.constant 0.000000e+00 : f32
    %2387 = vector.broadcast %cst_530 : f32 to vector<8x8xf32>
    %2388 = arith.maximumf %2386, %2387 : vector<8x8xf32>
    %2389 = vector.broadcast %2380 : vector<8x1xf32> to vector<8x8xf32>
    %2390 = arith.mulf %2388, %2389 : vector<8x8xf32>
    %2391 = arith.addf %2378, %2390 : vector<8x8xf32>
    %2392 = tpu.concatenate %2205, %2267, %2329, %2391 in 1 : vector<8x32xf32>, vector<8x16xf32>, vector<8x8xf32>, vector<8x8xf32> -> vector<8x64xf32>
    %2393 = vector.extract_strided_slice %1335 {offsets = [0, 24], sizes = [64, 8], strides = [1, 1]} : vector<64x32xf32> to vector<64x8xf32>
    %cst_531 = arith.constant dense<0.000000e+00> : vector<8x8xf32>
    %2394 = tpu.matmul %2392, %2393, %cst_531 {dimension_numbers = #tpu.dot_dimension_numbers<[1], [0], [0], [1], [0, 0, 1, 1], [], []>} : vector<8x64xf32>, vector<64x8xf32>, vector<8x8xf32> -> vector<8x8xf32>
    %2395 = tpu.concatenate %1605, %1868, %2131, %2394 in 1 : vector<8x8xf32>, vector<8x8xf32>, vector<8x8xf32>, vector<8x8xf32> -> vector<8x32xf32>
    %c1_532 = arith.constant 1 : index
    %c0_533 = arith.constant 0 : index
    %c352_534 = arith.constant 352 : index
    %2396 = vector.load %arg5[%c1_532, %c0_533, %c352_534] : memref<2x32x384xf32, #tpu.memory_space<vmem>>, vector<1x32x32xf32>
    %2397 = vector.shape_cast %2396 : vector<1x32x32xf32> to vector<32x32xf32>
    %cst_535 = arith.constant dense<0.000000e+00> : vector<8x32xf32>
    %2398 = tpu.matmul %2395, %2397, %cst_535 {dimension_numbers = #tpu.dot_dimension_numbers<[1], [0], [0], [1], [0, 0, 1, 1], [], []>} : vector<8x32xf32>, vector<32x32xf32>, vector<8x32xf32> -> vector<8x32xf32>
    %c1_536 = arith.constant 1 : index
    %c0_537 = arith.constant 0 : index
    %c352_538 = arith.constant 352 : index
    %2399 = vector.load %arg7[%c1_536, %c0_537, %c352_538] : memref<2x1x608xf32, #tpu.memory_space<vmem>>, vector<1x1x32xf32>
    %2400 = vector.shape_cast %2399 : vector<1x1x32xf32> to vector<1x32xf32>
    %2401 = vector.broadcast %2400 : vector<1x32xf32> to vector<8x32xf32>
    %2402 = arith.addf %2398, %2401 : vector<8x32xf32>
    %2403 = arith.addf %1327, %2402 : vector<8x32xf32>
    %c1_539 = arith.constant 1 : index
    %c0_540 = arith.constant 0 : index
    %c480_541 = arith.constant 480 : index
    %2404 = vector.load %arg7[%c1_539, %c0_540, %c480_541] : memref<2x1x608xf32, #tpu.memory_space<vmem>>, vector<1x1x32xf32>
    %2405 = vector.shape_cast %2404 : vector<1x1x32xf32> to vector<1x32xf32>
    %c1_542 = arith.constant 1 : index
    %c0_543 = arith.constant 0 : index
    %c512_544 = arith.constant 512 : index
    %2406 = vector.load %arg7[%c1_542, %c0_543, %c512_544] : memref<2x1x608xf32, #tpu.memory_space<vmem>>, vector<1x1x32xf32>
    %2407 = vector.shape_cast %2406 : vector<1x1x32xf32> to vector<1x32xf32>
    %cst_545 = arith.constant dense<0.000000e+00> : vector<8xf32>
    %2408 = vector.multi_reduction <add>, %2403, %cst_545 [1] : vector<8x32xf32> to vector<8xf32>
    %2409 = vector.shape_cast %2408 : vector<8xf32> to vector<8x1xf32>
    %cst_546 = arith.constant 3.200000e+01 : f32
    %2410 = vector.broadcast %cst_546 : f32 to vector<8x1xf32>
    %2411 = arith.divf %2409, %2410 : vector<8x1xf32>
    %2412 = vector.broadcast %2411 : vector<8x1xf32> to vector<8x32xf32>
    %2413 = arith.subf %2403, %2412 : vector<8x32xf32>
    %2414 = arith.mulf %2413, %2413 : vector<8x32xf32>
    %cst_547 = arith.constant dense<0.000000e+00> : vector<8xf32>
    %2415 = vector.multi_reduction <add>, %2414, %cst_547 [1] : vector<8x32xf32> to vector<8xf32>
    %2416 = vector.shape_cast %2415 : vector<8xf32> to vector<8x1xf32>
    %cst_548 = arith.constant 3.200000e+01 : f32
    %2417 = vector.broadcast %cst_548 : f32 to vector<8x1xf32>
    %2418 = arith.divf %2416, %2417 : vector<8x1xf32>
    %2419 = vector.broadcast %2411 : vector<8x1xf32> to vector<8x32xf32>
    %2420 = arith.subf %2403, %2419 : vector<8x32xf32>
    %cst_549 = arith.constant 9.99999974E-6 : f32
    %2421 = vector.broadcast %cst_549 : f32 to vector<8x1xf32>
    %2422 = arith.addf %2418, %2421 : vector<8x1xf32>
    %2423 = math.rsqrt %2422 : vector<8x1xf32>
    %2424 = vector.broadcast %2423 : vector<8x1xf32> to vector<8x32xf32>
    %2425 = arith.mulf %2420, %2424 : vector<8x32xf32>
    %2426 = vector.broadcast %2405 : vector<1x32xf32> to vector<8x32xf32>
    %2427 = arith.mulf %2425, %2426 : vector<8x32xf32>
    %2428 = vector.broadcast %2407 : vector<1x32xf32> to vector<8x32xf32>
    %2429 = arith.addf %2427, %2428 : vector<8x32xf32>
    %c1_550 = arith.constant 1 : index
    %c0_551 = arith.constant 0 : index
    %c192_552 = arith.constant 192 : index
    %2430 = vector.load %arg5[%c1_550, %c0_551, %c192_552] : memref<2x32x384xf32, #tpu.memory_space<vmem>>, vector<1x32x64xf32>
    %2431 = vector.shape_cast %2430 : vector<1x32x64xf32> to vector<32x64xf32>
    %cst_553 = arith.constant dense<0.000000e+00> : vector<8x64xf32>
    %2432 = tpu.matmul %2429, %2431, %cst_553 {dimension_numbers = #tpu.dot_dimension_numbers<[1], [0], [0], [1], [0, 0, 1, 1], [], []>} : vector<8x32xf32>, vector<32x64xf32>, vector<8x64xf32> -> vector<8x64xf32>
    %c1_554 = arith.constant 1 : index
    %c0_555 = arith.constant 0 : index
    %c192_556 = arith.constant 192 : index
    %2433 = vector.load %arg7[%c1_554, %c0_555, %c192_556] : memref<2x1x608xf32, #tpu.memory_space<vmem>>, vector<1x1x64xf32>
    %2434 = vector.shape_cast %2433 : vector<1x1x64xf32> to vector<1x64xf32>
    %2435 = vector.broadcast %2434 : vector<1x64xf32> to vector<8x64xf32>
    %2436 = arith.addf %2432, %2435 : vector<8x64xf32>
    %cst_557 = arith.constant 0.000000e+00 : f32
    %2437 = vector.broadcast %cst_557 : f32 to vector<8x64xf32>
    %2438 = arith.maximumf %2436, %2437 : vector<8x64xf32>
    %c1_558 = arith.constant 1 : index
    %c0_559 = arith.constant 0 : index
    %c0_560 = arith.constant 0 : index
    %2439 = vector.load %arg6[%c1_558, %c0_559, %c0_560] : memref<2x64x32xf32, #tpu.memory_space<vmem>>, vector<1x64x32xf32>
    %2440 = vector.shape_cast %2439 : vector<1x64x32xf32> to vector<64x32xf32>
    %cst_561 = arith.constant dense<0.000000e+00> : vector<8x32xf32>
    %2441 = tpu.matmul %2438, %2440, %cst_561 {dimension_numbers = #tpu.dot_dimension_numbers<[1], [0], [0], [1], [0, 0, 1, 1], [], []>} : vector<8x64xf32>, vector<64x32xf32>, vector<8x32xf32> -> vector<8x32xf32>
    %c1_562 = arith.constant 1 : index
    %c0_563 = arith.constant 0 : index
    %c384_564 = arith.constant 384 : index
    %2442 = vector.load %arg7[%c1_562, %c0_563, %c384_564] : memref<2x1x608xf32, #tpu.memory_space<vmem>>, vector<1x1x32xf32>
    %2443 = vector.shape_cast %2442 : vector<1x1x32xf32> to vector<1x32xf32>
    %2444 = vector.broadcast %2443 : vector<1x32xf32> to vector<8x32xf32>
    %2445 = arith.addf %2441, %2444 : vector<8x32xf32>
    %2446 = arith.addf %2429, %2445 : vector<8x32xf32>
    %c1_565 = arith.constant 1 : index
    %c0_566 = arith.constant 0 : index
    %c544_567 = arith.constant 544 : index
    %2447 = vector.load %arg7[%c1_565, %c0_566, %c544_567] : memref<2x1x608xf32, #tpu.memory_space<vmem>>, vector<1x1x32xf32>
    %2448 = vector.shape_cast %2447 : vector<1x1x32xf32> to vector<1x32xf32>
    %c1_568 = arith.constant 1 : index
    %c0_569 = arith.constant 0 : index
    %c576_570 = arith.constant 576 : index
    %2449 = vector.load %arg7[%c1_568, %c0_569, %c576_570] : memref<2x1x608xf32, #tpu.memory_space<vmem>>, vector<1x1x32xf32>
    %2450 = vector.shape_cast %2449 : vector<1x1x32xf32> to vector<1x32xf32>
    %cst_571 = arith.constant dense<0.000000e+00> : vector<8xf32>
    %2451 = vector.multi_reduction <add>, %2446, %cst_571 [1] : vector<8x32xf32> to vector<8xf32>
    %2452 = vector.shape_cast %2451 : vector<8xf32> to vector<8x1xf32>
    %cst_572 = arith.constant 3.200000e+01 : f32
    %2453 = vector.broadcast %cst_572 : f32 to vector<8x1xf32>
    %2454 = arith.divf %2452, %2453 : vector<8x1xf32>
    %2455 = vector.broadcast %2454 : vector<8x1xf32> to vector<8x32xf32>
    %2456 = arith.subf %2446, %2455 : vector<8x32xf32>
    %2457 = arith.mulf %2456, %2456 : vector<8x32xf32>
    %cst_573 = arith.constant dense<0.000000e+00> : vector<8xf32>
    %2458 = vector.multi_reduction <add>, %2457, %cst_573 [1] : vector<8x32xf32> to vector<8xf32>
    %2459 = vector.shape_cast %2458 : vector<8xf32> to vector<8x1xf32>
    %cst_574 = arith.constant 3.200000e+01 : f32
    %2460 = vector.broadcast %cst_574 : f32 to vector<8x1xf32>
    %2461 = arith.divf %2459, %2460 : vector<8x1xf32>
    %2462 = vector.broadcast %2454 : vector<8x1xf32> to vector<8x32xf32>
    %2463 = arith.subf %2446, %2462 : vector<8x32xf32>
    %cst_575 = arith.constant 9.99999974E-6 : f32
    %2464 = vector.broadcast %cst_575 : f32 to vector<8x1xf32>
    %2465 = arith.addf %2461, %2464 : vector<8x1xf32>
    %2466 = math.rsqrt %2465 : vector<8x1xf32>
    %2467 = vector.broadcast %2466 : vector<8x1xf32> to vector<8x32xf32>
    %2468 = arith.mulf %2463, %2467 : vector<8x32xf32>
    %2469 = vector.broadcast %2448 : vector<1x32xf32> to vector<8x32xf32>
    %2470 = arith.mulf %2468, %2469 : vector<8x32xf32>
    %2471 = vector.broadcast %2450 : vector<1x32xf32> to vector<8x32xf32>
    %2472 = arith.addf %2470, %2471 : vector<8x32xf32>
    %c1_576 = arith.constant 1 : index
    %c0_577 = arith.constant 0 : index
    %c0_578 = arith.constant 0 : index
    %c0_579 = arith.constant 0 : index
    %2473 = vector.load %arg8[%c1_576, %c0_577, %c0_578, %c0_579] : memref<2x1x8x32xf32, #tpu.memory_space<vmem>>, vector<1x1x8x32xf32>
    %2474 = vector.shape_cast %2473 : vector<1x1x8x32xf32> to vector<8x32xf32>
    %2475 = vector.shape_cast %2472 : vector<8x32xf32> to vector<1x1x8x32xf32>
    tpu.vector_store %arg8[%c1_576, %c0_577, %c0_578, %c0_579], %2475 {strides = array<i32>} : memref<2x1x8x32xf32, #tpu.memory_space<vmem>>, vector<1x1x8x32xf32>,
    return
  }
  func.func @transform_0(%arg0: i32) -> (i32, i32, i32) {
    %c0_i32 = arith.constant 0 : i32
    %c0_i32_0 = arith.constant 0 : i32
    %c0_i32_1 = arith.constant 0 : i32
    return %arg0, %c0_i32, %c0_i32_0 : i32, i32, i32
  }
  func.func @transform_1(%arg0: i32) -> (i32, i32, i32) {
    %c0_i32 = arith.constant 0 : i32
    %c0_i32_0 = arith.constant 0 : i32
    %c0_i32_1 = arith.constant 0 : i32
    return %arg0, %c0_i32, %c0_i32_0 : i32, i32, i32
  }
  func.func @transform_2(%arg0: i32) -> (i32, i32, i32) {
    %c0_i32 = arith.constant 0 : i32
    %c0_i32_0 = arith.constant 0 : i32
    %c0_i32_1 = arith.constant 0 : i32
    return %arg0, %c0_i32, %c0_i32_0 : i32, i32, i32
  }
  func.func @transform_3(%arg0: i32) -> (i32, i32, i32) {
    %c0_i32 = arith.constant 0 : i32
    %c0_i32_0 = arith.constant 0 : i32
    %c0_i32_1 = arith.constant 0 : i32
    return %arg0, %c0_i32, %c0_i32_0 : i32, i32, i32
  }
  func.func @transform_4(%arg0: i32) -> (i32, i32, i32) {
    %c0_i32 = arith.constant 0 : i32
    %c0_i32_0 = arith.constant 0 : i32
    %c0_i32_1 = arith.constant 0 : i32
    %c0_i32_2 = arith.constant 0 : i32
    return %c0_i32, %c0_i32_0, %c0_i32_1 : i32, i32, i32
  }
  func.func @transform_5(%arg0: i32) -> (i32, i32, i32) {
    %c0_i32 = arith.constant 0 : i32
    %c0_i32_0 = arith.constant 0 : i32
    %c0_i32_1 = arith.constant 0 : i32
    %c0_i32_2 = arith.constant 0 : i32
    return %c0_i32, %c0_i32_0, %c0_i32_1 : i32, i32, i32
  }
  func.func @transform_6(%arg0: i32) -> (i32, i32, i32) {
    %c0_i32 = arith.constant 0 : i32
    %c0_i32_0 = arith.constant 0 : i32
    %c0_i32_1 = arith.constant 0 : i32
    %c0_i32_2 = arith.constant 0 : i32
    return %c0_i32, %c0_i32_0, %c0_i32_1 : i32, i32, i32
  }
  func.func @transform_7(%arg0: i32) -> (i32, i32, i32, i32) {
    %c0_i32 = arith.constant 0 : i32
    %c0_i32_0 = arith.constant 0 : i32
    %c0_i32_1 = arith.constant 0 : i32
    %c0_i32_2 = arith.constant 0 : i32
    return %c0_i32, %arg0, %c0_i32_0, %c0_i32_1 : i32, i32, i32, i32
  }
}

</mosaic_0001>

<llo_original>
// kernel: decoder_forward.1
$region0: #{decoder_forward.1}
  #allocation0 [shape = 'u32[]', space=smem, size = 0x4, offset = 0x4, fixed_abs, tag = 'smem constant byte address 0x4 - core index']
  #allocation1 [shape = 'u32[72,128]{1,0:T(1,128)}', space=vmem, size = 0x9000, scoped, tag = 'internal scratch']
  %s0 = inlined_call_operand.vmem [shape: f32[2,8,32], index: 0, kind: input, shape index: {}]
  %s1 = inlined_call_operand.vmem [shape: f32[2,8,32], index: 1, kind: input, shape index: {}]
  %s2 = inlined_call_operand.vmem [shape: f32[2,64,32], index: 2, kind: input, shape index: {}]
  %s3 = inlined_call_operand.vmem [shape: f32[2,8,4], index: 3, kind: input, shape index: {}]
  %s4 = inlined_call_operand.vmem [shape: f32[2,32,384], index: 4, kind: input, shape index: {}]
  %s5 = inlined_call_operand.vmem [shape: f32[2,64,32], index: 5, kind: input, shape index: {}]
  %s6 = inlined_call_operand.vmem [shape: f32[2,1,608], index: 6, kind: input, shape index: {}]
  %s7 = inlined_call_operand.hbm [shape: f32[2,2,8,32], index: 7, kind: output, shape index: {}]
  %s8 = sld [smem:[#allocation0]]
  $region61: #{decoder_forward.1} parent=0
    _
  %s10 = ssub.s32 1, %s8
  %s11 = scalar_select 0, %s10, %s8
  $region1: #{decoder_forward.1} parent=0
    #allocation2 [shape = 'u8[16384]{0}', space=vmem, size = 0x4000, scoped, tag = 'output window, operand 0']
    #allocation3 [shape = 's32[2]{0}', space=sflag, size = 0x8, scoped, tag = 'scoped memory for decoder_forward.1']
    %12 = vsyncpa [#allocation3], 0
    %s13 = scalar_lea.sflag [#allocation3], 1
    %14 = vsyncpa %s13, 0
    loop: start=0, step=1, limit=4
    $region2: #{decoder_forward.1} parent=1 // loop_pre_header
      _
    $region3: #{decoder_forward.1} parent=1 // loop_header
      %s16 = sphi 0, %s20
      %p17 = scmp.ge.s32.totalorder %s16, 4
      %s26 = sphi 0, %s28
      %s29 = sphi 0, %s26
      %s30 = sphi 0, %s29
      %s46 = sphi 0, %s30
      %s52 = sphi 0, %s54
      %s55 = sphi 0, %s52
      %s56 = sphi 0, %s55
      %s72 = sphi 0, %s56
      %s78 = sphi 0, %s80
      %s81 = sphi 0, %s78
      %s82 = sphi 0, %s81
      %s98 = sphi 0, %s82
      %s104 = sphi 0, %s106
      %s107 = sphi 0, %s104
      %s108 = sphi 0, %s107
      %s124 = sphi 0, %s108
      %s128 = sphi 0, %s128
      %s130 = sphi 0, %s128
      %s131 = sphi 0, %s130
      %s145 = sphi 0, %s131
      %s149 = sphi 0, %s149
      %s151 = sphi 0, %s149
      %s152 = sphi 0, %s151
      %s166 = sphi 0, %s152
      %s170 = sphi 0, %s170
      %s172 = sphi 0, %s170
      %s173 = sphi 0, %s172
      %s187 = sphi 0, %s173
      %s193 = sphi 0, %s195
      %s196 = sphi 0, %s193
      %s197 = sphi 0, %s196
      %s213 = sphi 0, %s197
    $region4: #{decoder_forward.1} parent=1 // loop_header_branch
      %19 = sbr.rel (%p17) target = $region8
    $region5: #{decoder_forward.1} parent=1 // loop_body
      %s21 = ssub.s32 %s16, 1
      %s22 = ssub.s32 %s16, 2
      %s23 = sadd.s32 %s16, 1
      %s24 = ssub.s32 %s16, %s23
      %p25 = scmp.eq.s32.totalorder %s24, 0
      %s27 = sadd.s32 %s26, 1
      %s28 = scalar_select %p25, %s26, %s27
      %p31 = pneg %p25
      %p32 = scmp.eq.s32.totalorder %s16, 1
      %p33 = por %p31, %p32
      %p34 = scmp.ne.s32.totalorder %s26, %s29
      %p35 = scmp.eq.s32.totalorder %s16, 0
      %p36 = por %p34, %p35
      %p37 = scmp.ne.s32.totalorder %s26, %s29
      %p38 = scmp.eq.s32.totalorder %s21, 1
      %p39 = por %p37, %p38
      %p40 = scmp.ne.s32.totalorder %s29, %s30
      %p41 = scmp.eq.s32.totalorder %s21, 0
      %p42 = por %p40, %p41
      %p43 = scmp.ne.s32.totalorder %s29, %s30
      %p44 = scmp.eq.s32.totalorder %s22, 1
      %p45 = por %p43, %p44
      %p47 = scmp.ne.s32.totalorder %s30, %s46
      %p48 = scmp.eq.s32.totalorder %s22, 0
      %p49 = por %p47, %p48
      %s50 = ssub.s32 %s16, %s23
      %p51 = scmp.eq.s32.totalorder %s50, 0
      %s53 = sadd.s32 %s52, 1
      %s54 = scalar_select %p51, %s52, %s53
      %p57 = pneg %p51
      %p58 = scmp.eq.s32.totalorder %s16, 1
      %p59 = por %p57, %p58
      %p60 = scmp.ne.s32.totalorder %s52, %s55
      %p61 = scmp.eq.s32.totalorder %s16, 0
      %p62 = por %p60, %p61
      %p63 = scmp.ne.s32.totalorder %s52, %s55
      %p64 = scmp.eq.s32.totalorder %s21, 1
      %p65 = por %p63, %p64
      %p66 = scmp.ne.s32.totalorder %s55, %s56
      %p67 = scmp.eq.s32.totalorder %s21, 0
      %p68 = por %p66, %p67
      %p69 = scmp.ne.s32.totalorder %s55, %s56
      %p70 = scmp.eq.s32.totalorder %s22, 1
      %p71 = por %p69, %p70
      %p73 = scmp.ne.s32.totalorder %s56, %s72
      %p74 = scmp.eq.s32.totalorder %s22, 0
      %p75 = por %p73, %p74
      %s76 = ssub.s32 %s16, %s23
      %p77 = scmp.eq.s32.totalorder %s76, 0
      %s79 = sadd.s32 %s78, 1
      %s80 = scalar_select %p77, %s78, %s79
      %p83 = pneg %p77
      %p84 = scmp.eq.s32.totalorder %s16, 1
      %p85 = por %p83, %p84
      %p86 = scmp.ne.s32.totalorder %s78, %s81
      %p87 = scmp.eq.s32.totalorder %s16, 0
      %p88 = por %p86, %p87
      %p89 = scmp.ne.s32.totalorder %s78, %s81
      %p90 = scmp.eq.s32.totalorder %s21, 1
      %p91 = por %p89, %p90
      %p92 = scmp.ne.s32.totalorder %s81, %s82
      %p93 = scmp.eq.s32.totalorder %s21, 0
      %p94 = por %p92, %p93
      %p95 = scmp.ne.s32.totalorder %s81, %s82
      %p96 = scmp.eq.s32.totalorder %s22, 1
      %p97 = por %p95, %p96
      %p99 = scmp.ne.s32.totalorder %s82, %s98
      %p100 = scmp.eq.s32.totalorder %s22, 0
      %p101 = por %p99, %p100
      %s102 = ssub.s32 %s16, %s23
      %p103 = scmp.eq.s32.totalorder %s102, 0
      %s105 = sadd.s32 %s104, 1
      %s106 = scalar_select %p103, %s104, %s105
      %p109 = pneg %p103
      %p110 = scmp.eq.s32.totalorder %s16, 1
      %p111 = por %p109, %p110
      %p112 = scmp.ne.s32.totalorder %s104, %s107
      %p113 = scmp.eq.s32.totalorder %s16, 0
      %p114 = por %p112, %p113
      %p115 = scmp.ne.s32.totalorder %s104, %s107
      %p116 = scmp.eq.s32.totalorder %s21, 1
      %p117 = por %p115, %p116
      %p118 = scmp.ne.s32.totalorder %s107, %s108
      %p119 = scmp.eq.s32.totalorder %s21, 0
      %p120 = por %p118, %p119
      %p121 = scmp.ne.s32.totalorder %s107, %s108
      %p122 = scmp.eq.s32.totalorder %s22, 1
      %p123 = por %p121, %p122
      %p125 = scmp.ne.s32.totalorder %s108, %s124
      %p126 = scmp.eq.s32.totalorder %s22, 0
      %p127 = por %p125, %p126
      %s129 = sadd.s32 %s128, 1
      %p132 = scmp.eq.s32.totalorder %s16, 1
      %p133 = scmp.ne.s32.totalorder %s128, %s130
      %p134 = scmp.eq.s32.totalorder %s16, 0
      %p135 = por %p133, %p134
      %p136 = scmp.ne.s32.totalorder %s128, %s130
      %p137 = scmp.eq.s32.totalorder %s21, 1
      %p138 = por %p136, %p137
      %p139 = scmp.ne.s32.totalorder %s130, %s131
      %p140 = scmp.eq.s32.totalorder %s21, 0
      %p141 = por %p139, %p140
      %p142 = scmp.ne.s32.totalorder %s130, %s131
      %p143 = scmp.eq.s32.totalorder %s22, 1
      %p144 = por %p142, %p143
      %p146 = scmp.ne.s32.totalorder %s131, %s145
      %p147 = scmp.eq.s32.totalorder %s22, 0
      %p148 = por %p146, %p147
      %s150 = sadd.s32 %s149, 1
      %p153 = scmp.eq.s32.totalorder %s16, 1
      %p154 = scmp.ne.s32.totalorder %s149, %s151
      %p155 = scmp.eq.s32.totalorder %s16, 0
      %p156 = por %p154, %p155
      %p157 = scmp.ne.s32.totalorder %s149, %s151
      %p158 = scmp.eq.s32.totalorder %s21, 1
      %p159 = por %p157, %p158
      %p160 = scmp.ne.s32.totalorder %s151, %s152
      %p161 = scmp.eq.s32.totalorder %s21, 0
      %p162 = por %p160, %p161
      %p163 = scmp.ne.s32.totalorder %s151, %s152
      %p164 = scmp.eq.s32.totalorder %s22, 1
      %p165 = por %p163, %p164
      %p167 = scmp.ne.s32.totalorder %s152, %s166
      %p168 = scmp.eq.s32.totalorder %s22, 0
      %p169 = por %p167, %p168
      %s171 = sadd.s32 %s170, 1
      %p174 = scmp.eq.s32.totalorder %s16, 1
      %p175 = scmp.ne.s32.totalorder %s170, %s172
      %p176 = scmp.eq.s32.totalorder %s16, 0
      %p177 = por %p175, %p176
      %p178 = scmp.ne.s32.totalorder %s170, %s172
      %p179 = scmp.eq.s32.totalorder %s21, 1
      %p180 = por %p178, %p179
      %p181 = scmp.ne.s32.totalorder %s172, %s173
      %p182 = scmp.eq.s32.totalorder %s21, 0
      %p183 = por %p181, %p182
      %p184 = scmp.ne.s32.totalorder %s172, %s173
      %p185 = scmp.eq.s32.totalorder %s22, 1
      %p186 = por %p184, %p185
      %p188 = scmp.ne.s32.totalorder %s173, %s187
      %p189 = scmp.eq.s32.totalorder %s22, 0
      %p190 = por %p188, %p189
      %s191 = ssub.s32 %s16, %s23
      %p192 = scmp.eq.s32.totalorder %s191, 0
      %s194 = sadd.s32 %s193, 1
      %s195 = scalar_select %p192, %s193, %s194
      %p198 = pneg %p192
      %p199 = scmp.eq.s32.totalorder %s16, 1
      %p200 = por %p198, %p199
      %p201 = scmp.ne.s32.totalorder %s193, %s196
      %p202 = scmp.eq.s32.totalorder %s16, 0
      %p203 = por %p201, %p202
      %p204 = scmp.ne.s32.totalorder %s193, %s196
      %p205 = scmp.eq.s32.totalorder %s21, 1
      %p206 = por %p204, %p205
      %p207 = scmp.ne.s32.totalorder %s196, %s197
      %p208 = scmp.eq.s32.totalorder %s21, 0
      %p209 = por %p207, %p208
      %p210 = scmp.ne.s32.totalorder %s196, %s197
      %p211 = scmp.eq.s32.totalorder %s22, 1
      %p212 = por %p210, %p211
      %p214 = scmp.ne.s32.totalorder %s197, %s213
      %p215 = scmp.eq.s32.totalorder %s22, 0
      %p216 = por %p214, %p215
      %p217 = scmp.le.s32.totalorder 1, %s16
      %p218 = scmp.lt.s32.totalorder %s16, 3
      %p219 = pnand %p217, %p218
      %p220 = pneg %p219
      // Predicated region
      $region9: #{decoder_forward.1} parent=5 // pred_check
        _
      $region10: #{decoder_forward.1} parent=5 // pred_check_branch
        %222 = sbr.rel (%p219) target = $region12
      $region11: #{decoder_forward.1} parent=5 // pred_region
        %s223 = ssub.s32 %s16, 1
        // Predicated region
        $region13: #{decoder_forward.1} parent=11 // pred_check
          %p224 = pneg %p141
        $region14: #{decoder_forward.1} parent=11 // pred_check_branch
          %226 = sbr.rel (%p224) target = $region16
        $region15: #{decoder_forward.1} parent=11 // pred_region
          _
        $region16: #{decoder_forward.1} parent=11 // pred_fallthru
          _
        // Predicated region
        $region17: #{decoder_forward.1} parent=11 // pred_check
          %p227 = pneg %p162
        $region18: #{decoder_forward.1} parent=11 // pred_check_branch
          %229 = sbr.rel (%p227) target = $region20
        $region19: #{decoder_forward.1} parent=11 // pred_region
          _
        $region20: #{decoder_forward.1} parent=11 // pred_fallthru
          _
        // Predicated region
        $region21: #{decoder_forward.1} parent=11 // pred_check
          %p230 = pneg %p183
        $region22: #{decoder_forward.1} parent=11 // pred_check_branch
          %232 = sbr.rel (%p230) target = $region24
        $region23: #{decoder_forward.1} parent=11 // pred_region
          _
        $region24: #{decoder_forward.1} parent=11 // pred_fallthru
          _
      $region12: #{decoder_forward.1} parent=5 // pred_fallthru
        _
      %p233 = scmp.lt.s32.totalorder %s16, 2
      // Predicated region
      $region25: #{decoder_forward.1} parent=5 // pred_check
        %p234 = pneg %p233
      $region26: #{decoder_forward.1} parent=5 // pred_check_branch
        %236 = sbr.rel (%p234) target = $region28
      $region27: #{decoder_forward.1} parent=5 // pred_region
        // Predicated region
        $region29: #{decoder_forward.1} parent=27 // pred_check
          %p237 = pneg %p36
        $region30: #{decoder_forward.1} parent=27 // pred_check_branch
          %239 = sbr.rel (%p237) target = $region32
        $region31: #{decoder_forward.1} parent=27 // pred_region
          %p240 = scmp.lt.s32.totalorder %s16, 1
          %s241 = scalar_select %p240, %s16, 1
          %s242 = smul.addr %s241, 8
          %s243 = scalar_lea.vmem %s0, %s242
        $region32: #{decoder_forward.1} parent=27 // pred_fallthru
          _
        // Predicated region
        $region33: #{decoder_forward.1} parent=27 // pred_check
          %p244 = pneg %p62
        $region34: #{decoder_forward.1} parent=27 // pred_check_branch
          %246 = sbr.rel (%p244) target = $region36
        $region35: #{decoder_forward.1} parent=27 // pred_region
          %p247 = scmp.lt.s32.totalorder %s16, 1
          %s248 = scalar_select %p247, %s16, 1
          %s249 = smul.addr %s248, 8
          %s250 = scalar_lea.vmem %s1, %s249
        $region36: #{decoder_forward.1} parent=27 // pred_fallthru
          _
        // Predicated region
        $region37: #{decoder_forward.1} parent=27 // pred_check
          %p251 = pneg %p88
        $region38: #{decoder_forward.1} parent=27 // pred_check_branch
          %253 = sbr.rel (%p251) target = $region40
        $region39: #{decoder_forward.1} parent=27 // pred_region
          %p254 = scmp.lt.s32.totalorder %s16, 1
          %s255 = scalar_select %p254, %s16, 1
          %s256 = smul.addr %s255, 8
          %s257 = smul.addr %s256, 8
          %s258 = scalar_lea.vmem %s2, %s257
        $region40: #{decoder_forward.1} parent=27 // pred_fallthru
          _
        // Predicated region
        $region41: #{decoder_forward.1} parent=27 // pred_check
          %p259 = pneg %p114
        $region42: #{decoder_forward.1} parent=27 // pred_check_branch
          %261 = sbr.rel (%p259) target = $region44
        $region43: #{decoder_forward.1} parent=27 // pred_region
          %p262 = scmp.lt.s32.totalorder %s16, 1
          %s263 = scalar_select %p262, %s16, 1
          %s264 = smul.addr %s263, 8
          %s265 = scalar_lea.vmem %s3, %s264
        $region44: #{decoder_forward.1} parent=27 // pred_fallthru
          _
      $region28: #{decoder_forward.1} parent=5 // pred_fallthru
        _
      %p266 = scmp.le.s32.totalorder 1, %s16
      %p267 = scmp.lt.s32.totalorder %s16, 3
      %p268 = pnand %p266, %p267
      %p269 = pneg %p268
      // Predicated region
      $region45: #{decoder_forward.1} parent=5 // pred_check
        _
      $region46: #{decoder_forward.1} parent=5 // pred_check_branch
        %271 = sbr.rel (%p268) target = $region48
      $region47: #{decoder_forward.1} parent=5 // pred_region
        %s272 = ssub.s32 %s16, 1
        %p273 = scmp.lt.s32.totalorder %s21, 1
        %s274 = scalar_select %p273, %s21, 1
        %s275 = smul.addr %s274, 8
        %s276 = scalar_lea.vmem %s0, %s275
        %p277 = pneg %p42
        %p278 = pneg %p39
        %p279 = scmp.lt.s32.totalorder %s21, 1
        %s280 = scalar_select %p279, %s21, 1
        %s281 = smul.addr %s280, 8
        %s282 = scalar_lea.vmem %s1, %s281
        %p283 = pneg %p68
        %p284 = pneg %p65
        %p285 = scmp.lt.s32.totalorder %s21, 1
        %s286 = scalar_select %p285, %s21, 1
        %s287 = smul.addr %s286, 8
        %s288 = smul.addr %s287, 8
        %s289 = scalar_lea.vmem %s2, %s288
        %p290 = pneg %p94
        %p291 = pneg %p91
        %p292 = scmp.lt.s32.totalorder %s21, 1
        %s293 = scalar_select %p292, %s21, 1
        %s294 = smul.addr %s293, 8
        %s295 = scalar_lea.vmem %s3, %s294
        %p296 = pneg %p120
        %p297 = pneg %p117
        %p298 = pneg %p141
        %p299 = pneg %p138
        %p300 = pneg %p162
        %p301 = pneg %p159
        %p302 = pneg %p183
        %p303 = pneg %p180
        %p304 = pneg %p209
        %p305 = pneg %p206
        %s306 = sand.u32 %s196, 1
        %s307 = scalar_lea.sflag [#allocation3], %s306
        %s308 = sand.u32 %s196, 1
        %s309 = smul.addr %s308, 16
        %s310 = scalar_lea.vmem [#allocation2], %s309
        %p311 = scmp.lt.s32.totalorder %s21, 1
        %s312 = scalar_select %p311, %s21, 1
        %s313 = smul.addr %s312, 8
        %s314 = scalar_lea.vmem %s0, %s313
        %p315 = scmp.lt.s32.totalorder %s21, 1
        %s316 = scalar_select %p315, %s21, 1
        %s317 = smul.addr %s316, 8
        %s318 = scalar_lea.vmem %s1, %s317
        %p319 = scmp.lt.s32.totalorder %s21, 1
        %s320 = scalar_select %p319, %s21, 1
        %s321 = smul.addr %s320, 8
        %s322 = smul.addr %s321, 8
        %s323 = scalar_lea.vmem %s2, %s322
        %p324 = scmp.lt.s32.totalorder %s21, 1
        %s325 = scalar_select %p324, %s21, 1
        %s326 = smul.addr %s325, 8
        %s327 = scalar_lea.vmem %s3, %s326
        %v328 = vld [vmem:[%s314] sm:$0xff]
        %v329 = vld [vmem:[%s318] sm:$0xff]
        %v330 = vld [vmem:[%s323] sm:$0xff]
        %v331 = vld [vmem:[%s323 + $0x8] sm:$0xff]
        %v332 = vld [vmem:[%s323 + $0x10] sm:$0xff]
        %v333 = vld [vmem:[%s323 + $0x18] sm:$0xff]
        %v334 = vld [vmem:[%s323 + $0x20] sm:$0xff]
        %v335 = vld [vmem:[%s323 + $0x28] sm:$0xff]
        %v336 = vld [vmem:[%s323 + $0x30] sm:$0xff]
        %v337 = vld [vmem:[%s323 + $0x38] sm:$0xff]
        %v338 = vld [vmem:[%s327] sm:$0xff]
        %v339 = vlaneseq
        %v340 = vand.u32 %v339, 127
        %v341 = vcvt.s32.f32 %v340
        %v342 = vadd.f32 %v328, %v329
        %v343 = vld [vmem:[%s4 + $0x8] sm:$0xff]
        %v344 = vld [vmem:[%s4 + $0x20] sm:$0xff]
        %v345 = vld [vmem:[%s4 + $0x38] sm:$0xff]
        %v346 = vld [vmem:[%s4 + $0x50] sm:$0xff]
        %v347 = vld [vmem:[%s6 + $0x1] sm:$0x1]
        %v349 = vperm.slane %v347, 0
        %vm351 = vcmask 261120
        %v353 = vsel %vm351, %v342, 0
        %355 = vmatpush.msra.mxu0 0.0
        %356 = vmatpush.msra.mxu0 0.0
        %357 = vmatpush.msra.mxu0 0.0
        %358 = vmatpush.msra.mxu0 0.0
        %359 = vmatpush.msra.mxu0 0.0
        %360 = vmatpush.msra.mxu0 0.0
        %361 = vmatpush.msra.mxu0 0.0
        %362 = vmatpush.msra.mxu0 0.0
        %363 = vmatpush.msra.mxu0 0.0
        %364 = vmatpush.msra.mxu0 0.0
        %365 = vmatpush.msra.mxu0 0.0
        %366 = vmatpush.msra.mxu0 0.0
        %367 = vmatpush.msra.mxu0 %v346
        %368 = vmatpush.msra.mxu0 %v345
        %369 = vmatpush.msra.mxu0 %v344
        %370 = vmatpush.msra.mxu0 %v343
        %371 = vmatmul.f32.gmra.mxu0 %v353
        %v372 = vpop.f32.mrf.mxu0
        %v373 = vadd.f32 %v349, %v372
        %374 = vdwg.mxu0
        %v375 = vld [vmem:[%s4 + $0x10] sm:$0xff]
        %v376 = vld [vmem:[%s4 + $0x28] sm:$0xff]
        %v377 = vld [vmem:[%s4 + $0x40] sm:$0xff]
        %v378 = vld [vmem:[%s4 + $0x58] sm:$0xff]
        %v379 = vld [vmem:[%s6 + $0x2] sm:$0x1]
        %v381 = vperm.slane %v379, 0
        %v384 = vsel %vm351, %v328, 0
        %386 = vmatpush.msra.mxu0 0.0
        %387 = vmatpush.msra.mxu0 0.0
        %388 = vmatpush.msra.mxu0 0.0
        %389 = vmatpush.msra.mxu0 0.0
        %390 = vmatpush.msra.mxu0 0.0
        %391 = vmatpush.msra.mxu0 0.0
        %392 = vmatpush.msra.mxu0 0.0
        %393 = vmatpush.msra.mxu0 0.0
        %394 = vmatpush.msra.mxu0 0.0
        %395 = vmatpush.msra.mxu0 0.0
        %396 = vmatpush.msra.mxu0 0.0
        %397 = vmatpush.msra.mxu0 0.0
        %398 = vmatpush.msra.mxu0 %v378
        %399 = vmatpush.msra.mxu0 %v377
        %400 = vmatpush.msra.mxu0 %v376
        %401 = vmatpush.msra.mxu0 %v375
        %402 = vmatmul.f32.gmra.mxu0 %v384
        %v403 = vpop.f32.mrf.mxu0
        %v404 = vadd.f32 %v381, %v403
        %405 = vdwg.mxu0
        %407 = vrot.lane.b32.xlu0 %v373, 96
        %v408 = vpop.permute.xlu0 %407
        %vm409 = vcmask 64512
        %v410 = vsel %vm409, %v373, 0
        %v412 = vsel %vm409, %v408, 0
        %414 = vmatpush.xpose.msra.mxu0 0.0
        %415 = vmatpush.xpose.msra.mxu0 0.0
        %416 = vmatpush.xpose.msra.mxu0 0.0
        %417 = vmatpush.xpose.msra.mxu0 0.0
        %418 = vmatpush.xpose.msra.mxu0 0.0
        %419 = vmatpush.xpose.msra.mxu0 0.0
        %420 = vmatpush.xpose.msra.mxu0 0.0
        %421 = vmatpush.xpose.msra.mxu0 0.0
        %422 = vmatpush.xpose.msra.mxu0 0.0
        %423 = vmatpush.xpose.msra.mxu0 0.0
        %424 = vmatpush.xpose.msra.mxu0 0.0
        %425 = vmatpush.xpose.msra.mxu0 0.0
        %426 = vmatpush.xpose.msra.mxu0 0.0
        %427 = vmatpush.xpose.msra.mxu0 0.0
        %428 = vmatpush.xpose.msra.mxu0 0.0
        %429 = vmatpush.xpose.msra.mxu0 %v412
        %430 = vmatmul.f32.gmra.mxu0 %v410
        %v431 = vpop.f32.mrf.mxu0
        %v432 = vadd.f32 0.0, %v431
        %433 = vdwg.mxu0
        %434 = vrot.lane.b32.xlu0 %v373, 120
        %v435 = vpop.permute.xlu0 %434
        %436 = vrot.lane.b32.xlu0 %v373, 88
        %v437 = vpop.permute.xlu0 %436
        %v438 = vsel %vm409, %v435, 0
        %v440 = vsel %vm409, %v437, 0
        %442 = vmatpush.xpose.msra.mxu0 0.0
        %443 = vmatpush.xpose.msra.mxu0 0.0
        %444 = vmatpush.xpose.msra.mxu0 0.0
        %445 = vmatpush.xpose.msra.mxu0 0.0
        %446 = vmatpush.xpose.msra.mxu0 0.0
        %447 = vmatpush.xpose.msra.mxu0 0.0
        %448 = vmatpush.xpose.msra.mxu0 0.0
        %449 = vmatpush.xpose.msra.mxu0 0.0
        %450 = vmatpush.xpose.msra.mxu0 0.0
        %451 = vmatpush.xpose.msra.mxu0 0.0
        %452 = vmatpush.xpose.msra.mxu0 0.0
        %453 = vmatpush.xpose.msra.mxu0 0.0
        %454 = vmatpush.xpose.msra.mxu0 0.0
        %455 = vmatpush.xpose.msra.mxu0 0.0
        %456 = vmatpush.xpose.msra.mxu0 0.0
        %457 = vmatpush.xpose.msra.mxu0 %v440
        %458 = vmatmul.f32.gmra.mxu0 %v438
        %v459 = vpop.f32.mrf.mxu0
        %v460 = vadd.f32 0.0, %v459
        %461 = vdwg.mxu0
        %462 = vrot.lane.b32.xlu0 %v373, 112
        %v463 = vpop.permute.xlu0 %462
        %464 = vrot.lane.b32.xlu0 %v373, 80
        %v465 = vpop.permute.xlu0 %464
        %v466 = vsel %vm409, %v463, 0
        %v468 = vsel %vm409, %v465, 0
        %470 = vmatpush.xpose.msra.mxu0 0.0
        %471 = vmatpush.xpose.msra.mxu0 0.0
        %472 = vmatpush.xpose.msra.mxu0 0.0
        %473 = vmatpush.xpose.msra.mxu0 0.0
        %474 = vmatpush.xpose.msra.mxu0 0.0
        %475 = vmatpush.xpose.msra.mxu0 0.0
        %476 = vmatpush.xpose.msra.mxu0 0.0
        %477 = vmatpush.xpose.msra.mxu0 0.0
        %478 = vmatpush.xpose.msra.mxu0 0.0
        %479 = vmatpush.xpose.msra.mxu0 0.0
        %480 = vmatpush.xpose.msra.mxu0 0.0
        %481 = vmatpush.xpose.msra.mxu0 0.0
        %482 = vmatpush.xpose.msra.mxu0 0.0
        %483 = vmatpush.xpose.msra.mxu0 0.0
        %484 = vmatpush.xpose.msra.mxu0 0.0
        %485 = vmatpush.xpose.msra.mxu0 %v468
        %486 = vmatmul.f32.gmra.mxu0 %v466
        %v487 = vpop.f32.mrf.mxu0
        %v488 = vadd.f32 0.0, %v487
        %489 = vdwg.mxu0
        %490 = vrot.lane.b32.xlu0 %v373, 104
        %v491 = vpop.permute.xlu0 %490
        %492 = vrot.lane.b32.xlu0 %v373, 72
        %v493 = vpop.permute.xlu0 %492
        %v494 = vsel %vm409, %v491, 0
        %v496 = vsel %vm409, %v493, 0
        %498 = vmatpush.xpose.msra.mxu0 0.0
        %499 = vmatpush.xpose.msra.mxu0 0.0
        %500 = vmatpush.xpose.msra.mxu0 0.0
        %501 = vmatpush.xpose.msra.mxu0 0.0
        %502 = vmatpush.xpose.msra.mxu0 0.0
        %503 = vmatpush.xpose.msra.mxu0 0.0
        %504 = vmatpush.xpose.msra.mxu0 0.0
        %505 = vmatpush.xpose.msra.mxu0 0.0
        %506 = vmatpush.xpose.msra.mxu0 0.0
        %507 = vmatpush.xpose.msra.mxu0 0.0
        %508 = vmatpush.xpose.msra.mxu0 0.0
        %509 = vmatpush.xpose.msra.mxu0 0.0
        %510 = vmatpush.xpose.msra.mxu0 0.0
        %511 = vmatpush.xpose.msra.mxu0 0.0
        %512 = vmatpush.xpose.msra.mxu0 0.0
        %513 = vmatpush.xpose.msra.mxu0 %v496
        %514 = vmatmul.f32.gmra.mxu0 %v494
        %v515 = vpop.f32.mrf.mxu0
        %v516 = vadd.f32 0.0, %v515
        %517 = vdwg.mxu0
        %v518 = vsel %vm409, %v432, -inf
        %519 = vmax.xlane.f32.xlu0 %v518
        %v520 = vpop.xlane.xlu0 %519
        %v521 = vsel %vm409, %v460, -inf
        %522 = vmax.xlane.f32.xlu0 %v521
        %v523 = vpop.xlane.xlu0 %522
        %v524 = vsel %vm409, %v488, -inf
        %525 = vmax.xlane.f32.xlu0 %v524
        %v526 = vpop.xlane.xlu0 %525
        %v527 = vsel %vm409, %v516, -inf
        %528 = vmax.xlane.f32.xlu0 %v527
        %v529 = vpop.xlane.xlu0 %528
        %v530 = vsub.f32 %v432, %v520
        %v531 = vsub.f32 %v460, %v523
        %v532 = vsub.f32 %v488, %v526
        %v533 = vsub.f32 %v516, %v529
        %v534 = vmul.f32 %v530, 1.442695
        %v535 = vpow.pop %v534
        %v536 = vmul.f32 %v531, 1.442695
        %v537 = vpow.pop %v536
        %v538 = vmul.f32 %v532, 1.442695
        %v539 = vpow.pop %v538
        %v540 = vmul.f32 %v533, 1.442695
        %v541 = vpow.pop %v540
        %v542 = vsel %vm409, %v535, 0.0
        %543 = vadd.xlane.f32.xlu0 %v542
        %v544 = vpop.xlane.xlu0 %543
        %v545 = vsel %vm409, %v537, 0.0
        %546 = vadd.xlane.f32.xlu0 %v545
        %v547 = vpop.xlane.xlu0 %546
        %v548 = vsel %vm409, %v539, 0.0
        %549 = vadd.xlane.f32.xlu0 %v548
        %v550 = vpop.xlane.xlu0 %549
        %v551 = vsel %vm409, %v541, 0.0
        %552 = vadd.xlane.f32.xlu0 %v551
        %v553 = vpop.xlane.xlu0 %552
        %v554 = vrcp.pop %v544
        %v555 = vrcp.pop %v547
        %v556 = vrcp.pop %v550
        %v557 = vrcp.pop %v553
        %v558 = vmul.f32 %v535, %v554
        %v559 = vmul.f32 %v537, %v555
        %v560 = vmul.f32 %v539, %v556
        %v561 = vmul.f32 %v541, %v557
        %v563 = vsel %vm409, %v558, 0
        %565 = vmatpush.msra.mxu0 0.0
        %566 = vmatpush.msra.mxu0 0.0
        %567 = vmatpush.msra.mxu0 0.0
        %568 = vmatpush.msra.mxu0 0.0
        %569 = vmatpush.msra.mxu0 0.0
        %570 = vmatpush.msra.mxu0 0.0
        %571 = vmatpush.msra.mxu0 0.0
        %572 = vmatpush.msra.mxu0 0.0
        %573 = vmatpush.msra.mxu0 0.0
        %574 = vmatpush.msra.mxu0 0.0
        %575 = vmatpush.msra.mxu0 0.0
        %576 = vmatpush.msra.mxu0 0.0
        %577 = vmatpush.msra.mxu0 0.0
        %578 = vmatpush.msra.mxu0 0.0
        %579 = vmatpush.msra.mxu0 0.0
        %580 = vmatpush.msra.mxu0 %v404
        %581 = vmatmul.f32.gmra.mxu0 %v563
        %v582 = vpop.f32.mrf.mxu0
        %v583 = vadd.f32 0.0, %v582
        %584 = vdwg.mxu0
        %586 = vrot.lane.b32.xlu0 %v404, 120
        %v587 = vpop.permute.xlu0 %586
        %v590 = vsel %vm409, %v559, 0
        %592 = vmatpush.msra.mxu0 0.0
        %593 = vmatpush.msra.mxu0 0.0
        %594 = vmatpush.msra.mxu0 0.0
        %595 = vmatpush.msra.mxu0 0.0
        %596 = vmatpush.msra.mxu0 0.0
        %597 = vmatpush.msra.mxu0 0.0
        %598 = vmatpush.msra.mxu0 0.0
        %599 = vmatpush.msra.mxu0 0.0
        %600 = vmatpush.msra.mxu0 0.0
        %601 = vmatpush.msra.mxu0 0.0
        %602 = vmatpush.msra.mxu0 0.0
        %603 = vmatpush.msra.mxu0 0.0
        %604 = vmatpush.msra.mxu0 0.0
        %605 = vmatpush.msra.mxu0 0.0
        %606 = vmatpush.msra.mxu0 0.0
        %607 = vmatpush.msra.mxu0 %v587
        %608 = vmatmul.f32.gmra.mxu0 %v590
        %v609 = vpop.f32.mrf.mxu0
        %v610 = vadd.f32 0.0, %v609
        %611 = vdwg.mxu0
        %612 = vrot.lane.b32.xlu0 %v404, 112
        %v613 = vpop.permute.xlu0 %612
        %v616 = vsel %vm409, %v560, 0
        %618 = vmatpush.msra.mxu0 0.0
        %619 = vmatpush.msra.mxu0 0.0
        %620 = vmatpush.msra.mxu0 0.0
        %621 = vmatpush.msra.mxu0 0.0
        %622 = vmatpush.msra.mxu0 0.0
        %623 = vmatpush.msra.mxu0 0.0
        %624 = vmatpush.msra.mxu0 0.0
        %625 = vmatpush.msra.mxu0 0.0
        %626 = vmatpush.msra.mxu0 0.0
        %627 = vmatpush.msra.mxu0 0.0
        %628 = vmatpush.msra.mxu0 0.0
        %629 = vmatpush.msra.mxu0 0.0
        %630 = vmatpush.msra.mxu0 0.0
        %631 = vmatpush.msra.mxu0 0.0
        %632 = vmatpush.msra.mxu0 0.0
        %633 = vmatpush.msra.mxu0 %v613
        %634 = vmatmul.f32.gmra.mxu0 %v616
        %v635 = vpop.f32.mrf.mxu0
        %v636 = vadd.f32 0.0, %v635
        %637 = vdwg.mxu0
        %638 = vrot.lane.b32.xlu0 %v404, 104
        %v639 = vpop.permute.xlu0 %638
        %v642 = vsel %vm409, %v561, 0
        %644 = vmatpush.msra.mxu0 0.0
        %645 = vmatpush.msra.mxu0 0.0
        %646 = vmatpush.msra.mxu0 0.0
        %647 = vmatpush.msra.mxu0 0.0
        %648 = vmatpush.msra.mxu0 0.0
        %649 = vmatpush.msra.mxu0 0.0
        %650 = vmatpush.msra.mxu0 0.0
        %651 = vmatpush.msra.mxu0 0.0
        %652 = vmatpush.msra.mxu0 0.0
        %653 = vmatpush.msra.mxu0 0.0
        %654 = vmatpush.msra.mxu0 0.0
        %655 = vmatpush.msra.mxu0 0.0
        %656 = vmatpush.msra.mxu0 0.0
        %657 = vmatpush.msra.mxu0 0.0
        %658 = vmatpush.msra.mxu0 0.0
        %659 = vmatpush.msra.mxu0 %v639
        %660 = vmatmul.f32.gmra.mxu0 %v642
        %v661 = vpop.f32.mrf.mxu0
        %v662 = vadd.f32 0.0, %v661
        %663 = vdwg.mxu0
        %665 = vrot.lane.b32.xlu0 %v610, 8
        %v666 = vpop.permute.xlu0 %665
        %669 = vrot.lane.b32.xlu0 %v636, 16
        %v670 = vpop.permute.xlu0 %669
        %673 = vrot.lane.b32.xlu0 %v662, 24
        %v674 = vpop.permute.xlu0 %673
        %v676 = vsel %vm409, %v583, %v666
        %vm677 = vcmask 130048
        %v678 = vsel %vm677, %v676, %v670
        %vm679 = vcmask 195584
        %v680 = vsel %vm679, %v678, %v674
        %685 = vrot.lane.b32.xlu0 %v375, 96
        %v686 = vpop.permute.xlu0 %685
        %687 = vrot.lane.b32.xlu0 %v376, 96
        %v688 = vpop.permute.xlu0 %687
        %689 = vrot.lane.b32.xlu0 %v377, 96
        %v690 = vpop.permute.xlu0 %689
        %691 = vrot.lane.b32.xlu0 %v378, 96
        %v692 = vpop.permute.xlu0 %691
        %697 = vrot.lane.b32.xlu0 %v381, 96
        %v698 = vpop.permute.xlu0 %697
        %v701 = vsel %vm351, %v680, 0
        %703 = vmatpush.msra.mxu0 0.0
        %704 = vmatpush.msra.mxu0 0.0
        %705 = vmatpush.msra.mxu0 0.0
        %706 = vmatpush.msra.mxu0 0.0
        %707 = vmatpush.msra.mxu0 0.0
        %708 = vmatpush.msra.mxu0 0.0
        %709 = vmatpush.msra.mxu0 0.0
        %710 = vmatpush.msra.mxu0 0.0
        %711 = vmatpush.msra.mxu0 0.0
        %712 = vmatpush.msra.mxu0 0.0
        %713 = vmatpush.msra.mxu0 0.0
        %714 = vmatpush.msra.mxu0 0.0
        %715 = vmatpush.msra.mxu0 %v692
        %716 = vmatpush.msra.mxu0 %v690
        %717 = vmatpush.msra.mxu0 %v688
        %718 = vmatpush.msra.mxu0 %v686
        %719 = vmatmul.f32.gmra.mxu0 %v701
        %v720 = vpop.f32.mrf.mxu0
        %v721 = vadd.f32 %v698, %v720
        %722 = vdwg.mxu0
        %v723 = vadd.f32 %v328, %v721
        %v724 = vld [vmem:[%s6 + $0x3] sm:$0x1]
        %v725 = vsel %vm351, %v723, 0.0
        %726 = vadd.xlane.f32.xlu0 %v725
        %v727 = vpop.xlane.xlu0 %726
        %v728 = vrcp.pop 32.0
        %v729 = vmul.f32 32.0, %v728
        %v730 = vsub.f32 1.0, %v729
        %v731 = vmul.f32 %v728, %v730
        %v732 = vadd.f32 %v728, %v731
        %vm733 = vweird.f32 %v728
        %v734 = vsel %vm733, %v728, %v732
        %v735 = vmul.f32 %v727, %v734
        %v736 = vsub.f32 %v723, %v735
        %v737 = vmul.f32 %v736, %v736
        %v738 = vsel %vm351, %v737, 0.0
        %739 = vadd.xlane.f32.xlu0 %v738
        %v740 = vpop.xlane.xlu0 %739
        %v741 = vmul.f32 %v740, %v734
        %v742 = vadd.f32 %v741, 1e-05
        %v743 = vrsqrt.pop %v742
        %v744 = vmul.f32 %v743, %v742
        %v745 = vmul.f32 %v744, %v743
        %v746 = vmul.f32 0.5, %v745
        %v747 = vsub.f32 1.5, %v746
        %v748 = vmul.f32 %v743, %v747
        %vm749 = vweird.f32 %v742
        %vm750 = vweird.f32 %v743
        %vm751 = vmor %vm749, %vm750
        %v752 = vsel %vm751, %v743, %v748
        %v753 = vmul.f32 %v736, %v752
        %v755 = vperm.slane %v724, 0
        %756 = vrot.lane.b32.xlu0 %v755, 96
        %v757 = vpop.permute.xlu0 %756
        %v759 = vmul.f32 %v753, %v757
        %760 = vrot.lane.b32.xlu0 %v755, 64
        %v761 = vpop.permute.xlu0 %760
        %v763 = vadd.f32 %v759, %v761
        %v764 = vadd.f32 %v763, %v329
        %765 = vrot.lane.b32.xlu0 %v375, 64
        %v766 = vpop.permute.xlu0 %765
        %767 = vrot.lane.b32.xlu0 %v376, 64
        %v768 = vpop.permute.xlu0 %767
        %769 = vrot.lane.b32.xlu0 %v377, 64
        %v770 = vpop.permute.xlu0 %769
        %771 = vrot.lane.b32.xlu0 %v378, 64
        %v772 = vpop.permute.xlu0 %771
        %777 = vrot.lane.b32.xlu0 %v381, 64
        %v778 = vpop.permute.xlu0 %777
        %v781 = vsel %vm351, %v330, 0
        %v784 = vsel %vm351, %v331, 0
        %v787 = vsel %vm351, %v332, 0
        %v790 = vsel %vm351, %v333, 0
        %v793 = vsel %vm351, %v334, 0
        %v796 = vsel %vm351, %v335, 0
        %v799 = vsel %vm351, %v336, 0
        %v802 = vsel %vm351, %v337, 0
        %804 = vmatpush.msra.mxu0 0.0
        %805 = vmatpush.msra.mxu0 0.0
        %806 = vmatpush.msra.mxu0 0.0
        %807 = vmatpush.msra.mxu0 0.0
        %808 = vmatpush.msra.mxu0 0.0
        %809 = vmatpush.msra.mxu0 0.0
        %810 = vmatpush.msra.mxu0 0.0
        %811 = vmatpush.msra.mxu0 0.0
        %812 = vmatpush.msra.mxu0 0.0
        %813 = vmatpush.msra.mxu0 0.0
        %814 = vmatpush.msra.mxu0 0.0
        %815 = vmatpush.msra.mxu0 0.0
        %816 = vmatpush.msra.mxu0 %v772
        %817 = vmatpush.msra.mxu0 %v770
        %818 = vmatpush.msra.mxu0 %v768
        %819 = vmatpush.msra.mxu0 %v766
        %820 = vmatmul.f32.gmra.mxu0 %v781
        %v821 = vpop.f32.mrf.mxu0
        %v822 = vadd.f32 %v778, %v821
        %823 = vmatmul.f32.gmra.mxu0 %v784
        %v824 = vpop.f32.mrf.mxu0
        %v825 = vadd.f32 %v778, %v824
        %826 = vmatmul.f32.gmra.mxu0 %v787
        %v827 = vpop.f32.mrf.mxu0
        %v828 = vadd.f32 %v778, %v827
        %829 = vmatmul.f32.gmra.mxu0 %v790
        %v830 = vpop.f32.mrf.mxu0
        %v831 = vadd.f32 %v778, %v830
        %832 = vmatmul.f32.gmra.mxu0 %v793
        %v833 = vpop.f32.mrf.mxu0
        %v834 = vadd.f32 %v778, %v833
        %835 = vmatmul.f32.gmra.mxu0 %v796
        %v836 = vpop.f32.mrf.mxu0
        %v837 = vadd.f32 %v778, %v836
        %838 = vmatmul.f32.gmra.mxu0 %v799
        %v839 = vpop.f32.mrf.mxu0
        %v840 = vadd.f32 %v778, %v839
        %841 = vmatmul.f32.gmra.mxu0 %v802
        %v842 = vpop.f32.mrf.mxu0
        %v843 = vadd.f32 %v778, %v842
        %844 = vdwg.mxu0
        %v845 = vld [vmem:[%s4] sm:$0xff]
        %v846 = vld [vmem:[%s4 + $0x18] sm:$0xff]
        %v847 = vld [vmem:[%s4 + $0x30] sm:$0xff]
        %v848 = vld [vmem:[%s4 + $0x48] sm:$0xff]
        %v849 = vld [vmem:[%s6] sm:$0x1]
        %v851 = vperm.slane %v849, 0
        %v854 = vsel %vm351, %v764, 0
        %856 = vmatpush.msra.mxu0 0.0
        %857 = vmatpush.msra.mxu0 0.0
        %858 = vmatpush.msra.mxu0 0.0
        %859 = vmatpush.msra.mxu0 0.0
        %860 = vmatpush.msra.mxu0 0.0
        %861 = vmatpush.msra.mxu0 0.0
        %862 = vmatpush.msra.mxu0 0.0
        %863 = vmatpush.msra.mxu0 0.0
        %864 = vmatpush.msra.mxu0 0.0
        %865 = vmatpush.msra.mxu0 0.0
        %866 = vmatpush.msra.mxu0 0.0
        %867 = vmatpush.msra.mxu0 0.0
        %868 = vmatpush.msra.mxu0 %v848
        %869 = vmatpush.msra.mxu0 %v847
        %870 = vmatpush.msra.mxu0 %v846
        %871 = vmatpush.msra.mxu0 %v845
        %872 = vmatmul.f32.gmra.mxu0 %v854
        %v873 = vpop.f32.mrf.mxu0
        %v874 = vadd.f32 %v851, %v873
        %875 = vdwg.mxu0
        %vm876 = vcmask 654848
        %v877 = vsel %vm876, %v874, -inf
        %878 = vmax.xlane.f32.xlu0 %v877
        %v879 = vpop.xlane.xlu0 %878
        %v880 = vsub.f32 %v874, %v879
        %v881 = vmul.f32 %v880, 1.442695
        %v882 = vpow.pop %v881
        %884 = vrot.lane.b32.xlu0 %v882, 64
        %v885 = vpop.permute.xlu0 %884
        %v887 = vsel %vm677, %v885, 0.0
        %888 = vadd.xlane.f32.xlu0 %v887
        %v889 = vpop.xlane.xlu0 %888
        %v890 = vrcp.pop %v889
        %v891 = vmul.f32 %v882, %v890
        %v892 = vmul.f32 %v338, 32.0
        %894 = vset.pattern.permute.xlu0 0
        %895 = vperm.xlu0 %894, %v892
        %v896 = vpop.permute.xlu0 %895
        %v898 = vadd.f32 %v896, %v874
        %v899 = vsub.f32 %v898, 0.5
        %901 = vset.pattern.permute.xlu0 0
        %902 = vperm.xlu0 %901, %v899
        %v903 = vpop.permute.xlu0 %902
        %v905 = vsub.f32 %v341, %v903
        %v906 = vand.u32 2147483647, %v905
        %v907 = vsub.f32 1.0, %v906
        %v908 = vmax.f32 %v907, 0.0
        %910 = vset.pattern.permute.xlu0 64
        %911 = vperm.xlu0 %910, %v891
        %v912 = vpop.permute.xlu0 %911
        %v914 = vmul.f32 %v908, %v912
        %v915 = vadd.f32 %v914, 0.0
        %916 = vset.pattern.permute.xlu0 1
        %917 = vperm.xlu0 %916, %v899
        %v918 = vpop.permute.xlu0 %917
        %v920 = vsub.f32 %v341, %v918
        %v921 = vand.u32 2147483647, %v920
        %v922 = vsub.f32 1.0, %v921
        %v923 = vmax.f32 %v922, 0.0
        %924 = vset.pattern.permute.xlu0 65
        %925 = vperm.xlu0 %924, %v891
        %v926 = vpop.permute.xlu0 %925
        %v928 = vmul.f32 %v923, %v926
        %v929 = vadd.f32 %v915, %v928
        %930 = vset.pattern.permute.xlu0 2
        %931 = vperm.xlu0 %930, %v899
        %v932 = vpop.permute.xlu0 %931
        %v934 = vsub.f32 %v341, %v932
        %v935 = vand.u32 2147483647, %v934
        %v936 = vsub.f32 1.0, %v935
        %v937 = vmax.f32 %v936, 0.0
        %938 = vset.pattern.permute.xlu0 66
        %939 = vperm.xlu0 %938, %v891
        %v940 = vpop.permute.xlu0 %939
        %v942 = vmul.f32 %v937, %v940
        %v943 = vadd.f32 %v929, %v942
        %944 = vset.pattern.permute.xlu0 3
        %945 = vperm.xlu0 %944, %v899
        %v946 = vpop.permute.xlu0 %945
        %v948 = vsub.f32 %v341, %v946
        %v949 = vand.u32 2147483647, %v948
        %v950 = vsub.f32 1.0, %v949
        %v951 = vmax.f32 %v950, 0.0
        %952 = vset.pattern.permute.xlu0 67
        %953 = vperm.xlu0 %952, %v891
        %v954 = vpop.permute.xlu0 %953
        %v956 = vmul.f32 %v951, %v954
        %v957 = vadd.f32 %v943, %v956
        %v958 = vmul.f32 %v338, 16.0
        %960 = vset.pattern.permute.xlu0 1
        %961 = vperm.xlu0 %960, %v958
        %v962 = vpop.permute.xlu0 %961
        %v964 = vadd.f32 %v962, %v874
        %v965 = vsub.f32 %v964, 0.5
        %967 = vset.pattern.permute.xlu0 4
        %968 = vperm.xlu0 %967, %v965
        %v969 = vpop.permute.xlu0 %968
        %v971 = vsub.f32 %v341, %v969
        %v972 = vand.u32 2147483647, %v971
        %v973 = vsub.f32 1.0, %v972
        %v974 = vmax.f32 %v973, 0.0
        %975 = vset.pattern.permute.xlu0 68
        %976 = vperm.xlu0 %975, %v891
        %v977 = vpop.permute.xlu0 %976
        %v979 = vmul.f32 %v974, %v977
        %v980 = vadd.f32 %v979, 0.0
        %981 = vset.pattern.permute.xlu0 5
        %982 = vperm.xlu0 %981, %v965
        %v983 = vpop.permute.xlu0 %982
        %v985 = vsub.f32 %v341, %v983
        %v986 = vand.u32 2147483647, %v985
        %v987 = vsub.f32 1.0, %v986
        %v988 = vmax.f32 %v987, 0.0
        %989 = vset.pattern.permute.xlu0 69
        %990 = vperm.xlu0 %989, %v891
        %v991 = vpop.permute.xlu0 %990
        %v993 = vmul.f32 %v988, %v991
        %v994 = vadd.f32 %v980, %v993
        %995 = vset.pattern.permute.xlu0 6
        %996 = vperm.xlu0 %995, %v965
        %v997 = vpop.permute.xlu0 %996
        %v999 = vsub.f32 %v341, %v997
        %v1000 = vand.u32 2147483647, %v999
        %v1001 = vsub.f32 1.0, %v1000
        %v1002 = vmax.f32 %v1001, 0.0
        %1003 = vset.pattern.permute.xlu0 70
        %1004 = vperm.xlu0 %1003, %v891
        %v1005 = vpop.permute.xlu0 %1004
        %v1007 = vmul.f32 %v1002, %v1005
        %v1008 = vadd.f32 %v994, %v1007
        %1009 = vset.pattern.permute.xlu0 7
        %1010 = vperm.xlu0 %1009, %v965
        %v1011 = vpop.permute.xlu0 %1010
        %v1013 = vsub.f32 %v341, %v1011
        %v1014 = vand.u32 2147483647, %v1013
        %v1015 = vsub.f32 1.0, %v1014
        %v1016 = vmax.f32 %v1015, 0.0
        %1017 = vset.pattern.permute.xlu0 71
        %1018 = vperm.xlu0 %1017, %v891
        %v1019 = vpop.permute.xlu0 %1018
        %v1021 = vmul.f32 %v1016, %v1019
        %v1022 = vadd.f32 %v1008, %v1021
        %v1023 = vmul.f32 %v338, 8.0
        %1025 = vset.pattern.permute.xlu0 2
        %1026 = vperm.xlu0 %1025, %v1023
        %v1027 = vpop.permute.xlu0 %1026
        %v1029 = vadd.f32 %v1027, %v874
        %v1030 = vsub.f32 %v1029, 0.5
        %1032 = vset.pattern.permute.xlu0 8
        %1033 = vperm.xlu0 %1032, %v1030
        %v1034 = vpop.permute.xlu0 %1033
        %v1036 = vsub.f32 %v341, %v1034
        %v1037 = vand.u32 2147483647, %v1036
        %v1038 = vsub.f32 1.0, %v1037
        %v1039 = vmax.f32 %v1038, 0.0
        %1040 = vset.pattern.permute.xlu0 72
        %1041 = vperm.xlu0 %1040, %v891
        %v1042 = vpop.permute.xlu0 %1041
        %v1044 = vmul.f32 %v1039, %v1042
        %v1045 = vadd.f32 %v1044, 0.0
        %1046 = vset.pattern.permute.xlu0 9
        %1047 = vperm.xlu0 %1046, %v1030
        %v1048 = vpop.permute.xlu0 %1047
        %v1050 = vsub.f32 %v341, %v1048
        %v1051 = vand.u32 2147483647, %v1050
        %v1052 = vsub.f32 1.0, %v1051
        %v1053 = vmax.f32 %v1052, 0.0
        %1054 = vset.pattern.permute.xlu0 73
        %1055 = vperm.xlu0 %1054, %v891
        %v1056 = vpop.permute.xlu0 %1055
        %v1058 = vmul.f32 %v1053, %v1056
        %v1059 = vadd.f32 %v1045, %v1058
        %1060 = vset.pattern.permute.xlu0 10
        %1061 = vperm.xlu0 %1060, %v1030
        %v1062 = vpop.permute.xlu0 %1061
        %v1064 = vsub.f32 %v341, %v1062
        %v1065 = vand.u32 2147483647, %v1064
        %v1066 = vsub.f32 1.0, %v1065
        %v1067 = vmax.f32 %v1066, 0.0
        %1068 = vset.pattern.permute.xlu0 74
        %1069 = vperm.xlu0 %1068, %v891
        %v1070 = vpop.permute.xlu0 %1069
        %v1072 = vmul.f32 %v1067, %v1070
        %v1073 = vadd.f32 %v1059, %v1072
        %1074 = vset.pattern.permute.xlu0 11
        %1075 = vperm.xlu0 %1074, %v1030
        %v1076 = vpop.permute.xlu0 %1075
        %v1078 = vsub.f32 %v341, %v1076
        %v1079 = vand.u32 2147483647, %v1078
        %v1080 = vsub.f32 1.0, %v1079
        %v1081 = vmax.f32 %v1080, 0.0
        %1082 = vset.pattern.permute.xlu0 75
        %1083 = vperm.xlu0 %1082, %v891
        %v1084 = vpop.permute.xlu0 %1083
        %v1086 = vmul.f32 %v1081, %v1084
        %v1087 = vadd.f32 %v1073, %v1086
        %1088 = vset.pattern.permute.xlu0 3
        %1089 = vperm.xlu0 %1088, %v1023
        %v1090 = vpop.permute.xlu0 %1089
        %v1092 = vadd.f32 %v1090, %v874
        %v1093 = vsub.f32 %v1092, 0.5
        %1095 = vset.pattern.permute.xlu0 12
        %1096 = vperm.xlu0 %1095, %v1093
        %v1097 = vpop.permute.xlu0 %1096
        %v1099 = vsub.f32 %v341, %v1097
        %v1100 = vand.u32 2147483647, %v1099
        %v1101 = vsub.f32 1.0, %v1100
        %v1102 = vmax.f32 %v1101, 0.0
        %1103 = vset.pattern.permute.xlu0 76
        %1104 = vperm.xlu0 %1103, %v891
        %v1105 = vpop.permute.xlu0 %1104
        %v1107 = vmul.f32 %v1102, %v1105
        %v1108 = vadd.f32 %v1107, 0.0
        %1109 = vset.pattern.permute.xlu0 13
        %1110 = vperm.xlu0 %1109, %v1093
        %v1111 = vpop.permute.xlu0 %1110
        %v1113 = vsub.f32 %v341, %v1111
        %v1114 = vand.u32 2147483647, %v1113
        %v1115 = vsub.f32 1.0, %v1114
        %v1116 = vmax.f32 %v1115, 0.0
        %1117 = vset.pattern.permute.xlu0 77
        %1118 = vperm.xlu0 %1117, %v891
        %v1119 = vpop.permute.xlu0 %1118
        %v1121 = vmul.f32 %v1116, %v1119
        %v1122 = vadd.f32 %v1108, %v1121
        %1123 = vset.pattern.permute.xlu0 14
        %1124 = vperm.xlu0 %1123, %v1093
        %v1125 = vpop.permute.xlu0 %1124
        %v1127 = vsub.f32 %v341, %v1125
        %v1128 = vand.u32 2147483647, %v1127
        %v1129 = vsub.f32 1.0, %v1128
        %v1130 = vmax.f32 %v1129, 0.0
        %1131 = vset.pattern.permute.xlu0 78
        %1132 = vperm.xlu0 %1131, %v891
        %v1133 = vpop.permute.xlu0 %1132
        %v1135 = vmul.f32 %v1130, %v1133
        %v1136 = vadd.f32 %v1122, %v1135
        %1137 = vset.pattern.permute.xlu0 15
        %1138 = vperm.xlu0 %1137, %v1093
        %v1139 = vpop.permute.xlu0 %1138
        %v1141 = vsub.f32 %v341, %v1139
        %v1142 = vand.u32 2147483647, %v1141
        %v1143 = vsub.f32 1.0, %v1142
        %v1144 = vmax.f32 %v1143, 0.0
        %1145 = vset.pattern.permute.xlu0 79
        %1146 = vperm.xlu0 %1145, %v891
        %v1147 = vpop.permute.xlu0 %1146
        %v1149 = vmul.f32 %v1144, %v1147
        %v1150 = vadd.f32 %v1136, %v1149
        %1152 = vrot.lane.b32.xlu0 %v1022, 32
        %v1153 = vpop.permute.xlu0 %1152
        %1156 = vrot.lane.b32.xlu0 %v1087, 48
        %v1157 = vpop.permute.xlu0 %1156
        %1160 = vrot.lane.b32.xlu0 %v1150, 56
        %v1161 = vpop.permute.xlu0 %1160
        %v1163 = vsel %vm351, %v957, %v1153
        %vm1164 = vcmask 392192
        %v1165 = vsel %vm1164, %v1163, %v1157
        %vm1166 = vcmask 457728
        %v1167 = vsel %vm1166, %v1165, %v1161
        %vm1168 = vcmask 523264
        %v1170 = vsel %vm1168, %v1167, 0
        %1172 = vmatpush.msra.mxu0 0.0
        %1173 = vmatpush.msra.mxu0 0.0
        %1174 = vmatpush.msra.mxu0 0.0
        %1175 = vmatpush.msra.mxu0 0.0
        %1176 = vmatpush.msra.mxu0 0.0
        %1177 = vmatpush.msra.mxu0 0.0
        %1178 = vmatpush.msra.mxu0 0.0
        %1179 = vmatpush.msra.mxu0 0.0
        %1180 = vmatpush.msra.mxu0 %v843
        %1181 = vmatpush.msra.mxu0 %v840
        %1182 = vmatpush.msra.mxu0 %v837
        %1183 = vmatpush.msra.mxu0 %v834
        %1184 = vmatpush.msra.mxu0 %v831
        %1185 = vmatpush.msra.mxu0 %v828
        %1186 = vmatpush.msra.mxu0 %v825
        %1187 = vmatpush.msra.mxu0 %v822
        %1188 = vmatmul.f32.gmra.mxu0 %v1170
        %v1189 = vpop.f32.mrf.mxu0
        %v1190 = vadd.f32 0.0, %v1189
        %1191 = vdwg.mxu0
        %vm1192 = vcmask 786048
        %v1193 = vsel %vm1192, %v874, -inf
        %1194 = vmax.xlane.f32.xlu0 %v1193
        %v1195 = vpop.xlane.xlu0 %1194
        %v1196 = vsub.f32 %v874, %v1195
        %v1197 = vmul.f32 %v1196, 1.442695
        %v1198 = vpow.pop %v1197
        %1200 = vrot.lane.b32.xlu0 %v1198, 48
        %v1201 = vpop.permute.xlu0 %1200
        %v1203 = vsel %vm677, %v1201, 0.0
        %1204 = vadd.xlane.f32.xlu0 %v1203
        %v1205 = vpop.xlane.xlu0 %1204
        %v1206 = vrcp.pop %v1205
        %v1207 = vmul.f32 %v1198, %v1206
        %1208 = vset.pattern.permute.xlu0 16
        %1209 = vperm.xlu0 %1208, %v899
        %v1210 = vpop.permute.xlu0 %1209
        %v1212 = vsub.f32 %v341, %v1210
        %v1213 = vand.u32 2147483647, %v1212
        %v1214 = vsub.f32 1.0, %v1213
        %v1215 = vmax.f32 %v1214, 0.0
        %1217 = vset.pattern.permute.xlu0 80
        %1218 = vperm.xlu0 %1217, %v1207
        %v1219 = vpop.permute.xlu0 %1218
        %v1221 = vmul.f32 %v1215, %v1219
        %v1222 = vadd.f32 %v1221, 0.0
        %1223 = vset.pattern.permute.xlu0 17
        %1224 = vperm.xlu0 %1223, %v899
        %v1225 = vpop.permute.xlu0 %1224
        %v1227 = vsub.f32 %v341, %v1225
        %v1228 = vand.u32 2147483647, %v1227
        %v1229 = vsub.f32 1.0, %v1228
        %v1230 = vmax.f32 %v1229, 0.0
        %1231 = vset.pattern.permute.xlu0 81
        %1232 = vperm.xlu0 %1231, %v1207
        %v1233 = vpop.permute.xlu0 %1232
        %v1235 = vmul.f32 %v1230, %v1233
        %v1236 = vadd.f32 %v1222, %v1235
        %1237 = vset.pattern.permute.xlu0 18
        %1238 = vperm.xlu0 %1237, %v899
        %v1239 = vpop.permute.xlu0 %1238
        %v1241 = vsub.f32 %v341, %v1239
        %v1242 = vand.u32 2147483647, %v1241
        %v1243 = vsub.f32 1.0, %v1242
        %v1244 = vmax.f32 %v1243, 0.0
        %1245 = vset.pattern.permute.xlu0 82
        %1246 = vperm.xlu0 %1245, %v1207
        %v1247 = vpop.permute.xlu0 %1246
        %v1249 = vmul.f32 %v1244, %v1247
        %v1250 = vadd.f32 %v1236, %v1249
        %1251 = vset.pattern.permute.xlu0 19
        %1252 = vperm.xlu0 %1251, %v899
        %v1253 = vpop.permute.xlu0 %1252
        %v1255 = vsub.f32 %v341, %v1253
        %v1256 = vand.u32 2147483647, %v1255
        %v1257 = vsub.f32 1.0, %v1256
        %v1258 = vmax.f32 %v1257, 0.0
        %1259 = vset.pattern.permute.xlu0 83
        %1260 = vperm.xlu0 %1259, %v1207
        %v1261 = vpop.permute.xlu0 %1260
        %v1263 = vmul.f32 %v1258, %v1261
        %v1264 = vadd.f32 %v1250, %v1263
        %1265 = vset.pattern.permute.xlu0 20
        %1266 = vperm.xlu0 %1265, %v965
        %v1267 = vpop.permute.xlu0 %1266
        %v1269 = vsub.f32 %v341, %v1267
        %v1270 = vand.u32 2147483647, %v1269
        %v1271 = vsub.f32 1.0, %v1270
        %v1272 = vmax.f32 %v1271, 0.0
        %1273 = vset.pattern.permute.xlu0 84
        %1274 = vperm.xlu0 %1273, %v1207
        %v1275 = vpop.permute.xlu0 %1274
        %v1277 = vmul.f32 %v1272, %v1275
        %v1278 = vadd.f32 %v1277, 0.0
        %1279 = vset.pattern.permute.xlu0 21
        %1280 = vperm.xlu0 %1279, %v965
        %v1281 = vpop.permute.xlu0 %1280
        %v1283 = vsub.f32 %v341, %v1281
        %v1284 = vand.u32 2147483647, %v1283
        %v1285 = vsub.f32 1.0, %v1284
        %v1286 = vmax.f32 %v1285, 0.0
        %1287 = vset.pattern.permute.xlu0 85
        %1288 = vperm.xlu0 %1287, %v1207
        %v1289 = vpop.permute.xlu0 %1288
        %v1291 = vmul.f32 %v1286, %v1289
        %v1292 = vadd.f32 %v1278, %v1291
        %1293 = vset.pattern.permute.xlu0 22
        %1294 = vperm.xlu0 %1293, %v965
        %v1295 = vpop.permute.xlu0 %1294
        %v1297 = vsub.f32 %v341, %v1295
        %v1298 = vand.u32 2147483647, %v1297
        %v1299 = vsub.f32 1.0, %v1298
        %v1300 = vmax.f32 %v1299, 0.0
        %1301 = vset.pattern.permute.xlu0 86
        %1302 = vperm.xlu0 %1301, %v1207
        %v1303 = vpop.permute.xlu0 %1302
        %v1305 = vmul.f32 %v1300, %v1303
        %v1306 = vadd.f32 %v1292, %v1305
        %1307 = vset.pattern.permute.xlu0 23
        %1308 = vperm.xlu0 %1307, %v965
        %v1309 = vpop.permute.xlu0 %1308
        %v1311 = vsub.f32 %v341, %v1309
        %v1312 = vand.u32 2147483647, %v1311
        %v1313 = vsub.f32 1.0, %v1312
        %v1314 = vmax.f32 %v1313, 0.0
        %1315 = vset.pattern.permute.xlu0 87
        %1316 = vperm.xlu0 %1315, %v1207
        %v1317 = vpop.permute.xlu0 %1316
        %v1319 = vmul.f32 %v1314, %v1317
        %v1320 = vadd.f32 %v1306, %v1319
        %1321 = vset.pattern.permute.xlu0 24
        %1322 = vperm.xlu0 %1321, %v1030
        %v1323 = vpop.permute.xlu0 %1322
        %v1325 = vsub.f32 %v341, %v1323
        %v1326 = vand.u32 2147483647, %v1325
        %v1327 = vsub.f32 1.0, %v1326
        %v1328 = vmax.f32 %v1327, 0.0
        %1329 = vset.pattern.permute.xlu0 88
        %1330 = vperm.xlu0 %1329, %v1207
        %v1331 = vpop.permute.xlu0 %1330
        %v1333 = vmul.f32 %v1328, %v1331
        %v1334 = vadd.f32 %v1333, 0.0
        %1335 = vset.pattern.permute.xlu0 25
        %1336 = vperm.xlu0 %1335, %v1030
        %v1337 = vpop.permute.xlu0 %1336
        %v1339 = vsub.f32 %v341, %v1337
        %v1340 = vand.u32 2147483647, %v1339
        %v1341 = vsub.f32 1.0, %v1340
        %v1342 = vmax.f32 %v1341, 0.0
        %1343 = vset.pattern.permute.xlu0 89
        %1344 = vperm.xlu0 %1343, %v1207
        %v1345 = vpop.permute.xlu0 %1344
        %v1347 = vmul.f32 %v1342, %v1345
        %v1348 = vadd.f32 %v1334, %v1347
        %1349 = vset.pattern.permute.xlu0 26
        %1350 = vperm.xlu0 %1349, %v1030
        %v1351 = vpop.permute.xlu0 %1350
        %v1353 = vsub.f32 %v341, %v1351
        %v1354 = vand.u32 2147483647, %v1353
        %v1355 = vsub.f32 1.0, %v1354
        %v1356 = vmax.f32 %v1355, 0.0
        %1357 = vset.pattern.permute.xlu0 90
        %1358 = vperm.xlu0 %1357, %v1207
        %v1359 = vpop.permute.xlu0 %1358
        %v1361 = vmul.f32 %v1356, %v1359
        %v1362 = vadd.f32 %v1348, %v1361
        %1363 = vset.pattern.permute.xlu0 27
        %1364 = vperm.xlu0 %1363, %v1030
        %v1365 = vpop.permute.xlu0 %1364
        %v1367 = vsub.f32 %v341, %v1365
        %v1368 = vand.u32 2147483647, %v1367
        %v1369 = vsub.f32 1.0, %v1368
        %v1370 = vmax.f32 %v1369, 0.0
        %1371 = vset.pattern.permute.xlu0 91
        %1372 = vperm.xlu0 %1371, %v1207
        %v1373 = vpop.permute.xlu0 %1372
        %v1375 = vmul.f32 %v1370, %v1373
        %v1376 = vadd.f32 %v1362, %v1375
        %1377 = vset.pattern.permute.xlu0 28
        %1378 = vperm.xlu0 %1377, %v1093
        %v1379 = vpop.permute.xlu0 %1378
        %v1381 = vsub.f32 %v341, %v1379
        %v1382 = vand.u32 2147483647, %v1381
        %v1383 = vsub.f32 1.0, %v1382
        %v1384 = vmax.f32 %v1383, 0.0
        %1385 = vset.pattern.permute.xlu0 92
        %1386 = vperm.xlu0 %1385, %v1207
        %v1387 = vpop.permute.xlu0 %1386
        %v1389 = vmul.f32 %v1384, %v1387
        %v1390 = vadd.f32 %v1389, 0.0
        %1391 = vset.pattern.permute.xlu0 29
        %1392 = vperm.xlu0 %1391, %v1093
        %v1393 = vpop.permute.xlu0 %1392
        %v1395 = vsub.f32 %v341, %v1393
        %v1396 = vand.u32 2147483647, %v1395
        %v1397 = vsub.f32 1.0, %v1396
        %v1398 = vmax.f32 %v1397, 0.0
        %1399 = vset.pattern.permute.xlu0 93
        %1400 = vperm.xlu0 %1399, %v1207
        %v1401 = vpop.permute.xlu0 %1400
        %v1403 = vmul.f32 %v1398, %v1401
        %v1404 = vadd.f32 %v1390, %v1403
        %1405 = vset.pattern.permute.xlu0 30
        %1406 = vperm.xlu0 %1405, %v1093
        %v1407 = vpop.permute.xlu0 %1406
        %v1409 = vsub.f32 %v341, %v1407
        %v1410 = vand.u32 2147483647, %v1409
        %v1411 = vsub.f32 1.0, %v1410
        %v1412 = vmax.f32 %v1411, 0.0
        %1413 = vset.pattern.permute.xlu0 94
        %1414 = vperm.xlu0 %1413, %v1207
        %v1415 = vpop.permute.xlu0 %1414
        %v1417 = vmul.f32 %v1412, %v1415
        %v1418 = vadd.f32 %v1404, %v1417
        %1419 = vset.pattern.permute.xlu0 31
        %1420 = vperm.xlu0 %1419, %v1093
        %v1421 = vpop.permute.xlu0 %1420
        %v1423 = vsub.f32 %v341, %v1421
        %v1424 = vand.u32 2147483647, %v1423
        %v1425 = vsub.f32 1.0, %v1424
        %v1426 = vmax.f32 %v1425, 0.0
        %1427 = vset.pattern.permute.xlu0 95
        %1428 = vperm.xlu0 %1427, %v1207
        %v1429 = vpop.permute.xlu0 %1428
        %v1431 = vmul.f32 %v1426, %v1429
        %v1432 = vadd.f32 %v1418, %v1431
        %1434 = vrot.lane.b32.xlu0 %v1320, 32
        %v1435 = vpop.permute.xlu0 %1434
        %1438 = vrot.lane.b32.xlu0 %v1376, 48
        %v1439 = vpop.permute.xlu0 %1438
        %1442 = vrot.lane.b32.xlu0 %v1432, 56
        %v1443 = vpop.permute.xlu0 %1442
        %v1445 = vsel %vm351, %v1264, %v1435
        %v1446 = vsel %vm1164, %v1445, %v1439
        %v1447 = vsel %vm1166, %v1446, %v1443
        %1456 = vrot.lane.b32.xlu0 %v822, 120
        %v1457 = vpop.permute.xlu0 %1456
        %1458 = vrot.lane.b32.xlu0 %v825, 120
        %v1459 = vpop.permute.xlu0 %1458
        %1460 = vrot.lane.b32.xlu0 %v828, 120
        %v1461 = vpop.permute.xlu0 %1460
        %1462 = vrot.lane.b32.xlu0 %v831, 120
        %v1463 = vpop.permute.xlu0 %1462
        %1464 = vrot.lane.b32.xlu0 %v834, 120
        %v1465 = vpop.permute.xlu0 %1464
        %1466 = vrot.lane.b32.xlu0 %v837, 120
        %v1467 = vpop.permute.xlu0 %1466
        %1468 = vrot.lane.b32.xlu0 %v840, 120
        %v1469 = vpop.permute.xlu0 %1468
        %1470 = vrot.lane.b32.xlu0 %v843, 120
        %v1471 = vpop.permute.xlu0 %1470
        %v1481 = vsel %vm1168, %v1447, 0
        %1483 = vmatpush.msra.mxu0 0.0
        %1484 = vmatpush.msra.mxu0 0.0
        %1485 = vmatpush.msra.mxu0 0.0
        %1486 = vmatpush.msra.mxu0 0.0
        %1487 = vmatpush.msra.mxu0 0.0
        %1488 = vmatpush.msra.mxu0 0.0
        %1489 = vmatpush.msra.mxu0 0.0
        %1490 = vmatpush.msra.mxu0 0.0
        %1491 = vmatpush.msra.mxu0 %v1471
        %1492 = vmatpush.msra.mxu0 %v1469
        %1493 = vmatpush.msra.mxu0 %v1467
        %1494 = vmatpush.msra.mxu0 %v1465
        %1495 = vmatpush.msra.mxu0 %v1463
        %1496 = vmatpush.msra.mxu0 %v1461
        %1497 = vmatpush.msra.mxu0 %v1459
        %1498 = vmatpush.msra.mxu0 %v1457
        %1499 = vmatmul.f32.gmra.mxu0 %v1481
        %v1500 = vpop.f32.mrf.mxu0
        %v1501 = vadd.f32 0.0, %v1500
        %1502 = vdwg.mxu0
        %vm1503 = vcmask 917248
        %v1504 = vsel %vm1503, %v874, -inf
        %1505 = vmax.xlane.f32.xlu0 %v1504
        %v1506 = vpop.xlane.xlu0 %1505
        %v1507 = vsub.f32 %v874, %v1506
        %v1508 = vmul.f32 %v1507, 1.442695
        %v1509 = vpow.pop %v1508
        %1511 = vrot.lane.b32.xlu0 %v1509, 32
        %v1512 = vpop.permute.xlu0 %1511
        %v1514 = vsel %vm677, %v1512, 0.0
        %1515 = vadd.xlane.f32.xlu0 %v1514
        %v1516 = vpop.xlane.xlu0 %1515
        %v1517 = vrcp.pop %v1516
        %v1518 = vmul.f32 %v1509, %v1517
        %1519 = vset.pattern.permute.xlu0 32
        %1520 = vperm.xlu0 %1519, %v899
        %v1521 = vpop.permute.xlu0 %1520
        %v1523 = vsub.f32 %v341, %v1521
        %v1524 = vand.u32 2147483647, %v1523
        %v1525 = vsub.f32 1.0, %v1524
        %v1526 = vmax.f32 %v1525, 0.0
        %1528 = vset.pattern.permute.xlu0 96
        %1529 = vperm.xlu0 %1528, %v1518
        %v1530 = vpop.permute.xlu0 %1529
        %v1532 = vmul.f32 %v1526, %v1530
        %v1533 = vadd.f32 %v1532, 0.0
        %1534 = vset.pattern.permute.xlu0 33
        %1535 = vperm.xlu0 %1534, %v899
        %v1536 = vpop.permute.xlu0 %1535
        %v1538 = vsub.f32 %v341, %v1536
        %v1539 = vand.u32 2147483647, %v1538
        %v1540 = vsub.f32 1.0, %v1539
        %v1541 = vmax.f32 %v1540, 0.0
        %1542 = vset.pattern.permute.xlu0 97
        %1543 = vperm.xlu0 %1542, %v1518
        %v1544 = vpop.permute.xlu0 %1543
        %v1546 = vmul.f32 %v1541, %v1544
        %v1547 = vadd.f32 %v1533, %v1546
        %1548 = vset.pattern.permute.xlu0 34
        %1549 = vperm.xlu0 %1548, %v899
        %v1550 = vpop.permute.xlu0 %1549
        %v1552 = vsub.f32 %v341, %v1550
        %v1553 = vand.u32 2147483647, %v1552
        %v1554 = vsub.f32 1.0, %v1553
        %v1555 = vmax.f32 %v1554, 0.0
        %1556 = vset.pattern.permute.xlu0 98
        %1557 = vperm.xlu0 %1556, %v1518
        %v1558 = vpop.permute.xlu0 %1557
        %v1560 = vmul.f32 %v1555, %v1558
        %v1561 = vadd.f32 %v1547, %v1560
        %1562 = vset.pattern.permute.xlu0 35
        %1563 = vperm.xlu0 %1562, %v899
        %v1564 = vpop.permute.xlu0 %1563
        %v1566 = vsub.f32 %v341, %v1564
        %v1567 = vand.u32 2147483647, %v1566
        %v1568 = vsub.f32 1.0, %v1567
        %v1569 = vmax.f32 %v1568, 0.0
        %1570 = vset.pattern.permute.xlu0 99
        %1571 = vperm.xlu0 %1570, %v1518
        %v1572 = vpop.permute.xlu0 %1571
        %v1574 = vmul.f32 %v1569, %v1572
        %v1575 = vadd.f32 %v1561, %v1574
        %1576 = vset.pattern.permute.xlu0 36
        %1577 = vperm.xlu0 %1576, %v965
        %v1578 = vpop.permute.xlu0 %1577
        %v1580 = vsub.f32 %v341, %v1578
        %v1581 = vand.u32 2147483647, %v1580
        %v1582 = vsub.f32 1.0, %v1581
        %v1583 = vmax.f32 %v1582, 0.0
        %1584 = vset.pattern.permute.xlu0 100
        %1585 = vperm.xlu0 %1584, %v1518
        %v1586 = vpop.permute.xlu0 %1585
        %v1588 = vmul.f32 %v1583, %v1586
        %v1589 = vadd.f32 %v1588, 0.0
        %1590 = vset.pattern.permute.xlu0 37
        %1591 = vperm.xlu0 %1590, %v965
        %v1592 = vpop.permute.xlu0 %1591
        %v1594 = vsub.f32 %v341, %v1592
        %v1595 = vand.u32 2147483647, %v1594
        %v1596 = vsub.f32 1.0, %v1595
        %v1597 = vmax.f32 %v1596, 0.0
        %1598 = vset.pattern.permute.xlu0 101
        %1599 = vperm.xlu0 %1598, %v1518
        %v1600 = vpop.permute.xlu0 %1599
        %v1602 = vmul.f32 %v1597, %v1600
        %v1603 = vadd.f32 %v1589, %v1602
        %1604 = vset.pattern.permute.xlu0 38
        %1605 = vperm.xlu0 %1604, %v965
        %v1606 = vpop.permute.xlu0 %1605
        %v1608 = vsub.f32 %v341, %v1606
        %v1609 = vand.u32 2147483647, %v1608
        %v1610 = vsub.f32 1.0, %v1609
        %v1611 = vmax.f32 %v1610, 0.0
        %1612 = vset.pattern.permute.xlu0 102
        %1613 = vperm.xlu0 %1612, %v1518
        %v1614 = vpop.permute.xlu0 %1613
        %v1616 = vmul.f32 %v1611, %v1614
        %v1617 = vadd.f32 %v1603, %v1616
        %1618 = vset.pattern.permute.xlu0 39
        %1619 = vperm.xlu0 %1618, %v965
        %v1620 = vpop.permute.xlu0 %1619
        %v1622 = vsub.f32 %v341, %v1620
        %v1623 = vand.u32 2147483647, %v1622
        %v1624 = vsub.f32 1.0, %v1623
        %v1625 = vmax.f32 %v1624, 0.0
        %1626 = vset.pattern.permute.xlu0 103
        %1627 = vperm.xlu0 %1626, %v1518
        %v1628 = vpop.permute.xlu0 %1627
        %v1630 = vmul.f32 %v1625, %v1628
        %v1631 = vadd.f32 %v1617, %v1630
        %1632 = vset.pattern.permute.xlu0 40
        %1633 = vperm.xlu0 %1632, %v1030
        %v1634 = vpop.permute.xlu0 %1633
        %v1636 = vsub.f32 %v341, %v1634
        %v1637 = vand.u32 2147483647, %v1636
        %v1638 = vsub.f32 1.0, %v1637
        %v1639 = vmax.f32 %v1638, 0.0
        %1640 = vset.pattern.permute.xlu0 104
        %1641 = vperm.xlu0 %1640, %v1518
        %v1642 = vpop.permute.xlu0 %1641
        %v1644 = vmul.f32 %v1639, %v1642
        %v1645 = vadd.f32 %v1644, 0.0
        %1646 = vset.pattern.permute.xlu0 41
        %1647 = vperm.xlu0 %1646, %v1030
        %v1648 = vpop.permute.xlu0 %1647
        %v1650 = vsub.f32 %v341, %v1648
        %v1651 = vand.u32 2147483647, %v1650
        %v1652 = vsub.f32 1.0, %v1651
        %v1653 = vmax.f32 %v1652, 0.0
        %1654 = vset.pattern.permute.xlu0 105
        %1655 = vperm.xlu0 %1654, %v1518
        %v1656 = vpop.permute.xlu0 %1655
        %v1658 = vmul.f32 %v1653, %v1656
        %v1659 = vadd.f32 %v1645, %v1658
        %1660 = vset.pattern.permute.xlu0 42
        %1661 = vperm.xlu0 %1660, %v1030
        %v1662 = vpop.permute.xlu0 %1661
        %v1664 = vsub.f32 %v341, %v1662
        %v1665 = vand.u32 2147483647, %v1664
        %v1666 = vsub.f32 1.0, %v1665
        %v1667 = vmax.f32 %v1666, 0.0
        %1668 = vset.pattern.permute.xlu0 106
        %1669 = vperm.xlu0 %1668, %v1518
        %v1670 = vpop.permute.xlu0 %1669
        %v1672 = vmul.f32 %v1667, %v1670
        %v1673 = vadd.f32 %v1659, %v1672
        %1674 = vset.pattern.permute.xlu0 43
        %1675 = vperm.xlu0 %1674, %v1030
        %v1676 = vpop.permute.xlu0 %1675
        %v1678 = vsub.f32 %v341, %v1676
        %v1679 = vand.u32 2147483647, %v1678
        %v1680 = vsub.f32 1.0, %v1679
        %v1681 = vmax.f32 %v1680, 0.0
        %1682 = vset.pattern.permute.xlu0 107
        %1683 = vperm.xlu0 %1682, %v1518
        %v1684 = vpop.permute.xlu0 %1683
        %v1686 = vmul.f32 %v1681, %v1684
        %v1687 = vadd.f32 %v1673, %v1686
        %1688 = vset.pattern.permute.xlu0 44
        %1689 = vperm.xlu0 %1688, %v1093
        %v1690 = vpop.permute.xlu0 %1689
        %v1692 = vsub.f32 %v341, %v1690
        %v1693 = vand.u32 2147483647, %v1692
        %v1694 = vsub.f32 1.0, %v1693
        %v1695 = vmax.f32 %v1694, 0.0
        %1696 = vset.pattern.permute.xlu0 108
        %1697 = vperm.xlu0 %1696, %v1518
        %v1698 = vpop.permute.xlu0 %1697
        %v1700 = vmul.f32 %v1695, %v1698
        %v1701 = vadd.f32 %v1700, 0.0
        %1702 = vset.pattern.permute.xlu0 45
        %1703 = vperm.xlu0 %1702, %v1093
        %v1704 = vpop.permute.xlu0 %1703
        %v1706 = vsub.f32 %v341, %v1704
        %v1707 = vand.u32 2147483647, %v1706
        %v1708 = vsub.f32 1.0, %v1707
        %v1709 = vmax.f32 %v1708, 0.0
        %1710 = vset.pattern.permute.xlu0 109
        %1711 = vperm.xlu0 %1710, %v1518
        %v1712 = vpop.permute.xlu0 %1711
        %v1714 = vmul.f32 %v1709, %v1712
        %v1715 = vadd.f32 %v1701, %v1714
        %1716 = vset.pattern.permute.xlu0 46
        %1717 = vperm.xlu0 %1716, %v1093
        %v1718 = vpop.permute.xlu0 %1717
        %v1720 = vsub.f32 %v341, %v1718
        %v1721 = vand.u32 2147483647, %v1720
        %v1722 = vsub.f32 1.0, %v1721
        %v1723 = vmax.f32 %v1722, 0.0
        %1724 = vset.pattern.permute.xlu0 110
        %1725 = vperm.xlu0 %1724, %v1518
        %v1726 = vpop.permute.xlu0 %1725
        %v1728 = vmul.f32 %v1723, %v1726
        %v1729 = vadd.f32 %v1715, %v1728
        %1730 = vset.pattern.permute.xlu0 47
        %1731 = vperm.xlu0 %1730, %v1093
        %v1732 = vpop.permute.xlu0 %1731
        %v1734 = vsub.f32 %v341, %v1732
        %v1735 = vand.u32 2147483647, %v1734
        %v1736 = vsub.f32 1.0, %v1735
        %v1737 = vmax.f32 %v1736, 0.0
        %1738 = vset.pattern.permute.xlu0 111
        %1739 = vperm.xlu0 %1738, %v1518
        %v1740 = vpop.permute.xlu0 %1739
        %v1742 = vmul.f32 %v1737, %v1740
        %v1743 = vadd.f32 %v1729, %v1742
        %1745 = vrot.lane.b32.xlu0 %v1631, 32
        %v1746 = vpop.permute.xlu0 %1745
        %1749 = vrot.lane.b32.xlu0 %v1687, 48
        %v1750 = vpop.permute.xlu0 %1749
        %1753 = vrot.lane.b32.xlu0 %v1743, 56
        %v1754 = vpop.permute.xlu0 %1753
        %v1756 = vsel %vm351, %v1575, %v1746
        %v1757 = vsel %vm1164, %v1756, %v1750
        %v1758 = vsel %vm1166, %v1757, %v1754
        %1759 = vrot.lane.b32.xlu0 %v822, 112
        %v1760 = vpop.permute.xlu0 %1759
        %1761 = vrot.lane.b32.xlu0 %v825, 112
        %v1762 = vpop.permute.xlu0 %1761
        %1763 = vrot.lane.b32.xlu0 %v828, 112
        %v1764 = vpop.permute.xlu0 %1763
        %1765 = vrot.lane.b32.xlu0 %v831, 112
        %v1766 = vpop.permute.xlu0 %1765
        %1767 = vrot.lane.b32.xlu0 %v834, 112
        %v1768 = vpop.permute.xlu0 %1767
        %1769 = vrot.lane.b32.xlu0 %v837, 112
        %v1770 = vpop.permute.xlu0 %1769
        %1771 = vrot.lane.b32.xlu0 %v840, 112
        %v1772 = vpop.permute.xlu0 %1771
        %1773 = vrot.lane.b32.xlu0 %v843, 112
        %v1774 = vpop.permute.xlu0 %1773
        %v1784 = vsel %vm1168, %v1758, 0
        %1786 = vmatpush.msra.mxu0 0.0
        %1787 = vmatpush.msra.mxu0 0.0
        %1788 = vmatpush.msra.mxu0 0.0
        %1789 = vmatpush.msra.mxu0 0.0
        %1790 = vmatpush.msra.mxu0 0.0
        %1791 = vmatpush.msra.mxu0 0.0
        %1792 = vmatpush.msra.mxu0 0.0
        %1793 = vmatpush.msra.mxu0 0.0
        %1794 = vmatpush.msra.mxu0 %v1774
        %1795 = vmatpush.msra.mxu0 %v1772
        %1796 = vmatpush.msra.mxu0 %v1770
        %1797 = vmatpush.msra.mxu0 %v1768
        %1798 = vmatpush.msra.mxu0 %v1766
        %1799 = vmatpush.msra.mxu0 %v1764
        %1800 = vmatpush.msra.mxu0 %v1762
        %1801 = vmatpush.msra.mxu0 %v1760
        %1802 = vmatmul.f32.gmra.mxu0 %v1784
        %v1803 = vpop.f32.mrf.mxu0
        %v1804 = vadd.f32 0.0, %v1803
        %1805 = vdwg.mxu0
        %vm1806 = vcmask 1048448
        %v1807 = vsel %vm1806, %v874, -inf
        %1808 = vmax.xlane.f32.xlu0 %v1807
        %v1809 = vpop.xlane.xlu0 %1808
        %v1810 = vsub.f32 %v874, %v1809
        %v1811 = vmul.f32 %v1810, 1.442695
        %v1812 = vpow.pop %v1811
        %1814 = vrot.lane.b32.xlu0 %v1812, 16
        %v1815 = vpop.permute.xlu0 %1814
        %v1817 = vsel %vm677, %v1815, 0.0
        %1818 = vadd.xlane.f32.xlu0 %v1817
        %v1819 = vpop.xlane.xlu0 %1818
        %v1820 = vrcp.pop %v1819
        %v1821 = vmul.f32 %v1812, %v1820
        %1822 = vset.pattern.permute.xlu0 48
        %1823 = vperm.xlu0 %1822, %v899
        %v1824 = vpop.permute.xlu0 %1823
        %v1826 = vsub.f32 %v341, %v1824
        %v1827 = vand.u32 2147483647, %v1826
        %v1828 = vsub.f32 1.0, %v1827
        %v1829 = vmax.f32 %v1828, 0.0
        %1831 = vset.pattern.permute.xlu0 112
        %1832 = vperm.xlu0 %1831, %v1821
        %v1833 = vpop.permute.xlu0 %1832
        %v1835 = vmul.f32 %v1829, %v1833
        %v1836 = vadd.f32 %v1835, 0.0
        %1837 = vset.pattern.permute.xlu0 49
        %1838 = vperm.xlu0 %1837, %v899
        %v1839 = vpop.permute.xlu0 %1838
        %v1841 = vsub.f32 %v341, %v1839
        %v1842 = vand.u32 2147483647, %v1841
        %v1843 = vsub.f32 1.0, %v1842
        %v1844 = vmax.f32 %v1843, 0.0
        %1845 = vset.pattern.permute.xlu0 113
        %1846 = vperm.xlu0 %1845, %v1821
        %v1847 = vpop.permute.xlu0 %1846
        %v1849 = vmul.f32 %v1844, %v1847
        %v1850 = vadd.f32 %v1836, %v1849
        %1851 = vset.pattern.permute.xlu0 50
        %1852 = vperm.xlu0 %1851, %v899
        %v1853 = vpop.permute.xlu0 %1852
        %v1855 = vsub.f32 %v341, %v1853
        %v1856 = vand.u32 2147483647, %v1855
        %v1857 = vsub.f32 1.0, %v1856
        %v1858 = vmax.f32 %v1857, 0.0
        %1859 = vset.pattern.permute.xlu0 114
        %1860 = vperm.xlu0 %1859, %v1821
        %v1861 = vpop.permute.xlu0 %1860
        %v1863 = vmul.f32 %v1858, %v1861
        %v1864 = vadd.f32 %v1850, %v1863
        %1865 = vset.pattern.permute.xlu0 51
        %1866 = vperm.xlu0 %1865, %v899
        %v1867 = vpop.permute.xlu0 %1866
        %v1869 = vsub.f32 %v341, %v1867
        %v1870 = vand.u32 2147483647, %v1869
        %v1871 = vsub.f32 1.0, %v1870
        %v1872 = vmax.f32 %v1871, 0.0
        %1873 = vset.pattern.permute.xlu0 115
        %1874 = vperm.xlu0 %1873, %v1821
        %v1875 = vpop.permute.xlu0 %1874
        %v1877 = vmul.f32 %v1872, %v1875
        %v1878 = vadd.f32 %v1864, %v1877
        %1879 = vset.pattern.permute.xlu0 52
        %1880 = vperm.xlu0 %1879, %v965
        %v1881 = vpop.permute.xlu0 %1880
        %v1883 = vsub.f32 %v341, %v1881
        %v1884 = vand.u32 2147483647, %v1883
        %v1885 = vsub.f32 1.0, %v1884
        %v1886 = vmax.f32 %v1885, 0.0
        %1887 = vset.pattern.permute.xlu0 116
        %1888 = vperm.xlu0 %1887, %v1821
        %v1889 = vpop.permute.xlu0 %1888
        %v1891 = vmul.f32 %v1886, %v1889
        %v1892 = vadd.f32 %v1891, 0.0
        %1893 = vset.pattern.permute.xlu0 53
        %1894 = vperm.xlu0 %1893, %v965
        %v1895 = vpop.permute.xlu0 %1894
        %v1897 = vsub.f32 %v341, %v1895
        %v1898 = vand.u32 2147483647, %v1897
        %v1899 = vsub.f32 1.0, %v1898
        %v1900 = vmax.f32 %v1899, 0.0
        %1901 = vset.pattern.permute.xlu0 117
        %1902 = vperm.xlu0 %1901, %v1821
        %v1903 = vpop.permute.xlu0 %1902
        %v1905 = vmul.f32 %v1900, %v1903
        %v1906 = vadd.f32 %v1892, %v1905
        %1907 = vset.pattern.permute.xlu0 54
        %1908 = vperm.xlu0 %1907, %v965
        %v1909 = vpop.permute.xlu0 %1908
        %v1911 = vsub.f32 %v341, %v1909
        %v1912 = vand.u32 2147483647, %v1911
        %v1913 = vsub.f32 1.0, %v1912
        %v1914 = vmax.f32 %v1913, 0.0
        %1915 = vset.pattern.permute.xlu0 118
        %1916 = vperm.xlu0 %1915, %v1821
        %v1917 = vpop.permute.xlu0 %1916
        %v1919 = vmul.f32 %v1914, %v1917
        %v1920 = vadd.f32 %v1906, %v1919
        %1921 = vset.pattern.permute.xlu0 55
        %1922 = vperm.xlu0 %1921, %v965
        %v1923 = vpop.permute.xlu0 %1922
        %v1925 = vsub.f32 %v341, %v1923
        %v1926 = vand.u32 2147483647, %v1925
        %v1927 = vsub.f32 1.0, %v1926
        %v1928 = vmax.f32 %v1927, 0.0
        %1929 = vset.pattern.permute.xlu0 119
        %1930 = vperm.xlu0 %1929, %v1821
        %v1931 = vpop.permute.xlu0 %1930
        %v1933 = vmul.f32 %v1928, %v1931
        %v1934 = vadd.f32 %v1920, %v1933
        %1935 = vset.pattern.permute.xlu0 56
        %1936 = vperm.xlu0 %1935, %v1030
        %v1937 = vpop.permute.xlu0 %1936
        %v1939 = vsub.f32 %v341, %v1937
        %v1940 = vand.u32 2147483647, %v1939
        %v1941 = vsub.f32 1.0, %v1940
        %v1942 = vmax.f32 %v1941, 0.0
        %1943 = vset.pattern.permute.xlu0 120
        %1944 = vperm.xlu0 %1943, %v1821
        %v1945 = vpop.permute.xlu0 %1944
        %v1947 = vmul.f32 %v1942, %v1945
        %v1948 = vadd.f32 %v1947, 0.0
        %1949 = vset.pattern.permute.xlu0 57
        %1950 = vperm.xlu0 %1949, %v1030
        %v1951 = vpop.permute.xlu0 %1950
        %v1953 = vsub.f32 %v341, %v1951
        %v1954 = vand.u32 2147483647, %v1953
        %v1955 = vsub.f32 1.0, %v1954
        %v1956 = vmax.f32 %v1955, 0.0
        %1957 = vset.pattern.permute.xlu0 121
        %1958 = vperm.xlu0 %1957, %v1821
        %v1959 = vpop.permute.xlu0 %1958
        %v1961 = vmul.f32 %v1956, %v1959
        %v1962 = vadd.f32 %v1948, %v1961
        %1963 = vset.pattern.permute.xlu0 58
        %1964 = vperm.xlu0 %1963, %v1030
        %v1965 = vpop.permute.xlu0 %1964
        %v1967 = vsub.f32 %v341, %v1965
        %v1968 = vand.u32 2147483647, %v1967
        %v1969 = vsub.f32 1.0, %v1968
        %v1970 = vmax.f32 %v1969, 0.0
        %1971 = vset.pattern.permute.xlu0 122
        %1972 = vperm.xlu0 %1971, %v1821
        %v1973 = vpop.permute.xlu0 %1972
        %v1975 = vmul.f32 %v1970, %v1973
        %v1976 = vadd.f32 %v1962, %v1975
        %1977 = vset.pattern.permute.xlu0 59
        %1978 = vperm.xlu0 %1977, %v1030
        %v1979 = vpop.permute.xlu0 %1978
        %v1981 = vsub.f32 %v341, %v1979
        %v1982 = vand.u32 2147483647, %v1981
        %v1983 = vsub.f32 1.0, %v1982
        %v1984 = vmax.f32 %v1983, 0.0
        %1985 = vset.pattern.permute.xlu0 123
        %1986 = vperm.xlu0 %1985, %v1821
        %v1987 = vpop.permute.xlu0 %1986
        %v1989 = vmul.f32 %v1984, %v1987
        %v1990 = vadd.f32 %v1976, %v1989
        %1991 = vset.pattern.permute.xlu0 60
        %1992 = vperm.xlu0 %1991, %v1093
        %v1993 = vpop.permute.xlu0 %1992
        %v1995 = vsub.f32 %v341, %v1993
        %v1996 = vand.u32 2147483647, %v1995
        %v1997 = vsub.f32 1.0, %v1996
        %v1998 = vmax.f32 %v1997, 0.0
        %1999 = vset.pattern.permute.xlu0 124
        %2000 = vperm.xlu0 %1999, %v1821
        %v2001 = vpop.permute.xlu0 %2000
        %v2003 = vmul.f32 %v1998, %v2001
        %v2004 = vadd.f32 %v2003, 0.0
        %2005 = vset.pattern.permute.xlu0 61
        %2006 = vperm.xlu0 %2005, %v1093
        %v2007 = vpop.permute.xlu0 %2006
        %v2009 = vsub.f32 %v341, %v2007
        %v2010 = vand.u32 2147483647, %v2009
        %v2011 = vsub.f32 1.0, %v2010
        %v2012 = vmax.f32 %v2011, 0.0
        %2013 = vset.pattern.permute.xlu0 125
        %2014 = vperm.xlu0 %2013, %v1821
        %v2015 = vpop.permute.xlu0 %2014
        %v2017 = vmul.f32 %v2012, %v2015
        %v2018 = vadd.f32 %v2004, %v2017
        %2019 = vset.pattern.permute.xlu0 62
        %2020 = vperm.xlu0 %2019, %v1093
        %v2021 = vpop.permute.xlu0 %2020
        %v2023 = vsub.f32 %v341, %v2021
        %v2024 = vand.u32 2147483647, %v2023
        %v2025 = vsub.f32 1.0, %v2024
        %v2026 = vmax.f32 %v2025, 0.0
        %2027 = vset.pattern.permute.xlu0 126
        %2028 = vperm.xlu0 %2027, %v1821
        %v2029 = vpop.permute.xlu0 %2028
        %v2031 = vmul.f32 %v2026, %v2029
        %v2032 = vadd.f32 %v2018, %v2031
        %2033 = vset.pattern.permute.xlu0 63
        %2034 = vperm.xlu0 %2033, %v1093
        %v2035 = vpop.permute.xlu0 %2034
        %v2037 = vsub.f32 %v341, %v2035
        %v2038 = vand.u32 2147483647, %v2037
        %v2039 = vsub.f32 1.0, %v2038
        %v2040 = vmax.f32 %v2039, 0.0
        %2041 = vset.pattern.permute.xlu0 127
        %2042 = vperm.xlu0 %2041, %v1821
        %v2043 = vpop.permute.xlu0 %2042
        %v2045 = vmul.f32 %v2040, %v2043
        %v2046 = vadd.f32 %v2032, %v2045
        %2048 = vrot.lane.b32.xlu0 %v1934, 32
        %v2049 = vpop.permute.xlu0 %2048
        %2052 = vrot.lane.b32.xlu0 %v1990, 48
        %v2053 = vpop.permute.xlu0 %2052
        %2056 = vrot.lane.b32.xlu0 %v2046, 56
        %v2057 = vpop.permute.xlu0 %2056
        %v2059 = vsel %vm351, %v1878, %v2049
        %v2060 = vsel %vm1164, %v2059, %v2053
        %v2061 = vsel %vm1166, %v2060, %v2057
        %2062 = vrot.lane.b32.xlu0 %v822, 104
        %v2063 = vpop.permute.xlu0 %2062
        %2064 = vrot.lane.b32.xlu0 %v825, 104
        %v2065 = vpop.permute.xlu0 %2064
        %2066 = vrot.lane.b32.xlu0 %v828, 104
        %v2067 = vpop.permute.xlu0 %2066
        %2068 = vrot.lane.b32.xlu0 %v831, 104
        %v2069 = vpop.permute.xlu0 %2068
        %2070 = vrot.lane.b32.xlu0 %v834, 104
        %v2071 = vpop.permute.xlu0 %2070
        %2072 = vrot.lane.b32.xlu0 %v837, 104
        %v2073 = vpop.permute.xlu0 %2072
        %2074 = vrot.lane.b32.xlu0 %v840, 104
        %v2075 = vpop.permute.xlu0 %2074
        %2076 = vrot.lane.b32.xlu0 %v843, 104
        %v2077 = vpop.permute.xlu0 %2076
        %v2087 = vsel %vm1168, %v2061, 0
        %2089 = vmatpush.msra.mxu0 0.0
        %2090 = vmatpush.msra.mxu0 0.0
        %2091 = vmatpush.msra.mxu0 0.0
        %2092 = vmatpush.msra.mxu0 0.0
        %2093 = vmatpush.msra.mxu0 0.0
        %2094 = vmatpush.msra.mxu0 0.0
        %2095 = vmatpush.msra.mxu0 0.0
        %2096 = vmatpush.msra.mxu0 0.0
        %2097 = vmatpush.msra.mxu0 %v2077
        %2098 = vmatpush.msra.mxu0 %v2075
        %2099 = vmatpush.msra.mxu0 %v2073
        %2100 = vmatpush.msra.mxu0 %v2071
        %2101 = vmatpush.msra.mxu0 %v2069
        %2102 = vmatpush.msra.mxu0 %v2067
        %2103 = vmatpush.msra.mxu0 %v2065
        %2104 = vmatpush.msra.mxu0 %v2063
        %2105 = vmatmul.f32.gmra.mxu0 %v2087
        %v2106 = vpop.f32.mrf.mxu0
        %v2107 = vadd.f32 0.0, %v2106
        %2108 = vdwg.mxu0
        %2110 = vrot.lane.b32.xlu0 %v1501, 8
        %v2111 = vpop.permute.xlu0 %2110
        %2114 = vrot.lane.b32.xlu0 %v1804, 16
        %v2115 = vpop.permute.xlu0 %2114
        %2118 = vrot.lane.b32.xlu0 %v2107, 24
        %v2119 = vpop.permute.xlu0 %2118
        %v2121 = vsel %vm409, %v1190, %v2111
        %v2122 = vsel %vm677, %v2121, %v2115
        %v2123 = vsel %vm679, %v2122, %v2119
        %2124 = vrot.lane.b32.xlu0 %v375, 32
        %v2125 = vpop.permute.xlu0 %2124
        %2126 = vrot.lane.b32.xlu0 %v376, 32
        %v2127 = vpop.permute.xlu0 %2126
        %2128 = vrot.lane.b32.xlu0 %v377, 32
        %v2129 = vpop.permute.xlu0 %2128
        %2130 = vrot.lane.b32.xlu0 %v378, 32
        %v2131 = vpop.permute.xlu0 %2130
        %2136 = vrot.lane.b32.xlu0 %v381, 32
        %v2137 = vpop.permute.xlu0 %2136
        %v2140 = vsel %vm351, %v2123, 0
        %2142 = vmatpush.msra.mxu0 0.0
        %2143 = vmatpush.msra.mxu0 0.0
        %2144 = vmatpush.msra.mxu0 0.0
        %2145 = vmatpush.msra.mxu0 0.0
        %2146 = vmatpush.msra.mxu0 0.0
        %2147 = vmatpush.msra.mxu0 0.0
        %2148 = vmatpush.msra.mxu0 0.0
        %2149 = vmatpush.msra.mxu0 0.0
        %2150 = vmatpush.msra.mxu0 0.0
        %2151 = vmatpush.msra.mxu0 0.0
        %2152 = vmatpush.msra.mxu0 0.0
        %2153 = vmatpush.msra.mxu0 0.0
        %2154 = vmatpush.msra.mxu0 %v2131
        %2155 = vmatpush.msra.mxu0 %v2129
        %2156 = vmatpush.msra.mxu0 %v2127
        %2157 = vmatpush.msra.mxu0 %v2125
        %2158 = vmatmul.f32.gmra.mxu0 %v2140
        %v2159 = vpop.f32.mrf.mxu0
        %v2160 = vadd.f32 %v2137, %v2159
        %2161 = vdwg.mxu0
        %v2162 = vadd.f32 %v763, %v2160
        %v2163 = vld [vmem:[%s6 + $0x4] sm:$0x1]
        %v2164 = vsel %vm351, %v2162, 0.0
        %2165 = vadd.xlane.f32.xlu0 %v2164
        %v2166 = vpop.xlane.xlu0 %2165
        %v2167 = vmul.f32 %v2166, %v734
        %v2168 = vsub.f32 %v2162, %v2167
        %v2169 = vmul.f32 %v2168, %v2168
        %v2170 = vsel %vm351, %v2169, 0.0
        %2171 = vadd.xlane.f32.xlu0 %v2170
        %v2172 = vpop.xlane.xlu0 %2171
        %v2173 = vmul.f32 %v2172, %v734
        %v2174 = vadd.f32 %v2173, 1e-05
        %v2175 = vrsqrt.pop %v2174
        %v2176 = vmul.f32 %v2175, %v2174
        %v2177 = vmul.f32 %v2176, %v2175
        %v2178 = vmul.f32 0.5, %v2177
        %v2179 = vsub.f32 1.5, %v2178
        %v2180 = vmul.f32 %v2175, %v2179
        %vm2181 = vweird.f32 %v2174
        %vm2182 = vweird.f32 %v2175
        %vm2183 = vmor %vm2181, %vm2182
        %v2184 = vsel %vm2183, %v2175, %v2180
        %v2185 = vmul.f32 %v2168, %v2184
        %2186 = vrot.lane.b32.xlu0 %v755, 32
        %v2187 = vpop.permute.xlu0 %2186
        %v2189 = vmul.f32 %v2185, %v2187
        %v2191 = vperm.slane %v2163, 0
        %v2193 = vadd.f32 %v2189, %v2191
        %2198 = vrot.lane.b32.xlu0 %v343, 64
        %v2199 = vpop.permute.xlu0 %2198
        %2200 = vrot.lane.b32.xlu0 %v344, 64
        %v2201 = vpop.permute.xlu0 %2200
        %2202 = vrot.lane.b32.xlu0 %v345, 64
        %v2203 = vpop.permute.xlu0 %2202
        %2204 = vrot.lane.b32.xlu0 %v346, 64
        %v2205 = vpop.permute.xlu0 %2204
        %2210 = vrot.lane.b32.xlu0 %v349, 64
        %v2211 = vpop.permute.xlu0 %2210
        %v2214 = vsel %vm351, %v2193, 0
        %2216 = vmatpush.msra.mxu0 0.0
        %2217 = vmatpush.msra.mxu0 0.0
        %2218 = vmatpush.msra.mxu0 0.0
        %2219 = vmatpush.msra.mxu0 0.0
        %2220 = vmatpush.msra.mxu0 0.0
        %2221 = vmatpush.msra.mxu0 0.0
        %2222 = vmatpush.msra.mxu0 0.0
        %2223 = vmatpush.msra.mxu0 0.0
        %2224 = vmatpush.msra.mxu0 0.0
        %2225 = vmatpush.msra.mxu0 0.0
        %2226 = vmatpush.msra.mxu0 0.0
        %2227 = vmatpush.msra.mxu0 0.0
        %2228 = vmatpush.msra.mxu0 %v2205
        %2229 = vmatpush.msra.mxu0 %v2203
        %2230 = vmatpush.msra.mxu0 %v2201
        %2231 = vmatpush.msra.mxu0 %v2199
        %2232 = vmatmul.f32.gmra.mxu0 %v2214
        %v2233 = vpop.f32.mrf.mxu0
        %v2234 = vadd.f32 %v2211, %v2233
        %2235 = vdwg.mxu0
        %v2236 = vmax.f32 %v2234, 0.0
        %v2237 = vld [vmem:[%s5] sm:$0xff]
        %v2238 = vld [vmem:[%s5 + $0x8] sm:$0xff]
        %v2239 = vld [vmem:[%s5 + $0x10] sm:$0xff]
        %v2240 = vld [vmem:[%s5 + $0x18] sm:$0xff]
        %v2241 = vld [vmem:[%s5 + $0x20] sm:$0xff]
        %v2242 = vld [vmem:[%s5 + $0x28] sm:$0xff]
        %v2243 = vld [vmem:[%s5 + $0x30] sm:$0xff]
        %v2244 = vld [vmem:[%s5 + $0x38] sm:$0xff]
        %v2247 = vsel %vm1168, %v2236, 0
        %2249 = vmatpush.msra.mxu0 0.0
        %2250 = vmatpush.msra.mxu0 0.0
        %2251 = vmatpush.msra.mxu0 0.0
        %2252 = vmatpush.msra.mxu0 0.0
        %2253 = vmatpush.msra.mxu0 0.0
        %2254 = vmatpush.msra.mxu0 0.0
        %2255 = vmatpush.msra.mxu0 0.0
        %2256 = vmatpush.msra.mxu0 0.0
        %2257 = vmatpush.msra.mxu0 %v2244
        %2258 = vmatpush.msra.mxu0 %v2243
        %2259 = vmatpush.msra.mxu0 %v2242
        %2260 = vmatpush.msra.mxu0 %v2241
        %2261 = vmatpush.msra.mxu0 %v2240
        %2262 = vmatpush.msra.mxu0 %v2239
        %2263 = vmatpush.msra.mxu0 %v2238
        %2264 = vmatpush.msra.mxu0 %v2237
        %2265 = vmatmul.f32.gmra.mxu0 %v2247
        %v2266 = vpop.f32.mrf.mxu0
        %v2267 = vadd.f32 %v755, %v2266
        %2268 = vdwg.mxu0
        %v2269 = vadd.f32 %v2193, %v2267
        %v2270 = vsel %vm351, %v2269, 0.0
        %2271 = vadd.xlane.f32.xlu0 %v2270
        %v2272 = vpop.xlane.xlu0 %2271
        %v2273 = vmul.f32 %v2272, %v734
        %v2274 = vsub.f32 %v2269, %v2273
        %v2275 = vmul.f32 %v2274, %v2274
        %v2276 = vsel %vm351, %v2275, 0.0
        %2277 = vadd.xlane.f32.xlu0 %v2276
        %v2278 = vpop.xlane.xlu0 %2277
        %v2279 = vmul.f32 %v2278, %v734
        %v2280 = vadd.f32 %v2279, 1e-05
        %v2281 = vrsqrt.pop %v2280
        %v2282 = vmul.f32 %v2281, %v2280
        %v2283 = vmul.f32 %v2282, %v2281
        %v2284 = vmul.f32 0.5, %v2283
        %v2285 = vsub.f32 1.5, %v2284
        %v2286 = vmul.f32 %v2281, %v2285
        %vm2287 = vweird.f32 %v2280
        %vm2288 = vweird.f32 %v2281
        %vm2289 = vmor %vm2287, %vm2288
        %v2290 = vsel %vm2289, %v2281, %v2286
        %v2291 = vmul.f32 %v2274, %v2290
        %2292 = vrot.lane.b32.xlu0 %v2191, 96
        %v2293 = vpop.permute.xlu0 %2292
        %v2295 = vmul.f32 %v2291, %v2293
        %2296 = vrot.lane.b32.xlu0 %v2191, 64
        %v2297 = vpop.permute.xlu0 %2296
        %v2299 = vadd.f32 %v2295, %v2297
        %2300 = vst.msk [vmem:[%s310] sm:$0xff] %vm351, %v2299
        %v2301 = vadd.f32 %v2299, %v329
        %s2302 = scalar_lea.vmem %s4, 96
        %v2303 = vld [vmem:[%s2302 + $0x8] sm:$0xff]
        %v2304 = vld [vmem:[%s2302 + $0x20] sm:$0xff]
        %v2305 = vld [vmem:[%s2302 + $0x38] sm:$0xff]
        %v2306 = vld [vmem:[%s2302 + $0x50] sm:$0xff]
        %s2307 = scalar_lea.vmem %s6, 5
        %v2308 = vld [vmem:[%s2307 + $0x1] sm:$0x1]
        %v2310 = vperm.slane %v2308, 0
        %v2313 = vsel %vm351, %v2301, 0
        %2315 = vmatpush.msra.mxu0 0.0
        %2316 = vmatpush.msra.mxu0 0.0
        %2317 = vmatpush.msra.mxu0 0.0
        %2318 = vmatpush.msra.mxu0 0.0
        %2319 = vmatpush.msra.mxu0 0.0
        %2320 = vmatpush.msra.mxu0 0.0
        %2321 = vmatpush.msra.mxu0 0.0
        %2322 = vmatpush.msra.mxu0 0.0
        %2323 = vmatpush.msra.mxu0 0.0
        %2324 = vmatpush.msra.mxu0 0.0
        %2325 = vmatpush.msra.mxu0 0.0
        %2326 = vmatpush.msra.mxu0 0.0
        %2327 = vmatpush.msra.mxu0 %v2306
        %2328 = vmatpush.msra.mxu0 %v2305
        %2329 = vmatpush.msra.mxu0 %v2304
        %2330 = vmatpush.msra.mxu0 %v2303
        %2331 = vmatmul.f32.gmra.mxu0 %v2313
        %v2332 = vpop.f32.mrf.mxu0
        %v2333 = vadd.f32 %v2310, %v2332
        %2334 = vdwg.mxu0
        %v2335 = vld [vmem:[%s2302 + $0x10] sm:$0xff]
        %v2336 = vld [vmem:[%s2302 + $0x28] sm:$0xff]
        %v2337 = vld [vmem:[%s2302 + $0x40] sm:$0xff]
        %v2338 = vld [vmem:[%s2302 + $0x58] sm:$0xff]
        %v2339 = vld [vmem:[%s2307 + $0x2] sm:$0x1]
        %v2341 = vperm.slane %v2339, 0
        %v2344 = vsel %vm351, %v2299, 0
        %2346 = vmatpush.msra.mxu0 0.0
        %2347 = vmatpush.msra.mxu0 0.0
        %2348 = vmatpush.msra.mxu0 0.0
        %2349 = vmatpush.msra.mxu0 0.0
        %2350 = vmatpush.msra.mxu0 0.0
        %2351 = vmatpush.msra.mxu0 0.0
        %2352 = vmatpush.msra.mxu0 0.0
        %2353 = vmatpush.msra.mxu0 0.0
        %2354 = vmatpush.msra.mxu0 0.0
        %2355 = vmatpush.msra.mxu0 0.0
        %2356 = vmatpush.msra.mxu0 0.0
        %2357 = vmatpush.msra.mxu0 0.0
        %2358 = vmatpush.msra.mxu0 %v2338
        %2359 = vmatpush.msra.mxu0 %v2337
        %2360 = vmatpush.msra.mxu0 %v2336
        %2361 = vmatpush.msra.mxu0 %v2335
        %2362 = vmatmul.f32.gmra.mxu0 %v2344
        %v2363 = vpop.f32.mrf.mxu0
        %v2364 = vadd.f32 %v2341, %v2363
        %2365 = vdwg.mxu0
        %2367 = vrot.lane.b32.xlu0 %v2333, 96
        %v2368 = vpop.permute.xlu0 %2367
        %v2369 = vsel %vm409, %v2333, 0
        %v2371 = vsel %vm409, %v2368, 0
        %2373 = vmatpush.xpose.msra.mxu0 0.0
        %2374 = vmatpush.xpose.msra.mxu0 0.0
        %2375 = vmatpush.xpose.msra.mxu0 0.0
        %2376 = vmatpush.xpose.msra.mxu0 0.0
        %2377 = vmatpush.xpose.msra.mxu0 0.0
        %2378 = vmatpush.xpose.msra.mxu0 0.0
        %2379 = vmatpush.xpose.msra.mxu0 0.0
        %2380 = vmatpush.xpose.msra.mxu0 0.0
        %2381 = vmatpush.xpose.msra.mxu0 0.0
        %2382 = vmatpush.xpose.msra.mxu0 0.0
        %2383 = vmatpush.xpose.msra.mxu0 0.0
        %2384 = vmatpush.xpose.msra.mxu0 0.0
        %2385 = vmatpush.xpose.msra.mxu0 0.0
        %2386 = vmatpush.xpose.msra.mxu0 0.0
        %2387 = vmatpush.xpose.msra.mxu0 0.0
        %2388 = vmatpush.xpose.msra.mxu0 %v2371
        %2389 = vmatmul.f32.gmra.mxu0 %v2369
        %v2390 = vpop.f32.mrf.mxu0
        %v2391 = vadd.f32 0.0, %v2390
        %2392 = vdwg.mxu0
        %2393 = vrot.lane.b32.xlu0 %v2333, 120
        %v2394 = vpop.permute.xlu0 %2393
        %2395 = vrot.lane.b32.xlu0 %v2333, 88
        %v2396 = vpop.permute.xlu0 %2395
        %v2397 = vsel %vm409, %v2394, 0
        %v2399 = vsel %vm409, %v2396, 0
        %2401 = vmatpush.xpose.msra.mxu0 0.0
        %2402 = vmatpush.xpose.msra.mxu0 0.0
        %2403 = vmatpush.xpose.msra.mxu0 0.0
        %2404 = vmatpush.xpose.msra.mxu0 0.0
        %2405 = vmatpush.xpose.msra.mxu0 0.0
        %2406 = vmatpush.xpose.msra.mxu0 0.0
        %2407 = vmatpush.xpose.msra.mxu0 0.0
        %2408 = vmatpush.xpose.msra.mxu0 0.0
        %2409 = vmatpush.xpose.msra.mxu0 0.0
        %2410 = vmatpush.xpose.msra.mxu0 0.0
        %2411 = vmatpush.xpose.msra.mxu0 0.0
        %2412 = vmatpush.xpose.msra.mxu0 0.0
        %2413 = vmatpush.xpose.msra.mxu0 0.0
        %2414 = vmatpush.xpose.msra.mxu0 0.0
        %2415 = vmatpush.xpose.msra.mxu0 0.0
        %2416 = vmatpush.xpose.msra.mxu0 %v2399
        %2417 = vmatmul.f32.gmra.mxu0 %v2397
        %v2418 = vpop.f32.mrf.mxu0
        %v2419 = vadd.f32 0.0, %v2418
        %2420 = vdwg.mxu0
        %2421 = vrot.lane.b32.xlu0 %v2333, 112
        %v2422 = vpop.permute.xlu0 %2421
        %2423 = vrot.lane.b32.xlu0 %v2333, 80
        %v2424 = vpop.permute.xlu0 %2423
        %v2425 = vsel %vm409, %v2422, 0
        %v2427 = vsel %vm409, %v2424, 0
        %2429 = vmatpush.xpose.msra.mxu0 0.0
        %2430 = vmatpush.xpose.msra.mxu0 0.0
        %2431 = vmatpush.xpose.msra.mxu0 0.0
        %2432 = vmatpush.xpose.msra.mxu0 0.0
        %2433 = vmatpush.xpose.msra.mxu0 0.0
        %2434 = vmatpush.xpose.msra.mxu0 0.0
        %2435 = vmatpush.xpose.msra.mxu0 0.0
        %2436 = vmatpush.xpose.msra.mxu0 0.0
        %2437 = vmatpush.xpose.msra.mxu0 0.0
        %2438 = vmatpush.xpose.msra.mxu0 0.0
        %2439 = vmatpush.xpose.msra.mxu0 0.0
        %2440 = vmatpush.xpose.msra.mxu0 0.0
        %2441 = vmatpush.xpose.msra.mxu0 0.0
        %2442 = vmatpush.xpose.msra.mxu0 0.0
        %2443 = vmatpush.xpose.msra.mxu0 0.0
        %2444 = vmatpush.xpose.msra.mxu0 %v2427
        %2445 = vmatmul.f32.gmra.mxu0 %v2425
        %v2446 = vpop.f32.mrf.mxu0
        %v2447 = vadd.f32 0.0, %v2446
        %2448 = vdwg.mxu0
        %2449 = vrot.lane.b32.xlu0 %v2333, 104
        %v2450 = vpop.permute.xlu0 %2449
        %2451 = vrot.lane.b32.xlu0 %v2333, 72
        %v2452 = vpop.permute.xlu0 %2451
        %v2453 = vsel %vm409, %v2450, 0
        %v2455 = vsel %vm409, %v2452, 0
        %2457 = vmatpush.xpose.msra.mxu0 0.0
        %2458 = vmatpush.xpose.msra.mxu0 0.0
        %2459 = vmatpush.xpose.msra.mxu0 0.0
        %2460 = vmatpush.xpose.msra.mxu0 0.0
        %2461 = vmatpush.xpose.msra.mxu0 0.0
        %2462 = vmatpush.xpose.msra.mxu0 0.0
        %2463 = vmatpush.xpose.msra.mxu0 0.0
        %2464 = vmatpush.xpose.msra.mxu0 0.0
        %2465 = vmatpush.xpose.msra.mxu0 0.0
        %2466 = vmatpush.xpose.msra.mxu0 0.0
        %2467 = vmatpush.xpose.msra.mxu0 0.0
        %2468 = vmatpush.xpose.msra.mxu0 0.0
        %2469 = vmatpush.xpose.msra.mxu0 0.0
        %2470 = vmatpush.xpose.msra.mxu0 0.0
        %2471 = vmatpush.xpose.msra.mxu0 0.0
        %2472 = vmatpush.xpose.msra.mxu0 %v2455
        %2473 = vmatmul.f32.gmra.mxu0 %v2453
        %v2474 = vpop.f32.mrf.mxu0
        %v2475 = vadd.f32 0.0, %v2474
        %2476 = vdwg.mxu0
        %v2477 = vsel %vm409, %v2391, -inf
        %2478 = vmax.xlane.f32.xlu0 %v2477
        %v2479 = vpop.xlane.xlu0 %2478
        %v2480 = vsel %vm409, %v2419, -inf
        %2481 = vmax.xlane.f32.xlu0 %v2480
        %v2482 = vpop.xlane.xlu0 %2481
        %v2483 = vsel %vm409, %v2447, -inf
        %2484 = vmax.xlane.f32.xlu0 %v2483
        %v2485 = vpop.xlane.xlu0 %2484
        %v2486 = vsel %vm409, %v2475, -inf
        %2487 = vmax.xlane.f32.xlu0 %v2486
        %v2488 = vpop.xlane.xlu0 %2487
        %v2489 = vsub.f32 %v2391, %v2479
        %v2490 = vsub.f32 %v2419, %v2482
        %v2491 = vsub.f32 %v2447, %v2485
        %v2492 = vsub.f32 %v2475, %v2488
        %v2493 = vmul.f32 %v2489, 1.442695
        %v2494 = vpow.pop %v2493
        %v2495 = vmul.f32 %v2490, 1.442695
        %v2496 = vpow.pop %v2495
        %v2497 = vmul.f32 %v2491, 1.442695
        %v2498 = vpow.pop %v2497
        %v2499 = vmul.f32 %v2492, 1.442695
        %v2500 = vpow.pop %v2499
        %v2501 = vsel %vm409, %v2494, 0.0
        %2502 = vadd.xlane.f32.xlu0 %v2501
        %v2503 = vpop.xlane.xlu0 %2502
        %v2504 = vsel %vm409, %v2496, 0.0
        %2505 = vadd.xlane.f32.xlu0 %v2504
        %v2506 = vpop.xlane.xlu0 %2505
        %v2507 = vsel %vm409, %v2498, 0.0
        %2508 = vadd.xlane.f32.xlu0 %v2507
        %v2509 = vpop.xlane.xlu0 %2508
        %v2510 = vsel %vm409, %v2500, 0.0
        %2511 = vadd.xlane.f32.xlu0 %v2510
        %v2512 = vpop.xlane.xlu0 %2511
        %v2513 = vrcp.pop %v2503
        %v2514 = vrcp.pop %v2506
        %v2515 = vrcp.pop %v2509
        %v2516 = vrcp.pop %v2512
        %v2517 = vmul.f32 %v2494, %v2513
        %v2518 = vmul.f32 %v2496, %v2514
        %v2519 = vmul.f32 %v2498, %v2515
        %v2520 = vmul.f32 %v2500, %v2516
        %v2522 = vsel %vm409, %v2517, 0
        %2524 = vmatpush.msra.mxu0 0.0
        %2525 = vmatpush.msra.mxu0 0.0
        %2526 = vmatpush.msra.mxu0 0.0
        %2527 = vmatpush.msra.mxu0 0.0
        %2528 = vmatpush.msra.mxu0 0.0
        %2529 = vmatpush.msra.mxu0 0.0
        %2530 = vmatpush.msra.mxu0 0.0
        %2531 = vmatpush.msra.mxu0 0.0
        %2532 = vmatpush.msra.mxu0 0.0
        %2533 = vmatpush.msra.mxu0 0.0
        %2534 = vmatpush.msra.mxu0 0.0
        %2535 = vmatpush.msra.mxu0 0.0
        %2536 = vmatpush.msra.mxu0 0.0
        %2537 = vmatpush.msra.mxu0 0.0
        %2538 = vmatpush.msra.mxu0 0.0
        %2539 = vmatpush.msra.mxu0 %v2364
        %2540 = vmatmul.f32.gmra.mxu0 %v2522
        %v2541 = vpop.f32.mrf.mxu0
        %v2542 = vadd.f32 0.0, %v2541
        %2543 = vdwg.mxu0
        %2545 = vrot.lane.b32.xlu0 %v2364, 120
        %v2546 = vpop.permute.xlu0 %2545
        %v2549 = vsel %vm409, %v2518, 0
        %2551 = vmatpush.msra.mxu0 0.0
        %2552 = vmatpush.msra.mxu0 0.0
        %2553 = vmatpush.msra.mxu0 0.0
        %2554 = vmatpush.msra.mxu0 0.0
        %2555 = vmatpush.msra.mxu0 0.0
        %2556 = vmatpush.msra.mxu0 0.0
        %2557 = vmatpush.msra.mxu0 0.0
        %2558 = vmatpush.msra.mxu0 0.0
        %2559 = vmatpush.msra.mxu0 0.0
        %2560 = vmatpush.msra.mxu0 0.0
        %2561 = vmatpush.msra.mxu0 0.0
        %2562 = vmatpush.msra.mxu0 0.0
        %2563 = vmatpush.msra.mxu0 0.0
        %2564 = vmatpush.msra.mxu0 0.0
        %2565 = vmatpush.msra.mxu0 0.0
        %2566 = vmatpush.msra.mxu0 %v2546
        %2567 = vmatmul.f32.gmra.mxu0 %v2549
        %v2568 = vpop.f32.mrf.mxu0
        %v2569 = vadd.f32 0.0, %v2568
        %2570 = vdwg.mxu0
        %2571 = vrot.lane.b32.xlu0 %v2364, 112
        %v2572 = vpop.permute.xlu0 %2571
        %v2575 = vsel %vm409, %v2519, 0
        %2577 = vmatpush.msra.mxu0 0.0
        %2578 = vmatpush.msra.mxu0 0.0
        %2579 = vmatpush.msra.mxu0 0.0
        %2580 = vmatpush.msra.mxu0 0.0
        %2581 = vmatpush.msra.mxu0 0.0
        %2582 = vmatpush.msra.mxu0 0.0
        %2583 = vmatpush.msra.mxu0 0.0
        %2584 = vmatpush.msra.mxu0 0.0
        %2585 = vmatpush.msra.mxu0 0.0
        %2586 = vmatpush.msra.mxu0 0.0
        %2587 = vmatpush.msra.mxu0 0.0
        %2588 = vmatpush.msra.mxu0 0.0
        %2589 = vmatpush.msra.mxu0 0.0
        %2590 = vmatpush.msra.mxu0 0.0
        %2591 = vmatpush.msra.mxu0 0.0
        %2592 = vmatpush.msra.mxu0 %v2572
        %2593 = vmatmul.f32.gmra.mxu0 %v2575
        %v2594 = vpop.f32.mrf.mxu0
        %v2595 = vadd.f32 0.0, %v2594
        %2596 = vdwg.mxu0
        %2597 = vrot.lane.b32.xlu0 %v2364, 104
        %v2598 = vpop.permute.xlu0 %2597
        %v2601 = vsel %vm409, %v2520, 0
        %2603 = vmatpush.msra.mxu0 0.0
        %2604 = vmatpush.msra.mxu0 0.0
        %2605 = vmatpush.msra.mxu0 0.0
        %2606 = vmatpush.msra.mxu0 0.0
        %2607 = vmatpush.msra.mxu0 0.0
        %2608 = vmatpush.msra.mxu0 0.0
        %2609 = vmatpush.msra.mxu0 0.0
        %2610 = vmatpush.msra.mxu0 0.0
        %2611 = vmatpush.msra.mxu0 0.0
        %2612 = vmatpush.msra.mxu0 0.0
        %2613 = vmatpush.msra.mxu0 0.0
        %2614 = vmatpush.msra.mxu0 0.0
        %2615 = vmatpush.msra.mxu0 0.0
        %2616 = vmatpush.msra.mxu0 0.0
        %2617 = vmatpush.msra.mxu0 0.0
        %2618 = vmatpush.msra.mxu0 %v2598
        %2619 = vmatmul.f32.gmra.mxu0 %v2601
        %v2620 = vpop.f32.mrf.mxu0
        %v2621 = vadd.f32 0.0, %v2620
        %2622 = vdwg.mxu0
        %2624 = vrot.lane.b32.xlu0 %v2569, 8
        %v2625 = vpop.permute.xlu0 %2624
        %2628 = vrot.lane.b32.xlu0 %v2595, 16
        %v2629 = vpop.permute.xlu0 %2628
        %2632 = vrot.lane.b32.xlu0 %v2621, 24
        %v2633 = vpop.permute.xlu0 %2632
        %v2635 = vsel %vm409, %v2542, %v2625
        %v2636 = vsel %vm677, %v2635, %v2629
        %v2637 = vsel %vm679, %v2636, %v2633
        %2642 = vrot.lane.b32.xlu0 %v2335, 96
        %v2643 = vpop.permute.xlu0 %2642
        %2644 = vrot.lane.b32.xlu0 %v2336, 96
        %v2645 = vpop.permute.xlu0 %2644
        %2646 = vrot.lane.b32.xlu0 %v2337, 96
        %v2647 = vpop.permute.xlu0 %2646
        %2648 = vrot.lane.b32.xlu0 %v2338, 96
        %v2649 = vpop.permute.xlu0 %2648
        %2654 = vrot.lane.b32.xlu0 %v2341, 96
        %v2655 = vpop.permute.xlu0 %2654
        %v2658 = vsel %vm351, %v2637, 0
        %2660 = vmatpush.msra.mxu0 0.0
        %2661 = vmatpush.msra.mxu0 0.0
        %2662 = vmatpush.msra.mxu0 0.0
        %2663 = vmatpush.msra.mxu0 0.0
        %2664 = vmatpush.msra.mxu0 0.0
        %2665 = vmatpush.msra.mxu0 0.0
        %2666 = vmatpush.msra.mxu0 0.0
        %2667 = vmatpush.msra.mxu0 0.0
        %2668 = vmatpush.msra.mxu0 0.0
        %2669 = vmatpush.msra.mxu0 0.0
        %2670 = vmatpush.msra.mxu0 0.0
        %2671 = vmatpush.msra.mxu0 0.0
        %2672 = vmatpush.msra.mxu0 %v2649
        %2673 = vmatpush.msra.mxu0 %v2647
        %2674 = vmatpush.msra.mxu0 %v2645
        %2675 = vmatpush.msra.mxu0 %v2643
        %2676 = vmatmul.f32.gmra.mxu0 %v2658
        %v2677 = vpop.f32.mrf.mxu0
        %v2678 = vadd.f32 %v2655, %v2677
        %2679 = vdwg.mxu0
        %v2680 = vadd.f32 %v2299, %v2678
        %v2681 = vld [vmem:[%s2307 + $0x3] sm:$0x1]
        %v2682 = vsel %vm351, %v2680, 0.0
        %2683 = vadd.xlane.f32.xlu0 %v2682
        %v2684 = vpop.xlane.xlu0 %2683
        %v2685 = vmul.f32 %v2684, %v734
        %v2686 = vsub.f32 %v2680, %v2685
        %v2687 = vmul.f32 %v2686, %v2686
        %v2688 = vsel %vm351, %v2687, 0.0
        %2689 = vadd.xlane.f32.xlu0 %v2688
        %v2690 = vpop.xlane.xlu0 %2689
        %v2691 = vmul.f32 %v2690, %v734
        %v2692 = vadd.f32 %v2691, 1e-05
        %v2693 = vrsqrt.pop %v2692
        %v2694 = vmul.f32 %v2693, %v2692
        %v2695 = vmul.f32 %v2694, %v2693
        %v2696 = vmul.f32 0.5, %v2695
        %v2697 = vsub.f32 1.5, %v2696
        %v2698 = vmul.f32 %v2693, %v2697
        %vm2699 = vweird.f32 %v2692
        %vm2700 = vweird.f32 %v2693
        %vm2701 = vmor %vm2699, %vm2700
        %v2702 = vsel %vm2701, %v2693, %v2698
        %v2703 = vmul.f32 %v2686, %v2702
        %v2705 = vperm.slane %v2681, 0
        %2706 = vrot.lane.b32.xlu0 %v2705, 96
        %v2707 = vpop.permute.xlu0 %2706
        %v2709 = vmul.f32 %v2703, %v2707
        %2710 = vrot.lane.b32.xlu0 %v2705, 64
        %v2711 = vpop.permute.xlu0 %2710
        %v2713 = vadd.f32 %v2709, %v2711
        %v2714 = vadd.f32 %v2713, %v329
        %2715 = vrot.lane.b32.xlu0 %v2335, 64
        %v2716 = vpop.permute.xlu0 %2715
        %2717 = vrot.lane.b32.xlu0 %v2336, 64
        %v2718 = vpop.permute.xlu0 %2717
        %2719 = vrot.lane.b32.xlu0 %v2337, 64
        %v2720 = vpop.permute.xlu0 %2719
        %2721 = vrot.lane.b32.xlu0 %v2338, 64
        %v2722 = vpop.permute.xlu0 %2721
        %2727 = vrot.lane.b32.xlu0 %v2341, 64
        %v2728 = vpop.permute.xlu0 %2727
        %2730 = vmatpush.msra.mxu0 0.0
        %2731 = vmatpush.msra.mxu0 0.0
        %2732 = vmatpush.msra.mxu0 0.0
        %2733 = vmatpush.msra.mxu0 0.0
        %2734 = vmatpush.msra.mxu0 0.0
        %2735 = vmatpush.msra.mxu0 0.0
        %2736 = vmatpush.msra.mxu0 0.0
        %2737 = vmatpush.msra.mxu0 0.0
        %2738 = vmatpush.msra.mxu0 0.0
        %2739 = vmatpush.msra.mxu0 0.0
        %2740 = vmatpush.msra.mxu0 0.0
        %2741 = vmatpush.msra.mxu0 0.0
        %2742 = vmatpush.msra.mxu0 %v2722
        %2743 = vmatpush.msra.mxu0 %v2720
        %2744 = vmatpush.msra.mxu0 %v2718
        %2745 = vmatpush.msra.mxu0 %v2716
        %2746 = vmatmul.f32.gmra.mxu0 %v781
        %v2747 = vpop.f32.mrf.mxu0
        %v2748 = vadd.f32 %v2728, %v2747
        %2749 = vmatmul.f32.gmra.mxu0 %v784
        %v2750 = vpop.f32.mrf.mxu0
        %v2751 = vadd.f32 %v2728, %v2750
        %2752 = vmatmul.f32.gmra.mxu0 %v787
        %v2753 = vpop.f32.mrf.mxu0
        %v2754 = vadd.f32 %v2728, %v2753
        %2755 = vmatmul.f32.gmra.mxu0 %v790
        %v2756 = vpop.f32.mrf.mxu0
        %v2757 = vadd.f32 %v2728, %v2756
        %2758 = vmatmul.f32.gmra.mxu0 %v793
        %v2759 = vpop.f32.mrf.mxu0
        %v2760 = vadd.f32 %v2728, %v2759
        %2761 = vmatmul.f32.gmra.mxu0 %v796
        %v2762 = vpop.f32.mrf.mxu0
        %v2763 = vadd.f32 %v2728, %v2762
        %2764 = vmatmul.f32.gmra.mxu0 %v799
        %v2765 = vpop.f32.mrf.mxu0
        %v2766 = vadd.f32 %v2728, %v2765
        %2767 = vmatmul.f32.gmra.mxu0 %v802
        %v2768 = vpop.f32.mrf.mxu0
        %v2769 = vadd.f32 %v2728, %v2768
        %2770 = vdwg.mxu0
        %v2771 = vld [vmem:[%s2302] sm:$0xff]
        %v2772 = vld [vmem:[%s2302 + $0x18] sm:$0xff]
        %v2773 = vld [vmem:[%s2302 + $0x30] sm:$0xff]
        %v2774 = vld [vmem:[%s2302 + $0x48] sm:$0xff]
        %v2775 = vld [vmem:[%s2307] sm:$0x1]
        %v2777 = vperm.slane %v2775, 0
        %v2780 = vsel %vm351, %v2714, 0
        %2782 = vmatpush.msra.mxu0 0.0
        %2783 = vmatpush.msra.mxu0 0.0
        %2784 = vmatpush.msra.mxu0 0.0
        %2785 = vmatpush.msra.mxu0 0.0
        %2786 = vmatpush.msra.mxu0 0.0
        %2787 = vmatpush.msra.mxu0 0.0
        %2788 = vmatpush.msra.mxu0 0.0
        %2789 = vmatpush.msra.mxu0 0.0
        %2790 = vmatpush.msra.mxu0 0.0
        %2791 = vmatpush.msra.mxu0 0.0
        %2792 = vmatpush.msra.mxu0 0.0
        %2793 = vmatpush.msra.mxu0 0.0
        %2794 = vmatpush.msra.mxu0 %v2774
        %2795 = vmatpush.msra.mxu0 %v2773
        %2796 = vmatpush.msra.mxu0 %v2772
        %2797 = vmatpush.msra.mxu0 %v2771
        %2798 = vmatmul.f32.gmra.mxu0 %v2780
        %v2799 = vpop.f32.mrf.mxu0
        %v2800 = vadd.f32 %v2777, %v2799
        %2801 = vdwg.mxu0
        %v2802 = vsel %vm876, %v2800, -inf
        %2803 = vmax.xlane.f32.xlu0 %v2802
        %v2804 = vpop.xlane.xlu0 %2803
        %v2805 = vsub.f32 %v2800, %v2804
        %v2806 = vmul.f32 %v2805, 1.442695
        %v2807 = vpow.pop %v2806
        %2809 = vrot.lane.b32.xlu0 %v2807, 64
        %v2810 = vpop.permute.xlu0 %2809
        %v2812 = vsel %vm677, %v2810, 0.0
        %2813 = vadd.xlane.f32.xlu0 %v2812
        %v2814 = vpop.xlane.xlu0 %2813
        %v2815 = vrcp.pop %v2814
        %v2816 = vmul.f32 %v2807, %v2815
        %v2817 = vadd.f32 %v896, %v2800
        %v2818 = vsub.f32 %v2817, 0.5
        %2820 = vset.pattern.permute.xlu0 0
        %2821 = vperm.xlu0 %2820, %v2818
        %v2822 = vpop.permute.xlu0 %2821
        %v2824 = vsub.f32 %v341, %v2822
        %v2825 = vand.u32 2147483647, %v2824
        %v2826 = vsub.f32 1.0, %v2825
        %v2827 = vmax.f32 %v2826, 0.0
        %2829 = vset.pattern.permute.xlu0 64
        %2830 = vperm.xlu0 %2829, %v2816
        %v2831 = vpop.permute.xlu0 %2830
        %v2833 = vmul.f32 %v2827, %v2831
        %v2834 = vadd.f32 %v2833, 0.0
        %2835 = vset.pattern.permute.xlu0 1
        %2836 = vperm.xlu0 %2835, %v2818
        %v2837 = vpop.permute.xlu0 %2836
        %v2839 = vsub.f32 %v341, %v2837
        %v2840 = vand.u32 2147483647, %v2839
        %v2841 = vsub.f32 1.0, %v2840
        %v2842 = vmax.f32 %v2841, 0.0
        %2843 = vset.pattern.permute.xlu0 65
        %2844 = vperm.xlu0 %2843, %v2816
        %v2845 = vpop.permute.xlu0 %2844
        %v2847 = vmul.f32 %v2842, %v2845
        %v2848 = vadd.f32 %v2834, %v2847
        %2849 = vset.pattern.permute.xlu0 2
        %2850 = vperm.xlu0 %2849, %v2818
        %v2851 = vpop.permute.xlu0 %2850
        %v2853 = vsub.f32 %v341, %v2851
        %v2854 = vand.u32 2147483647, %v2853
        %v2855 = vsub.f32 1.0, %v2854
        %v2856 = vmax.f32 %v2855, 0.0
        %2857 = vset.pattern.permute.xlu0 66
        %2858 = vperm.xlu0 %2857, %v2816
        %v2859 = vpop.permute.xlu0 %2858
        %v2861 = vmul.f32 %v2856, %v2859
        %v2862 = vadd.f32 %v2848, %v2861
        %2863 = vset.pattern.permute.xlu0 3
        %2864 = vperm.xlu0 %2863, %v2818
        %v2865 = vpop.permute.xlu0 %2864
        %v2867 = vsub.f32 %v341, %v2865
        %v2868 = vand.u32 2147483647, %v2867
        %v2869 = vsub.f32 1.0, %v2868
        %v2870 = vmax.f32 %v2869, 0.0
        %2871 = vset.pattern.permute.xlu0 67
        %2872 = vperm.xlu0 %2871, %v2816
        %v2873 = vpop.permute.xlu0 %2872
        %v2875 = vmul.f32 %v2870, %v2873
        %v2876 = vadd.f32 %v2862, %v2875
        %v2877 = vadd.f32 %v962, %v2800
        %v2878 = vsub.f32 %v2877, 0.5
        %2880 = vset.pattern.permute.xlu0 4
        %2881 = vperm.xlu0 %2880, %v2878
        %v2882 = vpop.permute.xlu0 %2881
        %v2884 = vsub.f32 %v341, %v2882
        %v2885 = vand.u32 2147483647, %v2884
        %v2886 = vsub.f32 1.0, %v2885
        %v2887 = vmax.f32 %v2886, 0.0
        %2888 = vset.pattern.permute.xlu0 68
        %2889 = vperm.xlu0 %2888, %v2816
        %v2890 = vpop.permute.xlu0 %2889
        %v2892 = vmul.f32 %v2887, %v2890
        %v2893 = vadd.f32 %v2892, 0.0
        %2894 = vset.pattern.permute.xlu0 5
        %2895 = vperm.xlu0 %2894, %v2878
        %v2896 = vpop.permute.xlu0 %2895
        %v2898 = vsub.f32 %v341, %v2896
        %v2899 = vand.u32 2147483647, %v2898
        %v2900 = vsub.f32 1.0, %v2899
        %v2901 = vmax.f32 %v2900, 0.0
        %2902 = vset.pattern.permute.xlu0 69
        %2903 = vperm.xlu0 %2902, %v2816
        %v2904 = vpop.permute.xlu0 %2903
        %v2906 = vmul.f32 %v2901, %v2904
        %v2907 = vadd.f32 %v2893, %v2906
        %2908 = vset.pattern.permute.xlu0 6
        %2909 = vperm.xlu0 %2908, %v2878
        %v2910 = vpop.permute.xlu0 %2909
        %v2912 = vsub.f32 %v341, %v2910
        %v2913 = vand.u32 2147483647, %v2912
        %v2914 = vsub.f32 1.0, %v2913
        %v2915 = vmax.f32 %v2914, 0.0
        %2916 = vset.pattern.permute.xlu0 70
        %2917 = vperm.xlu0 %2916, %v2816
        %v2918 = vpop.permute.xlu0 %2917
        %v2920 = vmul.f32 %v2915, %v2918
        %v2921 = vadd.f32 %v2907, %v2920
        %2922 = vset.pattern.permute.xlu0 7
        %2923 = vperm.xlu0 %2922, %v2878
        %v2924 = vpop.permute.xlu0 %2923
        %v2926 = vsub.f32 %v341, %v2924
        %v2927 = vand.u32 2147483647, %v2926
        %v2928 = vsub.f32 1.0, %v2927
        %v2929 = vmax.f32 %v2928, 0.0
        %2930 = vset.pattern.permute.xlu0 71
        %2931 = vperm.xlu0 %2930, %v2816
        %v2932 = vpop.permute.xlu0 %2931
        %v2934 = vmul.f32 %v2929, %v2932
        %v2935 = vadd.f32 %v2921, %v2934
        %v2936 = vadd.f32 %v1027, %v2800
        %v2937 = vsub.f32 %v2936, 0.5
        %2939 = vset.pattern.permute.xlu0 8
        %2940 = vperm.xlu0 %2939, %v2937
        %v2941 = vpop.permute.xlu0 %2940
        %v2943 = vsub.f32 %v341, %v2941
        %v2944 = vand.u32 2147483647, %v2943
        %v2945 = vsub.f32 1.0, %v2944
        %v2946 = vmax.f32 %v2945, 0.0
        %2947 = vset.pattern.permute.xlu0 72
        %2948 = vperm.xlu0 %2947, %v2816
        %v2949 = vpop.permute.xlu0 %2948
        %v2951 = vmul.f32 %v2946, %v2949
        %v2952 = vadd.f32 %v2951, 0.0
        %2953 = vset.pattern.permute.xlu0 9
        %2954 = vperm.xlu0 %2953, %v2937
        %v2955 = vpop.permute.xlu0 %2954
        %v2957 = vsub.f32 %v341, %v2955
        %v2958 = vand.u32 2147483647, %v2957
        %v2959 = vsub.f32 1.0, %v2958
        %v2960 = vmax.f32 %v2959, 0.0
        %2961 = vset.pattern.permute.xlu0 73
        %2962 = vperm.xlu0 %2961, %v2816
        %v2963 = vpop.permute.xlu0 %2962
        %v2965 = vmul.f32 %v2960, %v2963
        %v2966 = vadd.f32 %v2952, %v2965
        %2967 = vset.pattern.permute.xlu0 10
        %2968 = vperm.xlu0 %2967, %v2937
        %v2969 = vpop.permute.xlu0 %2968
        %v2971 = vsub.f32 %v341, %v2969
        %v2972 = vand.u32 2147483647, %v2971
        %v2973 = vsub.f32 1.0, %v2972
        %v2974 = vmax.f32 %v2973, 0.0
        %2975 = vset.pattern.permute.xlu0 74
        %2976 = vperm.xlu0 %2975, %v2816
        %v2977 = vpop.permute.xlu0 %2976
        %v2979 = vmul.f32 %v2974, %v2977
        %v2980 = vadd.f32 %v2966, %v2979
        %2981 = vset.pattern.permute.xlu0 11
        %2982 = vperm.xlu0 %2981, %v2937
        %v2983 = vpop.permute.xlu0 %2982
        %v2985 = vsub.f32 %v341, %v2983
        %v2986 = vand.u32 2147483647, %v2985
        %v2987 = vsub.f32 1.0, %v2986
        %v2988 = vmax.f32 %v2987, 0.0
        %2989 = vset.pattern.permute.xlu0 75
        %2990 = vperm.xlu0 %2989, %v2816
        %v2991 = vpop.permute.xlu0 %2990
        %v2993 = vmul.f32 %v2988, %v2991
        %v2994 = vadd.f32 %v2980, %v2993
        %v2995 = vadd.f32 %v1090, %v2800
        %v2996 = vsub.f32 %v2995, 0.5
        %2998 = vset.pattern.permute.xlu0 12
        %2999 = vperm.xlu0 %2998, %v2996
        %v3000 = vpop.permute.xlu0 %2999
        %v3002 = vsub.f32 %v341, %v3000
        %v3003 = vand.u32 2147483647, %v3002
        %v3004 = vsub.f32 1.0, %v3003
        %v3005 = vmax.f32 %v3004, 0.0
        %3006 = vset.pattern.permute.xlu0 76
        %3007 = vperm.xlu0 %3006, %v2816
        %v3008 = vpop.permute.xlu0 %3007
        %v3010 = vmul.f32 %v3005, %v3008
        %v3011 = vadd.f32 %v3010, 0.0
        %3012 = vset.pattern.permute.xlu0 13
        %3013 = vperm.xlu0 %3012, %v2996
        %v3014 = vpop.permute.xlu0 %3013
        %v3016 = vsub.f32 %v341, %v3014
        %v3017 = vand.u32 2147483647, %v3016
        %v3018 = vsub.f32 1.0, %v3017
        %v3019 = vmax.f32 %v3018, 0.0
        %3020 = vset.pattern.permute.xlu0 77
        %3021 = vperm.xlu0 %3020, %v2816
        %v3022 = vpop.permute.xlu0 %3021
        %v3024 = vmul.f32 %v3019, %v3022
        %v3025 = vadd.f32 %v3011, %v3024
        %3026 = vset.pattern.permute.xlu0 14
        %3027 = vperm.xlu0 %3026, %v2996
        %v3028 = vpop.permute.xlu0 %3027
        %v3030 = vsub.f32 %v341, %v3028
        %v3031 = vand.u32 2147483647, %v3030
        %v3032 = vsub.f32 1.0, %v3031
        %v3033 = vmax.f32 %v3032, 0.0
        %3034 = vset.pattern.permute.xlu0 78
        %3035 = vperm.xlu0 %3034, %v2816
        %v3036 = vpop.permute.xlu0 %3035
        %v3038 = vmul.f32 %v3033, %v3036
        %v3039 = vadd.f32 %v3025, %v3038
        %3040 = vset.pattern.permute.xlu0 15
        %3041 = vperm.xlu0 %3040, %v2996
        %v3042 = vpop.permute.xlu0 %3041
        %v3044 = vsub.f32 %v341, %v3042
        %v3045 = vand.u32 2147483647, %v3044
        %v3046 = vsub.f32 1.0, %v3045
        %v3047 = vmax.f32 %v3046, 0.0
        %3048 = vset.pattern.permute.xlu0 79
        %3049 = vperm.xlu0 %3048, %v2816
        %v3050 = vpop.permute.xlu0 %3049
        %v3052 = vmul.f32 %v3047, %v3050
        %v3053 = vadd.f32 %v3039, %v3052
        %3055 = vrot.lane.b32.xlu0 %v2935, 32
        %v3056 = vpop.permute.xlu0 %3055
        %3059 = vrot.lane.b32.xlu0 %v2994, 48
        %v3060 = vpop.permute.xlu0 %3059
        %3063 = vrot.lane.b32.xlu0 %v3053, 56
        %v3064 = vpop.permute.xlu0 %3063
        %v3066 = vsel %vm351, %v2876, %v3056
        %v3067 = vsel %vm1164, %v3066, %v3060
        %v3068 = vsel %vm1166, %v3067, %v3064
        %v3070 = vsel %vm1168, %v3068, 0
        %3072 = vmatpush.msra.mxu0 0.0
        %3073 = vmatpush.msra.mxu0 0.0
        %3074 = vmatpush.msra.mxu0 0.0
        %3075 = vmatpush.msra.mxu0 0.0
        %3076 = vmatpush.msra.mxu0 0.0
        %3077 = vmatpush.msra.mxu0 0.0
        %3078 = vmatpush.msra.mxu0 0.0
        %3079 = vmatpush.msra.mxu0 0.0
        %3080 = vmatpush.msra.mxu0 %v2769
        %3081 = vmatpush.msra.mxu0 %v2766
        %3082 = vmatpush.msra.mxu0 %v2763
        %3083 = vmatpush.msra.mxu0 %v2760
        %3084 = vmatpush.msra.mxu0 %v2757
        %3085 = vmatpush.msra.mxu0 %v2754
        %3086 = vmatpush.msra.mxu0 %v2751
        %3087 = vmatpush.msra.mxu0 %v2748
        %3088 = vmatmul.f32.gmra.mxu0 %v3070
        %v3089 = vpop.f32.mrf.mxu0
        %v3090 = vadd.f32 0.0, %v3089
        %3091 = vdwg.mxu0
        %v3092 = vsel %vm1192, %v2800, -inf
        %3093 = vmax.xlane.f32.xlu0 %v3092
        %v3094 = vpop.xlane.xlu0 %3093
        %v3095 = vsub.f32 %v2800, %v3094
        %v3096 = vmul.f32 %v3095, 1.442695
        %v3097 = vpow.pop %v3096
        %3099 = vrot.lane.b32.xlu0 %v3097, 48
        %v3100 = vpop.permute.xlu0 %3099
        %v3102 = vsel %vm677, %v3100, 0.0
        %3103 = vadd.xlane.f32.xlu0 %v3102
        %v3104 = vpop.xlane.xlu0 %3103
        %v3105 = vrcp.pop %v3104
        %v3106 = vmul.f32 %v3097, %v3105
        %3107 = vset.pattern.permute.xlu0 16
        %3108 = vperm.xlu0 %3107, %v2818
        %v3109 = vpop.permute.xlu0 %3108
        %v3111 = vsub.f32 %v341, %v3109
        %v3112 = vand.u32 2147483647, %v3111
        %v3113 = vsub.f32 1.0, %v3112
        %v3114 = vmax.f32 %v3113, 0.0
        %3116 = vset.pattern.permute.xlu0 80
        %3117 = vperm.xlu0 %3116, %v3106
        %v3118 = vpop.permute.xlu0 %3117
        %v3120 = vmul.f32 %v3114, %v3118
        %v3121 = vadd.f32 %v3120, 0.0
        %3122 = vset.pattern.permute.xlu0 17
        %3123 = vperm.xlu0 %3122, %v2818
        %v3124 = vpop.permute.xlu0 %3123
        %v3126 = vsub.f32 %v341, %v3124
        %v3127 = vand.u32 2147483647, %v3126
        %v3128 = vsub.f32 1.0, %v3127
        %v3129 = vmax.f32 %v3128, 0.0
        %3130 = vset.pattern.permute.xlu0 81
        %3131 = vperm.xlu0 %3130, %v3106
        %v3132 = vpop.permute.xlu0 %3131
        %v3134 = vmul.f32 %v3129, %v3132
        %v3135 = vadd.f32 %v3121, %v3134
        %3136 = vset.pattern.permute.xlu0 18
        %3137 = vperm.xlu0 %3136, %v2818
        %v3138 = vpop.permute.xlu0 %3137
        %v3140 = vsub.f32 %v341, %v3138
        %v3141 = vand.u32 2147483647, %v3140
        %v3142 = vsub.f32 1.0, %v3141
        %v3143 = vmax.f32 %v3142, 0.0
        %3144 = vset.pattern.permute.xlu0 82
        %3145 = vperm.xlu0 %3144, %v3106
        %v3146 = vpop.permute.xlu0 %3145
        %v3148 = vmul.f32 %v3143, %v3146
        %v3149 = vadd.f32 %v3135, %v3148
        %3150 = vset.pattern.permute.xlu0 19
        %3151 = vperm.xlu0 %3150, %v2818
        %v3152 = vpop.permute.xlu0 %3151
        %v3154 = vsub.f32 %v341, %v3152
        %v3155 = vand.u32 2147483647, %v3154
        %v3156 = vsub.f32 1.0, %v3155
        %v3157 = vmax.f32 %v3156, 0.0
        %3158 = vset.pattern.permute.xlu0 83
        %3159 = vperm.xlu0 %3158, %v3106
        %v3160 = vpop.permute.xlu0 %3159
        %v3162 = vmul.f32 %v3157, %v3160
        %v3163 = vadd.f32 %v3149, %v3162
        %3164 = vset.pattern.permute.xlu0 20
        %3165 = vperm.xlu0 %3164, %v2878
        %v3166 = vpop.permute.xlu0 %3165
        %v3168 = vsub.f32 %v341, %v3166
        %v3169 = vand.u32 2147483647, %v3168
        %v3170 = vsub.f32 1.0, %v3169
        %v3171 = vmax.f32 %v3170, 0.0
        %3172 = vset.pattern.permute.xlu0 84
        %3173 = vperm.xlu0 %3172, %v3106
        %v3174 = vpop.permute.xlu0 %3173
        %v3176 = vmul.f32 %v3171, %v3174
        %v3177 = vadd.f32 %v3176, 0.0
        %3178 = vset.pattern.permute.xlu0 21
        %3179 = vperm.xlu0 %3178, %v2878
        %v3180 = vpop.permute.xlu0 %3179
        %v3182 = vsub.f32 %v341, %v3180
        %v3183 = vand.u32 2147483647, %v3182
        %v3184 = vsub.f32 1.0, %v3183
        %v3185 = vmax.f32 %v3184, 0.0
        %3186 = vset.pattern.permute.xlu0 85
        %3187 = vperm.xlu0 %3186, %v3106
        %v3188 = vpop.permute.xlu0 %3187
        %v3190 = vmul.f32 %v3185, %v3188
        %v3191 = vadd.f32 %v3177, %v3190
        %3192 = vset.pattern.permute.xlu0 22
        %3193 = vperm.xlu0 %3192, %v2878
        %v3194 = vpop.permute.xlu0 %3193
        %v3196 = vsub.f32 %v341, %v3194
        %v3197 = vand.u32 2147483647, %v3196
        %v3198 = vsub.f32 1.0, %v3197
        %v3199 = vmax.f32 %v3198, 0.0
        %3200 = vset.pattern.permute.xlu0 86
        %3201 = vperm.xlu0 %3200, %v3106
        %v3202 = vpop.permute.xlu0 %3201
        %v3204 = vmul.f32 %v3199, %v3202
        %v3205 = vadd.f32 %v3191, %v3204
        %3206 = vset.pattern.permute.xlu0 23
        %3207 = vperm.xlu0 %3206, %v2878
        %v3208 = vpop.permute.xlu0 %3207
        %v3210 = vsub.f32 %v341, %v3208
        %v3211 = vand.u32 2147483647, %v3210
        %v3212 = vsub.f32 1.0, %v3211
        %v3213 = vmax.f32 %v3212, 0.0
        %3214 = vset.pattern.permute.xlu0 87
        %3215 = vperm.xlu0 %3214, %v3106
        %v3216 = vpop.permute.xlu0 %3215
        %v3218 = vmul.f32 %v3213, %v3216
        %v3219 = vadd.f32 %v3205, %v3218
        %3220 = vset.pattern.permute.xlu0 24
        %3221 = vperm.xlu0 %3220, %v2937
        %v3222 = vpop.permute.xlu0 %3221
        %v3224 = vsub.f32 %v341, %v3222
        %v3225 = vand.u32 2147483647, %v3224
        %v3226 = vsub.f32 1.0, %v3225
        %v3227 = vmax.f32 %v3226, 0.0
        %3228 = vset.pattern.permute.xlu0 88
        %3229 = vperm.xlu0 %3228, %v3106
        %v3230 = vpop.permute.xlu0 %3229
        %v3232 = vmul.f32 %v3227, %v3230
        %v3233 = vadd.f32 %v3232, 0.0
        %3234 = vset.pattern.permute.xlu0 25
        %3235 = vperm.xlu0 %3234, %v2937
        %v3236 = vpop.permute.xlu0 %3235
        %v3238 = vsub.f32 %v341, %v3236
        %v3239 = vand.u32 2147483647, %v3238
        %v3240 = vsub.f32 1.0, %v3239
        %v3241 = vmax.f32 %v3240, 0.0
        %3242 = vset.pattern.permute.xlu0 89
        %3243 = vperm.xlu0 %3242, %v3106
        %v3244 = vpop.permute.xlu0 %3243
        %v3246 = vmul.f32 %v3241, %v3244
        %v3247 = vadd.f32 %v3233, %v3246
        %3248 = vset.pattern.permute.xlu0 26
        %3249 = vperm.xlu0 %3248, %v2937
        %v3250 = vpop.permute.xlu0 %3249
        %v3252 = vsub.f32 %v341, %v3250
        %v3253 = vand.u32 2147483647, %v3252
        %v3254 = vsub.f32 1.0, %v3253
        %v3255 = vmax.f32 %v3254, 0.0
        %3256 = vset.pattern.permute.xlu0 90
        %3257 = vperm.xlu0 %3256, %v3106
        %v3258 = vpop.permute.xlu0 %3257
        %v3260 = vmul.f32 %v3255, %v3258
        %v3261 = vadd.f32 %v3247, %v3260
        %3262 = vset.pattern.permute.xlu0 27
        %3263 = vperm.xlu0 %3262, %v2937
        %v3264 = vpop.permute.xlu0 %3263
        %v3266 = vsub.f32 %v341, %v3264
        %v3267 = vand.u32 2147483647, %v3266
        %v3268 = vsub.f32 1.0, %v3267
        %v3269 = vmax.f32 %v3268, 0.0
        %3270 = vset.pattern.permute.xlu0 91
        %3271 = vperm.xlu0 %3270, %v3106
        %v3272 = vpop.permute.xlu0 %3271
        %v3274 = vmul.f32 %v3269, %v3272
        %v3275 = vadd.f32 %v3261, %v3274
        %3276 = vset.pattern.permute.xlu0 28
        %3277 = vperm.xlu0 %3276, %v2996
        %v3278 = vpop.permute.xlu0 %3277
        %v3280 = vsub.f32 %v341, %v3278
        %v3281 = vand.u32 2147483647, %v3280
        %v3282 = vsub.f32 1.0, %v3281
        %v3283 = vmax.f32 %v3282, 0.0
        %3284 = vset.pattern.permute.xlu0 92
        %3285 = vperm.xlu0 %3284, %v3106
        %v3286 = vpop.permute.xlu0 %3285
        %v3288 = vmul.f32 %v3283, %v3286
        %v3289 = vadd.f32 %v3288, 0.0
        %3290 = vset.pattern.permute.xlu0 29
        %3291 = vperm.xlu0 %3290, %v2996
        %v3292 = vpop.permute.xlu0 %3291
        %v3294 = vsub.f32 %v341, %v3292
        %v3295 = vand.u32 2147483647, %v3294
        %v3296 = vsub.f32 1.0, %v3295
        %v3297 = vmax.f32 %v3296, 0.0
        %3298 = vset.pattern.permute.xlu0 93
        %3299 = vperm.xlu0 %3298, %v3106
        %v3300 = vpop.permute.xlu0 %3299
        %v3302 = vmul.f32 %v3297, %v3300
        %v3303 = vadd.f32 %v3289, %v3302
        %3304 = vset.pattern.permute.xlu0 30
        %3305 = vperm.xlu0 %3304, %v2996
        %v3306 = vpop.permute.xlu0 %3305
        %v3308 = vsub.f32 %v341, %v3306
        %v3309 = vand.u32 2147483647, %v3308
        %v3310 = vsub.f32 1.0, %v3309
        %v3311 = vmax.f32 %v3310, 0.0
        %3312 = vset.pattern.permute.xlu0 94
        %3313 = vperm.xlu0 %3312, %v3106
        %v3314 = vpop.permute.xlu0 %3313
        %v3316 = vmul.f32 %v3311, %v3314
        %v3317 = vadd.f32 %v3303, %v3316
        %3318 = vset.pattern.permute.xlu0 31
        %3319 = vperm.xlu0 %3318, %v2996
        %v3320 = vpop.permute.xlu0 %3319
        %v3322 = vsub.f32 %v341, %v3320
        %v3323 = vand.u32 2147483647, %v3322
        %v3324 = vsub.f32 1.0, %v3323
        %v3325 = vmax.f32 %v3324, 0.0
        %3326 = vset.pattern.permute.xlu0 95
        %3327 = vperm.xlu0 %3326, %v3106
        %v3328 = vpop.permute.xlu0 %3327
        %v3330 = vmul.f32 %v3325, %v3328
        %v3331 = vadd.f32 %v3317, %v3330
        %3333 = vrot.lane.b32.xlu0 %v3219, 32
        %v3334 = vpop.permute.xlu0 %3333
        %3337 = vrot.lane.b32.xlu0 %v3275, 48
        %v3338 = vpop.permute.xlu0 %3337
        %3341 = vrot.lane.b32.xlu0 %v3331, 56
        %v3342 = vpop.permute.xlu0 %3341
        %v3344 = vsel %vm351, %v3163, %v3334
        %v3345 = vsel %vm1164, %v3344, %v3338
        %v3346 = vsel %vm1166, %v3345, %v3342
        %3355 = vrot.lane.b32.xlu0 %v2748, 120
        %v3356 = vpop.permute.xlu0 %3355
        %3357 = vrot.lane.b32.xlu0 %v2751, 120
        %v3358 = vpop.permute.xlu0 %3357
        %3359 = vrot.lane.b32.xlu0 %v2754, 120
        %v3360 = vpop.permute.xlu0 %3359
        %3361 = vrot.lane.b32.xlu0 %v2757, 120
        %v3362 = vpop.permute.xlu0 %3361
        %3363 = vrot.lane.b32.xlu0 %v2760, 120
        %v3364 = vpop.permute.xlu0 %3363
        %3365 = vrot.lane.b32.xlu0 %v2763, 120
        %v3366 = vpop.permute.xlu0 %3365
        %3367 = vrot.lane.b32.xlu0 %v2766, 120
        %v3368 = vpop.permute.xlu0 %3367
        %3369 = vrot.lane.b32.xlu0 %v2769, 120
        %v3370 = vpop.permute.xlu0 %3369
        %v3380 = vsel %vm1168, %v3346, 0
        %3382 = vmatpush.msra.mxu0 0.0
        %3383 = vmatpush.msra.mxu0 0.0
        %3384 = vmatpush.msra.mxu0 0.0
        %3385 = vmatpush.msra.mxu0 0.0
        %3386 = vmatpush.msra.mxu0 0.0
        %3387 = vmatpush.msra.mxu0 0.0
        %3388 = vmatpush.msra.mxu0 0.0
        %3389 = vmatpush.msra.mxu0 0.0
        %3390 = vmatpush.msra.mxu0 %v3370
        %3391 = vmatpush.msra.mxu0 %v3368
        %3392 = vmatpush.msra.mxu0 %v3366
        %3393 = vmatpush.msra.mxu0 %v3364
        %3394 = vmatpush.msra.mxu0 %v3362
        %3395 = vmatpush.msra.mxu0 %v3360
        %3396 = vmatpush.msra.mxu0 %v3358
        %3397 = vmatpush.msra.mxu0 %v3356
        %3398 = vmatmul.f32.gmra.mxu0 %v3380
        %v3399 = vpop.f32.mrf.mxu0
        %v3400 = vadd.f32 0.0, %v3399
        %3401 = vdwg.mxu0
        %v3402 = vsel %vm1503, %v2800, -inf
        %3403 = vmax.xlane.f32.xlu0 %v3402
        %v3404 = vpop.xlane.xlu0 %3403
        %v3405 = vsub.f32 %v2800, %v3404
        %v3406 = vmul.f32 %v3405, 1.442695
        %v3407 = vpow.pop %v3406
        %3409 = vrot.lane.b32.xlu0 %v3407, 32
        %v3410 = vpop.permute.xlu0 %3409
        %v3412 = vsel %vm677, %v3410, 0.0
        %3413 = vadd.xlane.f32.xlu0 %v3412
        %v3414 = vpop.xlane.xlu0 %3413
        %v3415 = vrcp.pop %v3414
        %v3416 = vmul.f32 %v3407, %v3415
        %3417 = vset.pattern.permute.xlu0 32
        %3418 = vperm.xlu0 %3417, %v2818
        %v3419 = vpop.permute.xlu0 %3418
        %v3421 = vsub.f32 %v341, %v3419
        %v3422 = vand.u32 2147483647, %v3421
        %v3423 = vsub.f32 1.0, %v3422
        %v3424 = vmax.f32 %v3423, 0.0
        %3426 = vset.pattern.permute.xlu0 96
        %3427 = vperm.xlu0 %3426, %v3416
        %v3428 = vpop.permute.xlu0 %3427
        %v3430 = vmul.f32 %v3424, %v3428
        %v3431 = vadd.f32 %v3430, 0.0
        %3432 = vset.pattern.permute.xlu0 33
        %3433 = vperm.xlu0 %3432, %v2818
        %v3434 = vpop.permute.xlu0 %3433
        %v3436 = vsub.f32 %v341, %v3434
        %v3437 = vand.u32 2147483647, %v3436
        %v3438 = vsub.f32 1.0, %v3437
        %v3439 = vmax.f32 %v3438, 0.0
        %3440 = vset.pattern.permute.xlu0 97
        %3441 = vperm.xlu0 %3440, %v3416
        %v3442 = vpop.permute.xlu0 %3441
        %v3444 = vmul.f32 %v3439, %v3442
        %v3445 = vadd.f32 %v3431, %v3444
        %3446 = vset.pattern.permute.xlu0 34
        %3447 = vperm.xlu0 %3446, %v2818
        %v3448 = vpop.permute.xlu0 %3447
        %v3450 = vsub.f32 %v341, %v3448
        %v3451 = vand.u32 2147483647, %v3450
        %v3452 = vsub.f32 1.0, %v3451
        %v3453 = vmax.f32 %v3452, 0.0
        %3454 = vset.pattern.permute.xlu0 98
        %3455 = vperm.xlu0 %3454, %v3416
        %v3456 = vpop.permute.xlu0 %3455
        %v3458 = vmul.f32 %v3453, %v3456
        %v3459 = vadd.f32 %v3445, %v3458
        %3460 = vset.pattern.permute.xlu0 35
        %3461 = vperm.xlu0 %3460, %v2818
        %v3462 = vpop.permute.xlu0 %3461
        %v3464 = vsub.f32 %v341, %v3462
        %v3465 = vand.u32 2147483647, %v3464
        %v3466 = vsub.f32 1.0, %v3465
        %v3467 = vmax.f32 %v3466, 0.0
        %3468 = vset.pattern.permute.xlu0 99
        %3469 = vperm.xlu0 %3468, %v3416
        %v3470 = vpop.permute.xlu0 %3469
        %v3472 = vmul.f32 %v3467, %v3470
        %v3473 = vadd.f32 %v3459, %v3472
        %3474 = vset.pattern.permute.xlu0 36
        %3475 = vperm.xlu0 %3474, %v2878
        %v3476 = vpop.permute.xlu0 %3475
        %v3478 = vsub.f32 %v341, %v3476
        %v3479 = vand.u32 2147483647, %v3478
        %v3480 = vsub.f32 1.0, %v3479
        %v3481 = vmax.f32 %v3480, 0.0
        %3482 = vset.pattern.permute.xlu0 100
        %3483 = vperm.xlu0 %3482, %v3416
        %v3484 = vpop.permute.xlu0 %3483
        %v3486 = vmul.f32 %v3481, %v3484
        %v3487 = vadd.f32 %v3486, 0.0
        %3488 = vset.pattern.permute.xlu0 37
        %3489 = vperm.xlu0 %3488, %v2878
        %v3490 = vpop.permute.xlu0 %3489
        %v3492 = vsub.f32 %v341, %v3490
        %v3493 = vand.u32 2147483647, %v3492
        %v3494 = vsub.f32 1.0, %v3493
        %v3495 = vmax.f32 %v3494, 0.0
        %3496 = vset.pattern.permute.xlu0 101
        %3497 = vperm.xlu0 %3496, %v3416
        %v3498 = vpop.permute.xlu0 %3497
        %v3500 = vmul.f32 %v3495, %v3498
        %v3501 = vadd.f32 %v3487, %v3500
        %3502 = vset.pattern.permute.xlu0 38
        %3503 = vperm.xlu0 %3502, %v2878
        %v3504 = vpop.permute.xlu0 %3503
        %v3506 = vsub.f32 %v341, %v3504
        %v3507 = vand.u32 2147483647, %v3506
        %v3508 = vsub.f32 1.0, %v3507
        %v3509 = vmax.f32 %v3508, 0.0
        %3510 = vset.pattern.permute.xlu0 102
        %3511 = vperm.xlu0 %3510, %v3416
        %v3512 = vpop.permute.xlu0 %3511
        %v3514 = vmul.f32 %v3509, %v3512
        %v3515 = vadd.f32 %v3501, %v3514
        %3516 = vset.pattern.permute.xlu0 39
        %3517 = vperm.xlu0 %3516, %v2878
        %v3518 = vpop.permute.xlu0 %3517
        %v3520 = vsub.f32 %v341, %v3518
        %v3521 = vand.u32 2147483647, %v3520
        %v3522 = vsub.f32 1.0, %v3521
        %v3523 = vmax.f32 %v3522, 0.0
        %3524 = vset.pattern.permute.xlu0 103
        %3525 = vperm.xlu0 %3524, %v3416
        %v3526 = vpop.permute.xlu0 %3525
        %v3528 = vmul.f32 %v3523, %v3526
        %v3529 = vadd.f32 %v3515, %v3528
        %3530 = vset.pattern.permute.xlu0 40
        %3531 = vperm.xlu0 %3530, %v2937
        %v3532 = vpop.permute.xlu0 %3531
        %v3534 = vsub.f32 %v341, %v3532
        %v3535 = vand.u32 2147483647, %v3534
        %v3536 = vsub.f32 1.0, %v3535
        %v3537 = vmax.f32 %v3536, 0.0
        %3538 = vset.pattern.permute.xlu0 104
        %3539 = vperm.xlu0 %3538, %v3416
        %v3540 = vpop.permute.xlu0 %3539
        %v3542 = vmul.f32 %v3537, %v3540
        %v3543 = vadd.f32 %v3542, 0.0
        %3544 = vset.pattern.permute.xlu0 41
        %3545 = vperm.xlu0 %3544, %v2937
        %v3546 = vpop.permute.xlu0 %3545
        %v3548 = vsub.f32 %v341, %v3546
        %v3549 = vand.u32 2147483647, %v3548
        %v3550 = vsub.f32 1.0, %v3549
        %v3551 = vmax.f32 %v3550, 0.0
        %3552 = vset.pattern.permute.xlu0 105
        %3553 = vperm.xlu0 %3552, %v3416
        %v3554 = vpop.permute.xlu0 %3553
        %v3556 = vmul.f32 %v3551, %v3554
        %v3557 = vadd.f32 %v3543, %v3556
        %3558 = vset.pattern.permute.xlu0 42
        %3559 = vperm.xlu0 %3558, %v2937
        %v3560 = vpop.permute.xlu0 %3559
        %v3562 = vsub.f32 %v341, %v3560
        %v3563 = vand.u32 2147483647, %v3562
        %v3564 = vsub.f32 1.0, %v3563
        %v3565 = vmax.f32 %v3564, 0.0
        %3566 = vset.pattern.permute.xlu0 106
        %3567 = vperm.xlu0 %3566, %v3416
        %v3568 = vpop.permute.xlu0 %3567
        %v3570 = vmul.f32 %v3565, %v3568
        %v3571 = vadd.f32 %v3557, %v3570
        %3572 = vset.pattern.permute.xlu0 43
        %3573 = vperm.xlu0 %3572, %v2937
        %v3574 = vpop.permute.xlu0 %3573
        %v3576 = vsub.f32 %v341, %v3574
        %v3577 = vand.u32 2147483647, %v3576
        %v3578 = vsub.f32 1.0, %v3577
        %v3579 = vmax.f32 %v3578, 0.0
        %3580 = vset.pattern.permute.xlu0 107
        %3581 = vperm.xlu0 %3580, %v3416
        %v3582 = vpop.permute.xlu0 %3581
        %v3584 = vmul.f32 %v3579, %v3582
        %v3585 = vadd.f32 %v3571, %v3584
        %3586 = vset.pattern.permute.xlu0 44
        %3587 = vperm.xlu0 %3586, %v2996
        %v3588 = vpop.permute.xlu0 %3587
        %v3590 = vsub.f32 %v341, %v3588
        %v3591 = vand.u32 2147483647, %v3590
        %v3592 = vsub.f32 1.0, %v3591
        %v3593 = vmax.f32 %v3592, 0.0
        %3594 = vset.pattern.permute.xlu0 108
        %3595 = vperm.xlu0 %3594, %v3416
        %v3596 = vpop.permute.xlu0 %3595
        %v3598 = vmul.f32 %v3593, %v3596
        %v3599 = vadd.f32 %v3598, 0.0
        %3600 = vset.pattern.permute.xlu0 45
        %3601 = vperm.xlu0 %3600, %v2996
        %v3602 = vpop.permute.xlu0 %3601
        %v3604 = vsub.f32 %v341, %v3602
        %v3605 = vand.u32 2147483647, %v3604
        %v3606 = vsub.f32 1.0, %v3605
        %v3607 = vmax.f32 %v3606, 0.0
        %3608 = vset.pattern.permute.xlu0 109
        %3609 = vperm.xlu0 %3608, %v3416
        %v3610 = vpop.permute.xlu0 %3609
        %v3612 = vmul.f32 %v3607, %v3610
        %v3613 = vadd.f32 %v3599, %v3612
        %3614 = vset.pattern.permute.xlu0 46
        %3615 = vperm.xlu0 %3614, %v2996
        %v3616 = vpop.permute.xlu0 %3615
        %v3618 = vsub.f32 %v341, %v3616
        %v3619 = vand.u32 2147483647, %v3618
        %v3620 = vsub.f32 1.0, %v3619
        %v3621 = vmax.f32 %v3620, 0.0
        %3622 = vset.pattern.permute.xlu0 110
        %3623 = vperm.xlu0 %3622, %v3416
        %v3624 = vpop.permute.xlu0 %3623
        %v3626 = vmul.f32 %v3621, %v3624
        %v3627 = vadd.f32 %v3613, %v3626
        %3628 = vset.pattern.permute.xlu0 47
        %3629 = vperm.xlu0 %3628, %v2996
        %v3630 = vpop.permute.xlu0 %3629
        %v3632 = vsub.f32 %v341, %v3630
        %v3633 = vand.u32 2147483647, %v3632
        %v3634 = vsub.f32 1.0, %v3633
        %v3635 = vmax.f32 %v3634, 0.0
        %3636 = vset.pattern.permute.xlu0 111
        %3637 = vperm.xlu0 %3636, %v3416
        %v3638 = vpop.permute.xlu0 %3637
        %v3640 = vmul.f32 %v3635, %v3638
        %v3641 = vadd.f32 %v3627, %v3640
        %3643 = vrot.lane.b32.xlu0 %v3529, 32
        %v3644 = vpop.permute.xlu0 %3643
        %3647 = vrot.lane.b32.xlu0 %v3585, 48
        %v3648 = vpop.permute.xlu0 %3647
        %3651 = vrot.lane.b32.xlu0 %v3641, 56
        %v3652 = vpop.permute.xlu0 %3651
        %v3654 = vsel %vm351, %v3473, %v3644
        %v3655 = vsel %vm1164, %v3654, %v3648
        %v3656 = vsel %vm1166, %v3655, %v3652
        %3657 = vrot.lane.b32.xlu0 %v2748, 112
        %v3658 = vpop.permute.xlu0 %3657
        %3659 = vrot.lane.b32.xlu0 %v2751, 112
        %v3660 = vpop.permute.xlu0 %3659
        %3661 = vrot.lane.b32.xlu0 %v2754, 112
        %v3662 = vpop.permute.xlu0 %3661
        %3663 = vrot.lane.b32.xlu0 %v2757, 112
        %v3664 = vpop.permute.xlu0 %3663
        %3665 = vrot.lane.b32.xlu0 %v2760, 112
        %v3666 = vpop.permute.xlu0 %3665
        %3667 = vrot.lane.b32.xlu0 %v2763, 112
        %v3668 = vpop.permute.xlu0 %3667
        %3669 = vrot.lane.b32.xlu0 %v2766, 112
        %v3670 = vpop.permute.xlu0 %3669
        %3671 = vrot.lane.b32.xlu0 %v2769, 112
        %v3672 = vpop.permute.xlu0 %3671
        %v3682 = vsel %vm1168, %v3656, 0
        %3684 = vmatpush.msra.mxu0 0.0
        %3685 = vmatpush.msra.mxu0 0.0
        %3686 = vmatpush.msra.mxu0 0.0
        %3687 = vmatpush.msra.mxu0 0.0
        %3688 = vmatpush.msra.mxu0 0.0
        %3689 = vmatpush.msra.mxu0 0.0
        %3690 = vmatpush.msra.mxu0 0.0
        %3691 = vmatpush.msra.mxu0 0.0
        %3692 = vmatpush.msra.mxu0 %v3672
        %3693 = vmatpush.msra.mxu0 %v3670
        %3694 = vmatpush.msra.mxu0 %v3668
        %3695 = vmatpush.msra.mxu0 %v3666
        %3696 = vmatpush.msra.mxu0 %v3664
        %3697 = vmatpush.msra.mxu0 %v3662
        %3698 = vmatpush.msra.mxu0 %v3660
        %3699 = vmatpush.msra.mxu0 %v3658
        %3700 = vmatmul.f32.gmra.mxu0 %v3682
        %v3701 = vpop.f32.mrf.mxu0
        %v3702 = vadd.f32 0.0, %v3701
        %3703 = vdwg.mxu0
        %v3704 = vsel %vm1806, %v2800, -inf
        %3705 = vmax.xlane.f32.xlu0 %v3704
        %v3706 = vpop.xlane.xlu0 %3705
        %v3707 = vsub.f32 %v2800, %v3706
        %v3708 = vmul.f32 %v3707, 1.442695
        %v3709 = vpow.pop %v3708
        %3711 = vrot.lane.b32.xlu0 %v3709, 16
        %v3712 = vpop.permute.xlu0 %3711
        %v3714 = vsel %vm677, %v3712, 0.0
        %3715 = vadd.xlane.f32.xlu0 %v3714
        %v3716 = vpop.xlane.xlu0 %3715
        %v3717 = vrcp.pop %v3716
        %v3718 = vmul.f32 %v3709, %v3717
        %3719 = vset.pattern.permute.xlu0 48
        %3720 = vperm.xlu0 %3719, %v2818
        %v3721 = vpop.permute.xlu0 %3720
        %v3723 = vsub.f32 %v341, %v3721
        %v3724 = vand.u32 2147483647, %v3723
        %v3725 = vsub.f32 1.0, %v3724
        %v3726 = vmax.f32 %v3725, 0.0
        %3728 = vset.pattern.permute.xlu0 112
        %3729 = vperm.xlu0 %3728, %v3718
        %v3730 = vpop.permute.xlu0 %3729
        %v3732 = vmul.f32 %v3726, %v3730
        %v3733 = vadd.f32 %v3732, 0.0
        %3734 = vset.pattern.permute.xlu0 49
        %3735 = vperm.xlu0 %3734, %v2818
        %v3736 = vpop.permute.xlu0 %3735
        %v3738 = vsub.f32 %v341, %v3736
        %v3739 = vand.u32 2147483647, %v3738
        %v3740 = vsub.f32 1.0, %v3739
        %v3741 = vmax.f32 %v3740, 0.0
        %3742 = vset.pattern.permute.xlu0 113
        %3743 = vperm.xlu0 %3742, %v3718
        %v3744 = vpop.permute.xlu0 %3743
        %v3746 = vmul.f32 %v3741, %v3744
        %v3747 = vadd.f32 %v3733, %v3746
        %3748 = vset.pattern.permute.xlu0 50
        %3749 = vperm.xlu0 %3748, %v2818
        %v3750 = vpop.permute.xlu0 %3749
        %v3752 = vsub.f32 %v341, %v3750
        %v3753 = vand.u32 2147483647, %v3752
        %v3754 = vsub.f32 1.0, %v3753
        %v3755 = vmax.f32 %v3754, 0.0
        %3756 = vset.pattern.permute.xlu0 114
        %3757 = vperm.xlu0 %3756, %v3718
        %v3758 = vpop.permute.xlu0 %3757
        %v3760 = vmul.f32 %v3755, %v3758
        %v3761 = vadd.f32 %v3747, %v3760
        %3762 = vset.pattern.permute.xlu0 51
        %3763 = vperm.xlu0 %3762, %v2818
        %v3764 = vpop.permute.xlu0 %3763
        %v3766 = vsub.f32 %v341, %v3764
        %v3767 = vand.u32 2147483647, %v3766
        %v3768 = vsub.f32 1.0, %v3767
        %v3769 = vmax.f32 %v3768, 0.0
        %3770 = vset.pattern.permute.xlu0 115
        %3771 = vperm.xlu0 %3770, %v3718
        %v3772 = vpop.permute.xlu0 %3771
        %v3774 = vmul.f32 %v3769, %v3772
        %v3775 = vadd.f32 %v3761, %v3774
        %3776 = vset.pattern.permute.xlu0 52
        %3777 = vperm.xlu0 %3776, %v2878
        %v3778 = vpop.permute.xlu0 %3777
        %v3780 = vsub.f32 %v341, %v3778
        %v3781 = vand.u32 2147483647, %v3780
        %v3782 = vsub.f32 1.0, %v3781
        %v3783 = vmax.f32 %v3782, 0.0
        %3784 = vset.pattern.permute.xlu0 116
        %3785 = vperm.xlu0 %3784, %v3718
        %v3786 = vpop.permute.xlu0 %3785
        %v3788 = vmul.f32 %v3783, %v3786
        %v3789 = vadd.f32 %v3788, 0.0
        %3790 = vset.pattern.permute.xlu0 53
        %3791 = vperm.xlu0 %3790, %v2878
        %v3792 = vpop.permute.xlu0 %3791
        %v3794 = vsub.f32 %v341, %v3792
        %v3795 = vand.u32 2147483647, %v3794
        %v3796 = vsub.f32 1.0, %v3795
        %v3797 = vmax.f32 %v3796, 0.0
        %3798 = vset.pattern.permute.xlu0 117
        %3799 = vperm.xlu0 %3798, %v3718
        %v3800 = vpop.permute.xlu0 %3799
        %v3802 = vmul.f32 %v3797, %v3800
        %v3803 = vadd.f32 %v3789, %v3802
        %3804 = vset.pattern.permute.xlu0 54
        %3805 = vperm.xlu0 %3804, %v2878
        %v3806 = vpop.permute.xlu0 %3805
        %v3808 = vsub.f32 %v341, %v3806
        %v3809 = vand.u32 2147483647, %v3808
        %v3810 = vsub.f32 1.0, %v3809
        %v3811 = vmax.f32 %v3810, 0.0
        %3812 = vset.pattern.permute.xlu0 118
        %3813 = vperm.xlu0 %3812, %v3718
        %v3814 = vpop.permute.xlu0 %3813
        %v3816 = vmul.f32 %v3811, %v3814
        %v3817 = vadd.f32 %v3803, %v3816
        %3818 = vset.pattern.permute.xlu0 55
        %3819 = vperm.xlu0 %3818, %v2878
        %v3820 = vpop.permute.xlu0 %3819
        %v3822 = vsub.f32 %v341, %v3820
        %v3823 = vand.u32 2147483647, %v3822
        %v3824 = vsub.f32 1.0, %v3823
        %v3825 = vmax.f32 %v3824, 0.0
        %3826 = vset.pattern.permute.xlu0 119
        %3827 = vperm.xlu0 %3826, %v3718
        %v3828 = vpop.permute.xlu0 %3827
        %v3830 = vmul.f32 %v3825, %v3828
        %v3831 = vadd.f32 %v3817, %v3830
        %3832 = vset.pattern.permute.xlu0 56
        %3833 = vperm.xlu0 %3832, %v2937
        %v3834 = vpop.permute.xlu0 %3833
        %v3836 = vsub.f32 %v341, %v3834
        %v3837 = vand.u32 2147483647, %v3836
        %v3838 = vsub.f32 1.0, %v3837
        %v3839 = vmax.f32 %v3838, 0.0
        %3840 = vset.pattern.permute.xlu0 120
        %3841 = vperm.xlu0 %3840, %v3718
        %v3842 = vpop.permute.xlu0 %3841
        %v3844 = vmul.f32 %v3839, %v3842
        %v3845 = vadd.f32 %v3844, 0.0
        %3846 = vset.pattern.permute.xlu0 57
        %3847 = vperm.xlu0 %3846, %v2937
        %v3848 = vpop.permute.xlu0 %3847
        %v3850 = vsub.f32 %v341, %v3848
        %v3851 = vand.u32 2147483647, %v3850
        %v3852 = vsub.f32 1.0, %v3851
        %v3853 = vmax.f32 %v3852, 0.0
        %3854 = vset.pattern.permute.xlu0 121
        %3855 = vperm.xlu0 %3854, %v3718
        %v3856 = vpop.permute.xlu0 %3855
        %v3858 = vmul.f32 %v3853, %v3856
        %v3859 = vadd.f32 %v3845, %v3858
        %3860 = vset.pattern.permute.xlu0 58
        %3861 = vperm.xlu0 %3860, %v2937
        %v3862 = vpop.permute.xlu0 %3861
        %v3864 = vsub.f32 %v341, %v3862
        %v3865 = vand.u32 2147483647, %v3864
        %v3866 = vsub.f32 1.0, %v3865
        %v3867 = vmax.f32 %v3866, 0.0
        %3868 = vset.pattern.permute.xlu0 122
        %3869 = vperm.xlu0 %3868, %v3718
        %v3870 = vpop.permute.xlu0 %3869
        %v3872 = vmul.f32 %v3867, %v3870
        %v3873 = vadd.f32 %v3859, %v3872
        %3874 = vset.pattern.permute.xlu0 59
        %3875 = vperm.xlu0 %3874, %v2937
        %v3876 = vpop.permute.xlu0 %3875
        %v3878 = vsub.f32 %v341, %v3876
        %v3879 = vand.u32 2147483647, %v3878
        %v3880 = vsub.f32 1.0, %v3879
        %v3881 = vmax.f32 %v3880, 0.0
        %3882 = vset.pattern.permute.xlu0 123
        %3883 = vperm.xlu0 %3882, %v3718
        %v3884 = vpop.permute.xlu0 %3883
        %v3886 = vmul.f32 %v3881, %v3884
        %v3887 = vadd.f32 %v3873, %v3886
        %3888 = vset.pattern.permute.xlu0 60
        %3889 = vperm.xlu0 %3888, %v2996
        %v3890 = vpop.permute.xlu0 %3889
        %v3892 = vsub.f32 %v341, %v3890
        %v3893 = vand.u32 2147483647, %v3892
        %v3894 = vsub.f32 1.0, %v3893
        %v3895 = vmax.f32 %v3894, 0.0
        %3896 = vset.pattern.permute.xlu0 124
        %3897 = vperm.xlu0 %3896, %v3718
        %v3898 = vpop.permute.xlu0 %3897
        %v3900 = vmul.f32 %v3895, %v3898
        %v3901 = vadd.f32 %v3900, 0.0
        %3902 = vset.pattern.permute.xlu0 61
        %3903 = vperm.xlu0 %3902, %v2996
        %v3904 = vpop.permute.xlu0 %3903
        %v3906 = vsub.f32 %v341, %v3904
        %v3907 = vand.u32 2147483647, %v3906
        %v3908 = vsub.f32 1.0, %v3907
        %v3909 = vmax.f32 %v3908, 0.0
        %3910 = vset.pattern.permute.xlu0 125
        %3911 = vperm.xlu0 %3910, %v3718
        %v3912 = vpop.permute.xlu0 %3911
        %v3914 = vmul.f32 %v3909, %v3912
        %v3915 = vadd.f32 %v3901, %v3914
        %3916 = vset.pattern.permute.xlu0 62
        %3917 = vperm.xlu0 %3916, %v2996
        %v3918 = vpop.permute.xlu0 %3917
        %v3920 = vsub.f32 %v341, %v3918
        %v3921 = vand.u32 2147483647, %v3920
        %v3922 = vsub.f32 1.0, %v3921
        %v3923 = vmax.f32 %v3922, 0.0
        %3924 = vset.pattern.permute.xlu0 126
        %3925 = vperm.xlu0 %3924, %v3718
        %v3926 = vpop.permute.xlu0 %3925
        %v3928 = vmul.f32 %v3923, %v3926
        %v3929 = vadd.f32 %v3915, %v3928
        %3930 = vset.pattern.permute.xlu0 63
        %3931 = vperm.xlu0 %3930, %v2996
        %v3932 = vpop.permute.xlu0 %3931
        %v3934 = vsub.f32 %v341, %v3932
        %v3935 = vand.u32 2147483647, %v3934
        %v3936 = vsub.f32 1.0, %v3935
        %v3937 = vmax.f32 %v3936, 0.0
        %3938 = vset.pattern.permute.xlu0 127
        %3939 = vperm.xlu0 %3938, %v3718
        %v3940 = vpop.permute.xlu0 %3939
        %v3942 = vmul.f32 %v3937, %v3940
        %v3943 = vadd.f32 %v3929, %v3942
        %3945 = vrot.lane.b32.xlu0 %v3831, 32
        %v3946 = vpop.permute.xlu0 %3945
        %3949 = vrot.lane.b32.xlu0 %v3887, 48
        %v3950 = vpop.permute.xlu0 %3949
        %3953 = vrot.lane.b32.xlu0 %v3943, 56
        %v3954 = vpop.permute.xlu0 %3953
        %v3956 = vsel %vm351, %v3775, %v3946
        %v3957 = vsel %vm1164, %v3956, %v3950
        %v3958 = vsel %vm1166, %v3957, %v3954
        %3959 = vrot.lane.b32.xlu0 %v2748, 104
        %v3960 = vpop.permute.xlu0 %3959
        %3961 = vrot.lane.b32.xlu0 %v2751, 104
        %v3962 = vpop.permute.xlu0 %3961
        %3963 = vrot.lane.b32.xlu0 %v2754, 104
        %v3964 = vpop.permute.xlu0 %3963
        %3965 = vrot.lane.b32.xlu0 %v2757, 104
        %v3966 = vpop.permute.xlu0 %3965
        %3967 = vrot.lane.b32.xlu0 %v2760, 104
        %v3968 = vpop.permute.xlu0 %3967
        %3969 = vrot.lane.b32.xlu0 %v2763, 104
        %v3970 = vpop.permute.xlu0 %3969
        %3971 = vrot.lane.b32.xlu0 %v2766, 104
        %v3972 = vpop.permute.xlu0 %3971
        %3973 = vrot.lane.b32.xlu0 %v2769, 104
        %v3974 = vpop.permute.xlu0 %3973
        %v3984 = vsel %vm1168, %v3958, 0
        %3986 = vmatpush.msra.mxu0 0.0
        %3987 = vmatpush.msra.mxu0 0.0
        %3988 = vmatpush.msra.mxu0 0.0
        %3989 = vmatpush.msra.mxu0 0.0
        %3990 = vmatpush.msra.mxu0 0.0
        %3991 = vmatpush.msra.mxu0 0.0
        %3992 = vmatpush.msra.mxu0 0.0
        %3993 = vmatpush.msra.mxu0 0.0
        %3994 = vmatpush.msra.mxu0 %v3974
        %3995 = vmatpush.msra.mxu0 %v3972
        %3996 = vmatpush.msra.mxu0 %v3970
        %3997 = vmatpush.msra.mxu0 %v3968
        %3998 = vmatpush.msra.mxu0 %v3966
        %3999 = vmatpush.msra.mxu0 %v3964
        %4000 = vmatpush.msra.mxu0 %v3962
        %4001 = vmatpush.msra.mxu0 %v3960
        %4002 = vmatmul.f32.gmra.mxu0 %v3984
        %v4003 = vpop.f32.mrf.mxu0
        %v4004 = vadd.f32 0.0, %v4003
        %4005 = vdwg.mxu0
        %4007 = vrot.lane.b32.xlu0 %v3400, 8
        %v4008 = vpop.permute.xlu0 %4007
        %4011 = vrot.lane.b32.xlu0 %v3702, 16
        %v4012 = vpop.permute.xlu0 %4011
        %4015 = vrot.lane.b32.xlu0 %v4004, 24
        %v4016 = vpop.permute.xlu0 %4015
        %v4018 = vsel %vm409, %v3090, %v4008
        %v4019 = vsel %vm677, %v4018, %v4012
        %v4020 = vsel %vm679, %v4019, %v4016
        %4021 = vrot.lane.b32.xlu0 %v2335, 32
        %v4022 = vpop.permute.xlu0 %4021
        %4023 = vrot.lane.b32.xlu0 %v2336, 32
        %v4024 = vpop.permute.xlu0 %4023
        %4025 = vrot.lane.b32.xlu0 %v2337, 32
        %v4026 = vpop.permute.xlu0 %4025
        %4027 = vrot.lane.b32.xlu0 %v2338, 32
        %v4028 = vpop.permute.xlu0 %4027
        %4033 = vrot.lane.b32.xlu0 %v2341, 32
        %v4034 = vpop.permute.xlu0 %4033
        %v4037 = vsel %vm351, %v4020, 0
        %4039 = vmatpush.msra.mxu0 0.0
        %4040 = vmatpush.msra.mxu0 0.0
        %4041 = vmatpush.msra.mxu0 0.0
        %4042 = vmatpush.msra.mxu0 0.0
        %4043 = vmatpush.msra.mxu0 0.0
        %4044 = vmatpush.msra.mxu0 0.0
        %4045 = vmatpush.msra.mxu0 0.0
        %4046 = vmatpush.msra.mxu0 0.0
        %4047 = vmatpush.msra.mxu0 0.0
        %4048 = vmatpush.msra.mxu0 0.0
        %4049 = vmatpush.msra.mxu0 0.0
        %4050 = vmatpush.msra.mxu0 0.0
        %4051 = vmatpush.msra.mxu0 %v4028
        %4052 = vmatpush.msra.mxu0 %v4026
        %4053 = vmatpush.msra.mxu0 %v4024
        %4054 = vmatpush.msra.mxu0 %v4022
        %4055 = vmatmul.f32.gmra.mxu0 %v4037
        %v4056 = vpop.f32.mrf.mxu0
        %v4057 = vadd.f32 %v4034, %v4056
        %4058 = vdwg.mxu0
        %v4059 = vadd.f32 %v2713, %v4057
        %v4060 = vld [vmem:[%s2307 + $0x4] sm:$0x1]
        %v4061 = vsel %vm351, %v4059, 0.0
        %4062 = vadd.xlane.f32.xlu0 %v4061
        %v4063 = vpop.xlane.xlu0 %4062
        %v4064 = vmul.f32 %v4063, %v734
        %v4065 = vsub.f32 %v4059, %v4064
        %v4066 = vmul.f32 %v4065, %v4065
        %v4067 = vsel %vm351, %v4066, 0.0
        %4068 = vadd.xlane.f32.xlu0 %v4067
        %v4069 = vpop.xlane.xlu0 %4068
        %v4070 = vmul.f32 %v4069, %v734
        %v4071 = vadd.f32 %v4070, 1e-05
        %v4072 = vrsqrt.pop %v4071
        %v4073 = vmul.f32 %v4072, %v4071
        %v4074 = vmul.f32 %v4073, %v4072
        %v4075 = vmul.f32 0.5, %v4074
        %v4076 = vsub.f32 1.5, %v4075
        %v4077 = vmul.f32 %v4072, %v4076
        %vm4078 = vweird.f32 %v4071
        %vm4079 = vweird.f32 %v4072
        %vm4080 = vmor %vm4078, %vm4079
        %v4081 = vsel %vm4080, %v4072, %v4077
        %v4082 = vmul.f32 %v4065, %v4081
        %4083 = vrot.lane.b32.xlu0 %v2705, 32
        %v4084 = vpop.permute.xlu0 %4083
        %v4086 = vmul.f32 %v4082, %v4084
        %v4088 = vperm.slane %v4060, 0
        %v4090 = vadd.f32 %v4086, %v4088
        %4095 = vrot.lane.b32.xlu0 %v2303, 64
        %v4096 = vpop.permute.xlu0 %4095
        %4097 = vrot.lane.b32.xlu0 %v2304, 64
        %v4098 = vpop.permute.xlu0 %4097
        %4099 = vrot.lane.b32.xlu0 %v2305, 64
        %v4100 = vpop.permute.xlu0 %4099
        %4101 = vrot.lane.b32.xlu0 %v2306, 64
        %v4102 = vpop.permute.xlu0 %4101
        %4107 = vrot.lane.b32.xlu0 %v2310, 64
        %v4108 = vpop.permute.xlu0 %4107
        %v4111 = vsel %vm351, %v4090, 0
        %4113 = vmatpush.msra.mxu0 0.0
        %4114 = vmatpush.msra.mxu0 0.0
        %4115 = vmatpush.msra.mxu0 0.0
        %4116 = vmatpush.msra.mxu0 0.0
        %4117 = vmatpush.msra.mxu0 0.0
        %4118 = vmatpush.msra.mxu0 0.0
        %4119 = vmatpush.msra.mxu0 0.0
        %4120 = vmatpush.msra.mxu0 0.0
        %4121 = vmatpush.msra.mxu0 0.0
        %4122 = vmatpush.msra.mxu0 0.0
        %4123 = vmatpush.msra.mxu0 0.0
        %4124 = vmatpush.msra.mxu0 0.0
        %4125 = vmatpush.msra.mxu0 %v4102
        %4126 = vmatpush.msra.mxu0 %v4100
        %4127 = vmatpush.msra.mxu0 %v4098
        %4128 = vmatpush.msra.mxu0 %v4096
        %4129 = vmatmul.f32.gmra.mxu0 %v4111
        %v4130 = vpop.f32.mrf.mxu0
        %v4131 = vadd.f32 %v4108, %v4130
        %4132 = vdwg.mxu0
        %v4133 = vmax.f32 %v4131, 0.0
        %s4134 = scalar_lea.vmem %s5, 64
        %v4135 = vld [vmem:[%s4134] sm:$0xff]
        %v4136 = vld [vmem:[%s4134 + $0x8] sm:$0xff]
        %v4137 = vld [vmem:[%s4134 + $0x10] sm:$0xff]
        %v4138 = vld [vmem:[%s4134 + $0x18] sm:$0xff]
        %v4139 = vld [vmem:[%s4134 + $0x20] sm:$0xff]
        %v4140 = vld [vmem:[%s4134 + $0x28] sm:$0xff]
        %v4141 = vld [vmem:[%s4134 + $0x30] sm:$0xff]
        %v4142 = vld [vmem:[%s4134 + $0x38] sm:$0xff]
        %v4145 = vsel %vm1168, %v4133, 0
        %4147 = vmatpush.msra.mxu0 0.0
        %4148 = vmatpush.msra.mxu0 0.0
        %4149 = vmatpush.msra.mxu0 0.0
        %4150 = vmatpush.msra.mxu0 0.0
        %4151 = vmatpush.msra.mxu0 0.0
        %4152 = vmatpush.msra.mxu0 0.0
        %4153 = vmatpush.msra.mxu0 0.0
        %4154 = vmatpush.msra.mxu0 0.0
        %4155 = vmatpush.msra.mxu0 %v4142
        %4156 = vmatpush.msra.mxu0 %v4141
        %4157 = vmatpush.msra.mxu0 %v4140
        %4158 = vmatpush.msra.mxu0 %v4139
        %4159 = vmatpush.msra.mxu0 %v4138
        %4160 = vmatpush.msra.mxu0 %v4137
        %4161 = vmatpush.msra.mxu0 %v4136
        %4162 = vmatpush.msra.mxu0 %v4135
        %4163 = vmatmul.f32.gmra.mxu0 %v4145
        %v4164 = vpop.f32.mrf.mxu0
        %v4165 = vadd.f32 %v2705, %v4164
        %4166 = vdwg.mxu0
        %v4167 = vadd.f32 %v4090, %v4165
        %v4168 = vsel %vm351, %v4167, 0.0
        %4169 = vadd.xlane.f32.xlu0 %v4168
        %v4170 = vpop.xlane.xlu0 %4169
        %v4171 = vmul.f32 %v4170, %v734
        %v4172 = vsub.f32 %v4167, %v4171
        %v4173 = vmul.f32 %v4172, %v4172
        %v4174 = vsel %vm351, %v4173, 0.0
        %4175 = vadd.xlane.f32.xlu0 %v4174
        %v4176 = vpop.xlane.xlu0 %4175
        %v4177 = vmul.f32 %v4176, %v734
        %v4178 = vadd.f32 %v4177, 1e-05
        %v4179 = vrsqrt.pop %v4178
        %v4180 = vmul.f32 %v4179, %v4178
        %v4181 = vmul.f32 %v4180, %v4179
        %v4182 = vmul.f32 0.5, %v4181
        %v4183 = vsub.f32 1.5, %v4182
        %v4184 = vmul.f32 %v4179, %v4183
        %vm4185 = vweird.f32 %v4178
        %vm4186 = vweird.f32 %v4179
        %vm4187 = vmor %vm4185, %vm4186
        %v4188 = vsel %vm4187, %v4179, %v4184
        %v4189 = vmul.f32 %v4172, %v4188
        %4190 = vrot.lane.b32.xlu0 %v4088, 96
        %v4191 = vpop.permute.xlu0 %4190
        %v4193 = vmul.f32 %v4189, %v4191
        %4194 = vrot.lane.b32.xlu0 %v4088, 64
        %v4195 = vpop.permute.xlu0 %4194
        %v4197 = vadd.f32 %v4193, %v4195
        %s4198 = scalar_lea.vmem %s310, 8 [#allocation2]
        %4199 = vst.msk [vmem:[%s4198] sm:$0xff] %vm351, %v4197
        %s4200 = sand.u32 %s196, 1
        %s4201 = scalar_lea.sflag [#allocation3], %s4200
        %s4202 = sand.u32 %s196, 1
        %s4203 = smul.addr %s4202, 16
        %s4204 = scalar_lea.vmem [#allocation2], %s4203
        // Predicated region
        $region49: #{decoder_forward.1} parent=47 // pred_check
          %p4205 = pneg %p206
        $region50: #{decoder_forward.1} parent=47 // pred_check_branch
          %4207 = sbr.rel (%p4205) target = $region52
        $region51: #{decoder_forward.1} parent=47 // pred_region
          %4209 = vsyncadd %s4201, 0
          %s4210 = smul.addr %s21, 8
          %s4211 = scalar_lea.hbm %s7, %s4210
          %s4212 = sshll.u32 %s4204, 4
          %s4213 = int_to_ptr.vmem [resolvable:$true] %s4212
          %s4214 = sshll.u32 %s4211, 4
          %s4215 = int_to_ptr.hbm [resolvable:$true] %s4214
          %4220 = dma.vmem_to_hbm [thread:$0]  %s4213, 256, %s4215, %s4201, 128, 256, 8
        $region52: #{decoder_forward.1} parent=47 // pred_fallthru
          _
      $region48: #{decoder_forward.1} parent=5 // pred_fallthru
        _
      %p4221 = scmp.le.s32.totalorder 2, %s16
      // Predicated region
      $region53: #{decoder_forward.1} parent=5 // pred_check
        %p4222 = pneg %p4221
      $region54: #{decoder_forward.1} parent=5 // pred_check_branch
        %4224 = sbr.rel (%p4222) target = $region56
      $region55: #{decoder_forward.1} parent=5 // pred_region
        %s4225 = ssub.s32 %s16, 2
        // Predicated region
        $region57: #{decoder_forward.1} parent=55 // pred_check
          %p4226 = pneg %p212
        $region58: #{decoder_forward.1} parent=55 // pred_check_branch
          %4228 = sbr.rel (%p4226) target = $region60
        $region59: #{decoder_forward.1} parent=55 // pred_region
          %s4229 = sand.u32 %s197, 1
          %s4230 = scalar_lea.sflag [#allocation3], %s4229
          %s4231 = sand.u32 %s197, 1
          %s4232 = smul.addr %s4231, 16
          %s4233 = scalar_lea.vmem [#allocation2], %s4232
          %4235 = dma.done %s4230, 256
        $region60: #{decoder_forward.1} parent=55 // pred_fallthru
          _
      $region56: #{decoder_forward.1} parent=5 // pred_fallthru
        _
    $region6: #{decoder_forward.1} parent=1 // loop_footer
      %s20 = sadd.s32 1, %s16
    $region7: #{decoder_forward.1} parent=1 // loop_footer_branch
      %15 = sbr.rel target = $region3
    $region8: #{decoder_forward.1} parent=1 // loop_exit
      _
    %4236 = vsyncpa [#allocation3], 1
    %s4237 = scalar_lea.sflag [#allocation3], 1
    %4238 = vsyncpa %s4237, 1

</llo_original>
